<compile_context>
chip_gen: v7x
topology: tpu7x:2x2x1
jax: 0.10.0
libtpu: 0.0.40
codegen_flags: <defaults>
</compile_context>

<pallas_src>
import functools

import jax
import jax.numpy as jnp
from jax.experimental import pallas as pl
from jax.experimental.pallas import tpu as pltpu


LANE = 128


def _round_up(x, m):
    return (x + m - 1) // m * m


def _pad_last(a, target):
    pad = target - a.shape[-1]
    if pad == 0:
        return a
    cfg = [(0, 0)] * (a.ndim - 1) + [(0, pad)]
    return jnp.pad(a, cfg)


# ----------------------------------------------------------------------------
# Kernel 1: fused pointwise conv  y = relu(x @ Wcat + shift)
# (BN scale is pre-folded into the weight columns; used for b0 + b1a + b2a.)
# ----------------------------------------------------------------------------
def _mm_bias_relu_kernel(x_ref, w_ref, b_ref, o_ref):
    acc = jnp.dot(x_ref[...], w_ref[...], preferred_element_type=jnp.float32)
    o_ref[...] = jnp.maximum(acc + b_ref[...], 0.0).astype(o_ref.dtype)


def fused_matmul_bias_relu(x2d, w, b, out_dtype=jnp.bfloat16, tm_max=1024):
    M, K = x2d.shape
    cop = w.shape[1]
    steps = -(-M // tm_max)                       # number of grid steps
    tm = _round_up(-(-M // steps), 8)             # balanced, 8-aligned tile
    mp = tm * steps
    if mp != M:
        x2d = jnp.pad(x2d, ((0, mp - M), (0, 0)))
    out = pl.pallas_call(
        _mm_bias_relu_kernel,
        out_shape=jax.ShapeDtypeStruct((mp, cop), out_dtype),
        grid_spec=pltpu.PrefetchScalarGridSpec(
            num_scalar_prefetch=0,
            grid=(steps,),
            in_specs=[
                pl.BlockSpec((tm, K), lambda i: (i, 0)),
                pl.BlockSpec((K, cop), lambda i: (0, 0)),
                pl.BlockSpec((1, cop), lambda i: (0, 0)),
            ],
            out_specs=pl.BlockSpec((tm, cop), lambda i: (i, 0)),
        ),
        compiler_params=pltpu.CompilerParams(
            dimension_semantics=("parallel",)),
    )(x2d, w, b.reshape(1, -1))
    return out[:M] if mp != M else out


# ----------------------------------------------------------------------------
# Kernel 2: 3x3x3 SAME conv (stride 1) with an in-kernel 9-tap (kd, kh) loop.
# The W-window (3*Cin) has been gathered on the host; rows enumerate the
# padded (dp, hp, wo) grid so a tap is a simple row-offset slice.  The f32
# accumulation happens directly in the output VMEM block (no scratch).
# ----------------------------------------------------------------------------
def _conv3x3_tap_kernel(x_ref, w_ref, b_ref, o_ref, *, h_pad, w_out, rows_out):
    o_ref[0] = jnp.dot(x_ref[0, 0:rows_out, :], w_ref[0],
                       preferred_element_type=jnp.float32)
    for tap in range(1, 9):
        kd, kh = divmod(tap, 3)
        base = (kd * h_pad + kh) * w_out          # multiple of w_out
        o_ref[0] = o_ref[0] + jnp.dot(
            x_ref[0, base:base + rows_out, :], w_ref[tap],
            preferred_element_type=jnp.float32)
    o_ref[0] = jnp.maximum(o_ref[0] + b_ref[...], 0.0)


def conv3x3_bn_relu(h, w9, b):
    # h: (N, D, H, W, Ci) bf16;  w9: (9, 3*Ci, Cop) bf16;  b: (Cop,) f32
    N, D, H, W, Ci = h.shape
    cop = w9.shape[-1]
    K = 3 * Ci

    # Host glue: SAME padding + W-window gather (3x) of the small intermediate.
    # TODO(synk): for very large volumes this pad/gather and the per-batch
    # block should also be tiled over D.
    hpad = jnp.pad(h, ((0, 0), (1, 1), (1, 1), (1, 1), (0, 0)))
    xw = jnp.stack([hpad[:, :, :, kw:kw + W, :] for kw in range(3)], axis=4)
    xw = xw.reshape(N, (D + 2) * (H + 2) * W, K)
    # 2*W extra zero rows so the (kd, kh) = (2, 2) tap window stays in bounds.
    xw = jnp.pad(xw, ((0, 0), (0, 2 * W), (0, 0)))
    rin = xw.shape[1]
    rows_out = D * (H + 2) * W

    kern = functools.partial(_conv3x3_tap_kernel,
                             h_pad=H + 2, w_out=W, rows_out=rows_out)
    out = pl.pallas_call(
        kern,
        out_shape=jax.ShapeDtypeStruct((N, rows_out, cop), jnp.float32),
        grid_spec=pltpu.PrefetchScalarGridSpec(
            num_scalar_prefetch=0,
            grid=(N,),
            in_specs=[
                pl.BlockSpec((1, rin, K), lambda n: (n, 0, 0)),
                pl.BlockSpec((9, K, cop), lambda n: (0, 0, 0)),
                pl.BlockSpec((1, cop), lambda n: (0, 0)),
            ],
            out_specs=pl.BlockSpec((1, rows_out, cop), lambda n: (n, 0, 0)),
        ),
        compiler_params=pltpu.CompilerParams(
            dimension_semantics=("parallel",)),
    )(xw, w9, b.reshape(1, -1))

    # Undo the row flattening: rows enumerate (d, h_padded, w); drop the two
    # junk h rows per depth slice.
    out = out.reshape(N, D, H + 2, W, cop)[:, :, :H, :, :]
    return out


# ----------------------------------------------------------------------------
# Kernel 3: TF-SAME 3x3x3 maxpool (zero constant padding) fused with the
# branch-3 1x1 conv + BN + ReLU.  Separable window-of-3 maxima are computed in
# bf16 on the zero-padded flattened rows (strides 1 / W+2 / (H+2)(W+2)), then
# the pooled rows go straight into the matmul — pooled never touches HBM.
# ----------------------------------------------------------------------------
def _maxpool_b3_kernel(x_ref, w_ref, b_ref, o_ref, *, wd, hd):
    v = x_ref[0]                               # (Rp, C) bf16 (max is exact)
    r = v.shape[0]
    m = jnp.maximum(jnp.maximum(v[0:r - 2], v[1:r - 1]), v[2:r])          # W
    r -= 2
    k = wd + 2
    m = jnp.maximum(jnp.maximum(m[0:r - 2 * k], m[k:r - k]), m[2 * k:r])  # H
    r -= 2 * k
    k = (hd + 2) * (wd + 2)
    m = jnp.maximum(jnp.maximum(m[0:r - 2 * k], m[k:r - k]), m[2 * k:r])  # D
    acc = jnp.dot(m, w_ref[...], preferred_element_type=jnp.float32)
    o_ref[0] = jnp.maximum(acc + b_ref[...], 0.0).astype(o_ref.dtype)


def maxpool3_b3_bn_relu(x, w, b):
    # x: (N, D, H, W, C) bf16;  w: (C, Cop) bf16;  b: (Cop,) f32
    N, D, H, W, C = x.shape
    cop = w.shape[-1]
    xp = jnp.pad(x, ((0, 0), (1, 1), (1, 1), (1, 1), (0, 0)))
    rp = (D + 2) * (H + 2) * (W + 2)
    xf = xp.reshape(N, rp, C)

    off0 = 1 + (W + 2) + (H + 2) * (W + 2)
    rv = rp - 2 * off0                         # rows surviving the 3 shrinks
    tail = (-rv) % 8                           # keep the matmul M 8-aligned
    if tail:
        xf = jnp.pad(xf, ((0, 0), (0, tail), (0, 0)))
    rpp, rvp = rp + tail, rv + tail

    kern = functools.partial(_maxpool_b3_kernel, wd=W, hd=H)
    out = pl.pallas_call(
        kern,
        out_shape=jax.ShapeDtypeStruct((N, rvp, cop), jnp.float32),
        grid_spec=pltpu.PrefetchScalarGridSpec(
            num_scalar_prefetch=0,
            grid=(N,),
            in_specs=[
                pl.BlockSpec((1, rpp, C), lambda n: (n, 0, 0)),
                pl.BlockSpec((C, cop), lambda n: (0, 0)),
                pl.BlockSpec((1, cop), lambda n: (0, 0)),
            ],
            out_specs=pl.BlockSpec((1, rvp, cop), lambda n: (n, 0, 0)),
        ),
        compiler_params=pltpu.CompilerParams(
            dimension_semantics=("parallel",)),
    )(xf, w, b.reshape(1, -1))

    # Kernel row i corresponds to padded flat position i + off0; scatter rows
    # back onto the padded grid and keep the interior (host glue).
    out = out[:, :rv, :]
    out = jnp.pad(out, ((0, 0), (off0, rp - off0 - rv), (0, 0)))
    out = out.reshape(N, D + 2, H + 2, W + 2, cop)
    return out[:, 1:D + 1, 1:H + 1, 1:W + 1, :]


# ----------------------------------------------------------------------------
# Mixed forward
# ----------------------------------------------------------------------------
def mixed_forward(x_ncdhw, params):
    x = jnp.transpose(x_ncdhw, (0, 2, 3, 4, 1)).astype(jnp.bfloat16)  # NDHWC
    N, D, H, W, Cin = x.shape

    oc0 = params["b0"][0].shape[-1]
    oc1 = params["b1a"][0].shape[-1]
    oc2 = params["b1b"][0].shape[-1]
    oc3 = params["b2a"][0].shape[-1]
    oc4 = params["b2b"][0].shape[-1]
    oc5 = params["b3"][0].shape[-1]
    cc = oc1 + oc3                       # channels feeding the two 3x3 convs

    def fold1(p):                        # fold BN scale into the conv weight
        w, s, sh = p
        return w * s[None, :], sh

    w_b1a, sh_b1a = fold1(params["b1a"])
    w_b2a, sh_b2a = fold1(params["b2a"])
    w_b0, sh_b0 = fold1(params["b0"])
    w_b3, sh_b3 = fold1(params["b3"])

    # stage-1 weights: columns = [b1a | b2a | b0], padded to a 128-wide lane slab
    cop1 = _round_up(cc + oc0, LANE)
    w1 = _pad_last(jnp.concatenate([w_b1a, w_b2a, w_b0], axis=1), cop1)
    b1 = _pad_last(jnp.concatenate([sh_b1a, sh_b2a, sh_b0], axis=0), cop1)

    # per-branch 3x3x3 weights (BN scale folded), as 9 (kd, kh) taps
    def fold3(p):
        w, s, sh = p                     # (3, 3, 3, ci, co)
        ws = w * s[None, :]
        ci, co = ws.shape[3], ws.shape[4]
        cop = _round_up(co, LANE)
        w9 = _pad_last(ws, cop).reshape(9, 3 * ci, cop)   # (kd*3+kh, kw*ci+c, o)
        return w9.astype(jnp.bfloat16), _pad_last(sh, cop)

    w9_1, bsh_1 = fold3(params["b1b"])
    w9_2, bsh_2 = fold3(params["b2b"])

    cop3 = _round_up(oc5, LANE)
    w3 = _pad_last(w_b3, cop3).astype(jnp.bfloat16)
    b3 = _pad_last(sh_b3, cop3)

    # ---- stage 1: the three 1x1 convs reading x, fused into one matmul -----
    y1 = fused_matmul_bias_relu(
        x.reshape(N * D * H * W, Cin), w1.astype(jnp.bfloat16), b1,
        out_dtype=jnp.bfloat16)
    y1 = y1.reshape(N, D, H, W, cop1)
    h1 = y1[..., :oc1]                                    # -> branch-1 3x3 conv
    h2 = y1[..., oc1:cc]                                  # -> branch-2 3x3 conv
    out0 = y1[..., cc:cc + oc0].astype(jnp.float32)       # branch 0 output

    # ---- stage 2: the two 3x3x3 convs (in-kernel tap accumulation) ----------
    out1 = conv3x3_bn_relu(h1, w9_1, bsh_1)[..., :oc2]
    out2 = conv3x3_bn_relu(h2, w9_2, bsh_2)[..., :oc4]

    # ---- stage 3: TF-SAME maxpool fused with the branch-3 1x1 conv ---------
    out3 = maxpool3_b3_bn_relu(x, w3, b3)[..., :oc5]

    out = jnp.concatenate([out0, out1, out2, out3], axis=-1)  # torch.cat dim=1
    return jnp.transpose(out, (0, 4, 1, 2, 3))                # back to NCDHW


# ----------------------------------------------------------------------------
# Pure-JAX f32 reference of the same module (for the correctness check)
# ----------------------------------------------------------------------------
def _ref_forward(x_ncdhw, params):
    x = jnp.transpose(x_ncdhw, (0, 2, 3, 4, 1))  # NDHWC, f32

    def unit1(h, p):
        w, s, sh = p
        y = jnp.einsum('ndhwc,co->ndhwo', h, w,
                       precision=jax.lax.Precision.HIGHEST)
        return jax.nn.relu(y * s + sh)

    def unit3(h, p):
        w, s, sh = p
        y = jax.lax.conv_general_dilated(
            h, w, window_strides=(1, 1, 1), padding='SAME',
            dimension_numbers=('NDHWC', 'DHWIO', 'NDHWC'),
            precision=jax.lax.Precision.HIGHEST)
        return jax.nn.relu(y * s + sh)

    def pool3(h):                                     # ConstantPad3d(0)+MaxPool3d(3,1)
        hp = jnp.pad(h, ((0, 0), (1, 1), (1, 1), (1, 1), (0, 0)))
        return jax.lax.reduce_window(hp, -jnp.inf, jax.lax.max,
                                     (1, 3, 3, 3, 1), (1, 1, 1, 1, 1), 'VALID')

    o0 = unit1(x, params['b0'])
    o1 = unit3(unit1(x, params['b1a']), params['b1b'])
    o2 = unit3(unit1(x, params['b2a']), params['b2b'])
    o3 = unit1(pool3(x), params['b3'])
    out = jnp.concatenate([o0, o1, o2, o3], axis=-1)
    return jnp.transpose(out, (0, 4, 1, 2, 3))


# ----------------------------------------------------------------------------
# Deterministic parameter construction (inference-mode BN folded to scale/shift)
# ----------------------------------------------------------------------------
def _bn_fold(key, c, eps=1e-5):
    k1, k2, k3, k4 = jax.random.split(key, 4)
    gamma = 1.0 + 0.1 * jax.random.normal(k1, (c,), jnp.float32)
    beta = 0.1 * jax.random.normal(k2, (c,), jnp.float32)
    run_mean = 0.1 * jax.random.normal(k3, (c,), jnp.float32)
    run_var = 1.0 + 0.1 * jax.random.uniform(k4, (c,), jnp.float32)
    scale = gamma / jnp.sqrt(run_var + eps)
    shift = beta - run_mean * scale
    return scale, shift


def make_params(key, in_channels, out_channels):
    oc = out_channels
    ks = jax.random.split(key, 12)

    def conv1(kw, kb, cin, cout):
        w = 0.1 * jax.random.normal(kw, (cin, cout), jnp.float32)
        return (w,) + _bn_fold(kb, cout)

    def conv3(kw, kb, cin, cout):
        w = 0.1 * jax.random.normal(kw, (3, 3, 3, cin, cout), jnp.float32)
        return (w,) + _bn_fold(kb, cout)

    return {
        "b0": conv1(ks[0], ks[1], in_channels, oc[0]),
        "b1a": conv1(ks[2], ks[3], in_channels, oc[1]),
        "b1b": conv3(ks[4], ks[5], oc[1], oc[2]),
        "b2a": conv1(ks[6], ks[7], in_channels, oc[3]),
        "b2b": conv3(ks[8], ks[9], oc[3], oc[4]),
        "b3": conv1(ks[10], ks[11], in_channels, oc[5]),
    }


if __name__ == "__main__":
    key = jax.random.PRNGKey(0)
    k_x, k_p = jax.random.split(key)

    N, Cin, D, H, W = 2, 8, 4, 8, 8
    out_channels = (8, 8, 16, 8, 16, 8)  # concat channels = 8+16+16+8 = 48

    x = jax.random.normal(k_x, (N, Cin, D, H, W), jnp.float32)  # NCDHW like torch
    params = make_params(k_p, Cin, out_channels)

    fwd = jax.jit(mixed_forward)
    out = jax.block_until_ready(fwd(x, params))

    c_total = out_channels[0] + out_channels[2] + out_channels[4] + out_channels[5]
    assert out.shape == (N, c_total, D, H, W), out.shape
    assert bool(jnp.all(jnp.isfinite(out)))

    # Numeric check against the pure-JAX f32 reference (bf16 kernel tolerance).
    ref = jax.block_until_ready(_ref_forward(x, params))
    max_err = float(jnp.max(jnp.abs(out - ref)))
    assert max_err < 0.1, f"max abs err vs reference = {max_err}"
    print("KERNEL_OK")
</pallas_src>

<mosaic_0001>
module attributes {stable_mosaic.version = 11 : i64} {
  func.func @_mm_bias_relu_kernel(%arg0: i32, %arg1: memref<512x8xbf16, #tpu.memory_space<vmem>>, %arg2: memref<8x128xbf16, #tpu.memory_space<vmem>>, %arg3: memref<1x128xf32, #tpu.memory_space<vmem>>, %arg4: memref<512x128xbf16, #tpu.memory_space<vmem>>) attributes {dimension_semantics = [#tpu.dimension_semantics<parallel>], iteration_bounds = array<i64: 1>, scalar_prefetch = 0 : i64, scratch_operands = 0 : i64, tpu.core_type = #tpu.core_type<tc>, window_params = [{transform_indices = @transform_0, window_bounds = array<i64: 512, 8>}, {pipeline_mode = #tpu.pipeline_mode<synchronous>, transform_indices = @transform_1, window_bounds = array<i64: 8, 128>}, {pipeline_mode = #tpu.pipeline_mode<synchronous>, transform_indices = @transform_2, window_bounds = array<i64: 1, 128>}, {transform_indices = @transform_3, window_bounds = array<i64: 512, 128>}]} {
    %c0 = arith.constant 0 : index
    %c0_0 = arith.constant 0 : index
    %0 = vector.load %arg1[%c0, %c0_0] : memref<512x8xbf16, #tpu.memory_space<vmem>>, vector<512x8xbf16>
    %c0_1 = arith.constant 0 : index
    %c0_2 = arith.constant 0 : index
    %1 = vector.load %arg2[%c0_1, %c0_2] : memref<8x128xbf16, #tpu.memory_space<vmem>>, vector<8x128xbf16>
    %cst = arith.constant dense<0.000000e+00> : vector<512x128xf32>
    %2 = tpu.matmul %0, %1, %cst {dimension_numbers = #tpu.dot_dimension_numbers<[1], [0], [0], [1], [0, 0, 1, 1], [], []>} : vector<512x8xbf16>, vector<8x128xbf16>, vector<512x128xf32> -> vector<512x128xf32>
    %c0_3 = arith.constant 0 : index
    %c0_4 = arith.constant 0 : index
    %3 = vector.load %arg3[%c0_3, %c0_4] : memref<1x128xf32, #tpu.memory_space<vmem>>, vector<1x128xf32>
    %4 = vector.broadcast %3 : vector<1x128xf32> to vector<512x128xf32>
    %5 = arith.addf %2, %4 : vector<512x128xf32>
    %cst_5 = arith.constant 0.000000e+00 : f32
    %6 = vector.broadcast %cst_5 : f32 to vector<512x128xf32>
    %7 = arith.maximumf %5, %6 : vector<512x128xf32>
    %8 = arith.truncf %7 : vector<512x128xf32> to vector<512x128xbf16>
    %c0_6 = arith.constant 0 : index
    %c0_7 = arith.constant 0 : index
    %9 = vector.load %arg4[%c0_6, %c0_7] : memref<512x128xbf16, #tpu.memory_space<vmem>>, vector<512x128xbf16>
    tpu.vector_store %arg4[%c0_6, %c0_7], %8 {strides = array<i32>} : memref<512x128xbf16, #tpu.memory_space<vmem>>, vector<512x128xbf16>,
    return
  }
  func.func @transform_0(%arg0: i32) -> (i32, i32) {
    %c0_i32 = arith.constant 0 : i32
    %c0_i32_0 = arith.constant 0 : i32
    return %arg0, %c0_i32 : i32, i32
  }
  func.func @transform_1(%arg0: i32) -> (i32, i32) {
    %c0_i32 = arith.constant 0 : i32
    %c0_i32_0 = arith.constant 0 : i32
    %c0_i32_1 = arith.constant 0 : i32
    return %c0_i32, %c0_i32_0 : i32, i32
  }
  func.func @transform_2(%arg0: i32) -> (i32, i32) {
    %c0_i32 = arith.constant 0 : i32
    %c0_i32_0 = arith.constant 0 : i32
    %c0_i32_1 = arith.constant 0 : i32
    return %c0_i32, %c0_i32_0 : i32, i32
  }
  func.func @transform_3(%arg0: i32) -> (i32, i32) {
    %c0_i32 = arith.constant 0 : i32
    %c0_i32_0 = arith.constant 0 : i32
    return %arg0, %c0_i32 : i32, i32
  }
}

module attributes {stable_mosaic.version = 11 : i64} {
  func.func @_conv3x3_tap_kernel(%arg0: i32, %arg1: memref<1x496x24xbf16, #tpu.memory_space<vmem>>, %arg2: memref<9x24x128xbf16, #tpu.memory_space<vmem>>, %arg3: memref<1x128xf32, #tpu.memory_space<vmem>>, %arg4: memref<1x320x128xf32, #tpu.memory_space<vmem>>) attributes {dimension_semantics = [#tpu.dimension_semantics<parallel>], iteration_bounds = array<i64: 2>, scalar_prefetch = 0 : i64, scratch_operands = 0 : i64, tpu.core_type = #tpu.core_type<tc>, window_params = [{transform_indices = @transform_0, window_bounds = array<i64: 1, 496, 24>}, {pipeline_mode = #tpu.pipeline_mode<synchronous>, transform_indices = @transform_1, window_bounds = array<i64: 9, 24, 128>}, {pipeline_mode = #tpu.pipeline_mode<synchronous>, transform_indices = @transform_2, window_bounds = array<i64: 1, 128>}, {transform_indices = @transform_3, window_bounds = array<i64: 1, 320, 128>}]} {
    %c0 = arith.constant 0 : index
    %c0_0 = arith.constant 0 : index
    %c0_1 = arith.constant 0 : index
    %0 = vector.load %arg1[%c0, %c0_0, %c0_1] : memref<1x496x24xbf16, #tpu.memory_space<vmem>>, vector<1x320x24xbf16>
    %1 = vector.shape_cast %0 : vector<1x320x24xbf16> to vector<320x24xbf16>
    %c0_2 = arith.constant 0 : index
    %c0_3 = arith.constant 0 : index
    %c0_4 = arith.constant 0 : index
    %2 = vector.load %arg2[%c0_2, %c0_3, %c0_4] : memref<9x24x128xbf16, #tpu.memory_space<vmem>>, vector<1x24x128xbf16>
    %3 = vector.shape_cast %2 : vector<1x24x128xbf16> to vector<24x128xbf16>
    %cst = arith.constant dense<0.000000e+00> : vector<320x128xf32>
    %4 = tpu.matmul %1, %3, %cst {dimension_numbers = #tpu.dot_dimension_numbers<[1], [0], [0], [1], [0, 0, 1, 1], [], []>} : vector<320x24xbf16>, vector<24x128xbf16>, vector<320x128xf32> -> vector<320x128xf32>
    %c0_5 = arith.constant 0 : index
    %c0_6 = arith.constant 0 : index
    %c0_7 = arith.constant 0 : index
    %5 = vector.load %arg4[%c0_5, %c0_6, %c0_7] : memref<1x320x128xf32, #tpu.memory_space<vmem>>, vector<1x320x128xf32>
    %6 = vector.shape_cast %5 : vector<1x320x128xf32> to vector<320x128xf32>
    %7 = vector.shape_cast %4 : vector<320x128xf32> to vector<1x320x128xf32>
    tpu.vector_store %arg4[%c0_5, %c0_6, %c0_7], %7 {strides = array<i32>} : memref<1x320x128xf32, #tpu.memory_space<vmem>>, vector<1x320x128xf32>,
    %c0_8 = arith.constant 0 : index
    %c0_9 = arith.constant 0 : index
    %c0_10 = arith.constant 0 : index
    %8 = vector.load %arg4[%c0_8, %c0_9, %c0_10] : memref<1x320x128xf32, #tpu.memory_space<vmem>>, vector<1x320x128xf32>
    %9 = vector.shape_cast %8 : vector<1x320x128xf32> to vector<320x128xf32>
    %c0_11 = arith.constant 0 : index
    %c8 = arith.constant 8 : index
    %c0_12 = arith.constant 0 : index
    %10 = vector.load %arg1[%c0_11, %c8, %c0_12] : memref<1x496x24xbf16, #tpu.memory_space<vmem>>, vector<1x320x24xbf16>
    %11 = vector.shape_cast %10 : vector<1x320x24xbf16> to vector<320x24xbf16>
    %c1 = arith.constant 1 : index
    %c0_13 = arith.constant 0 : index
    %c0_14 = arith.constant 0 : index
    %12 = vector.load %arg2[%c1, %c0_13, %c0_14] : memref<9x24x128xbf16, #tpu.memory_space<vmem>>, vector<1x24x128xbf16>
    %13 = vector.shape_cast %12 : vector<1x24x128xbf16> to vector<24x128xbf16>
    %cst_15 = arith.constant dense<0.000000e+00> : vector<320x128xf32>
    %14 = tpu.matmul %11, %13, %cst_15 {dimension_numbers = #tpu.dot_dimension_numbers<[1], [0], [0], [1], [0, 0, 1, 1], [], []>} : vector<320x24xbf16>, vector<24x128xbf16>, vector<320x128xf32> -> vector<320x128xf32>
    %15 = arith.addf %9, %14 : vector<320x128xf32>
    %c0_16 = arith.constant 0 : index
    %c0_17 = arith.constant 0 : index
    %c0_18 = arith.constant 0 : index
    %16 = vector.load %arg4[%c0_16, %c0_17, %c0_18] : memref<1x320x128xf32, #tpu.memory_space<vmem>>, vector<1x320x128xf32>
    %17 = vector.shape_cast %16 : vector<1x320x128xf32> to vector<320x128xf32>
    %18 = vector.shape_cast %15 : vector<320x128xf32> to vector<1x320x128xf32>
    tpu.vector_store %arg4[%c0_16, %c0_17, %c0_18], %18 {strides = array<i32>} : memref<1x320x128xf32, #tpu.memory_space<vmem>>, vector<1x320x128xf32>,
    %c0_19 = arith.constant 0 : index
    %c0_20 = arith.constant 0 : index
    %c0_21 = arith.constant 0 : index
    %19 = vector.load %arg4[%c0_19, %c0_20, %c0_21] : memref<1x320x128xf32, #tpu.memory_space<vmem>>, vector<1x320x128xf32>
    %20 = vector.shape_cast %19 : vector<1x320x128xf32> to vector<320x128xf32>
    %c0_22 = arith.constant 0 : index
    %c16 = arith.constant 16 : index
    %c0_23 = arith.constant 0 : index
    %21 = vector.load %arg1[%c0_22, %c16, %c0_23] : memref<1x496x24xbf16, #tpu.memory_space<vmem>>, vector<1x320x24xbf16>
    %22 = vector.shape_cast %21 : vector<1x320x24xbf16> to vector<320x24xbf16>
    %c2 = arith.constant 2 : index
    %c0_24 = arith.constant 0 : index
    %c0_25 = arith.constant 0 : index
    %23 = vector.load %arg2[%c2, %c0_24, %c0_25] : memref<9x24x128xbf16, #tpu.memory_space<vmem>>, vector<1x24x128xbf16>
    %24 = vector.shape_cast %23 : vector<1x24x128xbf16> to vector<24x128xbf16>
    %cst_26 = arith.constant dense<0.000000e+00> : vector<320x128xf32>
    %25 = tpu.matmul %22, %24, %cst_26 {dimension_numbers = #tpu.dot_dimension_numbers<[1], [0], [0], [1], [0, 0, 1, 1], [], []>} : vector<320x24xbf16>, vector<24x128xbf16>, vector<320x128xf32> -> vector<320x128xf32>
    %26 = arith.addf %20, %25 : vector<320x128xf32>
    %c0_27 = arith.constant 0 : index
    %c0_28 = arith.constant 0 : index
    %c0_29 = arith.constant 0 : index
    %27 = vector.load %arg4[%c0_27, %c0_28, %c0_29] : memref<1x320x128xf32, #tpu.memory_space<vmem>>, vector<1x320x128xf32>
    %28 = vector.shape_cast %27 : vector<1x320x128xf32> to vector<320x128xf32>
    %29 = vector.shape_cast %26 : vector<320x128xf32> to vector<1x320x128xf32>
    tpu.vector_store %arg4[%c0_27, %c0_28, %c0_29], %29 {strides = array<i32>} : memref<1x320x128xf32, #tpu.memory_space<vmem>>, vector<1x320x128xf32>,
    %c0_30 = arith.constant 0 : index
    %c0_31 = arith.constant 0 : index
    %c0_32 = arith.constant 0 : index
    %30 = vector.load %arg4[%c0_30, %c0_31, %c0_32] : memref<1x320x128xf32, #tpu.memory_space<vmem>>, vector<1x320x128xf32>
    %31 = vector.shape_cast %30 : vector<1x320x128xf32> to vector<320x128xf32>
    %c0_33 = arith.constant 0 : index
    %c80 = arith.constant 80 : index
    %c0_34 = arith.constant 0 : index
    %32 = vector.load %arg1[%c0_33, %c80, %c0_34] : memref<1x496x24xbf16, #tpu.memory_space<vmem>>, vector<1x320x24xbf16>
    %33 = vector.shape_cast %32 : vector<1x320x24xbf16> to vector<320x24xbf16>
    %c3 = arith.constant 3 : index
    %c0_35 = arith.constant 0 : index
    %c0_36 = arith.constant 0 : index
    %34 = vector.load %arg2[%c3, %c0_35, %c0_36] : memref<9x24x128xbf16, #tpu.memory_space<vmem>>, vector<1x24x128xbf16>
    %35 = vector.shape_cast %34 : vector<1x24x128xbf16> to vector<24x128xbf16>
    %cst_37 = arith.constant dense<0.000000e+00> : vector<320x128xf32>
    %36 = tpu.matmul %33, %35, %cst_37 {dimension_numbers = #tpu.dot_dimension_numbers<[1], [0], [0], [1], [0, 0, 1, 1], [], []>} : vector<320x24xbf16>, vector<24x128xbf16>, vector<320x128xf32> -> vector<320x128xf32>
    %37 = arith.addf %31, %36 : vector<320x128xf32>
    %c0_38 = arith.constant 0 : index
    %c0_39 = arith.constant 0 : index
    %c0_40 = arith.constant 0 : index
    %38 = vector.load %arg4[%c0_38, %c0_39, %c0_40] : memref<1x320x128xf32, #tpu.memory_space<vmem>>, vector<1x320x128xf32>
    %39 = vector.shape_cast %38 : vector<1x320x128xf32> to vector<320x128xf32>
    %40 = vector.shape_cast %37 : vector<320x128xf32> to vector<1x320x128xf32>
    tpu.vector_store %arg4[%c0_38, %c0_39, %c0_40], %40 {strides = array<i32>} : memref<1x320x128xf32, #tpu.memory_space<vmem>>, vector<1x320x128xf32>,
    %c0_41 = arith.constant 0 : index
    %c0_42 = arith.constant 0 : index
    %c0_43 = arith.constant 0 : index
    %41 = vector.load %arg4[%c0_41, %c0_42, %c0_43] : memref<1x320x128xf32, #tpu.memory_space<vmem>>, vector<1x320x128xf32>
    %42 = vector.shape_cast %41 : vector<1x320x128xf32> to vector<320x128xf32>
    %c0_44 = arith.constant 0 : index
    %c88 = arith.constant 88 : index
    %c0_45 = arith.constant 0 : index
    %43 = vector.load %arg1[%c0_44, %c88, %c0_45] : memref<1x496x24xbf16, #tpu.memory_space<vmem>>, vector<1x320x24xbf16>
    %44 = vector.shape_cast %43 : vector<1x320x24xbf16> to vector<320x24xbf16>
    %c4 = arith.constant 4 : index
    %c0_46 = arith.constant 0 : index
    %c0_47 = arith.constant 0 : index
    %45 = vector.load %arg2[%c4, %c0_46, %c0_47] : memref<9x24x128xbf16, #tpu.memory_space<vmem>>, vector<1x24x128xbf16>
    %46 = vector.shape_cast %45 : vector<1x24x128xbf16> to vector<24x128xbf16>
    %cst_48 = arith.constant dense<0.000000e+00> : vector<320x128xf32>
    %47 = tpu.matmul %44, %46, %cst_48 {dimension_numbers = #tpu.dot_dimension_numbers<[1], [0], [0], [1], [0, 0, 1, 1], [], []>} : vector<320x24xbf16>, vector<24x128xbf16>, vector<320x128xf32> -> vector<320x128xf32>
    %48 = arith.addf %42, %47 : vector<320x128xf32>
    %c0_49 = arith.constant 0 : index
    %c0_50 = arith.constant 0 : index
    %c0_51 = arith.constant 0 : index
    %49 = vector.load %arg4[%c0_49, %c0_50, %c0_51] : memref<1x320x128xf32, #tpu.memory_space<vmem>>, vector<1x320x128xf32>
    %50 = vector.shape_cast %49 : vector<1x320x128xf32> to vector<320x128xf32>
    %51 = vector.shape_cast %48 : vector<320x128xf32> to vector<1x320x128xf32>
    tpu.vector_store %arg4[%c0_49, %c0_50, %c0_51], %51 {strides = array<i32>} : memref<1x320x128xf32, #tpu.memory_space<vmem>>, vector<1x320x128xf32>,
    %c0_52 = arith.constant 0 : index
    %c0_53 = arith.constant 0 : index
    %c0_54 = arith.constant 0 : index
    %52 = vector.load %arg4[%c0_52, %c0_53, %c0_54] : memref<1x320x128xf32, #tpu.memory_space<vmem>>, vector<1x320x128xf32>
    %53 = vector.shape_cast %52 : vector<1x320x128xf32> to vector<320x128xf32>
    %c0_55 = arith.constant 0 : index
    %c96 = arith.constant 96 : index
    %c0_56 = arith.constant 0 : index
    %54 = vector.load %arg1[%c0_55, %c96, %c0_56] : memref<1x496x24xbf16, #tpu.memory_space<vmem>>, vector<1x320x24xbf16>
    %55 = vector.shape_cast %54 : vector<1x320x24xbf16> to vector<320x24xbf16>
    %c5 = arith.constant 5 : index
    %c0_57 = arith.constant 0 : index
    %c0_58 = arith.constant 0 : index
    %56 = vector.load %arg2[%c5, %c0_57, %c0_58] : memref<9x24x128xbf16, #tpu.memory_space<vmem>>, vector<1x24x128xbf16>
    %57 = vector.shape_cast %56 : vector<1x24x128xbf16> to vector<24x128xbf16>
    %cst_59 = arith.constant dense<0.000000e+00> : vector<320x128xf32>
    %58 = tpu.matmul %55, %57, %cst_59 {dimension_numbers = #tpu.dot_dimension_numbers<[1], [0], [0], [1], [0, 0, 1, 1], [], []>} : vector<320x24xbf16>, vector<24x128xbf16>, vector<320x128xf32> -> vector<320x128xf32>
    %59 = arith.addf %53, %58 : vector<320x128xf32>
    %c0_60 = arith.constant 0 : index
    %c0_61 = arith.constant 0 : index
    %c0_62 = arith.constant 0 : index
    %60 = vector.load %arg4[%c0_60, %c0_61, %c0_62] : memref<1x320x128xf32, #tpu.memory_space<vmem>>, vector<1x320x128xf32>
    %61 = vector.shape_cast %60 : vector<1x320x128xf32> to vector<320x128xf32>
    %62 = vector.shape_cast %59 : vector<320x128xf32> to vector<1x320x128xf32>
    tpu.vector_store %arg4[%c0_60, %c0_61, %c0_62], %62 {strides = array<i32>} : memref<1x320x128xf32, #tpu.memory_space<vmem>>, vector<1x320x128xf32>,
    %c0_63 = arith.constant 0 : index
    %c0_64 = arith.constant 0 : index
    %c0_65 = arith.constant 0 : index
    %63 = vector.load %arg4[%c0_63, %c0_64, %c0_65] : memref<1x320x128xf32, #tpu.memory_space<vmem>>, vector<1x320x128xf32>
    %64 = vector.shape_cast %63 : vector<1x320x128xf32> to vector<320x128xf32>
    %c0_66 = arith.constant 0 : index
    %c160 = arith.constant 160 : index
    %c0_67 = arith.constant 0 : index
    %65 = vector.load %arg1[%c0_66, %c160, %c0_67] : memref<1x496x24xbf16, #tpu.memory_space<vmem>>, vector<1x320x24xbf16>
    %66 = vector.shape_cast %65 : vector<1x320x24xbf16> to vector<320x24xbf16>
    %c6 = arith.constant 6 : index
    %c0_68 = arith.constant 0 : index
    %c0_69 = arith.constant 0 : index
    %67 = vector.load %arg2[%c6, %c0_68, %c0_69] : memref<9x24x128xbf16, #tpu.memory_space<vmem>>, vector<1x24x128xbf16>
    %68 = vector.shape_cast %67 : vector<1x24x128xbf16> to vector<24x128xbf16>
    %cst_70 = arith.constant dense<0.000000e+00> : vector<320x128xf32>
    %69 = tpu.matmul %66, %68, %cst_70 {dimension_numbers = #tpu.dot_dimension_numbers<[1], [0], [0], [1], [0, 0, 1, 1], [], []>} : vector<320x24xbf16>, vector<24x128xbf16>, vector<320x128xf32> -> vector<320x128xf32>
    %70 = arith.addf %64, %69 : vector<320x128xf32>
    %c0_71 = arith.constant 0 : index
    %c0_72 = arith.constant 0 : index
    %c0_73 = arith.constant 0 : index
    %71 = vector.load %arg4[%c0_71, %c0_72, %c0_73] : memref<1x320x128xf32, #tpu.memory_space<vmem>>, vector<1x320x128xf32>
    %72 = vector.shape_cast %71 : vector<1x320x128xf32> to vector<320x128xf32>
    %73 = vector.shape_cast %70 : vector<320x128xf32> to vector<1x320x128xf32>
    tpu.vector_store %arg4[%c0_71, %c0_72, %c0_73], %73 {strides = array<i32>} : memref<1x320x128xf32, #tpu.memory_space<vmem>>, vector<1x320x128xf32>,
    %c0_74 = arith.constant 0 : index
    %c0_75 = arith.constant 0 : index
    %c0_76 = arith.constant 0 : index
    %74 = vector.load %arg4[%c0_74, %c0_75, %c0_76] : memref<1x320x128xf32, #tpu.memory_space<vmem>>, vector<1x320x128xf32>
    %75 = vector.shape_cast %74 : vector<1x320x128xf32> to vector<320x128xf32>
    %c0_77 = arith.constant 0 : index
    %c168 = arith.constant 168 : index
    %c0_78 = arith.constant 0 : index
    %76 = vector.load %arg1[%c0_77, %c168, %c0_78] : memref<1x496x24xbf16, #tpu.memory_space<vmem>>, vector<1x320x24xbf16>
    %77 = vector.shape_cast %76 : vector<1x320x24xbf16> to vector<320x24xbf16>
    %c7 = arith.constant 7 : index
    %c0_79 = arith.constant 0 : index
    %c0_80 = arith.constant 0 : index
    %78 = vector.load %arg2[%c7, %c0_79, %c0_80] : memref<9x24x128xbf16, #tpu.memory_space<vmem>>, vector<1x24x128xbf16>
    %79 = vector.shape_cast %78 : vector<1x24x128xbf16> to vector<24x128xbf16>
    %cst_81 = arith.constant dense<0.000000e+00> : vector<320x128xf32>
    %80 = tpu.matmul %77, %79, %cst_81 {dimension_numbers = #tpu.dot_dimension_numbers<[1], [0], [0], [1], [0, 0, 1, 1], [], []>} : vector<320x24xbf16>, vector<24x128xbf16>, vector<320x128xf32> -> vector<320x128xf32>
    %81 = arith.addf %75, %80 : vector<320x128xf32>
    %c0_82 = arith.constant 0 : index
    %c0_83 = arith.constant 0 : index
    %c0_84 = arith.constant 0 : index
    %82 = vector.load %arg4[%c0_82, %c0_83, %c0_84] : memref<1x320x128xf32, #tpu.memory_space<vmem>>, vector<1x320x128xf32>
    %83 = vector.shape_cast %82 : vector<1x320x128xf32> to vector<320x128xf32>
    %84 = vector.shape_cast %81 : vector<320x128xf32> to vector<1x320x128xf32>
    tpu.vector_store %arg4[%c0_82, %c0_83, %c0_84], %84 {strides = array<i32>} : memref<1x320x128xf32, #tpu.memory_space<vmem>>, vector<1x320x128xf32>,
    %c0_85 = arith.constant 0 : index
    %c0_86 = arith.constant 0 : index
    %c0_87 = arith.constant 0 : index
    %85 = vector.load %arg4[%c0_85, %c0_86, %c0_87] : memref<1x320x128xf32, #tpu.memory_space<vmem>>, vector<1x320x128xf32>
    %86 = vector.shape_cast %85 : vector<1x320x128xf32> to vector<320x128xf32>
    %c0_88 = arith.constant 0 : index
    %c176 = arith.constant 176 : index
    %c0_89 = arith.constant 0 : index
    %87 = vector.load %arg1[%c0_88, %c176, %c0_89] : memref<1x496x24xbf16, #tpu.memory_space<vmem>>, vector<1x320x24xbf16>
    %88 = vector.shape_cast %87 : vector<1x320x24xbf16> to vector<320x24xbf16>
    %c8_90 = arith.constant 8 : index
    %c0_91 = arith.constant 0 : index
    %c0_92 = arith.constant 0 : index
    %89 = vector.load %arg2[%c8_90, %c0_91, %c0_92] : memref<9x24x128xbf16, #tpu.memory_space<vmem>>, vector<1x24x128xbf16>
    %90 = vector.shape_cast %89 : vector<1x24x128xbf16> to vector<24x128xbf16>
    %cst_93 = arith.constant dense<0.000000e+00> : vector<320x128xf32>
    %91 = tpu.matmul %88, %90, %cst_93 {dimension_numbers = #tpu.dot_dimension_numbers<[1], [0], [0], [1], [0, 0, 1, 1], [], []>} : vector<320x24xbf16>, vector<24x128xbf16>, vector<320x128xf32> -> vector<320x128xf32>
    %92 = arith.addf %86, %91 : vector<320x128xf32>
    %c0_94 = arith.constant 0 : index
    %c0_95 = arith.constant 0 : index
    %c0_96 = arith.constant 0 : index
    %93 = vector.load %arg4[%c0_94, %c0_95, %c0_96] : memref<1x320x128xf32, #tpu.memory_space<vmem>>, vector<1x320x128xf32>
    %94 = vector.shape_cast %93 : vector<1x320x128xf32> to vector<320x128xf32>
    %95 = vector.shape_cast %92 : vector<320x128xf32> to vector<1x320x128xf32>
    tpu.vector_store %arg4[%c0_94, %c0_95, %c0_96], %95 {strides = array<i32>} : memref<1x320x128xf32, #tpu.memory_space<vmem>>, vector<1x320x128xf32>,
    %c0_97 = arith.constant 0 : index
    %c0_98 = arith.constant 0 : index
    %c0_99 = arith.constant 0 : index
    %96 = vector.load %arg4[%c0_97, %c0_98, %c0_99] : memref<1x320x128xf32, #tpu.memory_space<vmem>>, vector<1x320x128xf32>
    %97 = vector.shape_cast %96 : vector<1x320x128xf32> to vector<320x128xf32>
    %c0_100 = arith.constant 0 : index
    %c0_101 = arith.constant 0 : index
    %98 = vector.load %arg3[%c0_100, %c0_101] : memref<1x128xf32, #tpu.memory_space<vmem>>, vector<1x128xf32>
    %99 = vector.broadcast %98 : vector<1x128xf32> to vector<320x128xf32>
    %100 = arith.addf %97, %99 : vector<320x128xf32>
    %cst_102 = arith.constant 0.000000e+00 : f32
    %101 = vector.broadcast %cst_102 : f32 to vector<320x128xf32>
    %102 = arith.maximumf %100, %101 : vector<320x128xf32>
    %c0_103 = arith.constant 0 : index
    %c0_104 = arith.constant 0 : index
    %c0_105 = arith.constant 0 : index
    %103 = vector.load %arg4[%c0_103, %c0_104, %c0_105] : memref<1x320x128xf32, #tpu.memory_space<vmem>>, vector<1x320x128xf32>
    %104 = vector.shape_cast %103 : vector<1x320x128xf32> to vector<320x128xf32>
    %105 = vector.shape_cast %102 : vector<320x128xf32> to vector<1x320x128xf32>
    tpu.vector_store %arg4[%c0_103, %c0_104, %c0_105], %105 {strides = array<i32>} : memref<1x320x128xf32, #tpu.memory_space<vmem>>, vector<1x320x128xf32>,
    return
  }
  func.func @transform_0(%arg0: i32) -> (i32, i32, i32) {
    %c0_i32 = arith.constant 0 : i32
    %c0_i32_0 = arith.constant 0 : i32
    %c0_i32_1 = arith.constant 0 : i32
    return %arg0, %c0_i32, %c0_i32_0 : i32, i32, i32
  }
  func.func @transform_1(%arg0: i32) -> (i32, i32, i32) {
    %c0_i32 = arith.constant 0 : i32
    %c0_i32_0 = arith.constant 0 : i32
    %c0_i32_1 = arith.constant 0 : i32
    %c0_i32_2 = arith.constant 0 : i32
    return %c0_i32, %c0_i32_0, %c0_i32_1 : i32, i32, i32
  }
  func.func @transform_2(%arg0: i32) -> (i32, i32) {
    %c0_i32 = arith.constant 0 : i32
    %c0_i32_0 = arith.constant 0 : i32
    %c0_i32_1 = arith.constant 0 : i32
    return %c0_i32, %c0_i32_0 : i32, i32
  }
  func.func @transform_3(%arg0: i32) -> (i32, i32, i32) {
    %c0_i32 = arith.constant 0 : i32
    %c0_i32_0 = arith.constant 0 : i32
    %c0_i32_1 = arith.constant 0 : i32
    return %arg0, %c0_i32, %c0_i32_0 : i32, i32, i32
  }
}

module attributes {stable_mosaic.version = 11 : i64} {
  func.func @_maxpool_b3_kernel(%arg0: i32, %arg1: memref<1x606x8xbf16, #tpu.memory_space<vmem>>, %arg2: memref<8x128xbf16, #tpu.memory_space<vmem>>, %arg3: memref<1x128xf32, #tpu.memory_space<vmem>>, %arg4: memref<1x384x128xf32, #tpu.memory_space<vmem>>) attributes {dimension_semantics = [#tpu.dimension_semantics<parallel>], iteration_bounds = array<i64: 2>, scalar_prefetch = 0 : i64, scratch_operands = 0 : i64, tpu.core_type = #tpu.core_type<tc>, window_params = [{transform_indices = @transform_0, window_bounds = array<i64: 1, 606, 8>}, {pipeline_mode = #tpu.pipeline_mode<synchronous>, transform_indices = @transform_1, window_bounds = array<i64: 8, 128>}, {pipeline_mode = #tpu.pipeline_mode<synchronous>, transform_indices = @transform_2, window_bounds = array<i64: 1, 128>}, {transform_indices = @transform_3, window_bounds = array<i64: 1, 384, 128>}]} {
    %c0 = arith.constant 0 : index
    %c0_0 = arith.constant 0 : index
    %c0_1 = arith.constant 0 : index
    %0 = vector.load %arg1[%c0, %c0_0, %c0_1] : memref<1x606x8xbf16, #tpu.memory_space<vmem>>, vector<1x606x8xbf16>
    %1 = vector.shape_cast %0 : vector<1x606x8xbf16> to vector<606x8xbf16>
    %2 = vector.extract_strided_slice %1 {offsets = [0, 0], sizes = [604, 8], strides = [1, 1]} : vector<606x8xbf16> to vector<604x8xbf16>
    %3 = vector.extract_strided_slice %1 {offsets = [1, 0], sizes = [604, 8], strides = [1, 1]} : vector<606x8xbf16> to vector<604x8xbf16>
    %4 = arith.maximumf %2, %3 : vector<604x8xbf16>
    %5 = vector.extract_strided_slice %1 {offsets = [2, 0], sizes = [604, 8], strides = [1, 1]} : vector<606x8xbf16> to vector<604x8xbf16>
    %6 = arith.maximumf %4, %5 : vector<604x8xbf16>
    %7 = vector.extract_strided_slice %6 {offsets = [0, 0], sizes = [584, 8], strides = [1, 1]} : vector<604x8xbf16> to vector<584x8xbf16>
    %8 = vector.extract_strided_slice %6 {offsets = [10, 0], sizes = [584, 8], strides = [1, 1]} : vector<604x8xbf16> to vector<584x8xbf16>
    %9 = arith.maximumf %7, %8 : vector<584x8xbf16>
    %10 = vector.extract_strided_slice %6 {offsets = [20, 0], sizes = [584, 8], strides = [1, 1]} : vector<604x8xbf16> to vector<584x8xbf16>
    %11 = arith.maximumf %9, %10 : vector<584x8xbf16>
    %12 = vector.extract_strided_slice %11 {offsets = [0, 0], sizes = [384, 8], strides = [1, 1]} : vector<584x8xbf16> to vector<384x8xbf16>
    %13 = vector.extract_strided_slice %11 {offsets = [100, 0], sizes = [384, 8], strides = [1, 1]} : vector<584x8xbf16> to vector<384x8xbf16>
    %14 = arith.maximumf %12, %13 : vector<384x8xbf16>
    %15 = vector.extract_strided_slice %11 {offsets = [200, 0], sizes = [384, 8], strides = [1, 1]} : vector<584x8xbf16> to vector<384x8xbf16>
    %16 = arith.maximumf %14, %15 : vector<384x8xbf16>
    %c0_2 = arith.constant 0 : index
    %c0_3 = arith.constant 0 : index
    %17 = vector.load %arg2[%c0_2, %c0_3] : memref<8x128xbf16, #tpu.memory_space<vmem>>, vector<8x128xbf16>
    %cst = arith.constant dense<0.000000e+00> : vector<384x128xf32>
    %18 = tpu.matmul %16, %17, %cst {dimension_numbers = #tpu.dot_dimension_numbers<[1], [0], [0], [1], [0, 0, 1, 1], [], []>} : vector<384x8xbf16>, vector<8x128xbf16>, vector<384x128xf32> -> vector<384x128xf32>
    %c0_4 = arith.constant 0 : index
    %c0_5 = arith.constant 0 : index
    %19 = vector.load %arg3[%c0_4, %c0_5] : memref<1x128xf32, #tpu.memory_space<vmem>>, vector<1x128xf32>
    %20 = vector.broadcast %19 : vector<1x128xf32> to vector<384x128xf32>
    %21 = arith.addf %18, %20 : vector<384x128xf32>
    %cst_6 = arith.constant 0.000000e+00 : f32
    %22 = vector.broadcast %cst_6 : f32 to vector<384x128xf32>
    %23 = arith.maximumf %21, %22 : vector<384x128xf32>
    %c0_7 = arith.constant 0 : index
    %c0_8 = arith.constant 0 : index
    %c0_9 = arith.constant 0 : index
    %24 = vector.load %arg4[%c0_7, %c0_8, %c0_9] : memref<1x384x128xf32, #tpu.memory_space<vmem>>, vector<1x384x128xf32>
    %25 = vector.shape_cast %24 : vector<1x384x128xf32> to vector<384x128xf32>
    %26 = vector.shape_cast %23 : vector<384x128xf32> to vector<1x384x128xf32>
    tpu.vector_store %arg4[%c0_7, %c0_8, %c0_9], %26 {strides = array<i32>} : memref<1x384x128xf32, #tpu.memory_space<vmem>>, vector<1x384x128xf32>,
    return
  }
  func.func @transform_0(%arg0: i32) -> (i32, i32, i32) {
    %c0_i32 = arith.constant 0 : i32
    %c0_i32_0 = arith.constant 0 : i32
    %c0_i32_1 = arith.constant 0 : i32
    return %arg0, %c0_i32, %c0_i32_0 : i32, i32, i32
  }
  func.func @transform_1(%arg0: i32) -> (i32, i32) {
    %c0_i32 = arith.constant 0 : i32
    %c0_i32_0 = arith.constant 0 : i32
    %c0_i32_1 = arith.constant 0 : i32
    return %c0_i32, %c0_i32_0 : i32, i32
  }
  func.func @transform_2(%arg0: i32) -> (i32, i32) {
    %c0_i32 = arith.constant 0 : i32
    %c0_i32_0 = arith.constant 0 : i32
    %c0_i32_1 = arith.constant 0 : i32
    return %c0_i32, %c0_i32_0 : i32, i32
  }
  func.func @transform_3(%arg0: i32) -> (i32, i32, i32) {
    %c0_i32 = arith.constant 0 : i32
    %c0_i32_0 = arith.constant 0 : i32
    %c0_i32_1 = arith.constant 0 : i32
    return %arg0, %c0_i32, %c0_i32_0 : i32, i32, i32
  }
}

</mosaic_0001>

<llo_original>
// kernel: mixed_forward.4
$region0: #{mixed_forward.4}
  #allocation0 [shape = 'u32[]', space=smem, size = 0x4, offset = 0x4, fixed_abs, tag = 'smem constant byte address 0x4 - core index']
  #allocation1 [shape = 'u32[144,128]{1,0:T(1,128)}', space=vmem, size = 0x12000, scoped, tag = 'internal scratch']
  %s0 = inlined_call_operand.vmem [shape: bf16[512,8], index: 0, kind: input, shape index: {}]
  %s1 = inlined_call_operand.vmem [shape: bf16[8,128], index: 1, kind: input, shape index: {}]
  %s2 = inlined_call_operand.vmem [shape: f32[1,128], index: 2, kind: input, shape index: {}]
  %s3 = inlined_call_operand.vmem [shape: bf16[512,128], index: 3, kind: output, shape index: {}]
  %s4 = sld [smem:[#allocation0]]
  $region22: #{mixed_forward.4} parent=0
    _
  %s6 = ssub.s32 1, %s4
  %s7 = scalar_select 0, %s6, %s4
  // Predicated region
  $region2: #{mixed_forward.4} parent=0 // pred_check
    _
  $region3: #{mixed_forward.4} parent=0 // pred_check_branch
    %9 = sbr.rel (0) target = $region5
  $region4: #{mixed_forward.4} parent=0 // pred_region
    _
  $region5: #{mixed_forward.4} parent=0 // pred_fallthru
    _
  // Predicated region
  $region6: #{mixed_forward.4} parent=0 // pred_check
    _
  $region7: #{mixed_forward.4} parent=0 // pred_check_branch
    %11 = sbr.rel (0) target = $region9
  $region8: #{mixed_forward.4} parent=0 // pred_region
    _
  $region9: #{mixed_forward.4} parent=0 // pred_fallthru
    _
  // Predicated region
  $region10: #{mixed_forward.4} parent=0 // pred_check
    _
  $region11: #{mixed_forward.4} parent=0 // pred_check_branch
    %13 = sbr.rel (0) target = $region13
  $region12: #{mixed_forward.4} parent=0 // pred_region
    _
  $region13: #{mixed_forward.4} parent=0 // pred_fallthru
    _
  %v15 = vld [vmem:[%s0] sm:$0xf]
  %v16 = vld [vmem:[%s0 + $0x4] sm:$0xf]
  %v17 = vld [vmem:[%s0 + $0x8] sm:$0xf]
  %v18 = vld [vmem:[%s0 + $0xc] sm:$0xf]
  %v19 = vld [vmem:[%s0 + $0x10] sm:$0xf]
  %v20 = vld [vmem:[%s0 + $0x14] sm:$0xf]
  %v21 = vld [vmem:[%s0 + $0x18] sm:$0xf]
  %v22 = vld [vmem:[%s0 + $0x1c] sm:$0xf]
  %v23 = vld [vmem:[%s0 + $0x20] sm:$0xf]
  %v24 = vld [vmem:[%s0 + $0x24] sm:$0xf]
  %v25 = vld [vmem:[%s0 + $0x28] sm:$0xf]
  %v26 = vld [vmem:[%s0 + $0x2c] sm:$0xf]
  %v27 = vld [vmem:[%s0 + $0x30] sm:$0xf]
  %v28 = vld [vmem:[%s0 + $0x34] sm:$0xf]
  %v29 = vld [vmem:[%s0 + $0x38] sm:$0xf]
  %v30 = vld [vmem:[%s0 + $0x3c] sm:$0xf]
  %v31 = vld [vmem:[%s0 + $0x40] sm:$0xf]
  %v32 = vld [vmem:[%s0 + $0x44] sm:$0xf]
  %v33 = vld [vmem:[%s0 + $0x48] sm:$0xf]
  %v34 = vld [vmem:[%s0 + $0x4c] sm:$0xf]
  %v35 = vld [vmem:[%s0 + $0x50] sm:$0xf]
  %v36 = vld [vmem:[%s0 + $0x54] sm:$0xf]
  %v37 = vld [vmem:[%s0 + $0x58] sm:$0xf]
  %v38 = vld [vmem:[%s0 + $0x5c] sm:$0xf]
  %v39 = vld [vmem:[%s0 + $0x60] sm:$0xf]
  %v40 = vld [vmem:[%s0 + $0x64] sm:$0xf]
  %v41 = vld [vmem:[%s0 + $0x68] sm:$0xf]
  %v42 = vld [vmem:[%s0 + $0x6c] sm:$0xf]
  %v43 = vld [vmem:[%s0 + $0x70] sm:$0xf]
  %v44 = vld [vmem:[%s0 + $0x74] sm:$0xf]
  %v45 = vld [vmem:[%s0 + $0x78] sm:$0xf]
  %v46 = vld [vmem:[%s0 + $0x7c] sm:$0xf]
  %v47 = vld [vmem:[%s0 + $0x80] sm:$0xf]
  %v48 = vld [vmem:[%s0 + $0x84] sm:$0xf]
  %v49 = vld [vmem:[%s0 + $0x88] sm:$0xf]
  %v50 = vld [vmem:[%s0 + $0x8c] sm:$0xf]
  %v51 = vld [vmem:[%s0 + $0x90] sm:$0xf]
  %v52 = vld [vmem:[%s0 + $0x94] sm:$0xf]
  %v53 = vld [vmem:[%s0 + $0x98] sm:$0xf]
  %v54 = vld [vmem:[%s0 + $0x9c] sm:$0xf]
  %v55 = vld [vmem:[%s0 + $0xa0] sm:$0xf]
  %v56 = vld [vmem:[%s0 + $0xa4] sm:$0xf]
  %v57 = vld [vmem:[%s0 + $0xa8] sm:$0xf]
  %v58 = vld [vmem:[%s0 + $0xac] sm:$0xf]
  %v59 = vld [vmem:[%s0 + $0xb0] sm:$0xf]
  %v60 = vld [vmem:[%s0 + $0xb4] sm:$0xf]
  %v61 = vld [vmem:[%s0 + $0xb8] sm:$0xf]
  %v62 = vld [vmem:[%s0 + $0xbc] sm:$0xf]
  %v63 = vld [vmem:[%s0 + $0xc0] sm:$0xf]
  %v64 = vld [vmem:[%s0 + $0xc4] sm:$0xf]
  %v65 = vld [vmem:[%s0 + $0xc8] sm:$0xf]
  %v66 = vld [vmem:[%s0 + $0xcc] sm:$0xf]
  %v67 = vld [vmem:[%s0 + $0xd0] sm:$0xf]
  %v68 = vld [vmem:[%s0 + $0xd4] sm:$0xf]
  %v69 = vld [vmem:[%s0 + $0xd8] sm:$0xf]
  %v70 = vld [vmem:[%s0 + $0xdc] sm:$0xf]
  %v71 = vld [vmem:[%s0 + $0xe0] sm:$0xf]
  %v72 = vld [vmem:[%s0 + $0xe4] sm:$0xf]
  %v73 = vld [vmem:[%s0 + $0xe8] sm:$0xf]
  %v74 = vld [vmem:[%s0 + $0xec] sm:$0xf]
  %v75 = vld [vmem:[%s0 + $0xf0] sm:$0xf]
  %v76 = vld [vmem:[%s0 + $0xf4] sm:$0xf]
  %v77 = vld [vmem:[%s0 + $0xf8] sm:$0xf]
  %v78 = vld [vmem:[%s0 + $0xfc] sm:$0xf]
  %v79 = vld [vmem:[%s1] sm:$0xf]
  %v80 = vld [vmem:[%s2] sm:$0x1]
  %v82 = vlaneseq
  %v83 = vshrl.u32 %v82, 7
  %v84 = vsub.s32 0, %v83
  %v85 = vrot.slane %v80, %v84
  %v151 = vunpack.c.l.b16 %v15
  %v152 = vunpack.c.l.b16 %v16
  %v153 = vunpack.c.l.b16 %v17
  %v154 = vunpack.c.l.b16 %v18
  %v155 = vunpack.c.l.b16 %v19
  %v156 = vunpack.c.l.b16 %v20
  %v157 = vunpack.c.l.b16 %v21
  %v158 = vunpack.c.l.b16 %v22
  %v159 = vunpack.c.l.b16 %v23
  %v160 = vunpack.c.l.b16 %v24
  %v161 = vunpack.c.l.b16 %v25
  %v162 = vunpack.c.l.b16 %v26
  %v163 = vunpack.c.l.b16 %v27
  %v164 = vunpack.c.l.b16 %v28
  %v165 = vunpack.c.l.b16 %v29
  %v166 = vunpack.c.l.b16 %v30
  %v167 = vunpack.c.l.b16 %v31
  %v168 = vunpack.c.l.b16 %v32
  %v169 = vunpack.c.l.b16 %v33
  %v170 = vunpack.c.l.b16 %v34
  %v171 = vunpack.c.l.b16 %v35
  %v172 = vunpack.c.l.b16 %v36
  %v173 = vunpack.c.l.b16 %v37
  %v174 = vunpack.c.l.b16 %v38
  %v175 = vunpack.c.l.b16 %v39
  %v176 = vunpack.c.l.b16 %v40
  %v177 = vunpack.c.l.b16 %v41
  %v178 = vunpack.c.l.b16 %v42
  %v179 = vunpack.c.l.b16 %v43
  %v180 = vunpack.c.l.b16 %v44
  %v181 = vunpack.c.l.b16 %v45
  %v182 = vunpack.c.l.b16 %v46
  %v183 = vunpack.c.l.b16 %v47
  %v184 = vunpack.c.l.b16 %v48
  %v185 = vunpack.c.l.b16 %v49
  %v186 = vunpack.c.l.b16 %v50
  %v187 = vunpack.c.l.b16 %v51
  %v188 = vunpack.c.l.b16 %v52
  %v189 = vunpack.c.l.b16 %v53
  %v190 = vunpack.c.l.b16 %v54
  %v191 = vunpack.c.l.b16 %v55
  %v192 = vunpack.c.l.b16 %v56
  %v193 = vunpack.c.l.b16 %v57
  %v194 = vunpack.c.l.b16 %v58
  %v195 = vunpack.c.l.b16 %v59
  %v196 = vunpack.c.l.b16 %v60
  %v197 = vunpack.c.l.b16 %v61
  %v198 = vunpack.c.l.b16 %v62
  %v199 = vunpack.c.l.b16 %v63
  %v200 = vunpack.c.l.b16 %v64
  %v201 = vunpack.c.l.b16 %v65
  %v202 = vunpack.c.l.b16 %v66
  %v203 = vunpack.c.l.b16 %v67
  %v204 = vunpack.c.l.b16 %v68
  %v205 = vunpack.c.l.b16 %v69
  %v206 = vunpack.c.l.b16 %v70
  %v207 = vunpack.c.l.b16 %v71
  %v208 = vunpack.c.l.b16 %v72
  %v209 = vunpack.c.l.b16 %v73
  %v210 = vunpack.c.l.b16 %v74
  %v211 = vunpack.c.l.b16 %v75
  %v212 = vunpack.c.l.b16 %v76
  %v213 = vunpack.c.l.b16 %v77
  %v214 = vunpack.c.l.b16 %v78
  %v215 = vpack.c.b16 %v152, %v151
  %v216 = vpack.c.b16 %v154, %v153
  %v217 = vpack.c.b16 %v156, %v155
  %v218 = vpack.c.b16 %v158, %v157
  %v219 = vpack.c.b16 %v160, %v159
  %v220 = vpack.c.b16 %v162, %v161
  %v221 = vpack.c.b16 %v164, %v163
  %v222 = vpack.c.b16 %v166, %v165
  %v223 = vpack.c.b16 %v168, %v167
  %v224 = vpack.c.b16 %v170, %v169
  %v225 = vpack.c.b16 %v172, %v171
  %v226 = vpack.c.b16 %v174, %v173
  %v227 = vpack.c.b16 %v176, %v175
  %v228 = vpack.c.b16 %v178, %v177
  %v229 = vpack.c.b16 %v180, %v179
  %v230 = vpack.c.b16 %v182, %v181
  %v231 = vpack.c.b16 %v184, %v183
  %v232 = vpack.c.b16 %v186, %v185
  %v233 = vpack.c.b16 %v188, %v187
  %v234 = vpack.c.b16 %v190, %v189
  %v235 = vpack.c.b16 %v192, %v191
  %v236 = vpack.c.b16 %v194, %v193
  %v237 = vpack.c.b16 %v196, %v195
  %v238 = vpack.c.b16 %v198, %v197
  %v239 = vpack.c.b16 %v200, %v199
  %v240 = vpack.c.b16 %v202, %v201
  %v241 = vpack.c.b16 %v204, %v203
  %v242 = vpack.c.b16 %v206, %v205
  %v243 = vpack.c.b16 %v208, %v207
  %v244 = vpack.c.b16 %v210, %v209
  %v245 = vpack.c.b16 %v212, %v211
  %v246 = vpack.c.b16 %v214, %v213
  %vm247 = vcmask 64512
  %v249 = vsel %vm247, %v215, 0
  %v252 = vsel %vm247, %v216, 0
  %v255 = vsel %vm247, %v217, 0
  %v258 = vsel %vm247, %v218, 0
  %v261 = vsel %vm247, %v219, 0
  %v264 = vsel %vm247, %v220, 0
  %v267 = vsel %vm247, %v221, 0
  %v270 = vsel %vm247, %v222, 0
  %v273 = vsel %vm247, %v223, 0
  %v276 = vsel %vm247, %v224, 0
  %v279 = vsel %vm247, %v225, 0
  %v282 = vsel %vm247, %v226, 0
  %v285 = vsel %vm247, %v227, 0
  %v288 = vsel %vm247, %v228, 0
  %v291 = vsel %vm247, %v229, 0
  %v294 = vsel %vm247, %v230, 0
  %v297 = vsel %vm247, %v231, 0
  %v300 = vsel %vm247, %v232, 0
  %v303 = vsel %vm247, %v233, 0
  %v306 = vsel %vm247, %v234, 0
  %v309 = vsel %vm247, %v235, 0
  %v312 = vsel %vm247, %v236, 0
  %v315 = vsel %vm247, %v237, 0
  %v318 = vsel %vm247, %v238, 0
  %v321 = vsel %vm247, %v239, 0
  %v324 = vsel %vm247, %v240, 0
  %v327 = vsel %vm247, %v241, 0
  %v330 = vsel %vm247, %v242, 0
  %v333 = vsel %vm247, %v243, 0
  %v336 = vsel %vm247, %v244, 0
  %v339 = vsel %vm247, %v245, 0
  %v342 = vsel %vm247, %v246, 0
  %vm344 = vcmask 1043456
  %v346 = vsel %vm344, %v79, 0
  %348 = vmatprep.subr.bf16.mxu0 0
  %349 = vmatpush1.bf16.msra.mxu0 %v346
  %350 = vmatprep.subr.bf16.mxu0 0
  %351 = vmatpush1.bf16.msra.mxu0 0
  %352 = vmatprep.subr.bf16.mxu0 0
  %353 = vmatpush1.bf16.msra.mxu0 0
  %354 = vmatprep.subr.bf16.mxu0 0
  %355 = vmatpush1.bf16.msra.mxu0 0
  %356 = vmatprep.subr.bf16.mxu0 0
  %357 = vmatpush1.bf16.msra.mxu0 0
  %358 = vmatprep.subr.bf16.mxu0 0
  %359 = vmatpush1.bf16.msra.mxu0 0
  %360 = vmatprep.subr.bf16.mxu0 0
  %361 = vmatpush1.bf16.msra.mxu0 0
  %362 = vmatprep.subr.bf16.mxu0 0
  %363 = vmatpush1.bf16.msra.mxu0 0
  %364 = vmatprep.subr.bf16.mxu0 0
  %365 = vmatpush1.bf16.msra.mxu0 0
  %366 = vmatprep.subr.bf16.mxu0 0
  %367 = vmatpush1.bf16.msra.mxu0 0
  %368 = vmatprep.subr.bf16.mxu0 0
  %369 = vmatpush1.bf16.msra.mxu0 0
  %370 = vmatprep.subr.bf16.mxu0 0
  %371 = vmatpush1.bf16.msra.mxu0 0
  %372 = vmatprep.subr.bf16.mxu0 0
  %373 = vmatpush1.bf16.msra.mxu0 0
  %374 = vmatprep.subr.bf16.mxu0 0
  %375 = vmatpush1.bf16.msra.mxu0 0
  %376 = vmatprep.subr.bf16.mxu0 0
  %377 = vmatpush1.bf16.msra.mxu0 0
  %378 = vmatprep.subr.bf16.mxu0 0
  %379 = vmatpush1.bf16.msra.mxu0 0
  %380 = vmatprep.mubr.bf16.mxu0 0
  %381 = vmatmul.mubr.bf16.gmra.mrb[0].mxu0 %v249
  %v382 = vpop.f32.mrb[0].mxu0
  %v383 = vadd.f32 %v85, %v382
  %v384 = vpop.f32.mrb[0].mxu0
  %v385 = vpop.f32.mrb[0].mxu0
  %v386 = vadd.f32 %v85, %v385
  %v387 = vpop.f32.mrb[0].mxu0
  %388 = vmatprep.mubr.bf16.mxu0 0
  %389 = vmatmul.mubr.bf16.gmra.mrb[0].mxu0 %v252
  %v390 = vpop.f32.mrb[0].mxu0
  %v391 = vadd.f32 %v85, %v390
  %v392 = vpop.f32.mrb[0].mxu0
  %v393 = vpop.f32.mrb[0].mxu0
  %v394 = vadd.f32 %v85, %v393
  %v395 = vpop.f32.mrb[0].mxu0
  %396 = vmatprep.mubr.bf16.mxu0 0
  %397 = vmatmul.mubr.bf16.gmra.mrb[0].mxu0 %v255
  %v398 = vpop.f32.mrb[0].mxu0
  %v399 = vadd.f32 %v85, %v398
  %v400 = vpop.f32.mrb[0].mxu0
  %v401 = vpop.f32.mrb[0].mxu0
  %v402 = vadd.f32 %v85, %v401
  %v403 = vpop.f32.mrb[0].mxu0
  %404 = vmatprep.mubr.bf16.mxu0 0
  %405 = vmatmul.mubr.bf16.gmra.mrb[0].mxu0 %v258
  %v406 = vpop.f32.mrb[0].mxu0
  %v407 = vadd.f32 %v85, %v406
  %v408 = vpop.f32.mrb[0].mxu0
  %v409 = vpop.f32.mrb[0].mxu0
  %v410 = vadd.f32 %v85, %v409
  %v411 = vpop.f32.mrb[0].mxu0
  %412 = vmatprep.mubr.bf16.mxu0 0
  %413 = vmatmul.mubr.bf16.gmra.mrb[0].mxu0 %v261
  %v414 = vpop.f32.mrb[0].mxu0
  %v415 = vadd.f32 %v85, %v414
  %v416 = vpop.f32.mrb[0].mxu0
  %v417 = vpop.f32.mrb[0].mxu0
  %v418 = vadd.f32 %v85, %v417
  %v419 = vpop.f32.mrb[0].mxu0
  %420 = vmatprep.mubr.bf16.mxu0 0
  %421 = vmatmul.mubr.bf16.gmra.mrb[0].mxu0 %v264
  %v422 = vpop.f32.mrb[0].mxu0
  %v423 = vadd.f32 %v85, %v422
  %v424 = vpop.f32.mrb[0].mxu0
  %v425 = vpop.f32.mrb[0].mxu0
  %v426 = vadd.f32 %v85, %v425
  %v427 = vpop.f32.mrb[0].mxu0
  %428 = vmatprep.mubr.bf16.mxu0 0
  %429 = vmatmul.mubr.bf16.gmra.mrb[0].mxu0 %v267
  %v430 = vpop.f32.mrb[0].mxu0
  %v431 = vadd.f32 %v85, %v430
  %v432 = vpop.f32.mrb[0].mxu0
  %v433 = vpop.f32.mrb[0].mxu0
  %v434 = vadd.f32 %v85, %v433
  %v435 = vpop.f32.mrb[0].mxu0
  %436 = vmatprep.mubr.bf16.mxu0 0
  %437 = vmatmul.mubr.bf16.gmra.mrb[0].mxu0 %v270
  %v438 = vpop.f32.mrb[0].mxu0
  %v439 = vadd.f32 %v85, %v438
  %v440 = vpop.f32.mrb[0].mxu0
  %v441 = vpop.f32.mrb[0].mxu0
  %v442 = vadd.f32 %v85, %v441
  %v443 = vpop.f32.mrb[0].mxu0
  %444 = vmatprep.mubr.bf16.mxu0 0
  %445 = vmatmul.mubr.bf16.gmra.mrb[0].mxu0 %v273
  %v446 = vpop.f32.mrb[0].mxu0
  %v447 = vadd.f32 %v85, %v446
  %v448 = vpop.f32.mrb[0].mxu0
  %v449 = vpop.f32.mrb[0].mxu0
  %v450 = vadd.f32 %v85, %v449
  %v451 = vpop.f32.mrb[0].mxu0
  %452 = vmatprep.mubr.bf16.mxu0 0
  %453 = vmatmul.mubr.bf16.gmra.mrb[0].mxu0 %v276
  %v454 = vpop.f32.mrb[0].mxu0
  %v455 = vadd.f32 %v85, %v454
  %v456 = vpop.f32.mrb[0].mxu0
  %v457 = vpop.f32.mrb[0].mxu0
  %v458 = vadd.f32 %v85, %v457
  %v459 = vpop.f32.mrb[0].mxu0
  %460 = vmatprep.mubr.bf16.mxu0 0
  %461 = vmatmul.mubr.bf16.gmra.mrb[0].mxu0 %v279
  %v462 = vpop.f32.mrb[0].mxu0
  %v463 = vadd.f32 %v85, %v462
  %v464 = vpop.f32.mrb[0].mxu0
  %v465 = vpop.f32.mrb[0].mxu0
  %v466 = vadd.f32 %v85, %v465
  %v467 = vpop.f32.mrb[0].mxu0
  %468 = vmatprep.mubr.bf16.mxu0 0
  %469 = vmatmul.mubr.bf16.gmra.mrb[0].mxu0 %v282
  %v470 = vpop.f32.mrb[0].mxu0
  %v471 = vadd.f32 %v85, %v470
  %v472 = vpop.f32.mrb[0].mxu0
  %v473 = vpop.f32.mrb[0].mxu0
  %v474 = vadd.f32 %v85, %v473
  %v475 = vpop.f32.mrb[0].mxu0
  %476 = vmatprep.mubr.bf16.mxu0 0
  %477 = vmatmul.mubr.bf16.gmra.mrb[0].mxu0 %v285
  %v478 = vpop.f32.mrb[0].mxu0
  %v479 = vadd.f32 %v85, %v478
  %v480 = vpop.f32.mrb[0].mxu0
  %v481 = vpop.f32.mrb[0].mxu0
  %v482 = vadd.f32 %v85, %v481
  %v483 = vpop.f32.mrb[0].mxu0
  %484 = vmatprep.mubr.bf16.mxu0 0
  %485 = vmatmul.mubr.bf16.gmra.mrb[0].mxu0 %v288
  %v486 = vpop.f32.mrb[0].mxu0
  %v487 = vadd.f32 %v85, %v486
  %v488 = vpop.f32.mrb[0].mxu0
  %v489 = vpop.f32.mrb[0].mxu0
  %v490 = vadd.f32 %v85, %v489
  %v491 = vpop.f32.mrb[0].mxu0
  %492 = vmatprep.mubr.bf16.mxu0 0
  %493 = vmatmul.mubr.bf16.gmra.mrb[0].mxu0 %v291
  %v494 = vpop.f32.mrb[0].mxu0
  %v495 = vadd.f32 %v85, %v494
  %v496 = vpop.f32.mrb[0].mxu0
  %v497 = vpop.f32.mrb[0].mxu0
  %v498 = vadd.f32 %v85, %v497
  %v499 = vpop.f32.mrb[0].mxu0
  %500 = vmatprep.mubr.bf16.mxu0 0
  %501 = vmatmul.mubr.bf16.gmra.mrb[0].mxu0 %v294
  %v502 = vpop.f32.mrb[0].mxu0
  %v503 = vadd.f32 %v85, %v502
  %v504 = vpop.f32.mrb[0].mxu0
  %v505 = vpop.f32.mrb[0].mxu0
  %v506 = vadd.f32 %v85, %v505
  %v507 = vpop.f32.mrb[0].mxu0
  %508 = vmatprep.mubr.bf16.mxu0 0
  %509 = vmatmul.mubr.bf16.gmra.mrb[0].mxu0 %v297
  %v510 = vpop.f32.mrb[0].mxu0
  %v511 = vadd.f32 %v85, %v510
  %v512 = vpop.f32.mrb[0].mxu0
  %v513 = vpop.f32.mrb[0].mxu0
  %v514 = vadd.f32 %v85, %v513
  %v515 = vpop.f32.mrb[0].mxu0
  %516 = vmatprep.mubr.bf16.mxu0 0
  %517 = vmatmul.mubr.bf16.gmra.mrb[0].mxu0 %v300
  %v518 = vpop.f32.mrb[0].mxu0
  %v519 = vadd.f32 %v85, %v518
  %v520 = vpop.f32.mrb[0].mxu0
  %v521 = vpop.f32.mrb[0].mxu0
  %v522 = vadd.f32 %v85, %v521
  %v523 = vpop.f32.mrb[0].mxu0
  %524 = vmatprep.mubr.bf16.mxu0 0
  %525 = vmatmul.mubr.bf16.gmra.mrb[0].mxu0 %v303
  %v526 = vpop.f32.mrb[0].mxu0
  %v527 = vadd.f32 %v85, %v526
  %v528 = vpop.f32.mrb[0].mxu0
  %v529 = vpop.f32.mrb[0].mxu0
  %v530 = vadd.f32 %v85, %v529
  %v531 = vpop.f32.mrb[0].mxu0
  %532 = vmatprep.mubr.bf16.mxu0 0
  %533 = vmatmul.mubr.bf16.gmra.mrb[0].mxu0 %v306
  %v534 = vpop.f32.mrb[0].mxu0
  %v535 = vadd.f32 %v85, %v534
  %v536 = vpop.f32.mrb[0].mxu0
  %v537 = vpop.f32.mrb[0].mxu0
  %v538 = vadd.f32 %v85, %v537
  %v539 = vpop.f32.mrb[0].mxu0
  %540 = vmatprep.mubr.bf16.mxu0 0
  %541 = vmatmul.mubr.bf16.gmra.mrb[0].mxu0 %v309
  %v542 = vpop.f32.mrb[0].mxu0
  %v543 = vadd.f32 %v85, %v542
  %v544 = vpop.f32.mrb[0].mxu0
  %v545 = vpop.f32.mrb[0].mxu0
  %v546 = vadd.f32 %v85, %v545
  %v547 = vpop.f32.mrb[0].mxu0
  %548 = vmatprep.mubr.bf16.mxu0 0
  %549 = vmatmul.mubr.bf16.gmra.mrb[0].mxu0 %v312
  %v550 = vpop.f32.mrb[0].mxu0
  %v551 = vadd.f32 %v85, %v550
  %v552 = vpop.f32.mrb[0].mxu0
  %v553 = vpop.f32.mrb[0].mxu0
  %v554 = vadd.f32 %v85, %v553
  %v555 = vpop.f32.mrb[0].mxu0
  %556 = vmatprep.mubr.bf16.mxu0 0
  %557 = vmatmul.mubr.bf16.gmra.mrb[0].mxu0 %v315
  %v558 = vpop.f32.mrb[0].mxu0
  %v559 = vadd.f32 %v85, %v558
  %v560 = vpop.f32.mrb[0].mxu0
  %v561 = vpop.f32.mrb[0].mxu0
  %v562 = vadd.f32 %v85, %v561
  %v563 = vpop.f32.mrb[0].mxu0
  %564 = vmatprep.mubr.bf16.mxu0 0
  %565 = vmatmul.mubr.bf16.gmra.mrb[0].mxu0 %v318
  %v566 = vpop.f32.mrb[0].mxu0
  %v567 = vadd.f32 %v85, %v566
  %v568 = vpop.f32.mrb[0].mxu0
  %v569 = vpop.f32.mrb[0].mxu0
  %v570 = vadd.f32 %v85, %v569
  %v571 = vpop.f32.mrb[0].mxu0
  %572 = vmatprep.mubr.bf16.mxu0 0
  %573 = vmatmul.mubr.bf16.gmra.mrb[0].mxu0 %v321
  %v574 = vpop.f32.mrb[0].mxu0
  %v575 = vadd.f32 %v85, %v574
  %v576 = vpop.f32.mrb[0].mxu0
  %v577 = vpop.f32.mrb[0].mxu0
  %v578 = vadd.f32 %v85, %v577
  %v579 = vpop.f32.mrb[0].mxu0
  %580 = vmatprep.mubr.bf16.mxu0 0
  %581 = vmatmul.mubr.bf16.gmra.mrb[0].mxu0 %v324
  %v582 = vpop.f32.mrb[0].mxu0
  %v583 = vadd.f32 %v85, %v582
  %v584 = vpop.f32.mrb[0].mxu0
  %v585 = vpop.f32.mrb[0].mxu0
  %v586 = vadd.f32 %v85, %v585
  %v587 = vpop.f32.mrb[0].mxu0
  %588 = vmatprep.mubr.bf16.mxu0 0
  %589 = vmatmul.mubr.bf16.gmra.mrb[0].mxu0 %v327
  %v590 = vpop.f32.mrb[0].mxu0
  %v591 = vadd.f32 %v85, %v590
  %v592 = vpop.f32.mrb[0].mxu0
  %v593 = vpop.f32.mrb[0].mxu0
  %v594 = vadd.f32 %v85, %v593
  %v595 = vpop.f32.mrb[0].mxu0
  %596 = vmatprep.mubr.bf16.mxu0 0
  %597 = vmatmul.mubr.bf16.gmra.mrb[0].mxu0 %v330
  %v598 = vpop.f32.mrb[0].mxu0
  %v599 = vadd.f32 %v85, %v598
  %v600 = vpop.f32.mrb[0].mxu0
  %v601 = vpop.f32.mrb[0].mxu0
  %v602 = vadd.f32 %v85, %v601
  %v603 = vpop.f32.mrb[0].mxu0
  %604 = vmatprep.mubr.bf16.mxu0 0
  %605 = vmatmul.mubr.bf16.gmra.mrb[0].mxu0 %v333
  %v606 = vpop.f32.mrb[0].mxu0
  %v607 = vadd.f32 %v85, %v606
  %v608 = vpop.f32.mrb[0].mxu0
  %v609 = vpop.f32.mrb[0].mxu0
  %v610 = vadd.f32 %v85, %v609
  %v611 = vpop.f32.mrb[0].mxu0
  %612 = vmatprep.mubr.bf16.mxu0 0
  %613 = vmatmul.mubr.bf16.gmra.mrb[0].mxu0 %v336
  %v614 = vpop.f32.mrb[0].mxu0
  %v615 = vadd.f32 %v85, %v614
  %v616 = vpop.f32.mrb[0].mxu0
  %v617 = vpop.f32.mrb[0].mxu0
  %v618 = vadd.f32 %v85, %v617
  %v619 = vpop.f32.mrb[0].mxu0
  %620 = vmatprep.mubr.bf16.mxu0 0
  %621 = vmatmul.mubr.bf16.gmra.mrb[0].mxu0 %v339
  %v622 = vpop.f32.mrb[0].mxu0
  %v623 = vadd.f32 %v85, %v622
  %v624 = vpop.f32.mrb[0].mxu0
  %v625 = vpop.f32.mrb[0].mxu0
  %v626 = vadd.f32 %v85, %v625
  %v627 = vpop.f32.mrb[0].mxu0
  %628 = vmatprep.mubr.bf16.mxu0 0
  %629 = vmatmul.mubr.bf16.gmra.mrb[0].mxu0 %v342
  %v630 = vpop.f32.mrb[0].mxu0
  %v631 = vadd.f32 %v85, %v630
  %v632 = vpop.f32.mrb[0].mxu0
  %v633 = vpop.f32.mrb[0].mxu0
  %v634 = vadd.f32 %v85, %v633
  %v635 = vpop.f32.mrb[0].mxu0
  %636 = vdwg.mxu0
  %v637 = vmax.f32 %v383, 0.0
  %v638 = vmax.f32 %v386, 0.0
  %v639 = vmax.f32 %v391, 0.0
  %v640 = vmax.f32 %v394, 0.0
  %v641 = vmax.f32 %v399, 0.0
  %v642 = vmax.f32 %v402, 0.0
  %v643 = vmax.f32 %v407, 0.0
  %v644 = vmax.f32 %v410, 0.0
  %v645 = vmax.f32 %v415, 0.0
  %v646 = vmax.f32 %v418, 0.0
  %v647 = vmax.f32 %v423, 0.0
  %v648 = vmax.f32 %v426, 0.0
  %v649 = vmax.f32 %v431, 0.0
  %v650 = vmax.f32 %v434, 0.0
  %v651 = vmax.f32 %v439, 0.0
  %v652 = vmax.f32 %v442, 0.0
  %v653 = vmax.f32 %v447, 0.0
  %v654 = vmax.f32 %v450, 0.0
  %v655 = vmax.f32 %v455, 0.0
  %v656 = vmax.f32 %v458, 0.0
  %v657 = vmax.f32 %v463, 0.0
  %v658 = vmax.f32 %v466, 0.0
  %v659 = vmax.f32 %v471, 0.0
  %v660 = vmax.f32 %v474, 0.0
  %v661 = vmax.f32 %v479, 0.0
  %v662 = vmax.f32 %v482, 0.0
  %v663 = vmax.f32 %v487, 0.0
  %v664 = vmax.f32 %v490, 0.0
  %v665 = vmax.f32 %v495, 0.0
  %v666 = vmax.f32 %v498, 0.0
  %v667 = vmax.f32 %v503, 0.0
  %v668 = vmax.f32 %v506, 0.0
  %v669 = vmax.f32 %v511, 0.0
  %v670 = vmax.f32 %v514, 0.0
  %v671 = vmax.f32 %v519, 0.0
  %v672 = vmax.f32 %v522, 0.0
  %v673 = vmax.f32 %v527, 0.0
  %v674 = vmax.f32 %v530, 0.0
  %v675 = vmax.f32 %v535, 0.0
  %v676 = vmax.f32 %v538, 0.0
  %v677 = vmax.f32 %v543, 0.0
  %v678 = vmax.f32 %v546, 0.0
  %v679 = vmax.f32 %v551, 0.0
  %v680 = vmax.f32 %v554, 0.0
  %v681 = vmax.f32 %v559, 0.0
  %v682 = vmax.f32 %v562, 0.0
  %v683 = vmax.f32 %v567, 0.0
  %v684 = vmax.f32 %v570, 0.0
  %v685 = vmax.f32 %v575, 0.0
  %v686 = vmax.f32 %v578, 0.0
  %v687 = vmax.f32 %v583, 0.0
  %v688 = vmax.f32 %v586, 0.0
  %v689 = vmax.f32 %v591, 0.0
  %v690 = vmax.f32 %v594, 0.0
  %v691 = vmax.f32 %v599, 0.0
  %v692 = vmax.f32 %v602, 0.0
  %v693 = vmax.f32 %v607, 0.0
  %v694 = vmax.f32 %v610, 0.0
  %v695 = vmax.f32 %v615, 0.0
  %v696 = vmax.f32 %v618, 0.0
  %v697 = vmax.f32 %v623, 0.0
  %v698 = vmax.f32 %v626, 0.0
  %v699 = vmax.f32 %v631, 0.0
  %v700 = vmax.f32 %v634, 0.0
  %v701 = vpack.c.bf16 %v638, %v637
  %v702 = vpack.c.bf16 %v640, %v639
  %v703 = vpack.c.bf16 %v642, %v641
  %v704 = vpack.c.bf16 %v644, %v643
  %v705 = vpack.c.bf16 %v646, %v645
  %v706 = vpack.c.bf16 %v648, %v647
  %v707 = vpack.c.bf16 %v650, %v649
  %v708 = vpack.c.bf16 %v652, %v651
  %v709 = vpack.c.bf16 %v654, %v653
  %v710 = vpack.c.bf16 %v656, %v655
  %v711 = vpack.c.bf16 %v658, %v657
  %v712 = vpack.c.bf16 %v660, %v659
  %v713 = vpack.c.bf16 %v662, %v661
  %v714 = vpack.c.bf16 %v664, %v663
  %v715 = vpack.c.bf16 %v666, %v665
  %v716 = vpack.c.bf16 %v668, %v667
  %v717 = vpack.c.bf16 %v670, %v669
  %v718 = vpack.c.bf16 %v672, %v671
  %v719 = vpack.c.bf16 %v674, %v673
  %v720 = vpack.c.bf16 %v676, %v675
  %v721 = vpack.c.bf16 %v678, %v677
  %v722 = vpack.c.bf16 %v680, %v679
  %v723 = vpack.c.bf16 %v682, %v681
  %v724 = vpack.c.bf16 %v684, %v683
  %v725 = vpack.c.bf16 %v686, %v685
  %v726 = vpack.c.bf16 %v688, %v687
  %v727 = vpack.c.bf16 %v690, %v689
  %v728 = vpack.c.bf16 %v692, %v691
  %v729 = vpack.c.bf16 %v694, %v693
  %v730 = vpack.c.bf16 %v696, %v695
  %v731 = vpack.c.bf16 %v698, %v697
  %v732 = vpack.c.bf16 %v700, %v699
  %v765 = vunpack.c.l.b16 %v701
  %v766 = vunpack.c.h.b16 %v701
  %v767 = vunpack.c.l.b16 %v702
  %v768 = vunpack.c.h.b16 %v702
  %v769 = vunpack.c.l.b16 %v703
  %v770 = vunpack.c.h.b16 %v703
  %v771 = vunpack.c.l.b16 %v704
  %v772 = vunpack.c.h.b16 %v704
  %v773 = vunpack.c.l.b16 %v705
  %v774 = vunpack.c.h.b16 %v705
  %v775 = vunpack.c.l.b16 %v706
  %v776 = vunpack.c.h.b16 %v706
  %v777 = vunpack.c.l.b16 %v707
  %v778 = vunpack.c.h.b16 %v707
  %v779 = vunpack.c.l.b16 %v708
  %v780 = vunpack.c.h.b16 %v708
  %v781 = vunpack.c.l.b16 %v709
  %v782 = vunpack.c.h.b16 %v709
  %v783 = vunpack.c.l.b16 %v710
  %v784 = vunpack.c.h.b16 %v710
  %v785 = vunpack.c.l.b16 %v711
  %v786 = vunpack.c.h.b16 %v711
  %v787 = vunpack.c.l.b16 %v712
  %v788 = vunpack.c.h.b16 %v712
  %v789 = vunpack.c.l.b16 %v713
  %v790 = vunpack.c.h.b16 %v713
  %v791 = vunpack.c.l.b16 %v714
  %v792 = vunpack.c.h.b16 %v714
  %v793 = vunpack.c.l.b16 %v715
  %v794 = vunpack.c.h.b16 %v715
  %v795 = vunpack.c.l.b16 %v716
  %v796 = vunpack.c.h.b16 %v716
  %v797 = vunpack.c.l.b16 %v717
  %v798 = vunpack.c.h.b16 %v717
  %v799 = vunpack.c.l.b16 %v718
  %v800 = vunpack.c.h.b16 %v718
  %v801 = vunpack.c.l.b16 %v719
  %v802 = vunpack.c.h.b16 %v719
  %v803 = vunpack.c.l.b16 %v720
  %v804 = vunpack.c.h.b16 %v720
  %v805 = vunpack.c.l.b16 %v721
  %v806 = vunpack.c.h.b16 %v721
  %v807 = vunpack.c.l.b16 %v722
  %v808 = vunpack.c.h.b16 %v722
  %v809 = vunpack.c.l.b16 %v723
  %v810 = vunpack.c.h.b16 %v723
  %v811 = vunpack.c.l.b16 %v724
  %v812 = vunpack.c.h.b16 %v724
  %v813 = vunpack.c.l.b16 %v725
  %v814 = vunpack.c.h.b16 %v725
  %v815 = vunpack.c.l.b16 %v726
  %v816 = vunpack.c.h.b16 %v726
  %v817 = vunpack.c.l.b16 %v727
  %v818 = vunpack.c.h.b16 %v727
  %v819 = vunpack.c.l.b16 %v728
  %v820 = vunpack.c.h.b16 %v728
  %v821 = vunpack.c.l.b16 %v729
  %v822 = vunpack.c.h.b16 %v729
  %v823 = vunpack.c.l.b16 %v730
  %v824 = vunpack.c.h.b16 %v730
  %v825 = vunpack.c.l.b16 %v731
  %v826 = vunpack.c.h.b16 %v731
  %v827 = vunpack.c.l.b16 %v732
  %v828 = vunpack.c.h.b16 %v732
  %v829 = vpack.c.b16 %v765, %v765
  %v830 = vpack.c.b16 %v766, %v766
  %v831 = vpack.c.b16 %v767, %v767
  %v832 = vpack.c.b16 %v768, %v768
  %v833 = vpack.c.b16 %v769, %v769
  %v834 = vpack.c.b16 %v770, %v770
  %v835 = vpack.c.b16 %v771, %v771
  %v836 = vpack.c.b16 %v772, %v772
  %v837 = vpack.c.b16 %v773, %v773
  %v838 = vpack.c.b16 %v774, %v774
  %v839 = vpack.c.b16 %v775, %v775
  %v840 = vpack.c.b16 %v776, %v776
  %v841 = vpack.c.b16 %v777, %v777
  %v842 = vpack.c.b16 %v778, %v778
  %v843 = vpack.c.b16 %v779, %v779
  %v844 = vpack.c.b16 %v780, %v780
  %v845 = vpack.c.b16 %v781, %v781
  %v846 = vpack.c.b16 %v782, %v782
  %v847 = vpack.c.b16 %v783, %v783
  %v848 = vpack.c.b16 %v784, %v784
  %v849 = vpack.c.b16 %v785, %v785
  %v850 = vpack.c.b16 %v786, %v786
  %v851 = vpack.c.b16 %v787, %v787
  %v852 = vpack.c.b16 %v788, %v788
  %v853 = vpack.c.b16 %v789, %v789
  %v854 = vpack.c.b16 %v790, %v790
  %v855 = vpack.c.b16 %v791, %v791
  %v856 = vpack.c.b16 %v792, %v792
  %v857 = vpack.c.b16 %v793, %v793
  %v858 = vpack.c.b16 %v794, %v794
  %v859 = vpack.c.b16 %v795, %v795
  %v860 = vpack.c.b16 %v796, %v796
  %v861 = vpack.c.b16 %v797, %v797
  %v862 = vpack.c.b16 %v798, %v798
  %v863 = vpack.c.b16 %v799, %v799
  %v864 = vpack.c.b16 %v800, %v800
  %v865 = vpack.c.b16 %v801, %v801
  %v866 = vpack.c.b16 %v802, %v802
  %v867 = vpack.c.b16 %v803, %v803
  %v868 = vpack.c.b16 %v804, %v804
  %v869 = vpack.c.b16 %v805, %v805
  %v870 = vpack.c.b16 %v806, %v806
  %v871 = vpack.c.b16 %v807, %v807
  %v872 = vpack.c.b16 %v808, %v808
  %v873 = vpack.c.b16 %v809, %v809
  %v874 = vpack.c.b16 %v810, %v810
  %v875 = vpack.c.b16 %v811, %v811
  %v876 = vpack.c.b16 %v812, %v812
  %v877 = vpack.c.b16 %v813, %v813
  %v878 = vpack.c.b16 %v814, %v814
  %v879 = vpack.c.b16 %v815, %v815
  %v880 = vpack.c.b16 %v816, %v816
  %v881 = vpack.c.b16 %v817, %v817
  %v882 = vpack.c.b16 %v818, %v818
  %v883 = vpack.c.b16 %v819, %v819
  %v884 = vpack.c.b16 %v820, %v820
  %v885 = vpack.c.b16 %v821, %v821
  %v886 = vpack.c.b16 %v822, %v822
  %v887 = vpack.c.b16 %v823, %v823
  %v888 = vpack.c.b16 %v824, %v824
  %v889 = vpack.c.b16 %v825, %v825
  %v890 = vpack.c.b16 %v826, %v826
  %v891 = vpack.c.b16 %v827, %v827
  %v892 = vpack.c.b16 %v828, %v828
  %957 = vst [vmem:[%s3] sm:$0xf] %v829
  %958 = vst [vmem:[%s3 + $0x4] sm:$0xf] %v830
  %959 = vst [vmem:[%s3 + $0x8] sm:$0xf] %v831
  %960 = vst [vmem:[%s3 + $0xc] sm:$0xf] %v832
  %961 = vst [vmem:[%s3 + $0x10] sm:$0xf] %v833
  %962 = vst [vmem:[%s3 + $0x14] sm:$0xf] %v834
  %963 = vst [vmem:[%s3 + $0x18] sm:$0xf] %v835
  %964 = vst [vmem:[%s3 + $0x1c] sm:$0xf] %v836
  %965 = vst [vmem:[%s3 + $0x20] sm:$0xf] %v837
  %966 = vst [vmem:[%s3 + $0x24] sm:$0xf] %v838
  %967 = vst [vmem:[%s3 + $0x28] sm:$0xf] %v839
  %968 = vst [vmem:[%s3 + $0x2c] sm:$0xf] %v840
  %969 = vst [vmem:[%s3 + $0x30] sm:$0xf] %v841
  %970 = vst [vmem:[%s3 + $0x34] sm:$0xf] %v842
  %971 = vst [vmem:[%s3 + $0x38] sm:$0xf] %v843
  %972 = vst [vmem:[%s3 + $0x3c] sm:$0xf] %v844
  %973 = vst [vmem:[%s3 + $0x40] sm:$0xf] %v845
  %974 = vst [vmem:[%s3 + $0x44] sm:$0xf] %v846
  %975 = vst [vmem:[%s3 + $0x48] sm:$0xf] %v847
  %976 = vst [vmem:[%s3 + $0x4c] sm:$0xf] %v848
  %977 = vst [vmem:[%s3 + $0x50] sm:$0xf] %v849
  %978 = vst [vmem:[%s3 + $0x54] sm:$0xf] %v850
  %979 = vst [vmem:[%s3 + $0x58] sm:$0xf] %v851
  %980 = vst [vmem:[%s3 + $0x5c] sm:$0xf] %v852
  %981 = vst [vmem:[%s3 + $0x60] sm:$0xf] %v853
  %982 = vst [vmem:[%s3 + $0x64] sm:$0xf] %v854
  %983 = vst [vmem:[%s3 + $0x68] sm:$0xf] %v855
  %984 = vst [vmem:[%s3 + $0x6c] sm:$0xf] %v856
  %985 = vst [vmem:[%s3 + $0x70] sm:$0xf] %v857
  %986 = vst [vmem:[%s3 + $0x74] sm:$0xf] %v858
  %987 = vst [vmem:[%s3 + $0x78] sm:$0xf] %v859
  %988 = vst [vmem:[%s3 + $0x7c] sm:$0xf] %v860
  %989 = vst [vmem:[%s3 + $0x80] sm:$0xf] %v861
  %990 = vst [vmem:[%s3 + $0x84] sm:$0xf] %v862
  %991 = vst [vmem:[%s3 + $0x88] sm:$0xf] %v863
  %992 = vst [vmem:[%s3 + $0x8c] sm:$0xf] %v864
  %993 = vst [vmem:[%s3 + $0x90] sm:$0xf] %v865
  %994 = vst [vmem:[%s3 + $0x94] sm:$0xf] %v866
  %995 = vst [vmem:[%s3 + $0x98] sm:$0xf] %v867
  %996 = vst [vmem:[%s3 + $0x9c] sm:$0xf] %v868
  %997 = vst [vmem:[%s3 + $0xa0] sm:$0xf] %v869
  %998 = vst [vmem:[%s3 + $0xa4] sm:$0xf] %v870
  %999 = vst [vmem:[%s3 + $0xa8] sm:$0xf] %v871
  %1000 = vst [vmem:[%s3 + $0xac] sm:$0xf] %v872
  %1001 = vst [vmem:[%s3 + $0xb0] sm:$0xf] %v873
  %1002 = vst [vmem:[%s3 + $0xb4] sm:$0xf] %v874
  %1003 = vst [vmem:[%s3 + $0xb8] sm:$0xf] %v875
  %1004 = vst [vmem:[%s3 + $0xbc] sm:$0xf] %v876
  %1005 = vst [vmem:[%s3 + $0xc0] sm:$0xf] %v877
  %1006 = vst [vmem:[%s3 + $0xc4] sm:$0xf] %v878
  %1007 = vst [vmem:[%s3 + $0xc8] sm:$0xf] %v879
  %1008 = vst [vmem:[%s3 + $0xcc] sm:$0xf] %v880
  %1009 = vst [vmem:[%s3 + $0xd0] sm:$0xf] %v881
  %1010 = vst [vmem:[%s3 + $0xd4] sm:$0xf] %v882
  %1011 = vst [vmem:[%s3 + $0xd8] sm:$0xf] %v883
  %1012 = vst [vmem:[%s3 + $0xdc] sm:$0xf] %v884
  %1013 = vst [vmem:[%s3 + $0xe0] sm:$0xf] %v885
  %1014 = vst [vmem:[%s3 + $0xe4] sm:$0xf] %v886
  %1015 = vst [vmem:[%s3 + $0xe8] sm:$0xf] %v887
  %1016 = vst [vmem:[%s3 + $0xec] sm:$0xf] %v888
  %1017 = vst [vmem:[%s3 + $0xf0] sm:$0xf] %v889
  %1018 = vst [vmem:[%s3 + $0xf4] sm:$0xf] %v890
  %1019 = vst [vmem:[%s3 + $0xf8] sm:$0xf] %v891
  %1020 = vst [vmem:[%s3 + $0xfc] sm:$0xf] %v892
  // Predicated region
  $region14: #{mixed_forward.4} parent=0 // pred_check
    _
  $region15: #{mixed_forward.4} parent=0 // pred_check_branch
    %1022 = sbr.rel (0) target = $region17
  $region16: #{mixed_forward.4} parent=0 // pred_region
    _
  $region17: #{mixed_forward.4} parent=0 // pred_fallthru
    _
  // Predicated region
  $region18: #{mixed_forward.4} parent=0 // pred_check
    _
  $region19: #{mixed_forward.4} parent=0 // pred_check_branch
    %1024 = sbr.rel (0) target = $region21
  $region20: #{mixed_forward.4} parent=0 // pred_region
    _
  $region21: #{mixed_forward.4} parent=0 // pred_fallthru
    _

// kernel: mixed_forward.5
$region0: #{mixed_forward.5}
  #allocation0 [shape = 'u32[]', space=smem, size = 0x4, offset = 0x4, fixed_abs, tag = 'smem constant byte address 0x4 - core index']
  #allocation1 [shape = 'u32[144,128]{1,0:T(1,128)}', space=vmem, size = 0x12000, scoped, tag = 'internal scratch']
  %s0 = inlined_call_operand.vmem [shape: bf16[2,496,24], index: 0, kind: input, shape index: {}]
  %s1 = inlined_call_operand.vmem [shape: bf16[9,24,128], index: 1, kind: input, shape index: {}]
  %s2 = inlined_call_operand.vmem [shape: f32[1,128], index: 2, kind: input, shape index: {}]
  %s3 = inlined_call_operand.vmem [shape: f32[2,320,128], index: 3, kind: output, shape index: {}]
  %s4 = sld [smem:[#allocation0]]
  $region45: #{mixed_forward.5} parent=0
    _
  %s6 = ssub.s32 1, %s4
  %s7 = scalar_select 0, %s6, %s4
  loop: start=0, step=1, limit=4
  $region2: #{mixed_forward.5} parent=0 // loop_pre_header
    _
  $region3: #{mixed_forward.5} parent=0 // loop_header
    %s9 = sphi 0, %s13
    %p10 = scmp.ge.s32.totalorder %s9, 4
    %s19 = sphi 0, %s21
    %s22 = sphi 0, %s19
    %s23 = sphi 0, %s22
    %s39 = sphi 0, %s23
    %s43 = sphi 0, %s43
    %s45 = sphi 0, %s43
    %s46 = sphi 0, %s45
    %s60 = sphi 0, %s46
    %s64 = sphi 0, %s64
    %s66 = sphi 0, %s64
    %s67 = sphi 0, %s66
    %s81 = sphi 0, %s67
    %s87 = sphi 0, %s89
    %s90 = sphi 0, %s87
    %s91 = sphi 0, %s90
    %s107 = sphi 0, %s91
  $region4: #{mixed_forward.5} parent=0 // loop_header_branch
    %12 = sbr.rel (%p10) target = $region8
  $region5: #{mixed_forward.5} parent=0 // loop_body
    %s14 = ssub.s32 %s9, 1
    %s15 = ssub.s32 %s9, 2
    %s16 = sadd.s32 %s9, 1
    %s17 = ssub.s32 %s9, %s16
    %p18 = scmp.eq.s32.totalorder %s17, 0
    %s20 = sadd.s32 %s19, 1
    %s21 = scalar_select %p18, %s19, %s20
    %p24 = pneg %p18
    %p25 = scmp.eq.s32.totalorder %s9, 1
    %p26 = por %p24, %p25
    %p27 = scmp.ne.s32.totalorder %s19, %s22
    %p28 = scmp.eq.s32.totalorder %s9, 0
    %p29 = por %p27, %p28
    %p30 = scmp.ne.s32.totalorder %s19, %s22
    %p31 = scmp.eq.s32.totalorder %s14, 1
    %p32 = por %p30, %p31
    %p33 = scmp.ne.s32.totalorder %s22, %s23
    %p34 = scmp.eq.s32.totalorder %s14, 0
    %p35 = por %p33, %p34
    %p36 = scmp.ne.s32.totalorder %s22, %s23
    %p37 = scmp.eq.s32.totalorder %s15, 1
    %p38 = por %p36, %p37
    %p40 = scmp.ne.s32.totalorder %s23, %s39
    %p41 = scmp.eq.s32.totalorder %s15, 0
    %p42 = por %p40, %p41
    %s44 = sadd.s32 %s43, 1
    %p47 = scmp.eq.s32.totalorder %s9, 1
    %p48 = scmp.ne.s32.totalorder %s43, %s45
    %p49 = scmp.eq.s32.totalorder %s9, 0
    %p50 = por %p48, %p49
    %p51 = scmp.ne.s32.totalorder %s43, %s45
    %p52 = scmp.eq.s32.totalorder %s14, 1
    %p53 = por %p51, %p52
    %p54 = scmp.ne.s32.totalorder %s45, %s46
    %p55 = scmp.eq.s32.totalorder %s14, 0
    %p56 = por %p54, %p55
    %p57 = scmp.ne.s32.totalorder %s45, %s46
    %p58 = scmp.eq.s32.totalorder %s15, 1
    %p59 = por %p57, %p58
    %p61 = scmp.ne.s32.totalorder %s46, %s60
    %p62 = scmp.eq.s32.totalorder %s15, 0
    %p63 = por %p61, %p62
    %s65 = sadd.s32 %s64, 1
    %p68 = scmp.eq.s32.totalorder %s9, 1
    %p69 = scmp.ne.s32.totalorder %s64, %s66
    %p70 = scmp.eq.s32.totalorder %s9, 0
    %p71 = por %p69, %p70
    %p72 = scmp.ne.s32.totalorder %s64, %s66
    %p73 = scmp.eq.s32.totalorder %s14, 1
    %p74 = por %p72, %p73
    %p75 = scmp.ne.s32.totalorder %s66, %s67
    %p76 = scmp.eq.s32.totalorder %s14, 0
    %p77 = por %p75, %p76
    %p78 = scmp.ne.s32.totalorder %s66, %s67
    %p79 = scmp.eq.s32.totalorder %s15, 1
    %p80 = por %p78, %p79
    %p82 = scmp.ne.s32.totalorder %s67, %s81
    %p83 = scmp.eq.s32.totalorder %s15, 0
    %p84 = por %p82, %p83
    %s85 = ssub.s32 %s9, %s16
    %p86 = scmp.eq.s32.totalorder %s85, 0
    %s88 = sadd.s32 %s87, 1
    %s89 = scalar_select %p86, %s87, %s88
    %p92 = pneg %p86
    %p93 = scmp.eq.s32.totalorder %s9, 1
    %p94 = por %p92, %p93
    %p95 = scmp.ne.s32.totalorder %s87, %s90
    %p96 = scmp.eq.s32.totalorder %s9, 0
    %p97 = por %p95, %p96
    %p98 = scmp.ne.s32.totalorder %s87, %s90
    %p99 = scmp.eq.s32.totalorder %s14, 1
    %p100 = por %p98, %p99
    %p101 = scmp.ne.s32.totalorder %s90, %s91
    %p102 = scmp.eq.s32.totalorder %s14, 0
    %p103 = por %p101, %p102
    %p104 = scmp.ne.s32.totalorder %s90, %s91
    %p105 = scmp.eq.s32.totalorder %s15, 1
    %p106 = por %p104, %p105
    %p108 = scmp.ne.s32.totalorder %s91, %s107
    %p109 = scmp.eq.s32.totalorder %s15, 0
    %p110 = por %p108, %p109
    %p111 = scmp.le.s32.totalorder 1, %s9
    %p112 = scmp.lt.s32.totalorder %s9, 3
    %p113 = pnand %p111, %p112
    %p114 = pneg %p113
    // Predicated region
    $region9: #{mixed_forward.5} parent=5 // pred_check
      _
    $region10: #{mixed_forward.5} parent=5 // pred_check_branch
      %116 = sbr.rel (%p113) target = $region12
    $region11: #{mixed_forward.5} parent=5 // pred_region
      %s117 = ssub.s32 %s9, 1
      // Predicated region
      $region13: #{mixed_forward.5} parent=11 // pred_check
        %p118 = pneg %p56
      $region14: #{mixed_forward.5} parent=11 // pred_check_branch
        %120 = sbr.rel (%p118) target = $region16
      $region15: #{mixed_forward.5} parent=11 // pred_region
        _
      $region16: #{mixed_forward.5} parent=11 // pred_fallthru
        _
      // Predicated region
      $region17: #{mixed_forward.5} parent=11 // pred_check
        %p121 = pneg %p77
      $region18: #{mixed_forward.5} parent=11 // pred_check_branch
        %123 = sbr.rel (%p121) target = $region20
      $region19: #{mixed_forward.5} parent=11 // pred_region
        _
      $region20: #{mixed_forward.5} parent=11 // pred_fallthru
        _
    $region12: #{mixed_forward.5} parent=5 // pred_fallthru
      _
    %p124 = scmp.lt.s32.totalorder %s9, 2
    // Predicated region
    $region21: #{mixed_forward.5} parent=5 // pred_check
      %p125 = pneg %p124
    $region22: #{mixed_forward.5} parent=5 // pred_check_branch
      %127 = sbr.rel (%p125) target = $region24
    $region23: #{mixed_forward.5} parent=5 // pred_region
      // Predicated region
      $region25: #{mixed_forward.5} parent=23 // pred_check
        %p128 = pneg %p29
      $region26: #{mixed_forward.5} parent=23 // pred_check_branch
        %130 = sbr.rel (%p128) target = $region28
      $region27: #{mixed_forward.5} parent=23 // pred_region
        %p131 = scmp.lt.s32.totalorder %s9, 1
        %s132 = scalar_select %p131, %s9, 1
        %s133 = smul.addr %s132, 62
        %s134 = smul.addr %s133, 4
        %s135 = scalar_lea.vmem %s0, %s134
      $region28: #{mixed_forward.5} parent=23 // pred_fallthru
        _
    $region24: #{mixed_forward.5} parent=5 // pred_fallthru
      _
    %p136 = scmp.le.s32.totalorder 1, %s9
    %p137 = scmp.lt.s32.totalorder %s9, 3
    %p138 = pnand %p136, %p137
    %p139 = pneg %p138
    // Predicated region
    $region29: #{mixed_forward.5} parent=5 // pred_check
      _
    $region30: #{mixed_forward.5} parent=5 // pred_check_branch
      %141 = sbr.rel (%p138) target = $region32
    $region31: #{mixed_forward.5} parent=5 // pred_region
      %s142 = ssub.s32 %s9, 1
      %p143 = scmp.lt.s32.totalorder %s14, 1
      %s144 = scalar_select %p143, %s14, 1
      %s145 = smul.addr %s144, 62
      %s146 = smul.addr %s145, 4
      %s147 = scalar_lea.vmem %s0, %s146
      %p148 = pneg %p35
      %p149 = pneg %p32
      %p150 = pneg %p56
      %p151 = pneg %p53
      %p152 = pneg %p77
      %p153 = pneg %p74
      %p154 = pneg %p103
      %p155 = pneg %p100
      %p156 = scmp.lt.s32.totalorder %s14, 1
      %s157 = scalar_select %p156, %s14, 1
      %s158 = smul.addr %s157, 40
      %s159 = smul.addr %s158, 8
      %s160 = scalar_lea.vmem %s3, %s159
      %p161 = scmp.lt.s32.totalorder %s14, 1
      %s162 = scalar_select %p161, %s14, 1
      %s163 = smul.addr %s162, 62
      %s164 = smul.addr %s163, 4
      %s165 = scalar_lea.vmem %s0, %s164
      %p166 = scmp.lt.s32.totalorder %s14, 1
      %s167 = scalar_select %p166, %s14, 1
      %s168 = smul.addr %s167, 40
      %s169 = smul.addr %s168, 8
      %s170 = scalar_lea.vmem %s3, %s169
      %v172 = vld [vmem:[%s165] sm:$0xf]
      %v173 = vld [vmem:[%s165 + $0x4] sm:$0xf]
      %v174 = vld [vmem:[%s165 + $0x8] sm:$0xf]
      %v175 = vld [vmem:[%s165 + $0xc] sm:$0xf]
      %v176 = vld [vmem:[%s165 + $0x10] sm:$0xf]
      %v177 = vld [vmem:[%s165 + $0x14] sm:$0xf]
      %v178 = vld [vmem:[%s165 + $0x18] sm:$0xf]
      %v179 = vld [vmem:[%s165 + $0x1c] sm:$0xf]
      %v180 = vld [vmem:[%s165 + $0x20] sm:$0xf]
      %v181 = vld [vmem:[%s165 + $0x24] sm:$0xf]
      %v182 = vld [vmem:[%s165 + $0x28] sm:$0xf]
      %v183 = vld [vmem:[%s165 + $0x2c] sm:$0xf]
      %v184 = vld [vmem:[%s165 + $0x30] sm:$0xf]
      %v185 = vld [vmem:[%s165 + $0x34] sm:$0xf]
      %v186 = vld [vmem:[%s165 + $0x38] sm:$0xf]
      %v187 = vld [vmem:[%s165 + $0x3c] sm:$0xf]
      %v188 = vld [vmem:[%s165 + $0x40] sm:$0xf]
      %v189 = vld [vmem:[%s165 + $0x44] sm:$0xf]
      %v190 = vld [vmem:[%s165 + $0x48] sm:$0xf]
      %v191 = vld [vmem:[%s165 + $0x4c] sm:$0xf]
      %v192 = vld [vmem:[%s165 + $0x50] sm:$0xf]
      %v193 = vld [vmem:[%s165 + $0x54] sm:$0xf]
      %v194 = vld [vmem:[%s165 + $0x58] sm:$0xf]
      %v195 = vld [vmem:[%s165 + $0x5c] sm:$0xf]
      %v196 = vld [vmem:[%s165 + $0x60] sm:$0xf]
      %v197 = vld [vmem:[%s165 + $0x64] sm:$0xf]
      %v198 = vld [vmem:[%s165 + $0x68] sm:$0xf]
      %v199 = vld [vmem:[%s165 + $0x6c] sm:$0xf]
      %v200 = vld [vmem:[%s165 + $0x70] sm:$0xf]
      %v201 = vld [vmem:[%s165 + $0x74] sm:$0xf]
      %v202 = vld [vmem:[%s165 + $0x78] sm:$0xf]
      %v203 = vld [vmem:[%s165 + $0x7c] sm:$0xf]
      %v204 = vld [vmem:[%s165 + $0x80] sm:$0xf]
      %v205 = vld [vmem:[%s165 + $0x84] sm:$0xf]
      %v206 = vld [vmem:[%s165 + $0x88] sm:$0xf]
      %v207 = vld [vmem:[%s165 + $0x8c] sm:$0xf]
      %v208 = vld [vmem:[%s165 + $0x90] sm:$0xf]
      %v209 = vld [vmem:[%s165 + $0x94] sm:$0xf]
      %v210 = vld [vmem:[%s165 + $0x98] sm:$0xf]
      %v211 = vld [vmem:[%s165 + $0x9c] sm:$0xf]
      %v212 = vld [vmem:[%s1] sm:$0xf]
      %v213 = vld [vmem:[%s1 + $0x4] sm:$0xf]
      %v214 = vld [vmem:[%s1 + $0x8] sm:$0xf]
      %v255 = vunpack.c.l.b16 %v172
      %v256 = vunpack.c.l.b16 %v173
      %v257 = vunpack.c.l.b16 %v174
      %v258 = vunpack.c.l.b16 %v175
      %v259 = vunpack.c.l.b16 %v176
      %v260 = vunpack.c.l.b16 %v177
      %v261 = vunpack.c.l.b16 %v178
      %v262 = vunpack.c.l.b16 %v179
      %v263 = vunpack.c.l.b16 %v180
      %v264 = vunpack.c.l.b16 %v181
      %v265 = vunpack.c.l.b16 %v182
      %v266 = vunpack.c.l.b16 %v183
      %v267 = vunpack.c.l.b16 %v184
      %v268 = vunpack.c.l.b16 %v185
      %v269 = vunpack.c.l.b16 %v186
      %v270 = vunpack.c.l.b16 %v187
      %v271 = vunpack.c.l.b16 %v188
      %v272 = vunpack.c.l.b16 %v189
      %v273 = vunpack.c.l.b16 %v190
      %v274 = vunpack.c.l.b16 %v191
      %v275 = vunpack.c.l.b16 %v192
      %v276 = vunpack.c.l.b16 %v193
      %v277 = vunpack.c.l.b16 %v194
      %v278 = vunpack.c.l.b16 %v195
      %v279 = vunpack.c.l.b16 %v196
      %v280 = vunpack.c.l.b16 %v197
      %v281 = vunpack.c.l.b16 %v198
      %v282 = vunpack.c.l.b16 %v199
      %v283 = vunpack.c.l.b16 %v200
      %v284 = vunpack.c.l.b16 %v201
      %v285 = vunpack.c.l.b16 %v202
      %v286 = vunpack.c.l.b16 %v203
      %v287 = vunpack.c.l.b16 %v204
      %v288 = vunpack.c.l.b16 %v205
      %v289 = vunpack.c.l.b16 %v206
      %v290 = vunpack.c.l.b16 %v207
      %v291 = vunpack.c.l.b16 %v208
      %v292 = vunpack.c.l.b16 %v209
      %v293 = vunpack.c.l.b16 %v210
      %v294 = vunpack.c.l.b16 %v211
      %v295 = vpack.c.b16 %v256, %v255
      %v296 = vpack.c.b16 %v258, %v257
      %v297 = vpack.c.b16 %v260, %v259
      %v298 = vpack.c.b16 %v262, %v261
      %v299 = vpack.c.b16 %v264, %v263
      %v300 = vpack.c.b16 %v266, %v265
      %v301 = vpack.c.b16 %v268, %v267
      %v302 = vpack.c.b16 %v270, %v269
      %v303 = vpack.c.b16 %v272, %v271
      %v304 = vpack.c.b16 %v274, %v273
      %v305 = vpack.c.b16 %v276, %v275
      %v306 = vpack.c.b16 %v278, %v277
      %v307 = vpack.c.b16 %v280, %v279
      %v308 = vpack.c.b16 %v282, %v281
      %v309 = vpack.c.b16 %v284, %v283
      %v310 = vpack.c.b16 %v286, %v285
      %v311 = vpack.c.b16 %v288, %v287
      %v312 = vpack.c.b16 %v290, %v289
      %v313 = vpack.c.b16 %v292, %v291
      %v314 = vpack.c.b16 %v294, %v293
      %v318 = vunpack.c.l.b16 %v212
      %v319 = vunpack.c.l.b16 %v213
      %v320 = vunpack.c.l.b16 %v214
      %v321 = vpack.c.b16 %v319, %v318
      %v322 = vpack.c.b16 %v320, %v320
      %vm324 = vcmask 195584
      %v326 = vsel %vm324, %v295, 0
      %v329 = vsel %vm324, %v296, 0
      %v332 = vsel %vm324, %v297, 0
      %v335 = vsel %vm324, %v298, 0
      %v338 = vsel %vm324, %v299, 0
      %v341 = vsel %vm324, %v300, 0
      %v344 = vsel %vm324, %v301, 0
      %v347 = vsel %vm324, %v302, 0
      %v350 = vsel %vm324, %v303, 0
      %v353 = vsel %vm324, %v304, 0
      %v356 = vsel %vm324, %v305, 0
      %v359 = vsel %vm324, %v306, 0
      %v362 = vsel %vm324, %v307, 0
      %v365 = vsel %vm324, %v308, 0
      %v368 = vsel %vm324, %v309, 0
      %v371 = vsel %vm324, %v310, 0
      %v374 = vsel %vm324, %v311, 0
      %v377 = vsel %vm324, %v312, 0
      %v380 = vsel %vm324, %v313, 0
      %v383 = vsel %vm324, %v314, 0
      %vm385 = vcmask 1043456
      %v387 = vsel %vm385, %v322, 0
      %389 = vmatprep.subr.bf16.mxu0 0
      %390 = vmatpush1.bf16.msra.mxu0 %v321
      %391 = vmatprep.subr.bf16.mxu0 0
      %392 = vmatpush1.bf16.msra.mxu0 %v387
      %393 = vmatprep.subr.bf16.mxu0 0
      %394 = vmatpush1.bf16.msra.mxu0 0
      %395 = vmatprep.subr.bf16.mxu0 0
      %396 = vmatpush1.bf16.msra.mxu0 0
      %397 = vmatprep.subr.bf16.mxu0 0
      %398 = vmatpush1.bf16.msra.mxu0 0
      %399 = vmatprep.subr.bf16.mxu0 0
      %400 = vmatpush1.bf16.msra.mxu0 0
      %401 = vmatprep.subr.bf16.mxu0 0
      %402 = vmatpush1.bf16.msra.mxu0 0
      %403 = vmatprep.subr.bf16.mxu0 0
      %404 = vmatpush1.bf16.msra.mxu0 0
      %405 = vmatprep.subr.bf16.mxu0 0
      %406 = vmatpush1.bf16.msra.mxu0 0
      %407 = vmatprep.subr.bf16.mxu0 0
      %408 = vmatpush1.bf16.msra.mxu0 0
      %409 = vmatprep.subr.bf16.mxu0 0
      %410 = vmatpush1.bf16.msra.mxu0 0
      %411 = vmatprep.subr.bf16.mxu0 0
      %412 = vmatpush1.bf16.msra.mxu0 0
      %413 = vmatprep.subr.bf16.mxu0 0
      %414 = vmatpush1.bf16.msra.mxu0 0
      %415 = vmatprep.subr.bf16.mxu0 0
      %416 = vmatpush1.bf16.msra.mxu0 0
      %417 = vmatprep.subr.bf16.mxu0 0
      %418 = vmatpush1.bf16.msra.mxu0 0
      %419 = vmatprep.subr.bf16.mxu0 0
      %420 = vmatpush1.bf16.msra.mxu0 0
      %421 = vmatprep.mubr.bf16.mxu0 0
      %422 = vmatmul.mubr.bf16.gmra.mrb[0].mxu0 %v326
      %v423 = vpop.f32.mrb[0].mxu0
      %v424 = vadd.f32 0.0, %v423
      %v425 = vpop.f32.mrb[0].mxu0
      %v426 = vpop.f32.mrb[0].mxu0
      %v427 = vadd.f32 0.0, %v426
      %v428 = vpop.f32.mrb[0].mxu0
      %429 = vmatprep.mubr.bf16.mxu0 0
      %430 = vmatmul.mubr.bf16.gmra.mrb[0].mxu0 %v329
      %v431 = vpop.f32.mrb[0].mxu0
      %v432 = vadd.f32 0.0, %v431
      %v433 = vpop.f32.mrb[0].mxu0
      %v434 = vpop.f32.mrb[0].mxu0
      %v435 = vadd.f32 0.0, %v434
      %v436 = vpop.f32.mrb[0].mxu0
      %437 = vmatprep.mubr.bf16.mxu0 0
      %438 = vmatmul.mubr.bf16.gmra.mrb[0].mxu0 %v332
      %v439 = vpop.f32.mrb[0].mxu0
      %v440 = vadd.f32 0.0, %v439
      %v441 = vpop.f32.mrb[0].mxu0
      %v442 = vpop.f32.mrb[0].mxu0
      %v443 = vadd.f32 0.0, %v442
      %v444 = vpop.f32.mrb[0].mxu0
      %445 = vmatprep.mubr.bf16.mxu0 0
      %446 = vmatmul.mubr.bf16.gmra.mrb[0].mxu0 %v335
      %v447 = vpop.f32.mrb[0].mxu0
      %v448 = vadd.f32 0.0, %v447
      %v449 = vpop.f32.mrb[0].mxu0
      %v450 = vpop.f32.mrb[0].mxu0
      %v451 = vadd.f32 0.0, %v450
      %v452 = vpop.f32.mrb[0].mxu0
      %453 = vmatprep.mubr.bf16.mxu0 0
      %454 = vmatmul.mubr.bf16.gmra.mrb[0].mxu0 %v338
      %v455 = vpop.f32.mrb[0].mxu0
      %v456 = vadd.f32 0.0, %v455
      %v457 = vpop.f32.mrb[0].mxu0
      %v458 = vpop.f32.mrb[0].mxu0
      %v459 = vadd.f32 0.0, %v458
      %v460 = vpop.f32.mrb[0].mxu0
      %461 = vmatprep.mubr.bf16.mxu0 0
      %462 = vmatmul.mubr.bf16.gmra.mrb[0].mxu0 %v341
      %v463 = vpop.f32.mrb[0].mxu0
      %v464 = vadd.f32 0.0, %v463
      %v465 = vpop.f32.mrb[0].mxu0
      %v466 = vpop.f32.mrb[0].mxu0
      %v467 = vadd.f32 0.0, %v466
      %v468 = vpop.f32.mrb[0].mxu0
      %469 = vmatprep.mubr.bf16.mxu0 0
      %470 = vmatmul.mubr.bf16.gmra.mrb[0].mxu0 %v344
      %v471 = vpop.f32.mrb[0].mxu0
      %v472 = vadd.f32 0.0, %v471
      %v473 = vpop.f32.mrb[0].mxu0
      %v474 = vpop.f32.mrb[0].mxu0
      %v475 = vadd.f32 0.0, %v474
      %v476 = vpop.f32.mrb[0].mxu0
      %477 = vmatprep.mubr.bf16.mxu0 0
      %478 = vmatmul.mubr.bf16.gmra.mrb[0].mxu0 %v347
      %v479 = vpop.f32.mrb[0].mxu0
      %v480 = vadd.f32 0.0, %v479
      %v481 = vpop.f32.mrb[0].mxu0
      %v482 = vpop.f32.mrb[0].mxu0
      %v483 = vadd.f32 0.0, %v482
      %v484 = vpop.f32.mrb[0].mxu0
      %485 = vmatprep.mubr.bf16.mxu0 0
      %486 = vmatmul.mubr.bf16.gmra.mrb[0].mxu0 %v350
      %v487 = vpop.f32.mrb[0].mxu0
      %v488 = vadd.f32 0.0, %v487
      %v489 = vpop.f32.mrb[0].mxu0
      %v490 = vpop.f32.mrb[0].mxu0
      %v491 = vadd.f32 0.0, %v490
      %v492 = vpop.f32.mrb[0].mxu0
      %493 = vmatprep.mubr.bf16.mxu0 0
      %494 = vmatmul.mubr.bf16.gmra.mrb[0].mxu0 %v353
      %v495 = vpop.f32.mrb[0].mxu0
      %v496 = vadd.f32 0.0, %v495
      %v497 = vpop.f32.mrb[0].mxu0
      %v498 = vpop.f32.mrb[0].mxu0
      %v499 = vadd.f32 0.0, %v498
      %v500 = vpop.f32.mrb[0].mxu0
      %501 = vmatprep.mubr.bf16.mxu0 0
      %502 = vmatmul.mubr.bf16.gmra.mrb[0].mxu0 %v356
      %v503 = vpop.f32.mrb[0].mxu0
      %v504 = vadd.f32 0.0, %v503
      %v505 = vpop.f32.mrb[0].mxu0
      %v506 = vpop.f32.mrb[0].mxu0
      %v507 = vadd.f32 0.0, %v506
      %v508 = vpop.f32.mrb[0].mxu0
      %509 = vmatprep.mubr.bf16.mxu0 0
      %510 = vmatmul.mubr.bf16.gmra.mrb[0].mxu0 %v359
      %v511 = vpop.f32.mrb[0].mxu0
      %v512 = vadd.f32 0.0, %v511
      %v513 = vpop.f32.mrb[0].mxu0
      %v514 = vpop.f32.mrb[0].mxu0
      %v515 = vadd.f32 0.0, %v514
      %v516 = vpop.f32.mrb[0].mxu0
      %517 = vmatprep.mubr.bf16.mxu0 0
      %518 = vmatmul.mubr.bf16.gmra.mrb[0].mxu0 %v362
      %v519 = vpop.f32.mrb[0].mxu0
      %v520 = vadd.f32 0.0, %v519
      %v521 = vpop.f32.mrb[0].mxu0
      %v522 = vpop.f32.mrb[0].mxu0
      %v523 = vadd.f32 0.0, %v522
      %v524 = vpop.f32.mrb[0].mxu0
      %525 = vmatprep.mubr.bf16.mxu0 0
      %526 = vmatmul.mubr.bf16.gmra.mrb[0].mxu0 %v365
      %v527 = vpop.f32.mrb[0].mxu0
      %v528 = vadd.f32 0.0, %v527
      %v529 = vpop.f32.mrb[0].mxu0
      %v530 = vpop.f32.mrb[0].mxu0
      %v531 = vadd.f32 0.0, %v530
      %v532 = vpop.f32.mrb[0].mxu0
      %533 = vmatprep.mubr.bf16.mxu0 0
      %534 = vmatmul.mubr.bf16.gmra.mrb[0].mxu0 %v368
      %v535 = vpop.f32.mrb[0].mxu0
      %v536 = vadd.f32 0.0, %v535
      %v537 = vpop.f32.mrb[0].mxu0
      %v538 = vpop.f32.mrb[0].mxu0
      %v539 = vadd.f32 0.0, %v538
      %v540 = vpop.f32.mrb[0].mxu0
      %541 = vmatprep.mubr.bf16.mxu0 0
      %542 = vmatmul.mubr.bf16.gmra.mrb[0].mxu0 %v371
      %v543 = vpop.f32.mrb[0].mxu0
      %v544 = vadd.f32 0.0, %v543
      %v545 = vpop.f32.mrb[0].mxu0
      %v546 = vpop.f32.mrb[0].mxu0
      %v547 = vadd.f32 0.0, %v546
      %v548 = vpop.f32.mrb[0].mxu0
      %549 = vmatprep.mubr.bf16.mxu0 0
      %550 = vmatmul.mubr.bf16.gmra.mrb[0].mxu0 %v374
      %v551 = vpop.f32.mrb[0].mxu0
      %v552 = vadd.f32 0.0, %v551
      %v553 = vpop.f32.mrb[0].mxu0
      %v554 = vpop.f32.mrb[0].mxu0
      %v555 = vadd.f32 0.0, %v554
      %v556 = vpop.f32.mrb[0].mxu0
      %557 = vmatprep.mubr.bf16.mxu0 0
      %558 = vmatmul.mubr.bf16.gmra.mrb[0].mxu0 %v377
      %v559 = vpop.f32.mrb[0].mxu0
      %v560 = vadd.f32 0.0, %v559
      %v561 = vpop.f32.mrb[0].mxu0
      %v562 = vpop.f32.mrb[0].mxu0
      %v563 = vadd.f32 0.0, %v562
      %v564 = vpop.f32.mrb[0].mxu0
      %565 = vmatprep.mubr.bf16.mxu0 0
      %566 = vmatmul.mubr.bf16.gmra.mrb[0].mxu0 %v380
      %v567 = vpop.f32.mrb[0].mxu0
      %v568 = vadd.f32 0.0, %v567
      %v569 = vpop.f32.mrb[0].mxu0
      %v570 = vpop.f32.mrb[0].mxu0
      %v571 = vadd.f32 0.0, %v570
      %v572 = vpop.f32.mrb[0].mxu0
      %573 = vmatprep.mubr.bf16.mxu0 0
      %574 = vmatmul.mubr.bf16.gmra.mrb[0].mxu0 %v383
      %v575 = vpop.f32.mrb[0].mxu0
      %v576 = vadd.f32 0.0, %v575
      %v577 = vpop.f32.mrb[0].mxu0
      %v578 = vpop.f32.mrb[0].mxu0
      %v579 = vadd.f32 0.0, %v578
      %v580 = vpop.f32.mrb[0].mxu0
      %581 = vdwg.mxu0
      %582 = vst [vmem:[%s170] sm:$0xff] %v424
      %583 = vst [vmem:[%s170 + $0x8] sm:$0xff] %v427
      %584 = vst [vmem:[%s170 + $0x10] sm:$0xff] %v432
      %585 = vst [vmem:[%s170 + $0x18] sm:$0xff] %v435
      %586 = vst [vmem:[%s170 + $0x20] sm:$0xff] %v440
      %587 = vst [vmem:[%s170 + $0x28] sm:$0xff] %v443
      %588 = vst [vmem:[%s170 + $0x30] sm:$0xff] %v448
      %589 = vst [vmem:[%s170 + $0x38] sm:$0xff] %v451
      %590 = vst [vmem:[%s170 + $0x40] sm:$0xff] %v456
      %591 = vst [vmem:[%s170 + $0x48] sm:$0xff] %v459
      %592 = vst [vmem:[%s170 + $0x50] sm:$0xff] %v464
      %593 = vst [vmem:[%s170 + $0x58] sm:$0xff] %v467
      %594 = vst [vmem:[%s170 + $0x60] sm:$0xff] %v472
      %595 = vst [vmem:[%s170 + $0x68] sm:$0xff] %v475
      %596 = vst [vmem:[%s170 + $0x70] sm:$0xff] %v480
      %597 = vst [vmem:[%s170 + $0x78] sm:$0xff] %v483
      %598 = vst [vmem:[%s170 + $0x80] sm:$0xff] %v488
      %599 = vst [vmem:[%s170 + $0x88] sm:$0xff] %v491
      %600 = vst [vmem:[%s170 + $0x90] sm:$0xff] %v496
      %601 = vst [vmem:[%s170 + $0x98] sm:$0xff] %v499
      %602 = vst [vmem:[%s170 + $0xa0] sm:$0xff] %v504
      %603 = vst [vmem:[%s170 + $0xa8] sm:$0xff] %v507
      %604 = vst [vmem:[%s170 + $0xb0] sm:$0xff] %v512
      %605 = vst [vmem:[%s170 + $0xb8] sm:$0xff] %v515
      %606 = vst [vmem:[%s170 + $0xc0] sm:$0xff] %v520
      %607 = vst [vmem:[%s170 + $0xc8] sm:$0xff] %v523
      %608 = vst [vmem:[%s170 + $0xd0] sm:$0xff] %v528
      %609 = vst [vmem:[%s170 + $0xd8] sm:$0xff] %v531
      %610 = vst [vmem:[%s170 + $0xe0] sm:$0xff] %v536
      %611 = vst [vmem:[%s170 + $0xe8] sm:$0xff] %v539
      %612 = vst [vmem:[%s170 + $0xf0] sm:$0xff] %v544
      %613 = vst [vmem:[%s170 + $0xf8] sm:$0xff] %v547
      %614 = vst [vmem:[%s170 + $0x100] sm:$0xff] %v552
      %615 = vst [vmem:[%s170 + $0x108] sm:$0xff] %v555
      %616 = vst [vmem:[%s170 + $0x110] sm:$0xff] %v560
      %617 = vst [vmem:[%s170 + $0x118] sm:$0xff] %v563
      %618 = vst [vmem:[%s170 + $0x120] sm:$0xff] %v568
      %619 = vst [vmem:[%s170 + $0x128] sm:$0xff] %v571
      %620 = vst [vmem:[%s170 + $0x130] sm:$0xff] %v576
      %621 = vst [vmem:[%s170 + $0x138] sm:$0xff] %v579
      %v622 = vld [vmem:[%s170] sm:$0xff]
      %v623 = vld [vmem:[%s170 + $0x8] sm:$0xff]
      %v624 = vld [vmem:[%s170 + $0x10] sm:$0xff]
      %v625 = vld [vmem:[%s170 + $0x18] sm:$0xff]
      %v626 = vld [vmem:[%s170 + $0x20] sm:$0xff]
      %v627 = vld [vmem:[%s170 + $0x28] sm:$0xff]
      %v628 = vld [vmem:[%s170 + $0x30] sm:$0xff]
      %v629 = vld [vmem:[%s170 + $0x38] sm:$0xff]
      %v630 = vld [vmem:[%s170 + $0x40] sm:$0xff]
      %v631 = vld [vmem:[%s170 + $0x48] sm:$0xff]
      %v632 = vld [vmem:[%s170 + $0x50] sm:$0xff]
      %v633 = vld [vmem:[%s170 + $0x58] sm:$0xff]
      %v634 = vld [vmem:[%s170 + $0x60] sm:$0xff]
      %v635 = vld [vmem:[%s170 + $0x68] sm:$0xff]
      %v636 = vld [vmem:[%s170 + $0x70] sm:$0xff]
      %v637 = vld [vmem:[%s170 + $0x78] sm:$0xff]
      %v638 = vld [vmem:[%s170 + $0x80] sm:$0xff]
      %v639 = vld [vmem:[%s170 + $0x88] sm:$0xff]
      %v640 = vld [vmem:[%s170 + $0x90] sm:$0xff]
      %v641 = vld [vmem:[%s170 + $0x98] sm:$0xff]
      %v642 = vld [vmem:[%s170 + $0xa0] sm:$0xff]
      %v643 = vld [vmem:[%s170 + $0xa8] sm:$0xff]
      %v644 = vld [vmem:[%s170 + $0xb0] sm:$0xff]
      %v645 = vld [vmem:[%s170 + $0xb8] sm:$0xff]
      %v646 = vld [vmem:[%s170 + $0xc0] sm:$0xff]
      %v647 = vld [vmem:[%s170 + $0xc8] sm:$0xff]
      %v648 = vld [vmem:[%s170 + $0xd0] sm:$0xff]
      %v649 = vld [vmem:[%s170 + $0xd8] sm:$0xff]
      %v650 = vld [vmem:[%s170 + $0xe0] sm:$0xff]
      %v651 = vld [vmem:[%s170 + $0xe8] sm:$0xff]
      %v652 = vld [vmem:[%s170 + $0xf0] sm:$0xff]
      %v653 = vld [vmem:[%s170 + $0xf8] sm:$0xff]
      %v654 = vld [vmem:[%s170 + $0x100] sm:$0xff]
      %v655 = vld [vmem:[%s170 + $0x108] sm:$0xff]
      %v656 = vld [vmem:[%s170 + $0x110] sm:$0xff]
      %v657 = vld [vmem:[%s170 + $0x118] sm:$0xff]
      %v658 = vld [vmem:[%s170 + $0x120] sm:$0xff]
      %v659 = vld [vmem:[%s170 + $0x128] sm:$0xff]
      %v660 = vld [vmem:[%s170 + $0x130] sm:$0xff]
      %v661 = vld [vmem:[%s170 + $0x138] sm:$0xff]
      %v662 = vld [vmem:[%s165 + $0x4] sm:$0xf]
      %v663 = vld [vmem:[%s165 + $0x8] sm:$0xf]
      %v664 = vld [vmem:[%s165 + $0xc] sm:$0xf]
      %v665 = vld [vmem:[%s165 + $0x10] sm:$0xf]
      %v666 = vld [vmem:[%s165 + $0x14] sm:$0xf]
      %v667 = vld [vmem:[%s165 + $0x18] sm:$0xf]
      %v668 = vld [vmem:[%s165 + $0x1c] sm:$0xf]
      %v669 = vld [vmem:[%s165 + $0x20] sm:$0xf]
      %v670 = vld [vmem:[%s165 + $0x24] sm:$0xf]
      %v671 = vld [vmem:[%s165 + $0x28] sm:$0xf]
      %v672 = vld [vmem:[%s165 + $0x2c] sm:$0xf]
      %v673 = vld [vmem:[%s165 + $0x30] sm:$0xf]
      %v674 = vld [vmem:[%s165 + $0x34] sm:$0xf]
      %v675 = vld [vmem:[%s165 + $0x38] sm:$0xf]
      %v676 = vld [vmem:[%s165 + $0x3c] sm:$0xf]
      %v677 = vld [vmem:[%s165 + $0x40] sm:$0xf]
      %v678 = vld [vmem:[%s165 + $0x44] sm:$0xf]
      %v679 = vld [vmem:[%s165 + $0x48] sm:$0xf]
      %v680 = vld [vmem:[%s165 + $0x4c] sm:$0xf]
      %v681 = vld [vmem:[%s165 + $0x50] sm:$0xf]
      %v682 = vld [vmem:[%s165 + $0x54] sm:$0xf]
      %v683 = vld [vmem:[%s165 + $0x58] sm:$0xf]
      %v684 = vld [vmem:[%s165 + $0x5c] sm:$0xf]
      %v685 = vld [vmem:[%s165 + $0x60] sm:$0xf]
      %v686 = vld [vmem:[%s165 + $0x64] sm:$0xf]
      %v687 = vld [vmem:[%s165 + $0x68] sm:$0xf]
      %v688 = vld [vmem:[%s165 + $0x6c] sm:$0xf]
      %v689 = vld [vmem:[%s165 + $0x70] sm:$0xf]
      %v690 = vld [vmem:[%s165 + $0x74] sm:$0xf]
      %v691 = vld [vmem:[%s165 + $0x78] sm:$0xf]
      %v692 = vld [vmem:[%s165 + $0x7c] sm:$0xf]
      %v693 = vld [vmem:[%s165 + $0x80] sm:$0xf]
      %v694 = vld [vmem:[%s165 + $0x84] sm:$0xf]
      %v695 = vld [vmem:[%s165 + $0x88] sm:$0xf]
      %v696 = vld [vmem:[%s165 + $0x8c] sm:$0xf]
      %v697 = vld [vmem:[%s165 + $0x90] sm:$0xf]
      %v698 = vld [vmem:[%s165 + $0x94] sm:$0xf]
      %v699 = vld [vmem:[%s165 + $0x98] sm:$0xf]
      %v700 = vld [vmem:[%s165 + $0x9c] sm:$0xf]
      %v701 = vld [vmem:[%s165 + $0xa0] sm:$0xf]
      %s702 = scalar_lea.vmem %s1, 12
      %v703 = vld [vmem:[%s702] sm:$0xf]
      %v704 = vld [vmem:[%s702 + $0x4] sm:$0xf]
      %v705 = vld [vmem:[%s702 + $0x8] sm:$0xf]
      %v746 = vunpack.c.l.b16 %v662
      %v747 = vunpack.c.l.b16 %v663
      %v748 = vunpack.c.l.b16 %v664
      %v749 = vunpack.c.l.b16 %v665
      %v750 = vunpack.c.l.b16 %v666
      %v751 = vunpack.c.l.b16 %v667
      %v752 = vunpack.c.l.b16 %v668
      %v753 = vunpack.c.l.b16 %v669
      %v754 = vunpack.c.l.b16 %v670
      %v755 = vunpack.c.l.b16 %v671
      %v756 = vunpack.c.l.b16 %v672
      %v757 = vunpack.c.l.b16 %v673
      %v758 = vunpack.c.l.b16 %v674
      %v759 = vunpack.c.l.b16 %v675
      %v760 = vunpack.c.l.b16 %v676
      %v761 = vunpack.c.l.b16 %v677
      %v762 = vunpack.c.l.b16 %v678
      %v763 = vunpack.c.l.b16 %v679
      %v764 = vunpack.c.l.b16 %v680
      %v765 = vunpack.c.l.b16 %v681
      %v766 = vunpack.c.l.b16 %v682
      %v767 = vunpack.c.l.b16 %v683
      %v768 = vunpack.c.l.b16 %v684
      %v769 = vunpack.c.l.b16 %v685
      %v770 = vunpack.c.l.b16 %v686
      %v771 = vunpack.c.l.b16 %v687
      %v772 = vunpack.c.l.b16 %v688
      %v773 = vunpack.c.l.b16 %v689
      %v774 = vunpack.c.l.b16 %v690
      %v775 = vunpack.c.l.b16 %v691
      %v776 = vunpack.c.l.b16 %v692
      %v777 = vunpack.c.l.b16 %v693
      %v778 = vunpack.c.l.b16 %v694
      %v779 = vunpack.c.l.b16 %v695
      %v780 = vunpack.c.l.b16 %v696
      %v781 = vunpack.c.l.b16 %v697
      %v782 = vunpack.c.l.b16 %v698
      %v783 = vunpack.c.l.b16 %v699
      %v784 = vunpack.c.l.b16 %v700
      %v785 = vunpack.c.l.b16 %v701
      %v786 = vpack.c.b16 %v747, %v746
      %v787 = vpack.c.b16 %v749, %v748
      %v788 = vpack.c.b16 %v751, %v750
      %v789 = vpack.c.b16 %v753, %v752
      %v790 = vpack.c.b16 %v755, %v754
      %v791 = vpack.c.b16 %v757, %v756
      %v792 = vpack.c.b16 %v759, %v758
      %v793 = vpack.c.b16 %v761, %v760
      %v794 = vpack.c.b16 %v763, %v762
      %v795 = vpack.c.b16 %v765, %v764
      %v796 = vpack.c.b16 %v767, %v766
      %v797 = vpack.c.b16 %v769, %v768
      %v798 = vpack.c.b16 %v771, %v770
      %v799 = vpack.c.b16 %v773, %v772
      %v800 = vpack.c.b16 %v775, %v774
      %v801 = vpack.c.b16 %v777, %v776
      %v802 = vpack.c.b16 %v779, %v778
      %v803 = vpack.c.b16 %v781, %v780
      %v804 = vpack.c.b16 %v783, %v782
      %v805 = vpack.c.b16 %v785, %v784
      %v809 = vunpack.c.l.b16 %v703
      %v810 = vunpack.c.l.b16 %v704
      %v811 = vunpack.c.l.b16 %v705
      %v812 = vpack.c.b16 %v810, %v809
      %v813 = vpack.c.b16 %v811, %v811
      %v816 = vsel %vm324, %v786, 0
      %v819 = vsel %vm324, %v787, 0
      %v822 = vsel %vm324, %v788, 0
      %v825 = vsel %vm324, %v789, 0
      %v828 = vsel %vm324, %v790, 0
      %v831 = vsel %vm324, %v791, 0
      %v834 = vsel %vm324, %v792, 0
      %v837 = vsel %vm324, %v793, 0
      %v840 = vsel %vm324, %v794, 0
      %v843 = vsel %vm324, %v795, 0
      %v846 = vsel %vm324, %v796, 0
      %v849 = vsel %vm324, %v797, 0
      %v852 = vsel %vm324, %v798, 0
      %v855 = vsel %vm324, %v799, 0
      %v858 = vsel %vm324, %v800, 0
      %v861 = vsel %vm324, %v801, 0
      %v864 = vsel %vm324, %v802, 0
      %v867 = vsel %vm324, %v803, 0
      %v870 = vsel %vm324, %v804, 0
      %v873 = vsel %vm324, %v805, 0
      %v876 = vsel %vm385, %v813, 0
      %878 = vmatprep.subr.bf16.mxu0 0
      %879 = vmatpush1.bf16.msra.mxu0 %v812
      %880 = vmatprep.subr.bf16.mxu0 0
      %881 = vmatpush1.bf16.msra.mxu0 %v876
      %882 = vmatprep.subr.bf16.mxu0 0
      %883 = vmatpush1.bf16.msra.mxu0 0
      %884 = vmatprep.subr.bf16.mxu0 0
      %885 = vmatpush1.bf16.msra.mxu0 0
      %886 = vmatprep.subr.bf16.mxu0 0
      %887 = vmatpush1.bf16.msra.mxu0 0
      %888 = vmatprep.subr.bf16.mxu0 0
      %889 = vmatpush1.bf16.msra.mxu0 0
      %890 = vmatprep.subr.bf16.mxu0 0
      %891 = vmatpush1.bf16.msra.mxu0 0
      %892 = vmatprep.subr.bf16.mxu0 0
      %893 = vmatpush1.bf16.msra.mxu0 0
      %894 = vmatprep.subr.bf16.mxu0 0
      %895 = vmatpush1.bf16.msra.mxu0 0
      %896 = vmatprep.subr.bf16.mxu0 0
      %897 = vmatpush1.bf16.msra.mxu0 0
      %898 = vmatprep.subr.bf16.mxu0 0
      %899 = vmatpush1.bf16.msra.mxu0 0
      %900 = vmatprep.subr.bf16.mxu0 0
      %901 = vmatpush1.bf16.msra.mxu0 0
      %902 = vmatprep.subr.bf16.mxu0 0
      %903 = vmatpush1.bf16.msra.mxu0 0
      %904 = vmatprep.subr.bf16.mxu0 0
      %905 = vmatpush1.bf16.msra.mxu0 0
      %906 = vmatprep.subr.bf16.mxu0 0
      %907 = vmatpush1.bf16.msra.mxu0 0
      %908 = vmatprep.subr.bf16.mxu0 0
      %909 = vmatpush1.bf16.msra.mxu0 0
      %910 = vmatprep.mubr.bf16.mxu0 0
      %911 = vmatmul.mubr.bf16.gmra.mrb[0].mxu0 %v816
      %v912 = vpop.f32.mrb[0].mxu0
      %v913 = vadd.f32 0.0, %v912
      %v914 = vpop.f32.mrb[0].mxu0
      %v915 = vpop.f32.mrb[0].mxu0
      %v916 = vadd.f32 0.0, %v915
      %v917 = vpop.f32.mrb[0].mxu0
      %918 = vmatprep.mubr.bf16.mxu0 0
      %919 = vmatmul.mubr.bf16.gmra.mrb[0].mxu0 %v819
      %v920 = vpop.f32.mrb[0].mxu0
      %v921 = vadd.f32 0.0, %v920
      %v922 = vpop.f32.mrb[0].mxu0
      %v923 = vpop.f32.mrb[0].mxu0
      %v924 = vadd.f32 0.0, %v923
      %v925 = vpop.f32.mrb[0].mxu0
      %926 = vmatprep.mubr.bf16.mxu0 0
      %927 = vmatmul.mubr.bf16.gmra.mrb[0].mxu0 %v822
      %v928 = vpop.f32.mrb[0].mxu0
      %v929 = vadd.f32 0.0, %v928
      %v930 = vpop.f32.mrb[0].mxu0
      %v931 = vpop.f32.mrb[0].mxu0
      %v932 = vadd.f32 0.0, %v931
      %v933 = vpop.f32.mrb[0].mxu0
      %934 = vmatprep.mubr.bf16.mxu0 0
      %935 = vmatmul.mubr.bf16.gmra.mrb[0].mxu0 %v825
      %v936 = vpop.f32.mrb[0].mxu0
      %v937 = vadd.f32 0.0, %v936
      %v938 = vpop.f32.mrb[0].mxu0
      %v939 = vpop.f32.mrb[0].mxu0
      %v940 = vadd.f32 0.0, %v939
      %v941 = vpop.f32.mrb[0].mxu0
      %942 = vmatprep.mubr.bf16.mxu0 0
      %943 = vmatmul.mubr.bf16.gmra.mrb[0].mxu0 %v828
      %v944 = vpop.f32.mrb[0].mxu0
      %v945 = vadd.f32 0.0, %v944
      %v946 = vpop.f32.mrb[0].mxu0
      %v947 = vpop.f32.mrb[0].mxu0
      %v948 = vadd.f32 0.0, %v947
      %v949 = vpop.f32.mrb[0].mxu0
      %950 = vmatprep.mubr.bf16.mxu0 0
      %951 = vmatmul.mubr.bf16.gmra.mrb[0].mxu0 %v831
      %v952 = vpop.f32.mrb[0].mxu0
      %v953 = vadd.f32 0.0, %v952
      %v954 = vpop.f32.mrb[0].mxu0
      %v955 = vpop.f32.mrb[0].mxu0
      %v956 = vadd.f32 0.0, %v955
      %v957 = vpop.f32.mrb[0].mxu0
      %958 = vmatprep.mubr.bf16.mxu0 0
      %959 = vmatmul.mubr.bf16.gmra.mrb[0].mxu0 %v834
      %v960 = vpop.f32.mrb[0].mxu0
      %v961 = vadd.f32 0.0, %v960
      %v962 = vpop.f32.mrb[0].mxu0
      %v963 = vpop.f32.mrb[0].mxu0
      %v964 = vadd.f32 0.0, %v963
      %v965 = vpop.f32.mrb[0].mxu0
      %966 = vmatprep.mubr.bf16.mxu0 0
      %967 = vmatmul.mubr.bf16.gmra.mrb[0].mxu0 %v837
      %v968 = vpop.f32.mrb[0].mxu0
      %v969 = vadd.f32 0.0, %v968
      %v970 = vpop.f32.mrb[0].mxu0
      %v971 = vpop.f32.mrb[0].mxu0
      %v972 = vadd.f32 0.0, %v971
      %v973 = vpop.f32.mrb[0].mxu0
      %974 = vmatprep.mubr.bf16.mxu0 0
      %975 = vmatmul.mubr.bf16.gmra.mrb[0].mxu0 %v840
      %v976 = vpop.f32.mrb[0].mxu0
      %v977 = vadd.f32 0.0, %v976
      %v978 = vpop.f32.mrb[0].mxu0
      %v979 = vpop.f32.mrb[0].mxu0
      %v980 = vadd.f32 0.0, %v979
      %v981 = vpop.f32.mrb[0].mxu0
      %982 = vmatprep.mubr.bf16.mxu0 0
      %983 = vmatmul.mubr.bf16.gmra.mrb[0].mxu0 %v843
      %v984 = vpop.f32.mrb[0].mxu0
      %v985 = vadd.f32 0.0, %v984
      %v986 = vpop.f32.mrb[0].mxu0
      %v987 = vpop.f32.mrb[0].mxu0
      %v988 = vadd.f32 0.0, %v987
      %v989 = vpop.f32.mrb[0].mxu0
      %990 = vmatprep.mubr.bf16.mxu0 0
      %991 = vmatmul.mubr.bf16.gmra.mrb[0].mxu0 %v846
      %v992 = vpop.f32.mrb[0].mxu0
      %v993 = vadd.f32 0.0, %v992
      %v994 = vpop.f32.mrb[0].mxu0
      %v995 = vpop.f32.mrb[0].mxu0
      %v996 = vadd.f32 0.0, %v995
      %v997 = vpop.f32.mrb[0].mxu0
      %998 = vmatprep.mubr.bf16.mxu0 0
      %999 = vmatmul.mubr.bf16.gmra.mrb[0].mxu0 %v849
      %v1000 = vpop.f32.mrb[0].mxu0
      %v1001 = vadd.f32 0.0, %v1000
      %v1002 = vpop.f32.mrb[0].mxu0
      %v1003 = vpop.f32.mrb[0].mxu0
      %v1004 = vadd.f32 0.0, %v1003
      %v1005 = vpop.f32.mrb[0].mxu0
      %1006 = vmatprep.mubr.bf16.mxu0 0
      %1007 = vmatmul.mubr.bf16.gmra.mrb[0].mxu0 %v852
      %v1008 = vpop.f32.mrb[0].mxu0
      %v1009 = vadd.f32 0.0, %v1008
      %v1010 = vpop.f32.mrb[0].mxu0
      %v1011 = vpop.f32.mrb[0].mxu0
      %v1012 = vadd.f32 0.0, %v1011
      %v1013 = vpop.f32.mrb[0].mxu0
      %1014 = vmatprep.mubr.bf16.mxu0 0
      %1015 = vmatmul.mubr.bf16.gmra.mrb[0].mxu0 %v855
      %v1016 = vpop.f32.mrb[0].mxu0
      %v1017 = vadd.f32 0.0, %v1016
      %v1018 = vpop.f32.mrb[0].mxu0
      %v1019 = vpop.f32.mrb[0].mxu0
      %v1020 = vadd.f32 0.0, %v1019
      %v1021 = vpop.f32.mrb[0].mxu0
      %1022 = vmatprep.mubr.bf16.mxu0 0
      %1023 = vmatmul.mubr.bf16.gmra.mrb[0].mxu0 %v858
      %v1024 = vpop.f32.mrb[0].mxu0
      %v1025 = vadd.f32 0.0, %v1024
      %v1026 = vpop.f32.mrb[0].mxu0
      %v1027 = vpop.f32.mrb[0].mxu0
      %v1028 = vadd.f32 0.0, %v1027
      %v1029 = vpop.f32.mrb[0].mxu0
      %1030 = vmatprep.mubr.bf16.mxu0 0
      %1031 = vmatmul.mubr.bf16.gmra.mrb[0].mxu0 %v861
      %v1032 = vpop.f32.mrb[0].mxu0
      %v1033 = vadd.f32 0.0, %v1032
      %v1034 = vpop.f32.mrb[0].mxu0
      %v1035 = vpop.f32.mrb[0].mxu0
      %v1036 = vadd.f32 0.0, %v1035
      %v1037 = vpop.f32.mrb[0].mxu0
      %1038 = vmatprep.mubr.bf16.mxu0 0
      %1039 = vmatmul.mubr.bf16.gmra.mrb[0].mxu0 %v864
      %v1040 = vpop.f32.mrb[0].mxu0
      %v1041 = vadd.f32 0.0, %v1040
      %v1042 = vpop.f32.mrb[0].mxu0
      %v1043 = vpop.f32.mrb[0].mxu0
      %v1044 = vadd.f32 0.0, %v1043
      %v1045 = vpop.f32.mrb[0].mxu0
      %1046 = vmatprep.mubr.bf16.mxu0 0
      %1047 = vmatmul.mubr.bf16.gmra.mrb[0].mxu0 %v867
      %v1048 = vpop.f32.mrb[0].mxu0
      %v1049 = vadd.f32 0.0, %v1048
      %v1050 = vpop.f32.mrb[0].mxu0
      %v1051 = vpop.f32.mrb[0].mxu0
      %v1052 = vadd.f32 0.0, %v1051
      %v1053 = vpop.f32.mrb[0].mxu0
      %1054 = vmatprep.mubr.bf16.mxu0 0
      %1055 = vmatmul.mubr.bf16.gmra.mrb[0].mxu0 %v870
      %v1056 = vpop.f32.mrb[0].mxu0
      %v1057 = vadd.f32 0.0, %v1056
      %v1058 = vpop.f32.mrb[0].mxu0
      %v1059 = vpop.f32.mrb[0].mxu0
      %v1060 = vadd.f32 0.0, %v1059
      %v1061 = vpop.f32.mrb[0].mxu0
      %1062 = vmatprep.mubr.bf16.mxu0 0
      %1063 = vmatmul.mubr.bf16.gmra.mrb[0].mxu0 %v873
      %v1064 = vpop.f32.mrb[0].mxu0
      %v1065 = vadd.f32 0.0, %v1064
      %v1066 = vpop.f32.mrb[0].mxu0
      %v1067 = vpop.f32.mrb[0].mxu0
      %v1068 = vadd.f32 0.0, %v1067
      %v1069 = vpop.f32.mrb[0].mxu0
      %1070 = vdwg.mxu0
      %v1071 = vadd.f32 %v622, %v913
      %v1072 = vadd.f32 %v623, %v916
      %v1073 = vadd.f32 %v624, %v921
      %v1074 = vadd.f32 %v625, %v924
      %v1075 = vadd.f32 %v626, %v929
      %v1076 = vadd.f32 %v627, %v932
      %v1077 = vadd.f32 %v628, %v937
      %v1078 = vadd.f32 %v629, %v940
      %v1079 = vadd.f32 %v630, %v945
      %v1080 = vadd.f32 %v631, %v948
      %v1081 = vadd.f32 %v632, %v953
      %v1082 = vadd.f32 %v633, %v956
      %v1083 = vadd.f32 %v634, %v961
      %v1084 = vadd.f32 %v635, %v964
      %v1085 = vadd.f32 %v636, %v969
      %v1086 = vadd.f32 %v637, %v972
      %v1087 = vadd.f32 %v638, %v977
      %v1088 = vadd.f32 %v639, %v980
      %v1089 = vadd.f32 %v640, %v985
      %v1090 = vadd.f32 %v641, %v988
      %v1091 = vadd.f32 %v642, %v993
      %v1092 = vadd.f32 %v643, %v996
      %v1093 = vadd.f32 %v644, %v1001
      %v1094 = vadd.f32 %v645, %v1004
      %v1095 = vadd.f32 %v646, %v1009
      %v1096 = vadd.f32 %v647, %v1012
      %v1097 = vadd.f32 %v648, %v1017
      %v1098 = vadd.f32 %v649, %v1020
      %v1099 = vadd.f32 %v650, %v1025
      %v1100 = vadd.f32 %v651, %v1028
      %v1101 = vadd.f32 %v652, %v1033
      %v1102 = vadd.f32 %v653, %v1036
      %v1103 = vadd.f32 %v654, %v1041
      %v1104 = vadd.f32 %v655, %v1044
      %v1105 = vadd.f32 %v656, %v1049
      %v1106 = vadd.f32 %v657, %v1052
      %v1107 = vadd.f32 %v658, %v1057
      %v1108 = vadd.f32 %v659, %v1060
      %v1109 = vadd.f32 %v660, %v1065
      %v1110 = vadd.f32 %v661, %v1068
      %1111 = vst [vmem:[%s170] sm:$0xff] %v1071
      %1112 = vst [vmem:[%s170 + $0x8] sm:$0xff] %v1072
      %1113 = vst [vmem:[%s170 + $0x10] sm:$0xff] %v1073
      %1114 = vst [vmem:[%s170 + $0x18] sm:$0xff] %v1074
      %1115 = vst [vmem:[%s170 + $0x20] sm:$0xff] %v1075
      %1116 = vst [vmem:[%s170 + $0x28] sm:$0xff] %v1076
      %1117 = vst [vmem:[%s170 + $0x30] sm:$0xff] %v1077
      %1118 = vst [vmem:[%s170 + $0x38] sm:$0xff] %v1078
      %1119 = vst [vmem:[%s170 + $0x40] sm:$0xff] %v1079
      %1120 = vst [vmem:[%s170 + $0x48] sm:$0xff] %v1080
      %1121 = vst [vmem:[%s170 + $0x50] sm:$0xff] %v1081
      %1122 = vst [vmem:[%s170 + $0x58] sm:$0xff] %v1082
      %1123 = vst [vmem:[%s170 + $0x60] sm:$0xff] %v1083
      %1124 = vst [vmem:[%s170 + $0x68] sm:$0xff] %v1084
      %1125 = vst [vmem:[%s170 + $0x70] sm:$0xff] %v1085
      %1126 = vst [vmem:[%s170 + $0x78] sm:$0xff] %v1086
      %1127 = vst [vmem:[%s170 + $0x80] sm:$0xff] %v1087
      %1128 = vst [vmem:[%s170 + $0x88] sm:$0xff] %v1088
      %1129 = vst [vmem:[%s170 + $0x90] sm:$0xff] %v1089
      %1130 = vst [vmem:[%s170 + $0x98] sm:$0xff] %v1090
      %1131 = vst [vmem:[%s170 + $0xa0] sm:$0xff] %v1091
      %1132 = vst [vmem:[%s170 + $0xa8] sm:$0xff] %v1092
      %1133 = vst [vmem:[%s170 + $0xb0] sm:$0xff] %v1093
      %1134 = vst [vmem:[%s170 + $0xb8] sm:$0xff] %v1094
      %1135 = vst [vmem:[%s170 + $0xc0] sm:$0xff] %v1095
      %1136 = vst [vmem:[%s170 + $0xc8] sm:$0xff] %v1096
      %1137 = vst [vmem:[%s170 + $0xd0] sm:$0xff] %v1097
      %1138 = vst [vmem:[%s170 + $0xd8] sm:$0xff] %v1098
      %1139 = vst [vmem:[%s170 + $0xe0] sm:$0xff] %v1099
      %1140 = vst [vmem:[%s170 + $0xe8] sm:$0xff] %v1100
      %1141 = vst [vmem:[%s170 + $0xf0] sm:$0xff] %v1101
      %1142 = vst [vmem:[%s170 + $0xf8] sm:$0xff] %v1102
      %1143 = vst [vmem:[%s170 + $0x100] sm:$0xff] %v1103
      %1144 = vst [vmem:[%s170 + $0x108] sm:$0xff] %v1104
      %1145 = vst [vmem:[%s170 + $0x110] sm:$0xff] %v1105
      %1146 = vst [vmem:[%s170 + $0x118] sm:$0xff] %v1106
      %1147 = vst [vmem:[%s170 + $0x120] sm:$0xff] %v1107
      %1148 = vst [vmem:[%s170 + $0x128] sm:$0xff] %v1108
      %1149 = vst [vmem:[%s170 + $0x130] sm:$0xff] %v1109
      %1150 = vst [vmem:[%s170 + $0x138] sm:$0xff] %v1110
      %v1151 = vld [vmem:[%s170] sm:$0xff]
      %v1152 = vld [vmem:[%s170 + $0x8] sm:$0xff]
      %v1153 = vld [vmem:[%s170 + $0x10] sm:$0xff]
      %v1154 = vld [vmem:[%s170 + $0x18] sm:$0xff]
      %v1155 = vld [vmem:[%s170 + $0x20] sm:$0xff]
      %v1156 = vld [vmem:[%s170 + $0x28] sm:$0xff]
      %v1157 = vld [vmem:[%s170 + $0x30] sm:$0xff]
      %v1158 = vld [vmem:[%s170 + $0x38] sm:$0xff]
      %v1159 = vld [vmem:[%s170 + $0x40] sm:$0xff]
      %v1160 = vld [vmem:[%s170 + $0x48] sm:$0xff]
      %v1161 = vld [vmem:[%s170 + $0x50] sm:$0xff]
      %v1162 = vld [vmem:[%s170 + $0x58] sm:$0xff]
      %v1163 = vld [vmem:[%s170 + $0x60] sm:$0xff]
      %v1164 = vld [vmem:[%s170 + $0x68] sm:$0xff]
      %v1165 = vld [vmem:[%s170 + $0x70] sm:$0xff]
      %v1166 = vld [vmem:[%s170 + $0x78] sm:$0xff]
      %v1167 = vld [vmem:[%s170 + $0x80] sm:$0xff]
      %v1168 = vld [vmem:[%s170 + $0x88] sm:$0xff]
      %v1169 = vld [vmem:[%s170 + $0x90] sm:$0xff]
      %v1170 = vld [vmem:[%s170 + $0x98] sm:$0xff]
      %v1171 = vld [vmem:[%s170 + $0xa0] sm:$0xff]
      %v1172 = vld [vmem:[%s170 + $0xa8] sm:$0xff]
      %v1173 = vld [vmem:[%s170 + $0xb0] sm:$0xff]
      %v1174 = vld [vmem:[%s170 + $0xb8] sm:$0xff]
      %v1175 = vld [vmem:[%s170 + $0xc0] sm:$0xff]
      %v1176 = vld [vmem:[%s170 + $0xc8] sm:$0xff]
      %v1177 = vld [vmem:[%s170 + $0xd0] sm:$0xff]
      %v1178 = vld [vmem:[%s170 + $0xd8] sm:$0xff]
      %v1179 = vld [vmem:[%s170 + $0xe0] sm:$0xff]
      %v1180 = vld [vmem:[%s170 + $0xe8] sm:$0xff]
      %v1181 = vld [vmem:[%s170 + $0xf0] sm:$0xff]
      %v1182 = vld [vmem:[%s170 + $0xf8] sm:$0xff]
      %v1183 = vld [vmem:[%s170 + $0x100] sm:$0xff]
      %v1184 = vld [vmem:[%s170 + $0x108] sm:$0xff]
      %v1185 = vld [vmem:[%s170 + $0x110] sm:$0xff]
      %v1186 = vld [vmem:[%s170 + $0x118] sm:$0xff]
      %v1187 = vld [vmem:[%s170 + $0x120] sm:$0xff]
      %v1188 = vld [vmem:[%s170 + $0x128] sm:$0xff]
      %v1189 = vld [vmem:[%s170 + $0x130] sm:$0xff]
      %v1190 = vld [vmem:[%s170 + $0x138] sm:$0xff]
      %v1191 = vld [vmem:[%s165 + $0x8] sm:$0xf]
      %v1192 = vld [vmem:[%s165 + $0xc] sm:$0xf]
      %v1193 = vld [vmem:[%s165 + $0x10] sm:$0xf]
      %v1194 = vld [vmem:[%s165 + $0x14] sm:$0xf]
      %v1195 = vld [vmem:[%s165 + $0x18] sm:$0xf]
      %v1196 = vld [vmem:[%s165 + $0x1c] sm:$0xf]
      %v1197 = vld [vmem:[%s165 + $0x20] sm:$0xf]
      %v1198 = vld [vmem:[%s165 + $0x24] sm:$0xf]
      %v1199 = vld [vmem:[%s165 + $0x28] sm:$0xf]
      %v1200 = vld [vmem:[%s165 + $0x2c] sm:$0xf]
      %v1201 = vld [vmem:[%s165 + $0x30] sm:$0xf]
      %v1202 = vld [vmem:[%s165 + $0x34] sm:$0xf]
      %v1203 = vld [vmem:[%s165 + $0x38] sm:$0xf]
      %v1204 = vld [vmem:[%s165 + $0x3c] sm:$0xf]
      %v1205 = vld [vmem:[%s165 + $0x40] sm:$0xf]
      %v1206 = vld [vmem:[%s165 + $0x44] sm:$0xf]
      %v1207 = vld [vmem:[%s165 + $0x48] sm:$0xf]
      %v1208 = vld [vmem:[%s165 + $0x4c] sm:$0xf]
      %v1209 = vld [vmem:[%s165 + $0x50] sm:$0xf]
      %v1210 = vld [vmem:[%s165 + $0x54] sm:$0xf]
      %v1211 = vld [vmem:[%s165 + $0x58] sm:$0xf]
      %v1212 = vld [vmem:[%s165 + $0x5c] sm:$0xf]
      %v1213 = vld [vmem:[%s165 + $0x60] sm:$0xf]
      %v1214 = vld [vmem:[%s165 + $0x64] sm:$0xf]
      %v1215 = vld [vmem:[%s165 + $0x68] sm:$0xf]
      %v1216 = vld [vmem:[%s165 + $0x6c] sm:$0xf]
      %v1217 = vld [vmem:[%s165 + $0x70] sm:$0xf]
      %v1218 = vld [vmem:[%s165 + $0x74] sm:$0xf]
      %v1219 = vld [vmem:[%s165 + $0x78] sm:$0xf]
      %v1220 = vld [vmem:[%s165 + $0x7c] sm:$0xf]
      %v1221 = vld [vmem:[%s165 + $0x80] sm:$0xf]
      %v1222 = vld [vmem:[%s165 + $0x84] sm:$0xf]
      %v1223 = vld [vmem:[%s165 + $0x88] sm:$0xf]
      %v1224 = vld [vmem:[%s165 + $0x8c] sm:$0xf]
      %v1225 = vld [vmem:[%s165 + $0x90] sm:$0xf]
      %v1226 = vld [vmem:[%s165 + $0x94] sm:$0xf]
      %v1227 = vld [vmem:[%s165 + $0x98] sm:$0xf]
      %v1228 = vld [vmem:[%s165 + $0x9c] sm:$0xf]
      %v1229 = vld [vmem:[%s165 + $0xa0] sm:$0xf]
      %v1230 = vld [vmem:[%s165 + $0xa4] sm:$0xf]
      %s1231 = scalar_lea.vmem %s1, 24
      %v1232 = vld [vmem:[%s1231] sm:$0xf]
      %v1233 = vld [vmem:[%s1231 + $0x4] sm:$0xf]
      %v1234 = vld [vmem:[%s1231 + $0x8] sm:$0xf]
      %v1275 = vunpack.c.l.b16 %v1191
      %v1276 = vunpack.c.l.b16 %v1192
      %v1277 = vunpack.c.l.b16 %v1193
      %v1278 = vunpack.c.l.b16 %v1194
      %v1279 = vunpack.c.l.b16 %v1195
      %v1280 = vunpack.c.l.b16 %v1196
      %v1281 = vunpack.c.l.b16 %v1197
      %v1282 = vunpack.c.l.b16 %v1198
      %v1283 = vunpack.c.l.b16 %v1199
      %v1284 = vunpack.c.l.b16 %v1200
      %v1285 = vunpack.c.l.b16 %v1201
      %v1286 = vunpack.c.l.b16 %v1202
      %v1287 = vunpack.c.l.b16 %v1203
      %v1288 = vunpack.c.l.b16 %v1204
      %v1289 = vunpack.c.l.b16 %v1205
      %v1290 = vunpack.c.l.b16 %v1206
      %v1291 = vunpack.c.l.b16 %v1207
      %v1292 = vunpack.c.l.b16 %v1208
      %v1293 = vunpack.c.l.b16 %v1209
      %v1294 = vunpack.c.l.b16 %v1210
      %v1295 = vunpack.c.l.b16 %v1211
      %v1296 = vunpack.c.l.b16 %v1212
      %v1297 = vunpack.c.l.b16 %v1213
      %v1298 = vunpack.c.l.b16 %v1214
      %v1299 = vunpack.c.l.b16 %v1215
      %v1300 = vunpack.c.l.b16 %v1216
      %v1301 = vunpack.c.l.b16 %v1217
      %v1302 = vunpack.c.l.b16 %v1218
      %v1303 = vunpack.c.l.b16 %v1219
      %v1304 = vunpack.c.l.b16 %v1220
      %v1305 = vunpack.c.l.b16 %v1221
      %v1306 = vunpack.c.l.b16 %v1222
      %v1307 = vunpack.c.l.b16 %v1223
      %v1308 = vunpack.c.l.b16 %v1224
      %v1309 = vunpack.c.l.b16 %v1225
      %v1310 = vunpack.c.l.b16 %v1226
      %v1311 = vunpack.c.l.b16 %v1227
      %v1312 = vunpack.c.l.b16 %v1228
      %v1313 = vunpack.c.l.b16 %v1229
      %v1314 = vunpack.c.l.b16 %v1230
      %v1315 = vpack.c.b16 %v1276, %v1275
      %v1316 = vpack.c.b16 %v1278, %v1277
      %v1317 = vpack.c.b16 %v1280, %v1279
      %v1318 = vpack.c.b16 %v1282, %v1281
      %v1319 = vpack.c.b16 %v1284, %v1283
      %v1320 = vpack.c.b16 %v1286, %v1285
      %v1321 = vpack.c.b16 %v1288, %v1287
      %v1322 = vpack.c.b16 %v1290, %v1289
      %v1323 = vpack.c.b16 %v1292, %v1291
      %v1324 = vpack.c.b16 %v1294, %v1293
      %v1325 = vpack.c.b16 %v1296, %v1295
      %v1326 = vpack.c.b16 %v1298, %v1297
      %v1327 = vpack.c.b16 %v1300, %v1299
      %v1328 = vpack.c.b16 %v1302, %v1301
      %v1329 = vpack.c.b16 %v1304, %v1303
      %v1330 = vpack.c.b16 %v1306, %v1305
      %v1331 = vpack.c.b16 %v1308, %v1307
      %v1332 = vpack.c.b16 %v1310, %v1309
      %v1333 = vpack.c.b16 %v1312, %v1311
      %v1334 = vpack.c.b16 %v1314, %v1313
      %v1338 = vunpack.c.l.b16 %v1232
      %v1339 = vunpack.c.l.b16 %v1233
      %v1340 = vunpack.c.l.b16 %v1234
      %v1341 = vpack.c.b16 %v1339, %v1338
      %v1342 = vpack.c.b16 %v1340, %v1340
      %v1345 = vsel %vm324, %v1315, 0
      %v1348 = vsel %vm324, %v1316, 0
      %v1351 = vsel %vm324, %v1317, 0
      %v1354 = vsel %vm324, %v1318, 0
      %v1357 = vsel %vm324, %v1319, 0
      %v1360 = vsel %vm324, %v1320, 0
      %v1363 = vsel %vm324, %v1321, 0
      %v1366 = vsel %vm324, %v1322, 0
      %v1369 = vsel %vm324, %v1323, 0
      %v1372 = vsel %vm324, %v1324, 0
      %v1375 = vsel %vm324, %v1325, 0
      %v1378 = vsel %vm324, %v1326, 0
      %v1381 = vsel %vm324, %v1327, 0
      %v1384 = vsel %vm324, %v1328, 0
      %v1387 = vsel %vm324, %v1329, 0
      %v1390 = vsel %vm324, %v1330, 0
      %v1393 = vsel %vm324, %v1331, 0
      %v1396 = vsel %vm324, %v1332, 0
      %v1399 = vsel %vm324, %v1333, 0
      %v1402 = vsel %vm324, %v1334, 0
      %v1405 = vsel %vm385, %v1342, 0
      %1407 = vmatprep.subr.bf16.mxu0 0
      %1408 = vmatpush1.bf16.msra.mxu0 %v1341
      %1409 = vmatprep.subr.bf16.mxu0 0
      %1410 = vmatpush1.bf16.msra.mxu0 %v1405
      %1411 = vmatprep.subr.bf16.mxu0 0
      %1412 = vmatpush1.bf16.msra.mxu0 0
      %1413 = vmatprep.subr.bf16.mxu0 0
      %1414 = vmatpush1.bf16.msra.mxu0 0
      %1415 = vmatprep.subr.bf16.mxu0 0
      %1416 = vmatpush1.bf16.msra.mxu0 0
      %1417 = vmatprep.subr.bf16.mxu0 0
      %1418 = vmatpush1.bf16.msra.mxu0 0
      %1419 = vmatprep.subr.bf16.mxu0 0
      %1420 = vmatpush1.bf16.msra.mxu0 0
      %1421 = vmatprep.subr.bf16.mxu0 0
      %1422 = vmatpush1.bf16.msra.mxu0 0
      %1423 = vmatprep.subr.bf16.mxu0 0
      %1424 = vmatpush1.bf16.msra.mxu0 0
      %1425 = vmatprep.subr.bf16.mxu0 0
      %1426 = vmatpush1.bf16.msra.mxu0 0
      %1427 = vmatprep.subr.bf16.mxu0 0
      %1428 = vmatpush1.bf16.msra.mxu0 0
      %1429 = vmatprep.subr.bf16.mxu0 0
      %1430 = vmatpush1.bf16.msra.mxu0 0
      %1431 = vmatprep.subr.bf16.mxu0 0
      %1432 = vmatpush1.bf16.msra.mxu0 0
      %1433 = vmatprep.subr.bf16.mxu0 0
      %1434 = vmatpush1.bf16.msra.mxu0 0
      %1435 = vmatprep.subr.bf16.mxu0 0
      %1436 = vmatpush1.bf16.msra.mxu0 0
      %1437 = vmatprep.subr.bf16.mxu0 0
      %1438 = vmatpush1.bf16.msra.mxu0 0
      %1439 = vmatprep.mubr.bf16.mxu0 0
      %1440 = vmatmul.mubr.bf16.gmra.mrb[0].mxu0 %v1345
      %v1441 = vpop.f32.mrb[0].mxu0
      %v1442 = vadd.f32 0.0, %v1441
      %v1443 = vpop.f32.mrb[0].mxu0
      %v1444 = vpop.f32.mrb[0].mxu0
      %v1445 = vadd.f32 0.0, %v1444
      %v1446 = vpop.f32.mrb[0].mxu0
      %1447 = vmatprep.mubr.bf16.mxu0 0
      %1448 = vmatmul.mubr.bf16.gmra.mrb[0].mxu0 %v1348
      %v1449 = vpop.f32.mrb[0].mxu0
      %v1450 = vadd.f32 0.0, %v1449
      %v1451 = vpop.f32.mrb[0].mxu0
      %v1452 = vpop.f32.mrb[0].mxu0
      %v1453 = vadd.f32 0.0, %v1452
      %v1454 = vpop.f32.mrb[0].mxu0
      %1455 = vmatprep.mubr.bf16.mxu0 0
      %1456 = vmatmul.mubr.bf16.gmra.mrb[0].mxu0 %v1351
      %v1457 = vpop.f32.mrb[0].mxu0
      %v1458 = vadd.f32 0.0, %v1457
      %v1459 = vpop.f32.mrb[0].mxu0
      %v1460 = vpop.f32.mrb[0].mxu0
      %v1461 = vadd.f32 0.0, %v1460
      %v1462 = vpop.f32.mrb[0].mxu0
      %1463 = vmatprep.mubr.bf16.mxu0 0
      %1464 = vmatmul.mubr.bf16.gmra.mrb[0].mxu0 %v1354
      %v1465 = vpop.f32.mrb[0].mxu0
      %v1466 = vadd.f32 0.0, %v1465
      %v1467 = vpop.f32.mrb[0].mxu0
      %v1468 = vpop.f32.mrb[0].mxu0
      %v1469 = vadd.f32 0.0, %v1468
      %v1470 = vpop.f32.mrb[0].mxu0
      %1471 = vmatprep.mubr.bf16.mxu0 0
      %1472 = vmatmul.mubr.bf16.gmra.mrb[0].mxu0 %v1357
      %v1473 = vpop.f32.mrb[0].mxu0
      %v1474 = vadd.f32 0.0, %v1473
      %v1475 = vpop.f32.mrb[0].mxu0
      %v1476 = vpop.f32.mrb[0].mxu0
      %v1477 = vadd.f32 0.0, %v1476
      %v1478 = vpop.f32.mrb[0].mxu0
      %1479 = vmatprep.mubr.bf16.mxu0 0
      %1480 = vmatmul.mubr.bf16.gmra.mrb[0].mxu0 %v1360
      %v1481 = vpop.f32.mrb[0].mxu0
      %v1482 = vadd.f32 0.0, %v1481
      %v1483 = vpop.f32.mrb[0].mxu0
      %v1484 = vpop.f32.mrb[0].mxu0
      %v1485 = vadd.f32 0.0, %v1484
      %v1486 = vpop.f32.mrb[0].mxu0
      %1487 = vmatprep.mubr.bf16.mxu0 0
      %1488 = vmatmul.mubr.bf16.gmra.mrb[0].mxu0 %v1363
      %v1489 = vpop.f32.mrb[0].mxu0
      %v1490 = vadd.f32 0.0, %v1489
      %v1491 = vpop.f32.mrb[0].mxu0
      %v1492 = vpop.f32.mrb[0].mxu0
      %v1493 = vadd.f32 0.0, %v1492
      %v1494 = vpop.f32.mrb[0].mxu0
      %1495 = vmatprep.mubr.bf16.mxu0 0
      %1496 = vmatmul.mubr.bf16.gmra.mrb[0].mxu0 %v1366
      %v1497 = vpop.f32.mrb[0].mxu0
      %v1498 = vadd.f32 0.0, %v1497
      %v1499 = vpop.f32.mrb[0].mxu0
      %v1500 = vpop.f32.mrb[0].mxu0
      %v1501 = vadd.f32 0.0, %v1500
      %v1502 = vpop.f32.mrb[0].mxu0
      %1503 = vmatprep.mubr.bf16.mxu0 0
      %1504 = vmatmul.mubr.bf16.gmra.mrb[0].mxu0 %v1369
      %v1505 = vpop.f32.mrb[0].mxu0
      %v1506 = vadd.f32 0.0, %v1505
      %v1507 = vpop.f32.mrb[0].mxu0
      %v1508 = vpop.f32.mrb[0].mxu0
      %v1509 = vadd.f32 0.0, %v1508
      %v1510 = vpop.f32.mrb[0].mxu0
      %1511 = vmatprep.mubr.bf16.mxu0 0
      %1512 = vmatmul.mubr.bf16.gmra.mrb[0].mxu0 %v1372
      %v1513 = vpop.f32.mrb[0].mxu0
      %v1514 = vadd.f32 0.0, %v1513
      %v1515 = vpop.f32.mrb[0].mxu0
      %v1516 = vpop.f32.mrb[0].mxu0
      %v1517 = vadd.f32 0.0, %v1516
      %v1518 = vpop.f32.mrb[0].mxu0
      %1519 = vmatprep.mubr.bf16.mxu0 0
      %1520 = vmatmul.mubr.bf16.gmra.mrb[0].mxu0 %v1375
      %v1521 = vpop.f32.mrb[0].mxu0
      %v1522 = vadd.f32 0.0, %v1521
      %v1523 = vpop.f32.mrb[0].mxu0
      %v1524 = vpop.f32.mrb[0].mxu0
      %v1525 = vadd.f32 0.0, %v1524
      %v1526 = vpop.f32.mrb[0].mxu0
      %1527 = vmatprep.mubr.bf16.mxu0 0
      %1528 = vmatmul.mubr.bf16.gmra.mrb[0].mxu0 %v1378
      %v1529 = vpop.f32.mrb[0].mxu0
      %v1530 = vadd.f32 0.0, %v1529
      %v1531 = vpop.f32.mrb[0].mxu0
      %v1532 = vpop.f32.mrb[0].mxu0
      %v1533 = vadd.f32 0.0, %v1532
      %v1534 = vpop.f32.mrb[0].mxu0
      %1535 = vmatprep.mubr.bf16.mxu0 0
      %1536 = vmatmul.mubr.bf16.gmra.mrb[0].mxu0 %v1381
      %v1537 = vpop.f32.mrb[0].mxu0
      %v1538 = vadd.f32 0.0, %v1537
      %v1539 = vpop.f32.mrb[0].mxu0
      %v1540 = vpop.f32.mrb[0].mxu0
      %v1541 = vadd.f32 0.0, %v1540
      %v1542 = vpop.f32.mrb[0].mxu0
      %1543 = vmatprep.mubr.bf16.mxu0 0
      %1544 = vmatmul.mubr.bf16.gmra.mrb[0].mxu0 %v1384
      %v1545 = vpop.f32.mrb[0].mxu0
      %v1546 = vadd.f32 0.0, %v1545
      %v1547 = vpop.f32.mrb[0].mxu0
      %v1548 = vpop.f32.mrb[0].mxu0
      %v1549 = vadd.f32 0.0, %v1548
      %v1550 = vpop.f32.mrb[0].mxu0
      %1551 = vmatprep.mubr.bf16.mxu0 0
      %1552 = vmatmul.mubr.bf16.gmra.mrb[0].mxu0 %v1387
      %v1553 = vpop.f32.mrb[0].mxu0
      %v1554 = vadd.f32 0.0, %v1553
      %v1555 = vpop.f32.mrb[0].mxu0
      %v1556 = vpop.f32.mrb[0].mxu0
      %v1557 = vadd.f32 0.0, %v1556
      %v1558 = vpop.f32.mrb[0].mxu0
      %1559 = vmatprep.mubr.bf16.mxu0 0
      %1560 = vmatmul.mubr.bf16.gmra.mrb[0].mxu0 %v1390
      %v1561 = vpop.f32.mrb[0].mxu0
      %v1562 = vadd.f32 0.0, %v1561
      %v1563 = vpop.f32.mrb[0].mxu0
      %v1564 = vpop.f32.mrb[0].mxu0
      %v1565 = vadd.f32 0.0, %v1564
      %v1566 = vpop.f32.mrb[0].mxu0
      %1567 = vmatprep.mubr.bf16.mxu0 0
      %1568 = vmatmul.mubr.bf16.gmra.mrb[0].mxu0 %v1393
      %v1569 = vpop.f32.mrb[0].mxu0
      %v1570 = vadd.f32 0.0, %v1569
      %v1571 = vpop.f32.mrb[0].mxu0
      %v1572 = vpop.f32.mrb[0].mxu0
      %v1573 = vadd.f32 0.0, %v1572
      %v1574 = vpop.f32.mrb[0].mxu0
      %1575 = vmatprep.mubr.bf16.mxu0 0
      %1576 = vmatmul.mubr.bf16.gmra.mrb[0].mxu0 %v1396
      %v1577 = vpop.f32.mrb[0].mxu0
      %v1578 = vadd.f32 0.0, %v1577
      %v1579 = vpop.f32.mrb[0].mxu0
      %v1580 = vpop.f32.mrb[0].mxu0
      %v1581 = vadd.f32 0.0, %v1580
      %v1582 = vpop.f32.mrb[0].mxu0
      %1583 = vmatprep.mubr.bf16.mxu0 0
      %1584 = vmatmul.mubr.bf16.gmra.mrb[0].mxu0 %v1399
      %v1585 = vpop.f32.mrb[0].mxu0
      %v1586 = vadd.f32 0.0, %v1585
      %v1587 = vpop.f32.mrb[0].mxu0
      %v1588 = vpop.f32.mrb[0].mxu0
      %v1589 = vadd.f32 0.0, %v1588
      %v1590 = vpop.f32.mrb[0].mxu0
      %1591 = vmatprep.mubr.bf16.mxu0 0
      %1592 = vmatmul.mubr.bf16.gmra.mrb[0].mxu0 %v1402
      %v1593 = vpop.f32.mrb[0].mxu0
      %v1594 = vadd.f32 0.0, %v1593
      %v1595 = vpop.f32.mrb[0].mxu0
      %v1596 = vpop.f32.mrb[0].mxu0
      %v1597 = vadd.f32 0.0, %v1596
      %v1598 = vpop.f32.mrb[0].mxu0
      %1599 = vdwg.mxu0
      %v1600 = vadd.f32 %v1151, %v1442
      %v1601 = vadd.f32 %v1152, %v1445
      %v1602 = vadd.f32 %v1153, %v1450
      %v1603 = vadd.f32 %v1154, %v1453
      %v1604 = vadd.f32 %v1155, %v1458
      %v1605 = vadd.f32 %v1156, %v1461
      %v1606 = vadd.f32 %v1157, %v1466
      %v1607 = vadd.f32 %v1158, %v1469
      %v1608 = vadd.f32 %v1159, %v1474
      %v1609 = vadd.f32 %v1160, %v1477
      %v1610 = vadd.f32 %v1161, %v1482
      %v1611 = vadd.f32 %v1162, %v1485
      %v1612 = vadd.f32 %v1163, %v1490
      %v1613 = vadd.f32 %v1164, %v1493
      %v1614 = vadd.f32 %v1165, %v1498
      %v1615 = vadd.f32 %v1166, %v1501
      %v1616 = vadd.f32 %v1167, %v1506
      %v1617 = vadd.f32 %v1168, %v1509
      %v1618 = vadd.f32 %v1169, %v1514
      %v1619 = vadd.f32 %v1170, %v1517
      %v1620 = vadd.f32 %v1171, %v1522
      %v1621 = vadd.f32 %v1172, %v1525
      %v1622 = vadd.f32 %v1173, %v1530
      %v1623 = vadd.f32 %v1174, %v1533
      %v1624 = vadd.f32 %v1175, %v1538
      %v1625 = vadd.f32 %v1176, %v1541
      %v1626 = vadd.f32 %v1177, %v1546
      %v1627 = vadd.f32 %v1178, %v1549
      %v1628 = vadd.f32 %v1179, %v1554
      %v1629 = vadd.f32 %v1180, %v1557
      %v1630 = vadd.f32 %v1181, %v1562
      %v1631 = vadd.f32 %v1182, %v1565
      %v1632 = vadd.f32 %v1183, %v1570
      %v1633 = vadd.f32 %v1184, %v1573
      %v1634 = vadd.f32 %v1185, %v1578
      %v1635 = vadd.f32 %v1186, %v1581
      %v1636 = vadd.f32 %v1187, %v1586
      %v1637 = vadd.f32 %v1188, %v1589
      %v1638 = vadd.f32 %v1189, %v1594
      %v1639 = vadd.f32 %v1190, %v1597
      %1640 = vst [vmem:[%s170] sm:$0xff] %v1600
      %1641 = vst [vmem:[%s170 + $0x8] sm:$0xff] %v1601
      %1642 = vst [vmem:[%s170 + $0x10] sm:$0xff] %v1602
      %1643 = vst [vmem:[%s170 + $0x18] sm:$0xff] %v1603
      %1644 = vst [vmem:[%s170 + $0x20] sm:$0xff] %v1604
      %1645 = vst [vmem:[%s170 + $0x28] sm:$0xff] %v1605
      %1646 = vst [vmem:[%s170 + $0x30] sm:$0xff] %v1606
      %1647 = vst [vmem:[%s170 + $0x38] sm:$0xff] %v1607
      %1648 = vst [vmem:[%s170 + $0x40] sm:$0xff] %v1608
      %1649 = vst [vmem:[%s170 + $0x48] sm:$0xff] %v1609
      %1650 = vst [vmem:[%s170 + $0x50] sm:$0xff] %v1610
      %1651 = vst [vmem:[%s170 + $0x58] sm:$0xff] %v1611
      %1652 = vst [vmem:[%s170 + $0x60] sm:$0xff] %v1612
      %1653 = vst [vmem:[%s170 + $0x68] sm:$0xff] %v1613
      %1654 = vst [vmem:[%s170 + $0x70] sm:$0xff] %v1614
      %1655 = vst [vmem:[%s170 + $0x78] sm:$0xff] %v1615
      %1656 = vst [vmem:[%s170 + $0x80] sm:$0xff] %v1616
      %1657 = vst [vmem:[%s170 + $0x88] sm:$0xff] %v1617
      %1658 = vst [vmem:[%s170 + $0x90] sm:$0xff] %v1618
      %1659 = vst [vmem:[%s170 + $0x98] sm:$0xff] %v1619
      %1660 = vst [vmem:[%s170 + $0xa0] sm:$0xff] %v1620
      %1661 = vst [vmem:[%s170 + $0xa8] sm:$0xff] %v1621
      %1662 = vst [vmem:[%s170 + $0xb0] sm:$0xff] %v1622
      %1663 = vst [vmem:[%s170 + $0xb8] sm:$0xff] %v1623
      %1664 = vst [vmem:[%s170 + $0xc0] sm:$0xff] %v1624
      %1665 = vst [vmem:[%s170 + $0xc8] sm:$0xff] %v1625
      %1666 = vst [vmem:[%s170 + $0xd0] sm:$0xff] %v1626
      %1667 = vst [vmem:[%s170 + $0xd8] sm:$0xff] %v1627
      %1668 = vst [vmem:[%s170 + $0xe0] sm:$0xff] %v1628
      %1669 = vst [vmem:[%s170 + $0xe8] sm:$0xff] %v1629
      %1670 = vst [vmem:[%s170 + $0xf0] sm:$0xff] %v1630
      %1671 = vst [vmem:[%s170 + $0xf8] sm:$0xff] %v1631
      %1672 = vst [vmem:[%s170 + $0x100] sm:$0xff] %v1632
      %1673 = vst [vmem:[%s170 + $0x108] sm:$0xff] %v1633
      %1674 = vst [vmem:[%s170 + $0x110] sm:$0xff] %v1634
      %1675 = vst [vmem:[%s170 + $0x118] sm:$0xff] %v1635
      %1676 = vst [vmem:[%s170 + $0x120] sm:$0xff] %v1636
      %1677 = vst [vmem:[%s170 + $0x128] sm:$0xff] %v1637
      %1678 = vst [vmem:[%s170 + $0x130] sm:$0xff] %v1638
      %1679 = vst [vmem:[%s170 + $0x138] sm:$0xff] %v1639
      %v1680 = vld [vmem:[%s170] sm:$0xff]
      %v1681 = vld [vmem:[%s170 + $0x8] sm:$0xff]
      %v1682 = vld [vmem:[%s170 + $0x10] sm:$0xff]
      %v1683 = vld [vmem:[%s170 + $0x18] sm:$0xff]
      %v1684 = vld [vmem:[%s170 + $0x20] sm:$0xff]
      %v1685 = vld [vmem:[%s170 + $0x28] sm:$0xff]
      %v1686 = vld [vmem:[%s170 + $0x30] sm:$0xff]
      %v1687 = vld [vmem:[%s170 + $0x38] sm:$0xff]
      %v1688 = vld [vmem:[%s170 + $0x40] sm:$0xff]
      %v1689 = vld [vmem:[%s170 + $0x48] sm:$0xff]
      %v1690 = vld [vmem:[%s170 + $0x50] sm:$0xff]
      %v1691 = vld [vmem:[%s170 + $0x58] sm:$0xff]
      %v1692 = vld [vmem:[%s170 + $0x60] sm:$0xff]
      %v1693 = vld [vmem:[%s170 + $0x68] sm:$0xff]
      %v1694 = vld [vmem:[%s170 + $0x70] sm:$0xff]
      %v1695 = vld [vmem:[%s170 + $0x78] sm:$0xff]
      %v1696 = vld [vmem:[%s170 + $0x80] sm:$0xff]
      %v1697 = vld [vmem:[%s170 + $0x88] sm:$0xff]
      %v1698 = vld [vmem:[%s170 + $0x90] sm:$0xff]
      %v1699 = vld [vmem:[%s170 + $0x98] sm:$0xff]
      %v1700 = vld [vmem:[%s170 + $0xa0] sm:$0xff]
      %v1701 = vld [vmem:[%s170 + $0xa8] sm:$0xff]
      %v1702 = vld [vmem:[%s170 + $0xb0] sm:$0xff]
      %v1703 = vld [vmem:[%s170 + $0xb8] sm:$0xff]
      %v1704 = vld [vmem:[%s170 + $0xc0] sm:$0xff]
      %v1705 = vld [vmem:[%s170 + $0xc8] sm:$0xff]
      %v1706 = vld [vmem:[%s170 + $0xd0] sm:$0xff]
      %v1707 = vld [vmem:[%s170 + $0xd8] sm:$0xff]
      %v1708 = vld [vmem:[%s170 + $0xe0] sm:$0xff]
      %v1709 = vld [vmem:[%s170 + $0xe8] sm:$0xff]
      %v1710 = vld [vmem:[%s170 + $0xf0] sm:$0xff]
      %v1711 = vld [vmem:[%s170 + $0xf8] sm:$0xff]
      %v1712 = vld [vmem:[%s170 + $0x100] sm:$0xff]
      %v1713 = vld [vmem:[%s170 + $0x108] sm:$0xff]
      %v1714 = vld [vmem:[%s170 + $0x110] sm:$0xff]
      %v1715 = vld [vmem:[%s170 + $0x118] sm:$0xff]
      %v1716 = vld [vmem:[%s170 + $0x120] sm:$0xff]
      %v1717 = vld [vmem:[%s170 + $0x128] sm:$0xff]
      %v1718 = vld [vmem:[%s170 + $0x130] sm:$0xff]
      %v1719 = vld [vmem:[%s170 + $0x138] sm:$0xff]
      %v1720 = vld [vmem:[%s165 + $0x28] sm:$0xf]
      %v1721 = vld [vmem:[%s165 + $0x2c] sm:$0xf]
      %v1722 = vld [vmem:[%s165 + $0x30] sm:$0xf]
      %v1723 = vld [vmem:[%s165 + $0x34] sm:$0xf]
      %v1724 = vld [vmem:[%s165 + $0x38] sm:$0xf]
      %v1725 = vld [vmem:[%s165 + $0x3c] sm:$0xf]
      %v1726 = vld [vmem:[%s165 + $0x40] sm:$0xf]
      %v1727 = vld [vmem:[%s165 + $0x44] sm:$0xf]
      %v1728 = vld [vmem:[%s165 + $0x48] sm:$0xf]
      %v1729 = vld [vmem:[%s165 + $0x4c] sm:$0xf]
      %v1730 = vld [vmem:[%s165 + $0x50] sm:$0xf]
      %v1731 = vld [vmem:[%s165 + $0x54] sm:$0xf]
      %v1732 = vld [vmem:[%s165 + $0x58] sm:$0xf]
      %v1733 = vld [vmem:[%s165 + $0x5c] sm:$0xf]
      %v1734 = vld [vmem:[%s165 + $0x60] sm:$0xf]
      %v1735 = vld [vmem:[%s165 + $0x64] sm:$0xf]
      %v1736 = vld [vmem:[%s165 + $0x68] sm:$0xf]
      %v1737 = vld [vmem:[%s165 + $0x6c] sm:$0xf]
      %v1738 = vld [vmem:[%s165 + $0x70] sm:$0xf]
      %v1739 = vld [vmem:[%s165 + $0x74] sm:$0xf]
      %v1740 = vld [vmem:[%s165 + $0x78] sm:$0xf]
      %v1741 = vld [vmem:[%s165 + $0x7c] sm:$0xf]
      %v1742 = vld [vmem:[%s165 + $0x80] sm:$0xf]
      %v1743 = vld [vmem:[%s165 + $0x84] sm:$0xf]
      %v1744 = vld [vmem:[%s165 + $0x88] sm:$0xf]
      %v1745 = vld [vmem:[%s165 + $0x8c] sm:$0xf]
      %v1746 = vld [vmem:[%s165 + $0x90] sm:$0xf]
      %v1747 = vld [vmem:[%s165 + $0x94] sm:$0xf]
      %v1748 = vld [vmem:[%s165 + $0x98] sm:$0xf]
      %v1749 = vld [vmem:[%s165 + $0x9c] sm:$0xf]
      %v1750 = vld [vmem:[%s165 + $0xa0] sm:$0xf]
      %v1751 = vld [vmem:[%s165 + $0xa4] sm:$0xf]
      %v1752 = vld [vmem:[%s165 + $0xa8] sm:$0xf]
      %v1753 = vld [vmem:[%s165 + $0xac] sm:$0xf]
      %v1754 = vld [vmem:[%s165 + $0xb0] sm:$0xf]
      %v1755 = vld [vmem:[%s165 + $0xb4] sm:$0xf]
      %v1756 = vld [vmem:[%s165 + $0xb8] sm:$0xf]
      %v1757 = vld [vmem:[%s165 + $0xbc] sm:$0xf]
      %v1758 = vld [vmem:[%s165 + $0xc0] sm:$0xf]
      %v1759 = vld [vmem:[%s165 + $0xc4] sm:$0xf]
      %s1760 = scalar_lea.vmem %s1, 36
      %v1761 = vld [vmem:[%s1760] sm:$0xf]
      %v1762 = vld [vmem:[%s1760 + $0x4] sm:$0xf]
      %v1763 = vld [vmem:[%s1760 + $0x8] sm:$0xf]
      %v1804 = vunpack.c.l.b16 %v1720
      %v1805 = vunpack.c.l.b16 %v1721
      %v1806 = vunpack.c.l.b16 %v1722
      %v1807 = vunpack.c.l.b16 %v1723
      %v1808 = vunpack.c.l.b16 %v1724
      %v1809 = vunpack.c.l.b16 %v1725
      %v1810 = vunpack.c.l.b16 %v1726
      %v1811 = vunpack.c.l.b16 %v1727
      %v1812 = vunpack.c.l.b16 %v1728
      %v1813 = vunpack.c.l.b16 %v1729
      %v1814 = vunpack.c.l.b16 %v1730
      %v1815 = vunpack.c.l.b16 %v1731
      %v1816 = vunpack.c.l.b16 %v1732
      %v1817 = vunpack.c.l.b16 %v1733
      %v1818 = vunpack.c.l.b16 %v1734
      %v1819 = vunpack.c.l.b16 %v1735
      %v1820 = vunpack.c.l.b16 %v1736
      %v1821 = vunpack.c.l.b16 %v1737
      %v1822 = vunpack.c.l.b16 %v1738
      %v1823 = vunpack.c.l.b16 %v1739
      %v1824 = vunpack.c.l.b16 %v1740
      %v1825 = vunpack.c.l.b16 %v1741
      %v1826 = vunpack.c.l.b16 %v1742
      %v1827 = vunpack.c.l.b16 %v1743
      %v1828 = vunpack.c.l.b16 %v1744
      %v1829 = vunpack.c.l.b16 %v1745
      %v1830 = vunpack.c.l.b16 %v1746
      %v1831 = vunpack.c.l.b16 %v1747
      %v1832 = vunpack.c.l.b16 %v1748
      %v1833 = vunpack.c.l.b16 %v1749
      %v1834 = vunpack.c.l.b16 %v1750
      %v1835 = vunpack.c.l.b16 %v1751
      %v1836 = vunpack.c.l.b16 %v1752
      %v1837 = vunpack.c.l.b16 %v1753
      %v1838 = vunpack.c.l.b16 %v1754
      %v1839 = vunpack.c.l.b16 %v1755
      %v1840 = vunpack.c.l.b16 %v1756
      %v1841 = vunpack.c.l.b16 %v1757
      %v1842 = vunpack.c.l.b16 %v1758
      %v1843 = vunpack.c.l.b16 %v1759
      %v1844 = vpack.c.b16 %v1805, %v1804
      %v1845 = vpack.c.b16 %v1807, %v1806
      %v1846 = vpack.c.b16 %v1809, %v1808
      %v1847 = vpack.c.b16 %v1811, %v1810
      %v1848 = vpack.c.b16 %v1813, %v1812
      %v1849 = vpack.c.b16 %v1815, %v1814
      %v1850 = vpack.c.b16 %v1817, %v1816
      %v1851 = vpack.c.b16 %v1819, %v1818
      %v1852 = vpack.c.b16 %v1821, %v1820
      %v1853 = vpack.c.b16 %v1823, %v1822
      %v1854 = vpack.c.b16 %v1825, %v1824
      %v1855 = vpack.c.b16 %v1827, %v1826
      %v1856 = vpack.c.b16 %v1829, %v1828
      %v1857 = vpack.c.b16 %v1831, %v1830
      %v1858 = vpack.c.b16 %v1833, %v1832
      %v1859 = vpack.c.b16 %v1835, %v1834
      %v1860 = vpack.c.b16 %v1837, %v1836
      %v1861 = vpack.c.b16 %v1839, %v1838
      %v1862 = vpack.c.b16 %v1841, %v1840
      %v1863 = vpack.c.b16 %v1843, %v1842
      %v1867 = vunpack.c.l.b16 %v1761
      %v1868 = vunpack.c.l.b16 %v1762
      %v1869 = vunpack.c.l.b16 %v1763
      %v1870 = vpack.c.b16 %v1868, %v1867
      %v1871 = vpack.c.b16 %v1869, %v1869
      %v1874 = vsel %vm324, %v1844, 0
      %v1877 = vsel %vm324, %v1845, 0
      %v1880 = vsel %vm324, %v1846, 0
      %v1883 = vsel %vm324, %v1847, 0
      %v1886 = vsel %vm324, %v1848, 0
      %v1889 = vsel %vm324, %v1849, 0
      %v1892 = vsel %vm324, %v1850, 0
      %v1895 = vsel %vm324, %v1851, 0
      %v1898 = vsel %vm324, %v1852, 0
      %v1901 = vsel %vm324, %v1853, 0
      %v1904 = vsel %vm324, %v1854, 0
      %v1907 = vsel %vm324, %v1855, 0
      %v1910 = vsel %vm324, %v1856, 0
      %v1913 = vsel %vm324, %v1857, 0
      %v1916 = vsel %vm324, %v1858, 0
      %v1919 = vsel %vm324, %v1859, 0
      %v1922 = vsel %vm324, %v1860, 0
      %v1925 = vsel %vm324, %v1861, 0
      %v1928 = vsel %vm324, %v1862, 0
      %v1931 = vsel %vm324, %v1863, 0
      %v1934 = vsel %vm385, %v1871, 0
      %1936 = vmatprep.subr.bf16.mxu0 0
      %1937 = vmatpush1.bf16.msra.mxu0 %v1870
      %1938 = vmatprep.subr.bf16.mxu0 0
      %1939 = vmatpush1.bf16.msra.mxu0 %v1934
      %1940 = vmatprep.subr.bf16.mxu0 0
      %1941 = vmatpush1.bf16.msra.mxu0 0
      %1942 = vmatprep.subr.bf16.mxu0 0
      %1943 = vmatpush1.bf16.msra.mxu0 0
      %1944 = vmatprep.subr.bf16.mxu0 0
      %1945 = vmatpush1.bf16.msra.mxu0 0
      %1946 = vmatprep.subr.bf16.mxu0 0
      %1947 = vmatpush1.bf16.msra.mxu0 0
      %1948 = vmatprep.subr.bf16.mxu0 0
      %1949 = vmatpush1.bf16.msra.mxu0 0
      %1950 = vmatprep.subr.bf16.mxu0 0
      %1951 = vmatpush1.bf16.msra.mxu0 0
      %1952 = vmatprep.subr.bf16.mxu0 0
      %1953 = vmatpush1.bf16.msra.mxu0 0
      %1954 = vmatprep.subr.bf16.mxu0 0
      %1955 = vmatpush1.bf16.msra.mxu0 0
      %1956 = vmatprep.subr.bf16.mxu0 0
      %1957 = vmatpush1.bf16.msra.mxu0 0
      %1958 = vmatprep.subr.bf16.mxu0 0
      %1959 = vmatpush1.bf16.msra.mxu0 0
      %1960 = vmatprep.subr.bf16.mxu0 0
      %1961 = vmatpush1.bf16.msra.mxu0 0
      %1962 = vmatprep.subr.bf16.mxu0 0
      %1963 = vmatpush1.bf16.msra.mxu0 0
      %1964 = vmatprep.subr.bf16.mxu0 0
      %1965 = vmatpush1.bf16.msra.mxu0 0
      %1966 = vmatprep.subr.bf16.mxu0 0
      %1967 = vmatpush1.bf16.msra.mxu0 0
      %1968 = vmatprep.mubr.bf16.mxu0 0
      %1969 = vmatmul.mubr.bf16.gmra.mrb[0].mxu0 %v1874
      %v1970 = vpop.f32.mrb[0].mxu0
      %v1971 = vadd.f32 0.0, %v1970
      %v1972 = vpop.f32.mrb[0].mxu0
      %v1973 = vpop.f32.mrb[0].mxu0
      %v1974 = vadd.f32 0.0, %v1973
      %v1975 = vpop.f32.mrb[0].mxu0
      %1976 = vmatprep.mubr.bf16.mxu0 0
      %1977 = vmatmul.mubr.bf16.gmra.mrb[0].mxu0 %v1877
      %v1978 = vpop.f32.mrb[0].mxu0
      %v1979 = vadd.f32 0.0, %v1978
      %v1980 = vpop.f32.mrb[0].mxu0
      %v1981 = vpop.f32.mrb[0].mxu0
      %v1982 = vadd.f32 0.0, %v1981
      %v1983 = vpop.f32.mrb[0].mxu0
      %1984 = vmatprep.mubr.bf16.mxu0 0
      %1985 = vmatmul.mubr.bf16.gmra.mrb[0].mxu0 %v1880
      %v1986 = vpop.f32.mrb[0].mxu0
      %v1987 = vadd.f32 0.0, %v1986
      %v1988 = vpop.f32.mrb[0].mxu0
      %v1989 = vpop.f32.mrb[0].mxu0
      %v1990 = vadd.f32 0.0, %v1989
      %v1991 = vpop.f32.mrb[0].mxu0
      %1992 = vmatprep.mubr.bf16.mxu0 0
      %1993 = vmatmul.mubr.bf16.gmra.mrb[0].mxu0 %v1883
      %v1994 = vpop.f32.mrb[0].mxu0
      %v1995 = vadd.f32 0.0, %v1994
      %v1996 = vpop.f32.mrb[0].mxu0
      %v1997 = vpop.f32.mrb[0].mxu0
      %v1998 = vadd.f32 0.0, %v1997
      %v1999 = vpop.f32.mrb[0].mxu0
      %2000 = vmatprep.mubr.bf16.mxu0 0
      %2001 = vmatmul.mubr.bf16.gmra.mrb[0].mxu0 %v1886
      %v2002 = vpop.f32.mrb[0].mxu0
      %v2003 = vadd.f32 0.0, %v2002
      %v2004 = vpop.f32.mrb[0].mxu0
      %v2005 = vpop.f32.mrb[0].mxu0
      %v2006 = vadd.f32 0.0, %v2005
      %v2007 = vpop.f32.mrb[0].mxu0
      %2008 = vmatprep.mubr.bf16.mxu0 0
      %2009 = vmatmul.mubr.bf16.gmra.mrb[0].mxu0 %v1889
      %v2010 = vpop.f32.mrb[0].mxu0
      %v2011 = vadd.f32 0.0, %v2010
      %v2012 = vpop.f32.mrb[0].mxu0
      %v2013 = vpop.f32.mrb[0].mxu0
      %v2014 = vadd.f32 0.0, %v2013
      %v2015 = vpop.f32.mrb[0].mxu0
      %2016 = vmatprep.mubr.bf16.mxu0 0
      %2017 = vmatmul.mubr.bf16.gmra.mrb[0].mxu0 %v1892
      %v2018 = vpop.f32.mrb[0].mxu0
      %v2019 = vadd.f32 0.0, %v2018
      %v2020 = vpop.f32.mrb[0].mxu0
      %v2021 = vpop.f32.mrb[0].mxu0
      %v2022 = vadd.f32 0.0, %v2021
      %v2023 = vpop.f32.mrb[0].mxu0
      %2024 = vmatprep.mubr.bf16.mxu0 0
      %2025 = vmatmul.mubr.bf16.gmra.mrb[0].mxu0 %v1895
      %v2026 = vpop.f32.mrb[0].mxu0
      %v2027 = vadd.f32 0.0, %v2026
      %v2028 = vpop.f32.mrb[0].mxu0
      %v2029 = vpop.f32.mrb[0].mxu0
      %v2030 = vadd.f32 0.0, %v2029
      %v2031 = vpop.f32.mrb[0].mxu0
      %2032 = vmatprep.mubr.bf16.mxu0 0
      %2033 = vmatmul.mubr.bf16.gmra.mrb[0].mxu0 %v1898
      %v2034 = vpop.f32.mrb[0].mxu0
      %v2035 = vadd.f32 0.0, %v2034
      %v2036 = vpop.f32.mrb[0].mxu0
      %v2037 = vpop.f32.mrb[0].mxu0
      %v2038 = vadd.f32 0.0, %v2037
      %v2039 = vpop.f32.mrb[0].mxu0
      %2040 = vmatprep.mubr.bf16.mxu0 0
      %2041 = vmatmul.mubr.bf16.gmra.mrb[0].mxu0 %v1901
      %v2042 = vpop.f32.mrb[0].mxu0
      %v2043 = vadd.f32 0.0, %v2042
      %v2044 = vpop.f32.mrb[0].mxu0
      %v2045 = vpop.f32.mrb[0].mxu0
      %v2046 = vadd.f32 0.0, %v2045
      %v2047 = vpop.f32.mrb[0].mxu0
      %2048 = vmatprep.mubr.bf16.mxu0 0
      %2049 = vmatmul.mubr.bf16.gmra.mrb[0].mxu0 %v1904
      %v2050 = vpop.f32.mrb[0].mxu0
      %v2051 = vadd.f32 0.0, %v2050
      %v2052 = vpop.f32.mrb[0].mxu0
      %v2053 = vpop.f32.mrb[0].mxu0
      %v2054 = vadd.f32 0.0, %v2053
      %v2055 = vpop.f32.mrb[0].mxu0
      %2056 = vmatprep.mubr.bf16.mxu0 0
      %2057 = vmatmul.mubr.bf16.gmra.mrb[0].mxu0 %v1907
      %v2058 = vpop.f32.mrb[0].mxu0
      %v2059 = vadd.f32 0.0, %v2058
      %v2060 = vpop.f32.mrb[0].mxu0
      %v2061 = vpop.f32.mrb[0].mxu0
      %v2062 = vadd.f32 0.0, %v2061
      %v2063 = vpop.f32.mrb[0].mxu0
      %2064 = vmatprep.mubr.bf16.mxu0 0
      %2065 = vmatmul.mubr.bf16.gmra.mrb[0].mxu0 %v1910
      %v2066 = vpop.f32.mrb[0].mxu0
      %v2067 = vadd.f32 0.0, %v2066
      %v2068 = vpop.f32.mrb[0].mxu0
      %v2069 = vpop.f32.mrb[0].mxu0
      %v2070 = vadd.f32 0.0, %v2069
      %v2071 = vpop.f32.mrb[0].mxu0
      %2072 = vmatprep.mubr.bf16.mxu0 0
      %2073 = vmatmul.mubr.bf16.gmra.mrb[0].mxu0 %v1913
      %v2074 = vpop.f32.mrb[0].mxu0
      %v2075 = vadd.f32 0.0, %v2074
      %v2076 = vpop.f32.mrb[0].mxu0
      %v2077 = vpop.f32.mrb[0].mxu0
      %v2078 = vadd.f32 0.0, %v2077
      %v2079 = vpop.f32.mrb[0].mxu0
      %2080 = vmatprep.mubr.bf16.mxu0 0
      %2081 = vmatmul.mubr.bf16.gmra.mrb[0].mxu0 %v1916
      %v2082 = vpop.f32.mrb[0].mxu0
      %v2083 = vadd.f32 0.0, %v2082
      %v2084 = vpop.f32.mrb[0].mxu0
      %v2085 = vpop.f32.mrb[0].mxu0
      %v2086 = vadd.f32 0.0, %v2085
      %v2087 = vpop.f32.mrb[0].mxu0
      %2088 = vmatprep.mubr.bf16.mxu0 0
      %2089 = vmatmul.mubr.bf16.gmra.mrb[0].mxu0 %v1919
      %v2090 = vpop.f32.mrb[0].mxu0
      %v2091 = vadd.f32 0.0, %v2090
      %v2092 = vpop.f32.mrb[0].mxu0
      %v2093 = vpop.f32.mrb[0].mxu0
      %v2094 = vadd.f32 0.0, %v2093
      %v2095 = vpop.f32.mrb[0].mxu0
      %2096 = vmatprep.mubr.bf16.mxu0 0
      %2097 = vmatmul.mubr.bf16.gmra.mrb[0].mxu0 %v1922
      %v2098 = vpop.f32.mrb[0].mxu0
      %v2099 = vadd.f32 0.0, %v2098
      %v2100 = vpop.f32.mrb[0].mxu0
      %v2101 = vpop.f32.mrb[0].mxu0
      %v2102 = vadd.f32 0.0, %v2101
      %v2103 = vpop.f32.mrb[0].mxu0
      %2104 = vmatprep.mubr.bf16.mxu0 0
      %2105 = vmatmul.mubr.bf16.gmra.mrb[0].mxu0 %v1925
      %v2106 = vpop.f32.mrb[0].mxu0
      %v2107 = vadd.f32 0.0, %v2106
      %v2108 = vpop.f32.mrb[0].mxu0
      %v2109 = vpop.f32.mrb[0].mxu0
      %v2110 = vadd.f32 0.0, %v2109
      %v2111 = vpop.f32.mrb[0].mxu0
      %2112 = vmatprep.mubr.bf16.mxu0 0
      %2113 = vmatmul.mubr.bf16.gmra.mrb[0].mxu0 %v1928
      %v2114 = vpop.f32.mrb[0].mxu0
      %v2115 = vadd.f32 0.0, %v2114
      %v2116 = vpop.f32.mrb[0].mxu0
      %v2117 = vpop.f32.mrb[0].mxu0
      %v2118 = vadd.f32 0.0, %v2117
      %v2119 = vpop.f32.mrb[0].mxu0
      %2120 = vmatprep.mubr.bf16.mxu0 0
      %2121 = vmatmul.mubr.bf16.gmra.mrb[0].mxu0 %v1931
      %v2122 = vpop.f32.mrb[0].mxu0
      %v2123 = vadd.f32 0.0, %v2122
      %v2124 = vpop.f32.mrb[0].mxu0
      %v2125 = vpop.f32.mrb[0].mxu0
      %v2126 = vadd.f32 0.0, %v2125
      %v2127 = vpop.f32.mrb[0].mxu0
      %2128 = vdwg.mxu0
      %v2129 = vadd.f32 %v1680, %v1971
      %v2130 = vadd.f32 %v1681, %v1974
      %v2131 = vadd.f32 %v1682, %v1979
      %v2132 = vadd.f32 %v1683, %v1982
      %v2133 = vadd.f32 %v1684, %v1987
      %v2134 = vadd.f32 %v1685, %v1990
      %v2135 = vadd.f32 %v1686, %v1995
      %v2136 = vadd.f32 %v1687, %v1998
      %v2137 = vadd.f32 %v1688, %v2003
      %v2138 = vadd.f32 %v1689, %v2006
      %v2139 = vadd.f32 %v1690, %v2011
      %v2140 = vadd.f32 %v1691, %v2014
      %v2141 = vadd.f32 %v1692, %v2019
      %v2142 = vadd.f32 %v1693, %v2022
      %v2143 = vadd.f32 %v1694, %v2027
      %v2144 = vadd.f32 %v1695, %v2030
      %v2145 = vadd.f32 %v1696, %v2035
      %v2146 = vadd.f32 %v1697, %v2038
      %v2147 = vadd.f32 %v1698, %v2043
      %v2148 = vadd.f32 %v1699, %v2046
      %v2149 = vadd.f32 %v1700, %v2051
      %v2150 = vadd.f32 %v1701, %v2054
      %v2151 = vadd.f32 %v1702, %v2059
      %v2152 = vadd.f32 %v1703, %v2062
      %v2153 = vadd.f32 %v1704, %v2067
      %v2154 = vadd.f32 %v1705, %v2070
      %v2155 = vadd.f32 %v1706, %v2075
      %v2156 = vadd.f32 %v1707, %v2078
      %v2157 = vadd.f32 %v1708, %v2083
      %v2158 = vadd.f32 %v1709, %v2086
      %v2159 = vadd.f32 %v1710, %v2091
      %v2160 = vadd.f32 %v1711, %v2094
      %v2161 = vadd.f32 %v1712, %v2099
      %v2162 = vadd.f32 %v1713, %v2102
      %v2163 = vadd.f32 %v1714, %v2107
      %v2164 = vadd.f32 %v1715, %v2110
      %v2165 = vadd.f32 %v1716, %v2115
      %v2166 = vadd.f32 %v1717, %v2118
      %v2167 = vadd.f32 %v1718, %v2123
      %v2168 = vadd.f32 %v1719, %v2126
      %2169 = vst [vmem:[%s170] sm:$0xff] %v2129
      %2170 = vst [vmem:[%s170 + $0x8] sm:$0xff] %v2130
      %2171 = vst [vmem:[%s170 + $0x10] sm:$0xff] %v2131
      %2172 = vst [vmem:[%s170 + $0x18] sm:$0xff] %v2132
      %2173 = vst [vmem:[%s170 + $0x20] sm:$0xff] %v2133
      %2174 = vst [vmem:[%s170 + $0x28] sm:$0xff] %v2134
      %2175 = vst [vmem:[%s170 + $0x30] sm:$0xff] %v2135
      %2176 = vst [vmem:[%s170 + $0x38] sm:$0xff] %v2136
      %2177 = vst [vmem:[%s170 + $0x40] sm:$0xff] %v2137
      %2178 = vst [vmem:[%s170 + $0x48] sm:$0xff] %v2138
      %2179 = vst [vmem:[%s170 + $0x50] sm:$0xff] %v2139
      %2180 = vst [vmem:[%s170 + $0x58] sm:$0xff] %v2140
      %2181 = vst [vmem:[%s170 + $0x60] sm:$0xff] %v2141
      %2182 = vst [vmem:[%s170 + $0x68] sm:$0xff] %v2142
      %2183 = vst [vmem:[%s170 + $0x70] sm:$0xff] %v2143
      %2184 = vst [vmem:[%s170 + $0x78] sm:$0xff] %v2144
      %2185 = vst [vmem:[%s170 + $0x80] sm:$0xff] %v2145
      %2186 = vst [vmem:[%s170 + $0x88] sm:$0xff] %v2146
      %2187 = vst [vmem:[%s170 + $0x90] sm:$0xff] %v2147
      %2188 = vst [vmem:[%s170 + $0x98] sm:$0xff] %v2148
      %2189 = vst [vmem:[%s170 + $0xa0] sm:$0xff] %v2149
      %2190 = vst [vmem:[%s170 + $0xa8] sm:$0xff] %v2150
      %2191 = vst [vmem:[%s170 + $0xb0] sm:$0xff] %v2151
      %2192 = vst [vmem:[%s170 + $0xb8] sm:$0xff] %v2152
      %2193 = vst [vmem:[%s170 + $0xc0] sm:$0xff] %v2153
      %2194 = vst [vmem:[%s170 + $0xc8] sm:$0xff] %v2154
      %2195 = vst [vmem:[%s170 + $0xd0] sm:$0xff] %v2155
      %2196 = vst [vmem:[%s170 + $0xd8] sm:$0xff] %v2156
      %2197 = vst [vmem:[%s170 + $0xe0] sm:$0xff] %v2157
      %2198 = vst [vmem:[%s170 + $0xe8] sm:$0xff] %v2158
      %2199 = vst [vmem:[%s170 + $0xf0] sm:$0xff] %v2159
      %2200 = vst [vmem:[%s170 + $0xf8] sm:$0xff] %v2160
      %2201 = vst [vmem:[%s170 + $0x100] sm:$0xff] %v2161
      %2202 = vst [vmem:[%s170 + $0x108] sm:$0xff] %v2162
      %2203 = vst [vmem:[%s170 + $0x110] sm:$0xff] %v2163
      %2204 = vst [vmem:[%s170 + $0x118] sm:$0xff] %v2164
      %2205 = vst [vmem:[%s170 + $0x120] sm:$0xff] %v2165
      %2206 = vst [vmem:[%s170 + $0x128] sm:$0xff] %v2166
      %2207 = vst [vmem:[%s170 + $0x130] sm:$0xff] %v2167
      %2208 = vst [vmem:[%s170 + $0x138] sm:$0xff] %v2168
      %v2209 = vld [vmem:[%s170] sm:$0xff]
      %v2210 = vld [vmem:[%s170 + $0x8] sm:$0xff]
      %v2211 = vld [vmem:[%s170 + $0x10] sm:$0xff]
      %v2212 = vld [vmem:[%s170 + $0x18] sm:$0xff]
      %v2213 = vld [vmem:[%s170 + $0x20] sm:$0xff]
      %v2214 = vld [vmem:[%s170 + $0x28] sm:$0xff]
      %v2215 = vld [vmem:[%s170 + $0x30] sm:$0xff]
      %v2216 = vld [vmem:[%s170 + $0x38] sm:$0xff]
      %v2217 = vld [vmem:[%s170 + $0x40] sm:$0xff]
      %v2218 = vld [vmem:[%s170 + $0x48] sm:$0xff]
      %v2219 = vld [vmem:[%s170 + $0x50] sm:$0xff]
      %v2220 = vld [vmem:[%s170 + $0x58] sm:$0xff]
      %v2221 = vld [vmem:[%s170 + $0x60] sm:$0xff]
      %v2222 = vld [vmem:[%s170 + $0x68] sm:$0xff]
      %v2223 = vld [vmem:[%s170 + $0x70] sm:$0xff]
      %v2224 = vld [vmem:[%s170 + $0x78] sm:$0xff]
      %v2225 = vld [vmem:[%s170 + $0x80] sm:$0xff]
      %v2226 = vld [vmem:[%s170 + $0x88] sm:$0xff]
      %v2227 = vld [vmem:[%s170 + $0x90] sm:$0xff]
      %v2228 = vld [vmem:[%s170 + $0x98] sm:$0xff]
      %v2229 = vld [vmem:[%s170 + $0xa0] sm:$0xff]
      %v2230 = vld [vmem:[%s170 + $0xa8] sm:$0xff]
      %v2231 = vld [vmem:[%s170 + $0xb0] sm:$0xff]
      %v2232 = vld [vmem:[%s170 + $0xb8] sm:$0xff]
      %v2233 = vld [vmem:[%s170 + $0xc0] sm:$0xff]
      %v2234 = vld [vmem:[%s170 + $0xc8] sm:$0xff]
      %v2235 = vld [vmem:[%s170 + $0xd0] sm:$0xff]
      %v2236 = vld [vmem:[%s170 + $0xd8] sm:$0xff]
      %v2237 = vld [vmem:[%s170 + $0xe0] sm:$0xff]
      %v2238 = vld [vmem:[%s170 + $0xe8] sm:$0xff]
      %v2239 = vld [vmem:[%s170 + $0xf0] sm:$0xff]
      %v2240 = vld [vmem:[%s170 + $0xf8] sm:$0xff]
      %v2241 = vld [vmem:[%s170 + $0x100] sm:$0xff]
      %v2242 = vld [vmem:[%s170 + $0x108] sm:$0xff]
      %v2243 = vld [vmem:[%s170 + $0x110] sm:$0xff]
      %v2244 = vld [vmem:[%s170 + $0x118] sm:$0xff]
      %v2245 = vld [vmem:[%s170 + $0x120] sm:$0xff]
      %v2246 = vld [vmem:[%s170 + $0x128] sm:$0xff]
      %v2247 = vld [vmem:[%s170 + $0x130] sm:$0xff]
      %v2248 = vld [vmem:[%s170 + $0x138] sm:$0xff]
      %v2249 = vld [vmem:[%s165 + $0x2c] sm:$0xf]
      %v2250 = vld [vmem:[%s165 + $0x30] sm:$0xf]
      %v2251 = vld [vmem:[%s165 + $0x34] sm:$0xf]
      %v2252 = vld [vmem:[%s165 + $0x38] sm:$0xf]
      %v2253 = vld [vmem:[%s165 + $0x3c] sm:$0xf]
      %v2254 = vld [vmem:[%s165 + $0x40] sm:$0xf]
      %v2255 = vld [vmem:[%s165 + $0x44] sm:$0xf]
      %v2256 = vld [vmem:[%s165 + $0x48] sm:$0xf]
      %v2257 = vld [vmem:[%s165 + $0x4c] sm:$0xf]
      %v2258 = vld [vmem:[%s165 + $0x50] sm:$0xf]
      %v2259 = vld [vmem:[%s165 + $0x54] sm:$0xf]
      %v2260 = vld [vmem:[%s165 + $0x58] sm:$0xf]
      %v2261 = vld [vmem:[%s165 + $0x5c] sm:$0xf]
      %v2262 = vld [vmem:[%s165 + $0x60] sm:$0xf]
      %v2263 = vld [vmem:[%s165 + $0x64] sm:$0xf]
      %v2264 = vld [vmem:[%s165 + $0x68] sm:$0xf]
      %v2265 = vld [vmem:[%s165 + $0x6c] sm:$0xf]
      %v2266 = vld [vmem:[%s165 + $0x70] sm:$0xf]
      %v2267 = vld [vmem:[%s165 + $0x74] sm:$0xf]
      %v2268 = vld [vmem:[%s165 + $0x78] sm:$0xf]
      %v2269 = vld [vmem:[%s165 + $0x7c] sm:$0xf]
      %v2270 = vld [vmem:[%s165 + $0x80] sm:$0xf]
      %v2271 = vld [vmem:[%s165 + $0x84] sm:$0xf]
      %v2272 = vld [vmem:[%s165 + $0x88] sm:$0xf]
      %v2273 = vld [vmem:[%s165 + $0x8c] sm:$0xf]
      %v2274 = vld [vmem:[%s165 + $0x90] sm:$0xf]
      %v2275 = vld [vmem:[%s165 + $0x94] sm:$0xf]
      %v2276 = vld [vmem:[%s165 + $0x98] sm:$0xf]
      %v2277 = vld [vmem:[%s165 + $0x9c] sm:$0xf]
      %v2278 = vld [vmem:[%s165 + $0xa0] sm:$0xf]
      %v2279 = vld [vmem:[%s165 + $0xa4] sm:$0xf]
      %v2280 = vld [vmem:[%s165 + $0xa8] sm:$0xf]
      %v2281 = vld [vmem:[%s165 + $0xac] sm:$0xf]
      %v2282 = vld [vmem:[%s165 + $0xb0] sm:$0xf]
      %v2283 = vld [vmem:[%s165 + $0xb4] sm:$0xf]
      %v2284 = vld [vmem:[%s165 + $0xb8] sm:$0xf]
      %v2285 = vld [vmem:[%s165 + $0xbc] sm:$0xf]
      %v2286 = vld [vmem:[%s165 + $0xc0] sm:$0xf]
      %v2287 = vld [vmem:[%s165 + $0xc4] sm:$0xf]
      %v2288 = vld [vmem:[%s165 + $0xc8] sm:$0xf]
      %s2289 = scalar_lea.vmem %s1, 48
      %v2290 = vld [vmem:[%s2289] sm:$0xf]
      %v2291 = vld [vmem:[%s2289 + $0x4] sm:$0xf]
      %v2292 = vld [vmem:[%s2289 + $0x8] sm:$0xf]
      %v2333 = vunpack.c.l.b16 %v2249
      %v2334 = vunpack.c.l.b16 %v2250
      %v2335 = vunpack.c.l.b16 %v2251
      %v2336 = vunpack.c.l.b16 %v2252
      %v2337 = vunpack.c.l.b16 %v2253
      %v2338 = vunpack.c.l.b16 %v2254
      %v2339 = vunpack.c.l.b16 %v2255
      %v2340 = vunpack.c.l.b16 %v2256
      %v2341 = vunpack.c.l.b16 %v2257
      %v2342 = vunpack.c.l.b16 %v2258
      %v2343 = vunpack.c.l.b16 %v2259
      %v2344 = vunpack.c.l.b16 %v2260
      %v2345 = vunpack.c.l.b16 %v2261
      %v2346 = vunpack.c.l.b16 %v2262
      %v2347 = vunpack.c.l.b16 %v2263
      %v2348 = vunpack.c.l.b16 %v2264
      %v2349 = vunpack.c.l.b16 %v2265
      %v2350 = vunpack.c.l.b16 %v2266
      %v2351 = vunpack.c.l.b16 %v2267
      %v2352 = vunpack.c.l.b16 %v2268
      %v2353 = vunpack.c.l.b16 %v2269
      %v2354 = vunpack.c.l.b16 %v2270
      %v2355 = vunpack.c.l.b16 %v2271
      %v2356 = vunpack.c.l.b16 %v2272
      %v2357 = vunpack.c.l.b16 %v2273
      %v2358 = vunpack.c.l.b16 %v2274
      %v2359 = vunpack.c.l.b16 %v2275
      %v2360 = vunpack.c.l.b16 %v2276
      %v2361 = vunpack.c.l.b16 %v2277
      %v2362 = vunpack.c.l.b16 %v2278
      %v2363 = vunpack.c.l.b16 %v2279
      %v2364 = vunpack.c.l.b16 %v2280
      %v2365 = vunpack.c.l.b16 %v2281
      %v2366 = vunpack.c.l.b16 %v2282
      %v2367 = vunpack.c.l.b16 %v2283
      %v2368 = vunpack.c.l.b16 %v2284
      %v2369 = vunpack.c.l.b16 %v2285
      %v2370 = vunpack.c.l.b16 %v2286
      %v2371 = vunpack.c.l.b16 %v2287
      %v2372 = vunpack.c.l.b16 %v2288
      %v2373 = vpack.c.b16 %v2334, %v2333
      %v2374 = vpack.c.b16 %v2336, %v2335
      %v2375 = vpack.c.b16 %v2338, %v2337
      %v2376 = vpack.c.b16 %v2340, %v2339
      %v2377 = vpack.c.b16 %v2342, %v2341
      %v2378 = vpack.c.b16 %v2344, %v2343
      %v2379 = vpack.c.b16 %v2346, %v2345
      %v2380 = vpack.c.b16 %v2348, %v2347
      %v2381 = vpack.c.b16 %v2350, %v2349
      %v2382 = vpack.c.b16 %v2352, %v2351
      %v2383 = vpack.c.b16 %v2354, %v2353
      %v2384 = vpack.c.b16 %v2356, %v2355
      %v2385 = vpack.c.b16 %v2358, %v2357
      %v2386 = vpack.c.b16 %v2360, %v2359
      %v2387 = vpack.c.b16 %v2362, %v2361
      %v2388 = vpack.c.b16 %v2364, %v2363
      %v2389 = vpack.c.b16 %v2366, %v2365
      %v2390 = vpack.c.b16 %v2368, %v2367
      %v2391 = vpack.c.b16 %v2370, %v2369
      %v2392 = vpack.c.b16 %v2372, %v2371
      %v2396 = vunpack.c.l.b16 %v2290
      %v2397 = vunpack.c.l.b16 %v2291
      %v2398 = vunpack.c.l.b16 %v2292
      %v2399 = vpack.c.b16 %v2397, %v2396
      %v2400 = vpack.c.b16 %v2398, %v2398
      %v2403 = vsel %vm324, %v2373, 0
      %v2406 = vsel %vm324, %v2374, 0
      %v2409 = vsel %vm324, %v2375, 0
      %v2412 = vsel %vm324, %v2376, 0
      %v2415 = vsel %vm324, %v2377, 0
      %v2418 = vsel %vm324, %v2378, 0
      %v2421 = vsel %vm324, %v2379, 0
      %v2424 = vsel %vm324, %v2380, 0
      %v2427 = vsel %vm324, %v2381, 0
      %v2430 = vsel %vm324, %v2382, 0
      %v2433 = vsel %vm324, %v2383, 0
      %v2436 = vsel %vm324, %v2384, 0
      %v2439 = vsel %vm324, %v2385, 0
      %v2442 = vsel %vm324, %v2386, 0
      %v2445 = vsel %vm324, %v2387, 0
      %v2448 = vsel %vm324, %v2388, 0
      %v2451 = vsel %vm324, %v2389, 0
      %v2454 = vsel %vm324, %v2390, 0
      %v2457 = vsel %vm324, %v2391, 0
      %v2460 = vsel %vm324, %v2392, 0
      %v2463 = vsel %vm385, %v2400, 0
      %2465 = vmatprep.subr.bf16.mxu0 0
      %2466 = vmatpush1.bf16.msra.mxu0 %v2399
      %2467 = vmatprep.subr.bf16.mxu0 0
      %2468 = vmatpush1.bf16.msra.mxu0 %v2463
      %2469 = vmatprep.subr.bf16.mxu0 0
      %2470 = vmatpush1.bf16.msra.mxu0 0
      %2471 = vmatprep.subr.bf16.mxu0 0
      %2472 = vmatpush1.bf16.msra.mxu0 0
      %2473 = vmatprep.subr.bf16.mxu0 0
      %2474 = vmatpush1.bf16.msra.mxu0 0
      %2475 = vmatprep.subr.bf16.mxu0 0
      %2476 = vmatpush1.bf16.msra.mxu0 0
      %2477 = vmatprep.subr.bf16.mxu0 0
      %2478 = vmatpush1.bf16.msra.mxu0 0
      %2479 = vmatprep.subr.bf16.mxu0 0
      %2480 = vmatpush1.bf16.msra.mxu0 0
      %2481 = vmatprep.subr.bf16.mxu0 0
      %2482 = vmatpush1.bf16.msra.mxu0 0
      %2483 = vmatprep.subr.bf16.mxu0 0
      %2484 = vmatpush1.bf16.msra.mxu0 0
      %2485 = vmatprep.subr.bf16.mxu0 0
      %2486 = vmatpush1.bf16.msra.mxu0 0
      %2487 = vmatprep.subr.bf16.mxu0 0
      %2488 = vmatpush1.bf16.msra.mxu0 0
      %2489 = vmatprep.subr.bf16.mxu0 0
      %2490 = vmatpush1.bf16.msra.mxu0 0
      %2491 = vmatprep.subr.bf16.mxu0 0
      %2492 = vmatpush1.bf16.msra.mxu0 0
      %2493 = vmatprep.subr.bf16.mxu0 0
      %2494 = vmatpush1.bf16.msra.mxu0 0
      %2495 = vmatprep.subr.bf16.mxu0 0
      %2496 = vmatpush1.bf16.msra.mxu0 0
      %2497 = vmatprep.mubr.bf16.mxu0 0
      %2498 = vmatmul.mubr.bf16.gmra.mrb[0].mxu0 %v2403
      %v2499 = vpop.f32.mrb[0].mxu0
      %v2500 = vadd.f32 0.0, %v2499
      %v2501 = vpop.f32.mrb[0].mxu0
      %v2502 = vpop.f32.mrb[0].mxu0
      %v2503 = vadd.f32 0.0, %v2502
      %v2504 = vpop.f32.mrb[0].mxu0
      %2505 = vmatprep.mubr.bf16.mxu0 0
      %2506 = vmatmul.mubr.bf16.gmra.mrb[0].mxu0 %v2406
      %v2507 = vpop.f32.mrb[0].mxu0
      %v2508 = vadd.f32 0.0, %v2507
      %v2509 = vpop.f32.mrb[0].mxu0
      %v2510 = vpop.f32.mrb[0].mxu0
      %v2511 = vadd.f32 0.0, %v2510
      %v2512 = vpop.f32.mrb[0].mxu0
      %2513 = vmatprep.mubr.bf16.mxu0 0
      %2514 = vmatmul.mubr.bf16.gmra.mrb[0].mxu0 %v2409
      %v2515 = vpop.f32.mrb[0].mxu0
      %v2516 = vadd.f32 0.0, %v2515
      %v2517 = vpop.f32.mrb[0].mxu0
      %v2518 = vpop.f32.mrb[0].mxu0
      %v2519 = vadd.f32 0.0, %v2518
      %v2520 = vpop.f32.mrb[0].mxu0
      %2521 = vmatprep.mubr.bf16.mxu0 0
      %2522 = vmatmul.mubr.bf16.gmra.mrb[0].mxu0 %v2412
      %v2523 = vpop.f32.mrb[0].mxu0
      %v2524 = vadd.f32 0.0, %v2523
      %v2525 = vpop.f32.mrb[0].mxu0
      %v2526 = vpop.f32.mrb[0].mxu0
      %v2527 = vadd.f32 0.0, %v2526
      %v2528 = vpop.f32.mrb[0].mxu0
      %2529 = vmatprep.mubr.bf16.mxu0 0
      %2530 = vmatmul.mubr.bf16.gmra.mrb[0].mxu0 %v2415
      %v2531 = vpop.f32.mrb[0].mxu0
      %v2532 = vadd.f32 0.0, %v2531
      %v2533 = vpop.f32.mrb[0].mxu0
      %v2534 = vpop.f32.mrb[0].mxu0
      %v2535 = vadd.f32 0.0, %v2534
      %v2536 = vpop.f32.mrb[0].mxu0
      %2537 = vmatprep.mubr.bf16.mxu0 0
      %2538 = vmatmul.mubr.bf16.gmra.mrb[0].mxu0 %v2418
      %v2539 = vpop.f32.mrb[0].mxu0
      %v2540 = vadd.f32 0.0, %v2539
      %v2541 = vpop.f32.mrb[0].mxu0
      %v2542 = vpop.f32.mrb[0].mxu0
      %v2543 = vadd.f32 0.0, %v2542
      %v2544 = vpop.f32.mrb[0].mxu0
      %2545 = vmatprep.mubr.bf16.mxu0 0
      %2546 = vmatmul.mubr.bf16.gmra.mrb[0].mxu0 %v2421
      %v2547 = vpop.f32.mrb[0].mxu0
      %v2548 = vadd.f32 0.0, %v2547
      %v2549 = vpop.f32.mrb[0].mxu0
      %v2550 = vpop.f32.mrb[0].mxu0
      %v2551 = vadd.f32 0.0, %v2550
      %v2552 = vpop.f32.mrb[0].mxu0
      %2553 = vmatprep.mubr.bf16.mxu0 0
      %2554 = vmatmul.mubr.bf16.gmra.mrb[0].mxu0 %v2424
      %v2555 = vpop.f32.mrb[0].mxu0
      %v2556 = vadd.f32 0.0, %v2555
      %v2557 = vpop.f32.mrb[0].mxu0
      %v2558 = vpop.f32.mrb[0].mxu0
      %v2559 = vadd.f32 0.0, %v2558
      %v2560 = vpop.f32.mrb[0].mxu0
      %2561 = vmatprep.mubr.bf16.mxu0 0
      %2562 = vmatmul.mubr.bf16.gmra.mrb[0].mxu0 %v2427
      %v2563 = vpop.f32.mrb[0].mxu0
      %v2564 = vadd.f32 0.0, %v2563
      %v2565 = vpop.f32.mrb[0].mxu0
      %v2566 = vpop.f32.mrb[0].mxu0
      %v2567 = vadd.f32 0.0, %v2566
      %v2568 = vpop.f32.mrb[0].mxu0
      %2569 = vmatprep.mubr.bf16.mxu0 0
      %2570 = vmatmul.mubr.bf16.gmra.mrb[0].mxu0 %v2430
      %v2571 = vpop.f32.mrb[0].mxu0
      %v2572 = vadd.f32 0.0, %v2571
      %v2573 = vpop.f32.mrb[0].mxu0
      %v2574 = vpop.f32.mrb[0].mxu0
      %v2575 = vadd.f32 0.0, %v2574
      %v2576 = vpop.f32.mrb[0].mxu0
      %2577 = vmatprep.mubr.bf16.mxu0 0
      %2578 = vmatmul.mubr.bf16.gmra.mrb[0].mxu0 %v2433
      %v2579 = vpop.f32.mrb[0].mxu0
      %v2580 = vadd.f32 0.0, %v2579
      %v2581 = vpop.f32.mrb[0].mxu0
      %v2582 = vpop.f32.mrb[0].mxu0
      %v2583 = vadd.f32 0.0, %v2582
      %v2584 = vpop.f32.mrb[0].mxu0
      %2585 = vmatprep.mubr.bf16.mxu0 0
      %2586 = vmatmul.mubr.bf16.gmra.mrb[0].mxu0 %v2436
      %v2587 = vpop.f32.mrb[0].mxu0
      %v2588 = vadd.f32 0.0, %v2587
      %v2589 = vpop.f32.mrb[0].mxu0
      %v2590 = vpop.f32.mrb[0].mxu0
      %v2591 = vadd.f32 0.0, %v2590
      %v2592 = vpop.f32.mrb[0].mxu0
      %2593 = vmatprep.mubr.bf16.mxu0 0
      %2594 = vmatmul.mubr.bf16.gmra.mrb[0].mxu0 %v2439
      %v2595 = vpop.f32.mrb[0].mxu0
      %v2596 = vadd.f32 0.0, %v2595
      %v2597 = vpop.f32.mrb[0].mxu0
      %v2598 = vpop.f32.mrb[0].mxu0
      %v2599 = vadd.f32 0.0, %v2598
      %v2600 = vpop.f32.mrb[0].mxu0
      %2601 = vmatprep.mubr.bf16.mxu0 0
      %2602 = vmatmul.mubr.bf16.gmra.mrb[0].mxu0 %v2442
      %v2603 = vpop.f32.mrb[0].mxu0
      %v2604 = vadd.f32 0.0, %v2603
      %v2605 = vpop.f32.mrb[0].mxu0
      %v2606 = vpop.f32.mrb[0].mxu0
      %v2607 = vadd.f32 0.0, %v2606
      %v2608 = vpop.f32.mrb[0].mxu0
      %2609 = vmatprep.mubr.bf16.mxu0 0
      %2610 = vmatmul.mubr.bf16.gmra.mrb[0].mxu0 %v2445
      %v2611 = vpop.f32.mrb[0].mxu0
      %v2612 = vadd.f32 0.0, %v2611
      %v2613 = vpop.f32.mrb[0].mxu0
      %v2614 = vpop.f32.mrb[0].mxu0
      %v2615 = vadd.f32 0.0, %v2614
      %v2616 = vpop.f32.mrb[0].mxu0
      %2617 = vmatprep.mubr.bf16.mxu0 0
      %2618 = vmatmul.mubr.bf16.gmra.mrb[0].mxu0 %v2448
      %v2619 = vpop.f32.mrb[0].mxu0
      %v2620 = vadd.f32 0.0, %v2619
      %v2621 = vpop.f32.mrb[0].mxu0
      %v2622 = vpop.f32.mrb[0].mxu0
      %v2623 = vadd.f32 0.0, %v2622
      %v2624 = vpop.f32.mrb[0].mxu0
      %2625 = vmatprep.mubr.bf16.mxu0 0
      %2626 = vmatmul.mubr.bf16.gmra.mrb[0].mxu0 %v2451
      %v2627 = vpop.f32.mrb[0].mxu0
      %v2628 = vadd.f32 0.0, %v2627
      %v2629 = vpop.f32.mrb[0].mxu0
      %v2630 = vpop.f32.mrb[0].mxu0
      %v2631 = vadd.f32 0.0, %v2630
      %v2632 = vpop.f32.mrb[0].mxu0
      %2633 = vmatprep.mubr.bf16.mxu0 0
      %2634 = vmatmul.mubr.bf16.gmra.mrb[0].mxu0 %v2454
      %v2635 = vpop.f32.mrb[0].mxu0
      %v2636 = vadd.f32 0.0, %v2635
      %v2637 = vpop.f32.mrb[0].mxu0
      %v2638 = vpop.f32.mrb[0].mxu0
      %v2639 = vadd.f32 0.0, %v2638
      %v2640 = vpop.f32.mrb[0].mxu0
      %2641 = vmatprep.mubr.bf16.mxu0 0
      %2642 = vmatmul.mubr.bf16.gmra.mrb[0].mxu0 %v2457
      %v2643 = vpop.f32.mrb[0].mxu0
      %v2644 = vadd.f32 0.0, %v2643
      %v2645 = vpop.f32.mrb[0].mxu0
      %v2646 = vpop.f32.mrb[0].mxu0
      %v2647 = vadd.f32 0.0, %v2646
      %v2648 = vpop.f32.mrb[0].mxu0
      %2649 = vmatprep.mubr.bf16.mxu0 0
      %2650 = vmatmul.mubr.bf16.gmra.mrb[0].mxu0 %v2460
      %v2651 = vpop.f32.mrb[0].mxu0
      %v2652 = vadd.f32 0.0, %v2651
      %v2653 = vpop.f32.mrb[0].mxu0
      %v2654 = vpop.f32.mrb[0].mxu0
      %v2655 = vadd.f32 0.0, %v2654
      %v2656 = vpop.f32.mrb[0].mxu0
      %2657 = vdwg.mxu0
      %v2658 = vadd.f32 %v2209, %v2500
      %v2659 = vadd.f32 %v2210, %v2503
      %v2660 = vadd.f32 %v2211, %v2508
      %v2661 = vadd.f32 %v2212, %v2511
      %v2662 = vadd.f32 %v2213, %v2516
      %v2663 = vadd.f32 %v2214, %v2519
      %v2664 = vadd.f32 %v2215, %v2524
      %v2665 = vadd.f32 %v2216, %v2527
      %v2666 = vadd.f32 %v2217, %v2532
      %v2667 = vadd.f32 %v2218, %v2535
      %v2668 = vadd.f32 %v2219, %v2540
      %v2669 = vadd.f32 %v2220, %v2543
      %v2670 = vadd.f32 %v2221, %v2548
      %v2671 = vadd.f32 %v2222, %v2551
      %v2672 = vadd.f32 %v2223, %v2556
      %v2673 = vadd.f32 %v2224, %v2559
      %v2674 = vadd.f32 %v2225, %v2564
      %v2675 = vadd.f32 %v2226, %v2567
      %v2676 = vadd.f32 %v2227, %v2572
      %v2677 = vadd.f32 %v2228, %v2575
      %v2678 = vadd.f32 %v2229, %v2580
      %v2679 = vadd.f32 %v2230, %v2583
      %v2680 = vadd.f32 %v2231, %v2588
      %v2681 = vadd.f32 %v2232, %v2591
      %v2682 = vadd.f32 %v2233, %v2596
      %v2683 = vadd.f32 %v2234, %v2599
      %v2684 = vadd.f32 %v2235, %v2604
      %v2685 = vadd.f32 %v2236, %v2607
      %v2686 = vadd.f32 %v2237, %v2612
      %v2687 = vadd.f32 %v2238, %v2615
      %v2688 = vadd.f32 %v2239, %v2620
      %v2689 = vadd.f32 %v2240, %v2623
      %v2690 = vadd.f32 %v2241, %v2628
      %v2691 = vadd.f32 %v2242, %v2631
      %v2692 = vadd.f32 %v2243, %v2636
      %v2693 = vadd.f32 %v2244, %v2639
      %v2694 = vadd.f32 %v2245, %v2644
      %v2695 = vadd.f32 %v2246, %v2647
      %v2696 = vadd.f32 %v2247, %v2652
      %v2697 = vadd.f32 %v2248, %v2655
      %2698 = vst [vmem:[%s170] sm:$0xff] %v2658
      %2699 = vst [vmem:[%s170 + $0x8] sm:$0xff] %v2659
      %2700 = vst [vmem:[%s170 + $0x10] sm:$0xff] %v2660
      %2701 = vst [vmem:[%s170 + $0x18] sm:$0xff] %v2661
      %2702 = vst [vmem:[%s170 + $0x20] sm:$0xff] %v2662
      %2703 = vst [vmem:[%s170 + $0x28] sm:$0xff] %v2663
      %2704 = vst [vmem:[%s170 + $0x30] sm:$0xff] %v2664
      %2705 = vst [vmem:[%s170 + $0x38] sm:$0xff] %v2665
      %2706 = vst [vmem:[%s170 + $0x40] sm:$0xff] %v2666
      %2707 = vst [vmem:[%s170 + $0x48] sm:$0xff] %v2667
      %2708 = vst [vmem:[%s170 + $0x50] sm:$0xff] %v2668
      %2709 = vst [vmem:[%s170 + $0x58] sm:$0xff] %v2669
      %2710 = vst [vmem:[%s170 + $0x60] sm:$0xff] %v2670
      %2711 = vst [vmem:[%s170 + $0x68] sm:$0xff] %v2671
      %2712 = vst [vmem:[%s170 + $0x70] sm:$0xff] %v2672
      %2713 = vst [vmem:[%s170 + $0x78] sm:$0xff] %v2673
      %2714 = vst [vmem:[%s170 + $0x80] sm:$0xff] %v2674
      %2715 = vst [vmem:[%s170 + $0x88] sm:$0xff] %v2675
      %2716 = vst [vmem:[%s170 + $0x90] sm:$0xff] %v2676
      %2717 = vst [vmem:[%s170 + $0x98] sm:$0xff] %v2677
      %2718 = vst [vmem:[%s170 + $0xa0] sm:$0xff] %v2678
      %2719 = vst [vmem:[%s170 + $0xa8] sm:$0xff] %v2679
      %2720 = vst [vmem:[%s170 + $0xb0] sm:$0xff] %v2680
      %2721 = vst [vmem:[%s170 + $0xb8] sm:$0xff] %v2681
      %2722 = vst [vmem:[%s170 + $0xc0] sm:$0xff] %v2682
      %2723 = vst [vmem:[%s170 + $0xc8] sm:$0xff] %v2683
      %2724 = vst [vmem:[%s170 + $0xd0] sm:$0xff] %v2684
      %2725 = vst [vmem:[%s170 + $0xd8] sm:$0xff] %v2685
      %2726 = vst [vmem:[%s170 + $0xe0] sm:$0xff] %v2686
      %2727 = vst [vmem:[%s170 + $0xe8] sm:$0xff] %v2687
      %2728 = vst [vmem:[%s170 + $0xf0] sm:$0xff] %v2688
      %2729 = vst [vmem:[%s170 + $0xf8] sm:$0xff] %v2689
      %2730 = vst [vmem:[%s170 + $0x100] sm:$0xff] %v2690
      %2731 = vst [vmem:[%s170 + $0x108] sm:$0xff] %v2691
      %2732 = vst [vmem:[%s170 + $0x110] sm:$0xff] %v2692
      %2733 = vst [vmem:[%s170 + $0x118] sm:$0xff] %v2693
      %2734 = vst [vmem:[%s170 + $0x120] sm:$0xff] %v2694
      %2735 = vst [vmem:[%s170 + $0x128] sm:$0xff] %v2695
      %2736 = vst [vmem:[%s170 + $0x130] sm:$0xff] %v2696
      %2737 = vst [vmem:[%s170 + $0x138] sm:$0xff] %v2697
      %v2738 = vld [vmem:[%s170] sm:$0xff]
      %v2739 = vld [vmem:[%s170 + $0x8] sm:$0xff]
      %v2740 = vld [vmem:[%s170 + $0x10] sm:$0xff]
      %v2741 = vld [vmem:[%s170 + $0x18] sm:$0xff]
      %v2742 = vld [vmem:[%s170 + $0x20] sm:$0xff]
      %v2743 = vld [vmem:[%s170 + $0x28] sm:$0xff]
      %v2744 = vld [vmem:[%s170 + $0x30] sm:$0xff]
      %v2745 = vld [vmem:[%s170 + $0x38] sm:$0xff]
      %v2746 = vld [vmem:[%s170 + $0x40] sm:$0xff]
      %v2747 = vld [vmem:[%s170 + $0x48] sm:$0xff]
      %v2748 = vld [vmem:[%s170 + $0x50] sm:$0xff]
      %v2749 = vld [vmem:[%s170 + $0x58] sm:$0xff]
      %v2750 = vld [vmem:[%s170 + $0x60] sm:$0xff]
      %v2751 = vld [vmem:[%s170 + $0x68] sm:$0xff]
      %v2752 = vld [vmem:[%s170 + $0x70] sm:$0xff]
      %v2753 = vld [vmem:[%s170 + $0x78] sm:$0xff]
      %v2754 = vld [vmem:[%s170 + $0x80] sm:$0xff]
      %v2755 = vld [vmem:[%s170 + $0x88] sm:$0xff]
      %v2756 = vld [vmem:[%s170 + $0x90] sm:$0xff]
      %v2757 = vld [vmem:[%s170 + $0x98] sm:$0xff]
      %v2758 = vld [vmem:[%s170 + $0xa0] sm:$0xff]
      %v2759 = vld [vmem:[%s170 + $0xa8] sm:$0xff]
      %v2760 = vld [vmem:[%s170 + $0xb0] sm:$0xff]
      %v2761 = vld [vmem:[%s170 + $0xb8] sm:$0xff]
      %v2762 = vld [vmem:[%s170 + $0xc0] sm:$0xff]
      %v2763 = vld [vmem:[%s170 + $0xc8] sm:$0xff]
      %v2764 = vld [vmem:[%s170 + $0xd0] sm:$0xff]
      %v2765 = vld [vmem:[%s170 + $0xd8] sm:$0xff]
      %v2766 = vld [vmem:[%s170 + $0xe0] sm:$0xff]
      %v2767 = vld [vmem:[%s170 + $0xe8] sm:$0xff]
      %v2768 = vld [vmem:[%s170 + $0xf0] sm:$0xff]
      %v2769 = vld [vmem:[%s170 + $0xf8] sm:$0xff]
      %v2770 = vld [vmem:[%s170 + $0x100] sm:$0xff]
      %v2771 = vld [vmem:[%s170 + $0x108] sm:$0xff]
      %v2772 = vld [vmem:[%s170 + $0x110] sm:$0xff]
      %v2773 = vld [vmem:[%s170 + $0x118] sm:$0xff]
      %v2774 = vld [vmem:[%s170 + $0x120] sm:$0xff]
      %v2775 = vld [vmem:[%s170 + $0x128] sm:$0xff]
      %v2776 = vld [vmem:[%s170 + $0x130] sm:$0xff]
      %v2777 = vld [vmem:[%s170 + $0x138] sm:$0xff]
      %v2778 = vld [vmem:[%s165 + $0x30] sm:$0xf]
      %v2779 = vld [vmem:[%s165 + $0x34] sm:$0xf]
      %v2780 = vld [vmem:[%s165 + $0x38] sm:$0xf]
      %v2781 = vld [vmem:[%s165 + $0x3c] sm:$0xf]
      %v2782 = vld [vmem:[%s165 + $0x40] sm:$0xf]
      %v2783 = vld [vmem:[%s165 + $0x44] sm:$0xf]
      %v2784 = vld [vmem:[%s165 + $0x48] sm:$0xf]
      %v2785 = vld [vmem:[%s165 + $0x4c] sm:$0xf]
      %v2786 = vld [vmem:[%s165 + $0x50] sm:$0xf]
      %v2787 = vld [vmem:[%s165 + $0x54] sm:$0xf]
      %v2788 = vld [vmem:[%s165 + $0x58] sm:$0xf]
      %v2789 = vld [vmem:[%s165 + $0x5c] sm:$0xf]
      %v2790 = vld [vmem:[%s165 + $0x60] sm:$0xf]
      %v2791 = vld [vmem:[%s165 + $0x64] sm:$0xf]
      %v2792 = vld [vmem:[%s165 + $0x68] sm:$0xf]
      %v2793 = vld [vmem:[%s165 + $0x6c] sm:$0xf]
      %v2794 = vld [vmem:[%s165 + $0x70] sm:$0xf]
      %v2795 = vld [vmem:[%s165 + $0x74] sm:$0xf]
      %v2796 = vld [vmem:[%s165 + $0x78] sm:$0xf]
      %v2797 = vld [vmem:[%s165 + $0x7c] sm:$0xf]
      %v2798 = vld [vmem:[%s165 + $0x80] sm:$0xf]
      %v2799 = vld [vmem:[%s165 + $0x84] sm:$0xf]
      %v2800 = vld [vmem:[%s165 + $0x88] sm:$0xf]
      %v2801 = vld [vmem:[%s165 + $0x8c] sm:$0xf]
      %v2802 = vld [vmem:[%s165 + $0x90] sm:$0xf]
      %v2803 = vld [vmem:[%s165 + $0x94] sm:$0xf]
      %v2804 = vld [vmem:[%s165 + $0x98] sm:$0xf]
      %v2805 = vld [vmem:[%s165 + $0x9c] sm:$0xf]
      %v2806 = vld [vmem:[%s165 + $0xa0] sm:$0xf]
      %v2807 = vld [vmem:[%s165 + $0xa4] sm:$0xf]
      %v2808 = vld [vmem:[%s165 + $0xa8] sm:$0xf]
      %v2809 = vld [vmem:[%s165 + $0xac] sm:$0xf]
      %v2810 = vld [vmem:[%s165 + $0xb0] sm:$0xf]
      %v2811 = vld [vmem:[%s165 + $0xb4] sm:$0xf]
      %v2812 = vld [vmem:[%s165 + $0xb8] sm:$0xf]
      %v2813 = vld [vmem:[%s165 + $0xbc] sm:$0xf]
      %v2814 = vld [vmem:[%s165 + $0xc0] sm:$0xf]
      %v2815 = vld [vmem:[%s165 + $0xc4] sm:$0xf]
      %v2816 = vld [vmem:[%s165 + $0xc8] sm:$0xf]
      %v2817 = vld [vmem:[%s165 + $0xcc] sm:$0xf]
      %s2818 = scalar_lea.vmem %s1, 60
      %v2819 = vld [vmem:[%s2818] sm:$0xf]
      %v2820 = vld [vmem:[%s2818 + $0x4] sm:$0xf]
      %v2821 = vld [vmem:[%s2818 + $0x8] sm:$0xf]
      %v2862 = vunpack.c.l.b16 %v2778
      %v2863 = vunpack.c.l.b16 %v2779
      %v2864 = vunpack.c.l.b16 %v2780
      %v2865 = vunpack.c.l.b16 %v2781
      %v2866 = vunpack.c.l.b16 %v2782
      %v2867 = vunpack.c.l.b16 %v2783
      %v2868 = vunpack.c.l.b16 %v2784
      %v2869 = vunpack.c.l.b16 %v2785
      %v2870 = vunpack.c.l.b16 %v2786
      %v2871 = vunpack.c.l.b16 %v2787
      %v2872 = vunpack.c.l.b16 %v2788
      %v2873 = vunpack.c.l.b16 %v2789
      %v2874 = vunpack.c.l.b16 %v2790
      %v2875 = vunpack.c.l.b16 %v2791
      %v2876 = vunpack.c.l.b16 %v2792
      %v2877 = vunpack.c.l.b16 %v2793
      %v2878 = vunpack.c.l.b16 %v2794
      %v2879 = vunpack.c.l.b16 %v2795
      %v2880 = vunpack.c.l.b16 %v2796
      %v2881 = vunpack.c.l.b16 %v2797
      %v2882 = vunpack.c.l.b16 %v2798
      %v2883 = vunpack.c.l.b16 %v2799
      %v2884 = vunpack.c.l.b16 %v2800
      %v2885 = vunpack.c.l.b16 %v2801
      %v2886 = vunpack.c.l.b16 %v2802
      %v2887 = vunpack.c.l.b16 %v2803
      %v2888 = vunpack.c.l.b16 %v2804
      %v2889 = vunpack.c.l.b16 %v2805
      %v2890 = vunpack.c.l.b16 %v2806
      %v2891 = vunpack.c.l.b16 %v2807
      %v2892 = vunpack.c.l.b16 %v2808
      %v2893 = vunpack.c.l.b16 %v2809
      %v2894 = vunpack.c.l.b16 %v2810
      %v2895 = vunpack.c.l.b16 %v2811
      %v2896 = vunpack.c.l.b16 %v2812
      %v2897 = vunpack.c.l.b16 %v2813
      %v2898 = vunpack.c.l.b16 %v2814
      %v2899 = vunpack.c.l.b16 %v2815
      %v2900 = vunpack.c.l.b16 %v2816
      %v2901 = vunpack.c.l.b16 %v2817
      %v2902 = vpack.c.b16 %v2863, %v2862
      %v2903 = vpack.c.b16 %v2865, %v2864
      %v2904 = vpack.c.b16 %v2867, %v2866
      %v2905 = vpack.c.b16 %v2869, %v2868
      %v2906 = vpack.c.b16 %v2871, %v2870
      %v2907 = vpack.c.b16 %v2873, %v2872
      %v2908 = vpack.c.b16 %v2875, %v2874
      %v2909 = vpack.c.b16 %v2877, %v2876
      %v2910 = vpack.c.b16 %v2879, %v2878
      %v2911 = vpack.c.b16 %v2881, %v2880
      %v2912 = vpack.c.b16 %v2883, %v2882
      %v2913 = vpack.c.b16 %v2885, %v2884
      %v2914 = vpack.c.b16 %v2887, %v2886
      %v2915 = vpack.c.b16 %v2889, %v2888
      %v2916 = vpack.c.b16 %v2891, %v2890
      %v2917 = vpack.c.b16 %v2893, %v2892
      %v2918 = vpack.c.b16 %v2895, %v2894
      %v2919 = vpack.c.b16 %v2897, %v2896
      %v2920 = vpack.c.b16 %v2899, %v2898
      %v2921 = vpack.c.b16 %v2901, %v2900
      %v2925 = vunpack.c.l.b16 %v2819
      %v2926 = vunpack.c.l.b16 %v2820
      %v2927 = vunpack.c.l.b16 %v2821
      %v2928 = vpack.c.b16 %v2926, %v2925
      %v2929 = vpack.c.b16 %v2927, %v2927
      %v2932 = vsel %vm324, %v2902, 0
      %v2935 = vsel %vm324, %v2903, 0
      %v2938 = vsel %vm324, %v2904, 0
      %v2941 = vsel %vm324, %v2905, 0
      %v2944 = vsel %vm324, %v2906, 0
      %v2947 = vsel %vm324, %v2907, 0
      %v2950 = vsel %vm324, %v2908, 0
      %v2953 = vsel %vm324, %v2909, 0
      %v2956 = vsel %vm324, %v2910, 0
      %v2959 = vsel %vm324, %v2911, 0
      %v2962 = vsel %vm324, %v2912, 0
      %v2965 = vsel %vm324, %v2913, 0
      %v2968 = vsel %vm324, %v2914, 0
      %v2971 = vsel %vm324, %v2915, 0
      %v2974 = vsel %vm324, %v2916, 0
      %v2977 = vsel %vm324, %v2917, 0
      %v2980 = vsel %vm324, %v2918, 0
      %v2983 = vsel %vm324, %v2919, 0
      %v2986 = vsel %vm324, %v2920, 0
      %v2989 = vsel %vm324, %v2921, 0
      %v2992 = vsel %vm385, %v2929, 0
      %2994 = vmatprep.subr.bf16.mxu0 0
      %2995 = vmatpush1.bf16.msra.mxu0 %v2928
      %2996 = vmatprep.subr.bf16.mxu0 0
      %2997 = vmatpush1.bf16.msra.mxu0 %v2992
      %2998 = vmatprep.subr.bf16.mxu0 0
      %2999 = vmatpush1.bf16.msra.mxu0 0
      %3000 = vmatprep.subr.bf16.mxu0 0
      %3001 = vmatpush1.bf16.msra.mxu0 0
      %3002 = vmatprep.subr.bf16.mxu0 0
      %3003 = vmatpush1.bf16.msra.mxu0 0
      %3004 = vmatprep.subr.bf16.mxu0 0
      %3005 = vmatpush1.bf16.msra.mxu0 0
      %3006 = vmatprep.subr.bf16.mxu0 0
      %3007 = vmatpush1.bf16.msra.mxu0 0
      %3008 = vmatprep.subr.bf16.mxu0 0
      %3009 = vmatpush1.bf16.msra.mxu0 0
      %3010 = vmatprep.subr.bf16.mxu0 0
      %3011 = vmatpush1.bf16.msra.mxu0 0
      %3012 = vmatprep.subr.bf16.mxu0 0
      %3013 = vmatpush1.bf16.msra.mxu0 0
      %3014 = vmatprep.subr.bf16.mxu0 0
      %3015 = vmatpush1.bf16.msra.mxu0 0
      %3016 = vmatprep.subr.bf16.mxu0 0
      %3017 = vmatpush1.bf16.msra.mxu0 0
      %3018 = vmatprep.subr.bf16.mxu0 0
      %3019 = vmatpush1.bf16.msra.mxu0 0
      %3020 = vmatprep.subr.bf16.mxu0 0
      %3021 = vmatpush1.bf16.msra.mxu0 0
      %3022 = vmatprep.subr.bf16.mxu0 0
      %3023 = vmatpush1.bf16.msra.mxu0 0
      %3024 = vmatprep.subr.bf16.mxu0 0
      %3025 = vmatpush1.bf16.msra.mxu0 0
      %3026 = vmatprep.mubr.bf16.mxu0 0
      %3027 = vmatmul.mubr.bf16.gmra.mrb[0].mxu0 %v2932
      %v3028 = vpop.f32.mrb[0].mxu0
      %v3029 = vadd.f32 0.0, %v3028
      %v3030 = vpop.f32.mrb[0].mxu0
      %v3031 = vpop.f32.mrb[0].mxu0
      %v3032 = vadd.f32 0.0, %v3031
      %v3033 = vpop.f32.mrb[0].mxu0
      %3034 = vmatprep.mubr.bf16.mxu0 0
      %3035 = vmatmul.mubr.bf16.gmra.mrb[0].mxu0 %v2935
      %v3036 = vpop.f32.mrb[0].mxu0
      %v3037 = vadd.f32 0.0, %v3036
      %v3038 = vpop.f32.mrb[0].mxu0
      %v3039 = vpop.f32.mrb[0].mxu0
      %v3040 = vadd.f32 0.0, %v3039
      %v3041 = vpop.f32.mrb[0].mxu0
      %3042 = vmatprep.mubr.bf16.mxu0 0
      %3043 = vmatmul.mubr.bf16.gmra.mrb[0].mxu0 %v2938
      %v3044 = vpop.f32.mrb[0].mxu0
      %v3045 = vadd.f32 0.0, %v3044
      %v3046 = vpop.f32.mrb[0].mxu0
      %v3047 = vpop.f32.mrb[0].mxu0
      %v3048 = vadd.f32 0.0, %v3047
      %v3049 = vpop.f32.mrb[0].mxu0
      %3050 = vmatprep.mubr.bf16.mxu0 0
      %3051 = vmatmul.mubr.bf16.gmra.mrb[0].mxu0 %v2941
      %v3052 = vpop.f32.mrb[0].mxu0
      %v3053 = vadd.f32 0.0, %v3052
      %v3054 = vpop.f32.mrb[0].mxu0
      %v3055 = vpop.f32.mrb[0].mxu0
      %v3056 = vadd.f32 0.0, %v3055
      %v3057 = vpop.f32.mrb[0].mxu0
      %3058 = vmatprep.mubr.bf16.mxu0 0
      %3059 = vmatmul.mubr.bf16.gmra.mrb[0].mxu0 %v2944
      %v3060 = vpop.f32.mrb[0].mxu0
      %v3061 = vadd.f32 0.0, %v3060
      %v3062 = vpop.f32.mrb[0].mxu0
      %v3063 = vpop.f32.mrb[0].mxu0
      %v3064 = vadd.f32 0.0, %v3063
      %v3065 = vpop.f32.mrb[0].mxu0
      %3066 = vmatprep.mubr.bf16.mxu0 0
      %3067 = vmatmul.mubr.bf16.gmra.mrb[0].mxu0 %v2947
      %v3068 = vpop.f32.mrb[0].mxu0
      %v3069 = vadd.f32 0.0, %v3068
      %v3070 = vpop.f32.mrb[0].mxu0
      %v3071 = vpop.f32.mrb[0].mxu0
      %v3072 = vadd.f32 0.0, %v3071
      %v3073 = vpop.f32.mrb[0].mxu0
      %3074 = vmatprep.mubr.bf16.mxu0 0
      %3075 = vmatmul.mubr.bf16.gmra.mrb[0].mxu0 %v2950
      %v3076 = vpop.f32.mrb[0].mxu0
      %v3077 = vadd.f32 0.0, %v3076
      %v3078 = vpop.f32.mrb[0].mxu0
      %v3079 = vpop.f32.mrb[0].mxu0
      %v3080 = vadd.f32 0.0, %v3079
      %v3081 = vpop.f32.mrb[0].mxu0
      %3082 = vmatprep.mubr.bf16.mxu0 0
      %3083 = vmatmul.mubr.bf16.gmra.mrb[0].mxu0 %v2953
      %v3084 = vpop.f32.mrb[0].mxu0
      %v3085 = vadd.f32 0.0, %v3084
      %v3086 = vpop.f32.mrb[0].mxu0
      %v3087 = vpop.f32.mrb[0].mxu0
      %v3088 = vadd.f32 0.0, %v3087
      %v3089 = vpop.f32.mrb[0].mxu0
      %3090 = vmatprep.mubr.bf16.mxu0 0
      %3091 = vmatmul.mubr.bf16.gmra.mrb[0].mxu0 %v2956
      %v3092 = vpop.f32.mrb[0].mxu0
      %v3093 = vadd.f32 0.0, %v3092
      %v3094 = vpop.f32.mrb[0].mxu0
      %v3095 = vpop.f32.mrb[0].mxu0
      %v3096 = vadd.f32 0.0, %v3095
      %v3097 = vpop.f32.mrb[0].mxu0
      %3098 = vmatprep.mubr.bf16.mxu0 0
      %3099 = vmatmul.mubr.bf16.gmra.mrb[0].mxu0 %v2959
      %v3100 = vpop.f32.mrb[0].mxu0
      %v3101 = vadd.f32 0.0, %v3100
      %v3102 = vpop.f32.mrb[0].mxu0
      %v3103 = vpop.f32.mrb[0].mxu0
      %v3104 = vadd.f32 0.0, %v3103
      %v3105 = vpop.f32.mrb[0].mxu0
      %3106 = vmatprep.mubr.bf16.mxu0 0
      %3107 = vmatmul.mubr.bf16.gmra.mrb[0].mxu0 %v2962
      %v3108 = vpop.f32.mrb[0].mxu0
      %v3109 = vadd.f32 0.0, %v3108
      %v3110 = vpop.f32.mrb[0].mxu0
      %v3111 = vpop.f32.mrb[0].mxu0
      %v3112 = vadd.f32 0.0, %v3111
      %v3113 = vpop.f32.mrb[0].mxu0
      %3114 = vmatprep.mubr.bf16.mxu0 0
      %3115 = vmatmul.mubr.bf16.gmra.mrb[0].mxu0 %v2965
      %v3116 = vpop.f32.mrb[0].mxu0
      %v3117 = vadd.f32 0.0, %v3116
      %v3118 = vpop.f32.mrb[0].mxu0
      %v3119 = vpop.f32.mrb[0].mxu0
      %v3120 = vadd.f32 0.0, %v3119
      %v3121 = vpop.f32.mrb[0].mxu0
      %3122 = vmatprep.mubr.bf16.mxu0 0
      %3123 = vmatmul.mubr.bf16.gmra.mrb[0].mxu0 %v2968
      %v3124 = vpop.f32.mrb[0].mxu0
      %v3125 = vadd.f32 0.0, %v3124
      %v3126 = vpop.f32.mrb[0].mxu0
      %v3127 = vpop.f32.mrb[0].mxu0
      %v3128 = vadd.f32 0.0, %v3127
      %v3129 = vpop.f32.mrb[0].mxu0
      %3130 = vmatprep.mubr.bf16.mxu0 0
      %3131 = vmatmul.mubr.bf16.gmra.mrb[0].mxu0 %v2971
      %v3132 = vpop.f32.mrb[0].mxu0
      %v3133 = vadd.f32 0.0, %v3132
      %v3134 = vpop.f32.mrb[0].mxu0
      %v3135 = vpop.f32.mrb[0].mxu0
      %v3136 = vadd.f32 0.0, %v3135
      %v3137 = vpop.f32.mrb[0].mxu0
      %3138 = vmatprep.mubr.bf16.mxu0 0
      %3139 = vmatmul.mubr.bf16.gmra.mrb[0].mxu0 %v2974
      %v3140 = vpop.f32.mrb[0].mxu0
      %v3141 = vadd.f32 0.0, %v3140
      %v3142 = vpop.f32.mrb[0].mxu0
      %v3143 = vpop.f32.mrb[0].mxu0
      %v3144 = vadd.f32 0.0, %v3143
      %v3145 = vpop.f32.mrb[0].mxu0
      %3146 = vmatprep.mubr.bf16.mxu0 0
      %3147 = vmatmul.mubr.bf16.gmra.mrb[0].mxu0 %v2977
      %v3148 = vpop.f32.mrb[0].mxu0
      %v3149 = vadd.f32 0.0, %v3148
      %v3150 = vpop.f32.mrb[0].mxu0
      %v3151 = vpop.f32.mrb[0].mxu0
      %v3152 = vadd.f32 0.0, %v3151
      %v3153 = vpop.f32.mrb[0].mxu0
      %3154 = vmatprep.mubr.bf16.mxu0 0
      %3155 = vmatmul.mubr.bf16.gmra.mrb[0].mxu0 %v2980
      %v3156 = vpop.f32.mrb[0].mxu0
      %v3157 = vadd.f32 0.0, %v3156
      %v3158 = vpop.f32.mrb[0].mxu0
      %v3159 = vpop.f32.mrb[0].mxu0
      %v3160 = vadd.f32 0.0, %v3159
      %v3161 = vpop.f32.mrb[0].mxu0
      %3162 = vmatprep.mubr.bf16.mxu0 0
      %3163 = vmatmul.mubr.bf16.gmra.mrb[0].mxu0 %v2983
      %v3164 = vpop.f32.mrb[0].mxu0
      %v3165 = vadd.f32 0.0, %v3164
      %v3166 = vpop.f32.mrb[0].mxu0
      %v3167 = vpop.f32.mrb[0].mxu0
      %v3168 = vadd.f32 0.0, %v3167
      %v3169 = vpop.f32.mrb[0].mxu0
      %3170 = vmatprep.mubr.bf16.mxu0 0
      %3171 = vmatmul.mubr.bf16.gmra.mrb[0].mxu0 %v2986
      %v3172 = vpop.f32.mrb[0].mxu0
      %v3173 = vadd.f32 0.0, %v3172
      %v3174 = vpop.f32.mrb[0].mxu0
      %v3175 = vpop.f32.mrb[0].mxu0
      %v3176 = vadd.f32 0.0, %v3175
      %v3177 = vpop.f32.mrb[0].mxu0
      %3178 = vmatprep.mubr.bf16.mxu0 0
      %3179 = vmatmul.mubr.bf16.gmra.mrb[0].mxu0 %v2989
      %v3180 = vpop.f32.mrb[0].mxu0
      %v3181 = vadd.f32 0.0, %v3180
      %v3182 = vpop.f32.mrb[0].mxu0
      %v3183 = vpop.f32.mrb[0].mxu0
      %v3184 = vadd.f32 0.0, %v3183
      %v3185 = vpop.f32.mrb[0].mxu0
      %3186 = vdwg.mxu0
      %v3187 = vadd.f32 %v2738, %v3029
      %v3188 = vadd.f32 %v2739, %v3032
      %v3189 = vadd.f32 %v2740, %v3037
      %v3190 = vadd.f32 %v2741, %v3040
      %v3191 = vadd.f32 %v2742, %v3045
      %v3192 = vadd.f32 %v2743, %v3048
      %v3193 = vadd.f32 %v2744, %v3053
      %v3194 = vadd.f32 %v2745, %v3056
      %v3195 = vadd.f32 %v2746, %v3061
      %v3196 = vadd.f32 %v2747, %v3064
      %v3197 = vadd.f32 %v2748, %v3069
      %v3198 = vadd.f32 %v2749, %v3072
      %v3199 = vadd.f32 %v2750, %v3077
      %v3200 = vadd.f32 %v2751, %v3080
      %v3201 = vadd.f32 %v2752, %v3085
      %v3202 = vadd.f32 %v2753, %v3088
      %v3203 = vadd.f32 %v2754, %v3093
      %v3204 = vadd.f32 %v2755, %v3096
      %v3205 = vadd.f32 %v2756, %v3101
      %v3206 = vadd.f32 %v2757, %v3104
      %v3207 = vadd.f32 %v2758, %v3109
      %v3208 = vadd.f32 %v2759, %v3112
      %v3209 = vadd.f32 %v2760, %v3117
      %v3210 = vadd.f32 %v2761, %v3120
      %v3211 = vadd.f32 %v2762, %v3125
      %v3212 = vadd.f32 %v2763, %v3128
      %v3213 = vadd.f32 %v2764, %v3133
      %v3214 = vadd.f32 %v2765, %v3136
      %v3215 = vadd.f32 %v2766, %v3141
      %v3216 = vadd.f32 %v2767, %v3144
      %v3217 = vadd.f32 %v2768, %v3149
      %v3218 = vadd.f32 %v2769, %v3152
      %v3219 = vadd.f32 %v2770, %v3157
      %v3220 = vadd.f32 %v2771, %v3160
      %v3221 = vadd.f32 %v2772, %v3165
      %v3222 = vadd.f32 %v2773, %v3168
      %v3223 = vadd.f32 %v2774, %v3173
      %v3224 = vadd.f32 %v2775, %v3176
      %v3225 = vadd.f32 %v2776, %v3181
      %v3226 = vadd.f32 %v2777, %v3184
      %3227 = vst [vmem:[%s170] sm:$0xff] %v3187
      %3228 = vst [vmem:[%s170 + $0x8] sm:$0xff] %v3188
      %3229 = vst [vmem:[%s170 + $0x10] sm:$0xff] %v3189
      %3230 = vst [vmem:[%s170 + $0x18] sm:$0xff] %v3190
      %3231 = vst [vmem:[%s170 + $0x20] sm:$0xff] %v3191
      %3232 = vst [vmem:[%s170 + $0x28] sm:$0xff] %v3192
      %3233 = vst [vmem:[%s170 + $0x30] sm:$0xff] %v3193
      %3234 = vst [vmem:[%s170 + $0x38] sm:$0xff] %v3194
      %3235 = vst [vmem:[%s170 + $0x40] sm:$0xff] %v3195
      %3236 = vst [vmem:[%s170 + $0x48] sm:$0xff] %v3196
      %3237 = vst [vmem:[%s170 + $0x50] sm:$0xff] %v3197
      %3238 = vst [vmem:[%s170 + $0x58] sm:$0xff] %v3198
      %3239 = vst [vmem:[%s170 + $0x60] sm:$0xff] %v3199
      %3240 = vst [vmem:[%s170 + $0x68] sm:$0xff] %v3200
      %3241 = vst [vmem:[%s170 + $0x70] sm:$0xff] %v3201
      %3242 = vst [vmem:[%s170 + $0x78] sm:$0xff] %v3202
      %3243 = vst [vmem:[%s170 + $0x80] sm:$0xff] %v3203
      %3244 = vst [vmem:[%s170 + $0x88] sm:$0xff] %v3204
      %3245 = vst [vmem:[%s170 + $0x90] sm:$0xff] %v3205
      %3246 = vst [vmem:[%s170 + $0x98] sm:$0xff] %v3206
      %3247 = vst [vmem:[%s170 + $0xa0] sm:$0xff] %v3207
      %3248 = vst [vmem:[%s170 + $0xa8] sm:$0xff] %v3208
      %3249 = vst [vmem:[%s170 + $0xb0] sm:$0xff] %v3209
      %3250 = vst [vmem:[%s170 + $0xb8] sm:$0xff] %v3210
      %3251 = vst [vmem:[%s170 + $0xc0] sm:$0xff] %v3211
      %3252 = vst [vmem:[%s170 + $0xc8] sm:$0xff] %v3212
      %3253 = vst [vmem:[%s170 + $0xd0] sm:$0xff] %v3213
      %3254 = vst [vmem:[%s170 + $0xd8] sm:$0xff] %v3214
      %3255 = vst [vmem:[%s170 + $0xe0] sm:$0xff] %v3215
      %3256 = vst [vmem:[%s170 + $0xe8] sm:$0xff] %v3216
      %3257 = vst [vmem:[%s170 + $0xf0] sm:$0xff] %v3217
      %3258 = vst [vmem:[%s170 + $0xf8] sm:$0xff] %v3218
      %3259 = vst [vmem:[%s170 + $0x100] sm:$0xff] %v3219
      %3260 = vst [vmem:[%s170 + $0x108] sm:$0xff] %v3220
      %3261 = vst [vmem:[%s170 + $0x110] sm:$0xff] %v3221
      %3262 = vst [vmem:[%s170 + $0x118] sm:$0xff] %v3222
      %3263 = vst [vmem:[%s170 + $0x120] sm:$0xff] %v3223
      %3264 = vst [vmem:[%s170 + $0x128] sm:$0xff] %v3224
      %3265 = vst [vmem:[%s170 + $0x130] sm:$0xff] %v3225
      %3266 = vst [vmem:[%s170 + $0x138] sm:$0xff] %v3226
      %v3267 = vld [vmem:[%s170] sm:$0xff]
      %v3268 = vld [vmem:[%s170 + $0x8] sm:$0xff]
      %v3269 = vld [vmem:[%s170 + $0x10] sm:$0xff]
      %v3270 = vld [vmem:[%s170 + $0x18] sm:$0xff]
      %v3271 = vld [vmem:[%s170 + $0x20] sm:$0xff]
      %v3272 = vld [vmem:[%s170 + $0x28] sm:$0xff]
      %v3273 = vld [vmem:[%s170 + $0x30] sm:$0xff]
      %v3274 = vld [vmem:[%s170 + $0x38] sm:$0xff]
      %v3275 = vld [vmem:[%s170 + $0x40] sm:$0xff]
      %v3276 = vld [vmem:[%s170 + $0x48] sm:$0xff]
      %v3277 = vld [vmem:[%s170 + $0x50] sm:$0xff]
      %v3278 = vld [vmem:[%s170 + $0x58] sm:$0xff]
      %v3279 = vld [vmem:[%s170 + $0x60] sm:$0xff]
      %v3280 = vld [vmem:[%s170 + $0x68] sm:$0xff]
      %v3281 = vld [vmem:[%s170 + $0x70] sm:$0xff]
      %v3282 = vld [vmem:[%s170 + $0x78] sm:$0xff]
      %v3283 = vld [vmem:[%s170 + $0x80] sm:$0xff]
      %v3284 = vld [vmem:[%s170 + $0x88] sm:$0xff]
      %v3285 = vld [vmem:[%s170 + $0x90] sm:$0xff]
      %v3286 = vld [vmem:[%s170 + $0x98] sm:$0xff]
      %v3287 = vld [vmem:[%s170 + $0xa0] sm:$0xff]
      %v3288 = vld [vmem:[%s170 + $0xa8] sm:$0xff]
      %v3289 = vld [vmem:[%s170 + $0xb0] sm:$0xff]
      %v3290 = vld [vmem:[%s170 + $0xb8] sm:$0xff]
      %v3291 = vld [vmem:[%s170 + $0xc0] sm:$0xff]
      %v3292 = vld [vmem:[%s170 + $0xc8] sm:$0xff]
      %v3293 = vld [vmem:[%s170 + $0xd0] sm:$0xff]
      %v3294 = vld [vmem:[%s170 + $0xd8] sm:$0xff]
      %v3295 = vld [vmem:[%s170 + $0xe0] sm:$0xff]
      %v3296 = vld [vmem:[%s170 + $0xe8] sm:$0xff]
      %v3297 = vld [vmem:[%s170 + $0xf0] sm:$0xff]
      %v3298 = vld [vmem:[%s170 + $0xf8] sm:$0xff]
      %v3299 = vld [vmem:[%s170 + $0x100] sm:$0xff]
      %v3300 = vld [vmem:[%s170 + $0x108] sm:$0xff]
      %v3301 = vld [vmem:[%s170 + $0x110] sm:$0xff]
      %v3302 = vld [vmem:[%s170 + $0x118] sm:$0xff]
      %v3303 = vld [vmem:[%s170 + $0x120] sm:$0xff]
      %v3304 = vld [vmem:[%s170 + $0x128] sm:$0xff]
      %v3305 = vld [vmem:[%s170 + $0x130] sm:$0xff]
      %v3306 = vld [vmem:[%s170 + $0x138] sm:$0xff]
      %v3307 = vld [vmem:[%s165 + $0x50] sm:$0xf]
      %v3308 = vld [vmem:[%s165 + $0x54] sm:$0xf]
      %v3309 = vld [vmem:[%s165 + $0x58] sm:$0xf]
      %v3310 = vld [vmem:[%s165 + $0x5c] sm:$0xf]
      %v3311 = vld [vmem:[%s165 + $0x60] sm:$0xf]
      %v3312 = vld [vmem:[%s165 + $0x64] sm:$0xf]
      %v3313 = vld [vmem:[%s165 + $0x68] sm:$0xf]
      %v3314 = vld [vmem:[%s165 + $0x6c] sm:$0xf]
      %v3315 = vld [vmem:[%s165 + $0x70] sm:$0xf]
      %v3316 = vld [vmem:[%s165 + $0x74] sm:$0xf]
      %v3317 = vld [vmem:[%s165 + $0x78] sm:$0xf]
      %v3318 = vld [vmem:[%s165 + $0x7c] sm:$0xf]
      %v3319 = vld [vmem:[%s165 + $0x80] sm:$0xf]
      %v3320 = vld [vmem:[%s165 + $0x84] sm:$0xf]
      %v3321 = vld [vmem:[%s165 + $0x88] sm:$0xf]
      %v3322 = vld [vmem:[%s165 + $0x8c] sm:$0xf]
      %v3323 = vld [vmem:[%s165 + $0x90] sm:$0xf]
      %v3324 = vld [vmem:[%s165 + $0x94] sm:$0xf]
      %v3325 = vld [vmem:[%s165 + $0x98] sm:$0xf]
      %v3326 = vld [vmem:[%s165 + $0x9c] sm:$0xf]
      %v3327 = vld [vmem:[%s165 + $0xa0] sm:$0xf]
      %v3328 = vld [vmem:[%s165 + $0xa4] sm:$0xf]
      %v3329 = vld [vmem:[%s165 + $0xa8] sm:$0xf]
      %v3330 = vld [vmem:[%s165 + $0xac] sm:$0xf]
      %v3331 = vld [vmem:[%s165 + $0xb0] sm:$0xf]
      %v3332 = vld [vmem:[%s165 + $0xb4] sm:$0xf]
      %v3333 = vld [vmem:[%s165 + $0xb8] sm:$0xf]
      %v3334 = vld [vmem:[%s165 + $0xbc] sm:$0xf]
      %v3335 = vld [vmem:[%s165 + $0xc0] sm:$0xf]
      %v3336 = vld [vmem:[%s165 + $0xc4] sm:$0xf]
      %v3337 = vld [vmem:[%s165 + $0xc8] sm:$0xf]
      %v3338 = vld [vmem:[%s165 + $0xcc] sm:$0xf]
      %v3339 = vld [vmem:[%s165 + $0xd0] sm:$0xf]
      %v3340 = vld [vmem:[%s165 + $0xd4] sm:$0xf]
      %v3341 = vld [vmem:[%s165 + $0xd8] sm:$0xf]
      %v3342 = vld [vmem:[%s165 + $0xdc] sm:$0xf]
      %v3343 = vld [vmem:[%s165 + $0xe0] sm:$0xf]
      %v3344 = vld [vmem:[%s165 + $0xe4] sm:$0xf]
      %v3345 = vld [vmem:[%s165 + $0xe8] sm:$0xf]
      %v3346 = vld [vmem:[%s165 + $0xec] sm:$0xf]
      %s3347 = scalar_lea.vmem %s1, 72
      %v3348 = vld [vmem:[%s3347] sm:$0xf]
      %v3349 = vld [vmem:[%s3347 + $0x4] sm:$0xf]
      %v3350 = vld [vmem:[%s3347 + $0x8] sm:$0xf]
      %v3391 = vunpack.c.l.b16 %v3307
      %v3392 = vunpack.c.l.b16 %v3308
      %v3393 = vunpack.c.l.b16 %v3309
      %v3394 = vunpack.c.l.b16 %v3310
      %v3395 = vunpack.c.l.b16 %v3311
      %v3396 = vunpack.c.l.b16 %v3312
      %v3397 = vunpack.c.l.b16 %v3313
      %v3398 = vunpack.c.l.b16 %v3314
      %v3399 = vunpack.c.l.b16 %v3315
      %v3400 = vunpack.c.l.b16 %v3316
      %v3401 = vunpack.c.l.b16 %v3317
      %v3402 = vunpack.c.l.b16 %v3318
      %v3403 = vunpack.c.l.b16 %v3319
      %v3404 = vunpack.c.l.b16 %v3320
      %v3405 = vunpack.c.l.b16 %v3321
      %v3406 = vunpack.c.l.b16 %v3322
      %v3407 = vunpack.c.l.b16 %v3323
      %v3408 = vunpack.c.l.b16 %v3324
      %v3409 = vunpack.c.l.b16 %v3325
      %v3410 = vunpack.c.l.b16 %v3326
      %v3411 = vunpack.c.l.b16 %v3327
      %v3412 = vunpack.c.l.b16 %v3328
      %v3413 = vunpack.c.l.b16 %v3329
      %v3414 = vunpack.c.l.b16 %v3330
      %v3415 = vunpack.c.l.b16 %v3331
      %v3416 = vunpack.c.l.b16 %v3332
      %v3417 = vunpack.c.l.b16 %v3333
      %v3418 = vunpack.c.l.b16 %v3334
      %v3419 = vunpack.c.l.b16 %v3335
      %v3420 = vunpack.c.l.b16 %v3336
      %v3421 = vunpack.c.l.b16 %v3337
      %v3422 = vunpack.c.l.b16 %v3338
      %v3423 = vunpack.c.l.b16 %v3339
      %v3424 = vunpack.c.l.b16 %v3340
      %v3425 = vunpack.c.l.b16 %v3341
      %v3426 = vunpack.c.l.b16 %v3342
      %v3427 = vunpack.c.l.b16 %v3343
      %v3428 = vunpack.c.l.b16 %v3344
      %v3429 = vunpack.c.l.b16 %v3345
      %v3430 = vunpack.c.l.b16 %v3346
      %v3431 = vpack.c.b16 %v3392, %v3391
      %v3432 = vpack.c.b16 %v3394, %v3393
      %v3433 = vpack.c.b16 %v3396, %v3395
      %v3434 = vpack.c.b16 %v3398, %v3397
      %v3435 = vpack.c.b16 %v3400, %v3399
      %v3436 = vpack.c.b16 %v3402, %v3401
      %v3437 = vpack.c.b16 %v3404, %v3403
      %v3438 = vpack.c.b16 %v3406, %v3405
      %v3439 = vpack.c.b16 %v3408, %v3407
      %v3440 = vpack.c.b16 %v3410, %v3409
      %v3441 = vpack.c.b16 %v3412, %v3411
      %v3442 = vpack.c.b16 %v3414, %v3413
      %v3443 = vpack.c.b16 %v3416, %v3415
      %v3444 = vpack.c.b16 %v3418, %v3417
      %v3445 = vpack.c.b16 %v3420, %v3419
      %v3446 = vpack.c.b16 %v3422, %v3421
      %v3447 = vpack.c.b16 %v3424, %v3423
      %v3448 = vpack.c.b16 %v3426, %v3425
      %v3449 = vpack.c.b16 %v3428, %v3427
      %v3450 = vpack.c.b16 %v3430, %v3429
      %v3454 = vunpack.c.l.b16 %v3348
      %v3455 = vunpack.c.l.b16 %v3349
      %v3456 = vunpack.c.l.b16 %v3350
      %v3457 = vpack.c.b16 %v3455, %v3454
      %v3458 = vpack.c.b16 %v3456, %v3456
      %v3461 = vsel %vm324, %v3431, 0
      %v3464 = vsel %vm324, %v3432, 0
      %v3467 = vsel %vm324, %v3433, 0
      %v3470 = vsel %vm324, %v3434, 0
      %v3473 = vsel %vm324, %v3435, 0
      %v3476 = vsel %vm324, %v3436, 0
      %v3479 = vsel %vm324, %v3437, 0
      %v3482 = vsel %vm324, %v3438, 0
      %v3485 = vsel %vm324, %v3439, 0
      %v3488 = vsel %vm324, %v3440, 0
      %v3491 = vsel %vm324, %v3441, 0
      %v3494 = vsel %vm324, %v3442, 0
      %v3497 = vsel %vm324, %v3443, 0
      %v3500 = vsel %vm324, %v3444, 0
      %v3503 = vsel %vm324, %v3445, 0
      %v3506 = vsel %vm324, %v3446, 0
      %v3509 = vsel %vm324, %v3447, 0
      %v3512 = vsel %vm324, %v3448, 0
      %v3515 = vsel %vm324, %v3449, 0
      %v3518 = vsel %vm324, %v3450, 0
      %v3521 = vsel %vm385, %v3458, 0
      %3523 = vmatprep.subr.bf16.mxu0 0
      %3524 = vmatpush1.bf16.msra.mxu0 %v3457
      %3525 = vmatprep.subr.bf16.mxu0 0
      %3526 = vmatpush1.bf16.msra.mxu0 %v3521
      %3527 = vmatprep.subr.bf16.mxu0 0
      %3528 = vmatpush1.bf16.msra.mxu0 0
      %3529 = vmatprep.subr.bf16.mxu0 0
      %3530 = vmatpush1.bf16.msra.mxu0 0
      %3531 = vmatprep.subr.bf16.mxu0 0
      %3532 = vmatpush1.bf16.msra.mxu0 0
      %3533 = vmatprep.subr.bf16.mxu0 0
      %3534 = vmatpush1.bf16.msra.mxu0 0
      %3535 = vmatprep.subr.bf16.mxu0 0
      %3536 = vmatpush1.bf16.msra.mxu0 0
      %3537 = vmatprep.subr.bf16.mxu0 0
      %3538 = vmatpush1.bf16.msra.mxu0 0
      %3539 = vmatprep.subr.bf16.mxu0 0
      %3540 = vmatpush1.bf16.msra.mxu0 0
      %3541 = vmatprep.subr.bf16.mxu0 0
      %3542 = vmatpush1.bf16.msra.mxu0 0
      %3543 = vmatprep.subr.bf16.mxu0 0
      %3544 = vmatpush1.bf16.msra.mxu0 0
      %3545 = vmatprep.subr.bf16.mxu0 0
      %3546 = vmatpush1.bf16.msra.mxu0 0
      %3547 = vmatprep.subr.bf16.mxu0 0
      %3548 = vmatpush1.bf16.msra.mxu0 0
      %3549 = vmatprep.subr.bf16.mxu0 0
      %3550 = vmatpush1.bf16.msra.mxu0 0
      %3551 = vmatprep.subr.bf16.mxu0 0
      %3552 = vmatpush1.bf16.msra.mxu0 0
      %3553 = vmatprep.subr.bf16.mxu0 0
      %3554 = vmatpush1.bf16.msra.mxu0 0
      %3555 = vmatprep.mubr.bf16.mxu0 0
      %3556 = vmatmul.mubr.bf16.gmra.mrb[0].mxu0 %v3461
      %v3557 = vpop.f32.mrb[0].mxu0
      %v3558 = vadd.f32 0.0, %v3557
      %v3559 = vpop.f32.mrb[0].mxu0
      %v3560 = vpop.f32.mrb[0].mxu0
      %v3561 = vadd.f32 0.0, %v3560
      %v3562 = vpop.f32.mrb[0].mxu0
      %3563 = vmatprep.mubr.bf16.mxu0 0
      %3564 = vmatmul.mubr.bf16.gmra.mrb[0].mxu0 %v3464
      %v3565 = vpop.f32.mrb[0].mxu0
      %v3566 = vadd.f32 0.0, %v3565
      %v3567 = vpop.f32.mrb[0].mxu0
      %v3568 = vpop.f32.mrb[0].mxu0
      %v3569 = vadd.f32 0.0, %v3568
      %v3570 = vpop.f32.mrb[0].mxu0
      %3571 = vmatprep.mubr.bf16.mxu0 0
      %3572 = vmatmul.mubr.bf16.gmra.mrb[0].mxu0 %v3467
      %v3573 = vpop.f32.mrb[0].mxu0
      %v3574 = vadd.f32 0.0, %v3573
      %v3575 = vpop.f32.mrb[0].mxu0
      %v3576 = vpop.f32.mrb[0].mxu0
      %v3577 = vadd.f32 0.0, %v3576
      %v3578 = vpop.f32.mrb[0].mxu0
      %3579 = vmatprep.mubr.bf16.mxu0 0
      %3580 = vmatmul.mubr.bf16.gmra.mrb[0].mxu0 %v3470
      %v3581 = vpop.f32.mrb[0].mxu0
      %v3582 = vadd.f32 0.0, %v3581
      %v3583 = vpop.f32.mrb[0].mxu0
      %v3584 = vpop.f32.mrb[0].mxu0
      %v3585 = vadd.f32 0.0, %v3584
      %v3586 = vpop.f32.mrb[0].mxu0
      %3587 = vmatprep.mubr.bf16.mxu0 0
      %3588 = vmatmul.mubr.bf16.gmra.mrb[0].mxu0 %v3473
      %v3589 = vpop.f32.mrb[0].mxu0
      %v3590 = vadd.f32 0.0, %v3589
      %v3591 = vpop.f32.mrb[0].mxu0
      %v3592 = vpop.f32.mrb[0].mxu0
      %v3593 = vadd.f32 0.0, %v3592
      %v3594 = vpop.f32.mrb[0].mxu0
      %3595 = vmatprep.mubr.bf16.mxu0 0
      %3596 = vmatmul.mubr.bf16.gmra.mrb[0].mxu0 %v3476
      %v3597 = vpop.f32.mrb[0].mxu0
      %v3598 = vadd.f32 0.0, %v3597
      %v3599 = vpop.f32.mrb[0].mxu0
      %v3600 = vpop.f32.mrb[0].mxu0
      %v3601 = vadd.f32 0.0, %v3600
      %v3602 = vpop.f32.mrb[0].mxu0
      %3603 = vmatprep.mubr.bf16.mxu0 0
      %3604 = vmatmul.mubr.bf16.gmra.mrb[0].mxu0 %v3479
      %v3605 = vpop.f32.mrb[0].mxu0
      %v3606 = vadd.f32 0.0, %v3605
      %v3607 = vpop.f32.mrb[0].mxu0
      %v3608 = vpop.f32.mrb[0].mxu0
      %v3609 = vadd.f32 0.0, %v3608
      %v3610 = vpop.f32.mrb[0].mxu0
      %3611 = vmatprep.mubr.bf16.mxu0 0
      %3612 = vmatmul.mubr.bf16.gmra.mrb[0].mxu0 %v3482
      %v3613 = vpop.f32.mrb[0].mxu0
      %v3614 = vadd.f32 0.0, %v3613
      %v3615 = vpop.f32.mrb[0].mxu0
      %v3616 = vpop.f32.mrb[0].mxu0
      %v3617 = vadd.f32 0.0, %v3616
      %v3618 = vpop.f32.mrb[0].mxu0
      %3619 = vmatprep.mubr.bf16.mxu0 0
      %3620 = vmatmul.mubr.bf16.gmra.mrb[0].mxu0 %v3485
      %v3621 = vpop.f32.mrb[0].mxu0
      %v3622 = vadd.f32 0.0, %v3621
      %v3623 = vpop.f32.mrb[0].mxu0
      %v3624 = vpop.f32.mrb[0].mxu0
      %v3625 = vadd.f32 0.0, %v3624
      %v3626 = vpop.f32.mrb[0].mxu0
      %3627 = vmatprep.mubr.bf16.mxu0 0
      %3628 = vmatmul.mubr.bf16.gmra.mrb[0].mxu0 %v3488
      %v3629 = vpop.f32.mrb[0].mxu0
      %v3630 = vadd.f32 0.0, %v3629
      %v3631 = vpop.f32.mrb[0].mxu0
      %v3632 = vpop.f32.mrb[0].mxu0
      %v3633 = vadd.f32 0.0, %v3632
      %v3634 = vpop.f32.mrb[0].mxu0
      %3635 = vmatprep.mubr.bf16.mxu0 0
      %3636 = vmatmul.mubr.bf16.gmra.mrb[0].mxu0 %v3491
      %v3637 = vpop.f32.mrb[0].mxu0
      %v3638 = vadd.f32 0.0, %v3637
      %v3639 = vpop.f32.mrb[0].mxu0
      %v3640 = vpop.f32.mrb[0].mxu0
      %v3641 = vadd.f32 0.0, %v3640
      %v3642 = vpop.f32.mrb[0].mxu0
      %3643 = vmatprep.mubr.bf16.mxu0 0
      %3644 = vmatmul.mubr.bf16.gmra.mrb[0].mxu0 %v3494
      %v3645 = vpop.f32.mrb[0].mxu0
      %v3646 = vadd.f32 0.0, %v3645
      %v3647 = vpop.f32.mrb[0].mxu0
      %v3648 = vpop.f32.mrb[0].mxu0
      %v3649 = vadd.f32 0.0, %v3648
      %v3650 = vpop.f32.mrb[0].mxu0
      %3651 = vmatprep.mubr.bf16.mxu0 0
      %3652 = vmatmul.mubr.bf16.gmra.mrb[0].mxu0 %v3497
      %v3653 = vpop.f32.mrb[0].mxu0
      %v3654 = vadd.f32 0.0, %v3653
      %v3655 = vpop.f32.mrb[0].mxu0
      %v3656 = vpop.f32.mrb[0].mxu0
      %v3657 = vadd.f32 0.0, %v3656
      %v3658 = vpop.f32.mrb[0].mxu0
      %3659 = vmatprep.mubr.bf16.mxu0 0
      %3660 = vmatmul.mubr.bf16.gmra.mrb[0].mxu0 %v3500
      %v3661 = vpop.f32.mrb[0].mxu0
      %v3662 = vadd.f32 0.0, %v3661
      %v3663 = vpop.f32.mrb[0].mxu0
      %v3664 = vpop.f32.mrb[0].mxu0
      %v3665 = vadd.f32 0.0, %v3664
      %v3666 = vpop.f32.mrb[0].mxu0
      %3667 = vmatprep.mubr.bf16.mxu0 0
      %3668 = vmatmul.mubr.bf16.gmra.mrb[0].mxu0 %v3503
      %v3669 = vpop.f32.mrb[0].mxu0
      %v3670 = vadd.f32 0.0, %v3669
      %v3671 = vpop.f32.mrb[0].mxu0
      %v3672 = vpop.f32.mrb[0].mxu0
      %v3673 = vadd.f32 0.0, %v3672
      %v3674 = vpop.f32.mrb[0].mxu0
      %3675 = vmatprep.mubr.bf16.mxu0 0
      %3676 = vmatmul.mubr.bf16.gmra.mrb[0].mxu0 %v3506
      %v3677 = vpop.f32.mrb[0].mxu0
      %v3678 = vadd.f32 0.0, %v3677
      %v3679 = vpop.f32.mrb[0].mxu0
      %v3680 = vpop.f32.mrb[0].mxu0
      %v3681 = vadd.f32 0.0, %v3680
      %v3682 = vpop.f32.mrb[0].mxu0
      %3683 = vmatprep.mubr.bf16.mxu0 0
      %3684 = vmatmul.mubr.bf16.gmra.mrb[0].mxu0 %v3509
      %v3685 = vpop.f32.mrb[0].mxu0
      %v3686 = vadd.f32 0.0, %v3685
      %v3687 = vpop.f32.mrb[0].mxu0
      %v3688 = vpop.f32.mrb[0].mxu0
      %v3689 = vadd.f32 0.0, %v3688
      %v3690 = vpop.f32.mrb[0].mxu0
      %3691 = vmatprep.mubr.bf16.mxu0 0
      %3692 = vmatmul.mubr.bf16.gmra.mrb[0].mxu0 %v3512
      %v3693 = vpop.f32.mrb[0].mxu0
      %v3694 = vadd.f32 0.0, %v3693
      %v3695 = vpop.f32.mrb[0].mxu0
      %v3696 = vpop.f32.mrb[0].mxu0
      %v3697 = vadd.f32 0.0, %v3696
      %v3698 = vpop.f32.mrb[0].mxu0
      %3699 = vmatprep.mubr.bf16.mxu0 0
      %3700 = vmatmul.mubr.bf16.gmra.mrb[0].mxu0 %v3515
      %v3701 = vpop.f32.mrb[0].mxu0
      %v3702 = vadd.f32 0.0, %v3701
      %v3703 = vpop.f32.mrb[0].mxu0
      %v3704 = vpop.f32.mrb[0].mxu0
      %v3705 = vadd.f32 0.0, %v3704
      %v3706 = vpop.f32.mrb[0].mxu0
      %3707 = vmatprep.mubr.bf16.mxu0 0
      %3708 = vmatmul.mubr.bf16.gmra.mrb[0].mxu0 %v3518
      %v3709 = vpop.f32.mrb[0].mxu0
      %v3710 = vadd.f32 0.0, %v3709
      %v3711 = vpop.f32.mrb[0].mxu0
      %v3712 = vpop.f32.mrb[0].mxu0
      %v3713 = vadd.f32 0.0, %v3712
      %v3714 = vpop.f32.mrb[0].mxu0
      %3715 = vdwg.mxu0
      %v3716 = vadd.f32 %v3267, %v3558
      %v3717 = vadd.f32 %v3268, %v3561
      %v3718 = vadd.f32 %v3269, %v3566
      %v3719 = vadd.f32 %v3270, %v3569
      %v3720 = vadd.f32 %v3271, %v3574
      %v3721 = vadd.f32 %v3272, %v3577
      %v3722 = vadd.f32 %v3273, %v3582
      %v3723 = vadd.f32 %v3274, %v3585
      %v3724 = vadd.f32 %v3275, %v3590
      %v3725 = vadd.f32 %v3276, %v3593
      %v3726 = vadd.f32 %v3277, %v3598
      %v3727 = vadd.f32 %v3278, %v3601
      %v3728 = vadd.f32 %v3279, %v3606
      %v3729 = vadd.f32 %v3280, %v3609
      %v3730 = vadd.f32 %v3281, %v3614
      %v3731 = vadd.f32 %v3282, %v3617
      %v3732 = vadd.f32 %v3283, %v3622
      %v3733 = vadd.f32 %v3284, %v3625
      %v3734 = vadd.f32 %v3285, %v3630
      %v3735 = vadd.f32 %v3286, %v3633
      %v3736 = vadd.f32 %v3287, %v3638
      %v3737 = vadd.f32 %v3288, %v3641
      %v3738 = vadd.f32 %v3289, %v3646
      %v3739 = vadd.f32 %v3290, %v3649
      %v3740 = vadd.f32 %v3291, %v3654
      %v3741 = vadd.f32 %v3292, %v3657
      %v3742 = vadd.f32 %v3293, %v3662
      %v3743 = vadd.f32 %v3294, %v3665
      %v3744 = vadd.f32 %v3295, %v3670
      %v3745 = vadd.f32 %v3296, %v3673
      %v3746 = vadd.f32 %v3297, %v3678
      %v3747 = vadd.f32 %v3298, %v3681
      %v3748 = vadd.f32 %v3299, %v3686
      %v3749 = vadd.f32 %v3300, %v3689
      %v3750 = vadd.f32 %v3301, %v3694
      %v3751 = vadd.f32 %v3302, %v3697
      %v3752 = vadd.f32 %v3303, %v3702
      %v3753 = vadd.f32 %v3304, %v3705
      %v3754 = vadd.f32 %v3305, %v3710
      %v3755 = vadd.f32 %v3306, %v3713
      %3756 = vst [vmem:[%s170] sm:$0xff] %v3716
      %3757 = vst [vmem:[%s170 + $0x8] sm:$0xff] %v3717
      %3758 = vst [vmem:[%s170 + $0x10] sm:$0xff] %v3718
      %3759 = vst [vmem:[%s170 + $0x18] sm:$0xff] %v3719
      %3760 = vst [vmem:[%s170 + $0x20] sm:$0xff] %v3720
      %3761 = vst [vmem:[%s170 + $0x28] sm:$0xff] %v3721
      %3762 = vst [vmem:[%s170 + $0x30] sm:$0xff] %v3722
      %3763 = vst [vmem:[%s170 + $0x38] sm:$0xff] %v3723
      %3764 = vst [vmem:[%s170 + $0x40] sm:$0xff] %v3724
      %3765 = vst [vmem:[%s170 + $0x48] sm:$0xff] %v3725
      %3766 = vst [vmem:[%s170 + $0x50] sm:$0xff] %v3726
      %3767 = vst [vmem:[%s170 + $0x58] sm:$0xff] %v3727
      %3768 = vst [vmem:[%s170 + $0x60] sm:$0xff] %v3728
      %3769 = vst [vmem:[%s170 + $0x68] sm:$0xff] %v3729
      %3770 = vst [vmem:[%s170 + $0x70] sm:$0xff] %v3730
      %3771 = vst [vmem:[%s170 + $0x78] sm:$0xff] %v3731
      %3772 = vst [vmem:[%s170 + $0x80] sm:$0xff] %v3732
      %3773 = vst [vmem:[%s170 + $0x88] sm:$0xff] %v3733
      %3774 = vst [vmem:[%s170 + $0x90] sm:$0xff] %v3734
      %3775 = vst [vmem:[%s170 + $0x98] sm:$0xff] %v3735
      %3776 = vst [vmem:[%s170 + $0xa0] sm:$0xff] %v3736
      %3777 = vst [vmem:[%s170 + $0xa8] sm:$0xff] %v3737
      %3778 = vst [vmem:[%s170 + $0xb0] sm:$0xff] %v3738
      %3779 = vst [vmem:[%s170 + $0xb8] sm:$0xff] %v3739
      %3780 = vst [vmem:[%s170 + $0xc0] sm:$0xff] %v3740
      %3781 = vst [vmem:[%s170 + $0xc8] sm:$0xff] %v3741
      %3782 = vst [vmem:[%s170 + $0xd0] sm:$0xff] %v3742
      %3783 = vst [vmem:[%s170 + $0xd8] sm:$0xff] %v3743
      %3784 = vst [vmem:[%s170 + $0xe0] sm:$0xff] %v3744
      %3785 = vst [vmem:[%s170 + $0xe8] sm:$0xff] %v3745
      %3786 = vst [vmem:[%s170 + $0xf0] sm:$0xff] %v3746
      %3787 = vst [vmem:[%s170 + $0xf8] sm:$0xff] %v3747
      %3788 = vst [vmem:[%s170 + $0x100] sm:$0xff] %v3748
      %3789 = vst [vmem:[%s170 + $0x108] sm:$0xff] %v3749
      %3790 = vst [vmem:[%s170 + $0x110] sm:$0xff] %v3750
      %3791 = vst [vmem:[%s170 + $0x118] sm:$0xff] %v3751
      %3792 = vst [vmem:[%s170 + $0x120] sm:$0xff] %v3752
      %3793 = vst [vmem:[%s170 + $0x128] sm:$0xff] %v3753
      %3794 = vst [vmem:[%s170 + $0x130] sm:$0xff] %v3754
      %3795 = vst [vmem:[%s170 + $0x138] sm:$0xff] %v3755
      %v3796 = vld [vmem:[%s170] sm:$0xff]
      %v3797 = vld [vmem:[%s170 + $0x8] sm:$0xff]
      %v3798 = vld [vmem:[%s170 + $0x10] sm:$0xff]
      %v3799 = vld [vmem:[%s170 + $0x18] sm:$0xff]
      %v3800 = vld [vmem:[%s170 + $0x20] sm:$0xff]
      %v3801 = vld [vmem:[%s170 + $0x28] sm:$0xff]
      %v3802 = vld [vmem:[%s170 + $0x30] sm:$0xff]
      %v3803 = vld [vmem:[%s170 + $0x38] sm:$0xff]
      %v3804 = vld [vmem:[%s170 + $0x40] sm:$0xff]
      %v3805 = vld [vmem:[%s170 + $0x48] sm:$0xff]
      %v3806 = vld [vmem:[%s170 + $0x50] sm:$0xff]
      %v3807 = vld [vmem:[%s170 + $0x58] sm:$0xff]
      %v3808 = vld [vmem:[%s170 + $0x60] sm:$0xff]
      %v3809 = vld [vmem:[%s170 + $0x68] sm:$0xff]
      %v3810 = vld [vmem:[%s170 + $0x70] sm:$0xff]
      %v3811 = vld [vmem:[%s170 + $0x78] sm:$0xff]
      %v3812 = vld [vmem:[%s170 + $0x80] sm:$0xff]
      %v3813 = vld [vmem:[%s170 + $0x88] sm:$0xff]
      %v3814 = vld [vmem:[%s170 + $0x90] sm:$0xff]
      %v3815 = vld [vmem:[%s170 + $0x98] sm:$0xff]
      %v3816 = vld [vmem:[%s170 + $0xa0] sm:$0xff]
      %v3817 = vld [vmem:[%s170 + $0xa8] sm:$0xff]
      %v3818 = vld [vmem:[%s170 + $0xb0] sm:$0xff]
      %v3819 = vld [vmem:[%s170 + $0xb8] sm:$0xff]
      %v3820 = vld [vmem:[%s170 + $0xc0] sm:$0xff]
      %v3821 = vld [vmem:[%s170 + $0xc8] sm:$0xff]
      %v3822 = vld [vmem:[%s170 + $0xd0] sm:$0xff]
      %v3823 = vld [vmem:[%s170 + $0xd8] sm:$0xff]
      %v3824 = vld [vmem:[%s170 + $0xe0] sm:$0xff]
      %v3825 = vld [vmem:[%s170 + $0xe8] sm:$0xff]
      %v3826 = vld [vmem:[%s170 + $0xf0] sm:$0xff]
      %v3827 = vld [vmem:[%s170 + $0xf8] sm:$0xff]
      %v3828 = vld [vmem:[%s170 + $0x100] sm:$0xff]
      %v3829 = vld [vmem:[%s170 + $0x108] sm:$0xff]
      %v3830 = vld [vmem:[%s170 + $0x110] sm:$0xff]
      %v3831 = vld [vmem:[%s170 + $0x118] sm:$0xff]
      %v3832 = vld [vmem:[%s170 + $0x120] sm:$0xff]
      %v3833 = vld [vmem:[%s170 + $0x128] sm:$0xff]
      %v3834 = vld [vmem:[%s170 + $0x130] sm:$0xff]
      %v3835 = vld [vmem:[%s170 + $0x138] sm:$0xff]
      %v3836 = vld [vmem:[%s165 + $0x54] sm:$0xf]
      %v3837 = vld [vmem:[%s165 + $0x58] sm:$0xf]
      %v3838 = vld [vmem:[%s165 + $0x5c] sm:$0xf]
      %v3839 = vld [vmem:[%s165 + $0x60] sm:$0xf]
      %v3840 = vld [vmem:[%s165 + $0x64] sm:$0xf]
      %v3841 = vld [vmem:[%s165 + $0x68] sm:$0xf]
      %v3842 = vld [vmem:[%s165 + $0x6c] sm:$0xf]
      %v3843 = vld [vmem:[%s165 + $0x70] sm:$0xf]
      %v3844 = vld [vmem:[%s165 + $0x74] sm:$0xf]
      %v3845 = vld [vmem:[%s165 + $0x78] sm:$0xf]
      %v3846 = vld [vmem:[%s165 + $0x7c] sm:$0xf]
      %v3847 = vld [vmem:[%s165 + $0x80] sm:$0xf]
      %v3848 = vld [vmem:[%s165 + $0x84] sm:$0xf]
      %v3849 = vld [vmem:[%s165 + $0x88] sm:$0xf]
      %v3850 = vld [vmem:[%s165 + $0x8c] sm:$0xf]
      %v3851 = vld [vmem:[%s165 + $0x90] sm:$0xf]
      %v3852 = vld [vmem:[%s165 + $0x94] sm:$0xf]
      %v3853 = vld [vmem:[%s165 + $0x98] sm:$0xf]
      %v3854 = vld [vmem:[%s165 + $0x9c] sm:$0xf]
      %v3855 = vld [vmem:[%s165 + $0xa0] sm:$0xf]
      %v3856 = vld [vmem:[%s165 + $0xa4] sm:$0xf]
      %v3857 = vld [vmem:[%s165 + $0xa8] sm:$0xf]
      %v3858 = vld [vmem:[%s165 + $0xac] sm:$0xf]
      %v3859 = vld [vmem:[%s165 + $0xb0] sm:$0xf]
      %v3860 = vld [vmem:[%s165 + $0xb4] sm:$0xf]
      %v3861 = vld [vmem:[%s165 + $0xb8] sm:$0xf]
      %v3862 = vld [vmem:[%s165 + $0xbc] sm:$0xf]
      %v3863 = vld [vmem:[%s165 + $0xc0] sm:$0xf]
      %v3864 = vld [vmem:[%s165 + $0xc4] sm:$0xf]
      %v3865 = vld [vmem:[%s165 + $0xc8] sm:$0xf]
      %v3866 = vld [vmem:[%s165 + $0xcc] sm:$0xf]
      %v3867 = vld [vmem:[%s165 + $0xd0] sm:$0xf]
      %v3868 = vld [vmem:[%s165 + $0xd4] sm:$0xf]
      %v3869 = vld [vmem:[%s165 + $0xd8] sm:$0xf]
      %v3870 = vld [vmem:[%s165 + $0xdc] sm:$0xf]
      %v3871 = vld [vmem:[%s165 + $0xe0] sm:$0xf]
      %v3872 = vld [vmem:[%s165 + $0xe4] sm:$0xf]
      %v3873 = vld [vmem:[%s165 + $0xe8] sm:$0xf]
      %v3874 = vld [vmem:[%s165 + $0xec] sm:$0xf]
      %v3875 = vld [vmem:[%s165 + $0xf0] sm:$0xf]
      %s3876 = scalar_lea.vmem %s1, 84
      %v3877 = vld [vmem:[%s3876] sm:$0xf]
      %v3878 = vld [vmem:[%s3876 + $0x4] sm:$0xf]
      %v3879 = vld [vmem:[%s3876 + $0x8] sm:$0xf]
      %v3920 = vunpack.c.l.b16 %v3836
      %v3921 = vunpack.c.l.b16 %v3837
      %v3922 = vunpack.c.l.b16 %v3838
      %v3923 = vunpack.c.l.b16 %v3839
      %v3924 = vunpack.c.l.b16 %v3840
      %v3925 = vunpack.c.l.b16 %v3841
      %v3926 = vunpack.c.l.b16 %v3842
      %v3927 = vunpack.c.l.b16 %v3843
      %v3928 = vunpack.c.l.b16 %v3844
      %v3929 = vunpack.c.l.b16 %v3845
      %v3930 = vunpack.c.l.b16 %v3846
      %v3931 = vunpack.c.l.b16 %v3847
      %v3932 = vunpack.c.l.b16 %v3848
      %v3933 = vunpack.c.l.b16 %v3849
      %v3934 = vunpack.c.l.b16 %v3850
      %v3935 = vunpack.c.l.b16 %v3851
      %v3936 = vunpack.c.l.b16 %v3852
      %v3937 = vunpack.c.l.b16 %v3853
      %v3938 = vunpack.c.l.b16 %v3854
      %v3939 = vunpack.c.l.b16 %v3855
      %v3940 = vunpack.c.l.b16 %v3856
      %v3941 = vunpack.c.l.b16 %v3857
      %v3942 = vunpack.c.l.b16 %v3858
      %v3943 = vunpack.c.l.b16 %v3859
      %v3944 = vunpack.c.l.b16 %v3860
      %v3945 = vunpack.c.l.b16 %v3861
      %v3946 = vunpack.c.l.b16 %v3862
      %v3947 = vunpack.c.l.b16 %v3863
      %v3948 = vunpack.c.l.b16 %v3864
      %v3949 = vunpack.c.l.b16 %v3865
      %v3950 = vunpack.c.l.b16 %v3866
      %v3951 = vunpack.c.l.b16 %v3867
      %v3952 = vunpack.c.l.b16 %v3868
      %v3953 = vunpack.c.l.b16 %v3869
      %v3954 = vunpack.c.l.b16 %v3870
      %v3955 = vunpack.c.l.b16 %v3871
      %v3956 = vunpack.c.l.b16 %v3872
      %v3957 = vunpack.c.l.b16 %v3873
      %v3958 = vunpack.c.l.b16 %v3874
      %v3959 = vunpack.c.l.b16 %v3875
      %v3960 = vpack.c.b16 %v3921, %v3920
      %v3961 = vpack.c.b16 %v3923, %v3922
      %v3962 = vpack.c.b16 %v3925, %v3924
      %v3963 = vpack.c.b16 %v3927, %v3926
      %v3964 = vpack.c.b16 %v3929, %v3928
      %v3965 = vpack.c.b16 %v3931, %v3930
      %v3966 = vpack.c.b16 %v3933, %v3932
      %v3967 = vpack.c.b16 %v3935, %v3934
      %v3968 = vpack.c.b16 %v3937, %v3936
      %v3969 = vpack.c.b16 %v3939, %v3938
      %v3970 = vpack.c.b16 %v3941, %v3940
      %v3971 = vpack.c.b16 %v3943, %v3942
      %v3972 = vpack.c.b16 %v3945, %v3944
      %v3973 = vpack.c.b16 %v3947, %v3946
      %v3974 = vpack.c.b16 %v3949, %v3948
      %v3975 = vpack.c.b16 %v3951, %v3950
      %v3976 = vpack.c.b16 %v3953, %v3952
      %v3977 = vpack.c.b16 %v3955, %v3954
      %v3978 = vpack.c.b16 %v3957, %v3956
      %v3979 = vpack.c.b16 %v3959, %v3958
      %v3983 = vunpack.c.l.b16 %v3877
      %v3984 = vunpack.c.l.b16 %v3878
      %v3985 = vunpack.c.l.b16 %v3879
      %v3986 = vpack.c.b16 %v3984, %v3983
      %v3987 = vpack.c.b16 %v3985, %v3985
      %v3990 = vsel %vm324, %v3960, 0
      %v3993 = vsel %vm324, %v3961, 0
      %v3996 = vsel %vm324, %v3962, 0
      %v3999 = vsel %vm324, %v3963, 0
      %v4002 = vsel %vm324, %v3964, 0
      %v4005 = vsel %vm324, %v3965, 0
      %v4008 = vsel %vm324, %v3966, 0
      %v4011 = vsel %vm324, %v3967, 0
      %v4014 = vsel %vm324, %v3968, 0
      %v4017 = vsel %vm324, %v3969, 0
      %v4020 = vsel %vm324, %v3970, 0
      %v4023 = vsel %vm324, %v3971, 0
      %v4026 = vsel %vm324, %v3972, 0
      %v4029 = vsel %vm324, %v3973, 0
      %v4032 = vsel %vm324, %v3974, 0
      %v4035 = vsel %vm324, %v3975, 0
      %v4038 = vsel %vm324, %v3976, 0
      %v4041 = vsel %vm324, %v3977, 0
      %v4044 = vsel %vm324, %v3978, 0
      %v4047 = vsel %vm324, %v3979, 0
      %v4050 = vsel %vm385, %v3987, 0
      %4052 = vmatprep.subr.bf16.mxu0 0
      %4053 = vmatpush1.bf16.msra.mxu0 %v3986
      %4054 = vmatprep.subr.bf16.mxu0 0
      %4055 = vmatpush1.bf16.msra.mxu0 %v4050
      %4056 = vmatprep.subr.bf16.mxu0 0
      %4057 = vmatpush1.bf16.msra.mxu0 0
      %4058 = vmatprep.subr.bf16.mxu0 0
      %4059 = vmatpush1.bf16.msra.mxu0 0
      %4060 = vmatprep.subr.bf16.mxu0 0
      %4061 = vmatpush1.bf16.msra.mxu0 0
      %4062 = vmatprep.subr.bf16.mxu0 0
      %4063 = vmatpush1.bf16.msra.mxu0 0
      %4064 = vmatprep.subr.bf16.mxu0 0
      %4065 = vmatpush1.bf16.msra.mxu0 0
      %4066 = vmatprep.subr.bf16.mxu0 0
      %4067 = vmatpush1.bf16.msra.mxu0 0
      %4068 = vmatprep.subr.bf16.mxu0 0
      %4069 = vmatpush1.bf16.msra.mxu0 0
      %4070 = vmatprep.subr.bf16.mxu0 0
      %4071 = vmatpush1.bf16.msra.mxu0 0
      %4072 = vmatprep.subr.bf16.mxu0 0
      %4073 = vmatpush1.bf16.msra.mxu0 0
      %4074 = vmatprep.subr.bf16.mxu0 0
      %4075 = vmatpush1.bf16.msra.mxu0 0
      %4076 = vmatprep.subr.bf16.mxu0 0
      %4077 = vmatpush1.bf16.msra.mxu0 0
      %4078 = vmatprep.subr.bf16.mxu0 0
      %4079 = vmatpush1.bf16.msra.mxu0 0
      %4080 = vmatprep.subr.bf16.mxu0 0
      %4081 = vmatpush1.bf16.msra.mxu0 0
      %4082 = vmatprep.subr.bf16.mxu0 0
      %4083 = vmatpush1.bf16.msra.mxu0 0
      %4084 = vmatprep.mubr.bf16.mxu0 0
      %4085 = vmatmul.mubr.bf16.gmra.mrb[0].mxu0 %v3990
      %v4086 = vpop.f32.mrb[0].mxu0
      %v4087 = vadd.f32 0.0, %v4086
      %v4088 = vpop.f32.mrb[0].mxu0
      %v4089 = vpop.f32.mrb[0].mxu0
      %v4090 = vadd.f32 0.0, %v4089
      %v4091 = vpop.f32.mrb[0].mxu0
      %4092 = vmatprep.mubr.bf16.mxu0 0
      %4093 = vmatmul.mubr.bf16.gmra.mrb[0].mxu0 %v3993
      %v4094 = vpop.f32.mrb[0].mxu0
      %v4095 = vadd.f32 0.0, %v4094
      %v4096 = vpop.f32.mrb[0].mxu0
      %v4097 = vpop.f32.mrb[0].mxu0
      %v4098 = vadd.f32 0.0, %v4097
      %v4099 = vpop.f32.mrb[0].mxu0
      %4100 = vmatprep.mubr.bf16.mxu0 0
      %4101 = vmatmul.mubr.bf16.gmra.mrb[0].mxu0 %v3996
      %v4102 = vpop.f32.mrb[0].mxu0
      %v4103 = vadd.f32 0.0, %v4102
      %v4104 = vpop.f32.mrb[0].mxu0
      %v4105 = vpop.f32.mrb[0].mxu0
      %v4106 = vadd.f32 0.0, %v4105
      %v4107 = vpop.f32.mrb[0].mxu0
      %4108 = vmatprep.mubr.bf16.mxu0 0
      %4109 = vmatmul.mubr.bf16.gmra.mrb[0].mxu0 %v3999
      %v4110 = vpop.f32.mrb[0].mxu0
      %v4111 = vadd.f32 0.0, %v4110
      %v4112 = vpop.f32.mrb[0].mxu0
      %v4113 = vpop.f32.mrb[0].mxu0
      %v4114 = vadd.f32 0.0, %v4113
      %v4115 = vpop.f32.mrb[0].mxu0
      %4116 = vmatprep.mubr.bf16.mxu0 0
      %4117 = vmatmul.mubr.bf16.gmra.mrb[0].mxu0 %v4002
      %v4118 = vpop.f32.mrb[0].mxu0
      %v4119 = vadd.f32 0.0, %v4118
      %v4120 = vpop.f32.mrb[0].mxu0
      %v4121 = vpop.f32.mrb[0].mxu0
      %v4122 = vadd.f32 0.0, %v4121
      %v4123 = vpop.f32.mrb[0].mxu0
      %4124 = vmatprep.mubr.bf16.mxu0 0
      %4125 = vmatmul.mubr.bf16.gmra.mrb[0].mxu0 %v4005
      %v4126 = vpop.f32.mrb[0].mxu0
      %v4127 = vadd.f32 0.0, %v4126
      %v4128 = vpop.f32.mrb[0].mxu0
      %v4129 = vpop.f32.mrb[0].mxu0
      %v4130 = vadd.f32 0.0, %v4129
      %v4131 = vpop.f32.mrb[0].mxu0
      %4132 = vmatprep.mubr.bf16.mxu0 0
      %4133 = vmatmul.mubr.bf16.gmra.mrb[0].mxu0 %v4008
      %v4134 = vpop.f32.mrb[0].mxu0
      %v4135 = vadd.f32 0.0, %v4134
      %v4136 = vpop.f32.mrb[0].mxu0
      %v4137 = vpop.f32.mrb[0].mxu0
      %v4138 = vadd.f32 0.0, %v4137
      %v4139 = vpop.f32.mrb[0].mxu0
      %4140 = vmatprep.mubr.bf16.mxu0 0
      %4141 = vmatmul.mubr.bf16.gmra.mrb[0].mxu0 %v4011
      %v4142 = vpop.f32.mrb[0].mxu0
      %v4143 = vadd.f32 0.0, %v4142
      %v4144 = vpop.f32.mrb[0].mxu0
      %v4145 = vpop.f32.mrb[0].mxu0
      %v4146 = vadd.f32 0.0, %v4145
      %v4147 = vpop.f32.mrb[0].mxu0
      %4148 = vmatprep.mubr.bf16.mxu0 0
      %4149 = vmatmul.mubr.bf16.gmra.mrb[0].mxu0 %v4014
      %v4150 = vpop.f32.mrb[0].mxu0
      %v4151 = vadd.f32 0.0, %v4150
      %v4152 = vpop.f32.mrb[0].mxu0
      %v4153 = vpop.f32.mrb[0].mxu0
      %v4154 = vadd.f32 0.0, %v4153
      %v4155 = vpop.f32.mrb[0].mxu0
      %4156 = vmatprep.mubr.bf16.mxu0 0
      %4157 = vmatmul.mubr.bf16.gmra.mrb[0].mxu0 %v4017
      %v4158 = vpop.f32.mrb[0].mxu0
      %v4159 = vadd.f32 0.0, %v4158
      %v4160 = vpop.f32.mrb[0].mxu0
      %v4161 = vpop.f32.mrb[0].mxu0
      %v4162 = vadd.f32 0.0, %v4161
      %v4163 = vpop.f32.mrb[0].mxu0
      %4164 = vmatprep.mubr.bf16.mxu0 0
      %4165 = vmatmul.mubr.bf16.gmra.mrb[0].mxu0 %v4020
      %v4166 = vpop.f32.mrb[0].mxu0
      %v4167 = vadd.f32 0.0, %v4166
      %v4168 = vpop.f32.mrb[0].mxu0
      %v4169 = vpop.f32.mrb[0].mxu0
      %v4170 = vadd.f32 0.0, %v4169
      %v4171 = vpop.f32.mrb[0].mxu0
      %4172 = vmatprep.mubr.bf16.mxu0 0
      %4173 = vmatmul.mubr.bf16.gmra.mrb[0].mxu0 %v4023
      %v4174 = vpop.f32.mrb[0].mxu0
      %v4175 = vadd.f32 0.0, %v4174
      %v4176 = vpop.f32.mrb[0].mxu0
      %v4177 = vpop.f32.mrb[0].mxu0
      %v4178 = vadd.f32 0.0, %v4177
      %v4179 = vpop.f32.mrb[0].mxu0
      %4180 = vmatprep.mubr.bf16.mxu0 0
      %4181 = vmatmul.mubr.bf16.gmra.mrb[0].mxu0 %v4026
      %v4182 = vpop.f32.mrb[0].mxu0
      %v4183 = vadd.f32 0.0, %v4182
      %v4184 = vpop.f32.mrb[0].mxu0
      %v4185 = vpop.f32.mrb[0].mxu0
      %v4186 = vadd.f32 0.0, %v4185
      %v4187 = vpop.f32.mrb[0].mxu0
      %4188 = vmatprep.mubr.bf16.mxu0 0
      %4189 = vmatmul.mubr.bf16.gmra.mrb[0].mxu0 %v4029
      %v4190 = vpop.f32.mrb[0].mxu0
      %v4191 = vadd.f32 0.0, %v4190
      %v4192 = vpop.f32.mrb[0].mxu0
      %v4193 = vpop.f32.mrb[0].mxu0
      %v4194 = vadd.f32 0.0, %v4193
      %v4195 = vpop.f32.mrb[0].mxu0
      %4196 = vmatprep.mubr.bf16.mxu0 0
      %4197 = vmatmul.mubr.bf16.gmra.mrb[0].mxu0 %v4032
      %v4198 = vpop.f32.mrb[0].mxu0
      %v4199 = vadd.f32 0.0, %v4198
      %v4200 = vpop.f32.mrb[0].mxu0
      %v4201 = vpop.f32.mrb[0].mxu0
      %v4202 = vadd.f32 0.0, %v4201
      %v4203 = vpop.f32.mrb[0].mxu0
      %4204 = vmatprep.mubr.bf16.mxu0 0
      %4205 = vmatmul.mubr.bf16.gmra.mrb[0].mxu0 %v4035
      %v4206 = vpop.f32.mrb[0].mxu0
      %v4207 = vadd.f32 0.0, %v4206
      %v4208 = vpop.f32.mrb[0].mxu0
      %v4209 = vpop.f32.mrb[0].mxu0
      %v4210 = vadd.f32 0.0, %v4209
      %v4211 = vpop.f32.mrb[0].mxu0
      %4212 = vmatprep.mubr.bf16.mxu0 0
      %4213 = vmatmul.mubr.bf16.gmra.mrb[0].mxu0 %v4038
      %v4214 = vpop.f32.mrb[0].mxu0
      %v4215 = vadd.f32 0.0, %v4214
      %v4216 = vpop.f32.mrb[0].mxu0
      %v4217 = vpop.f32.mrb[0].mxu0
      %v4218 = vadd.f32 0.0, %v4217
      %v4219 = vpop.f32.mrb[0].mxu0
      %4220 = vmatprep.mubr.bf16.mxu0 0
      %4221 = vmatmul.mubr.bf16.gmra.mrb[0].mxu0 %v4041
      %v4222 = vpop.f32.mrb[0].mxu0
      %v4223 = vadd.f32 0.0, %v4222
      %v4224 = vpop.f32.mrb[0].mxu0
      %v4225 = vpop.f32.mrb[0].mxu0
      %v4226 = vadd.f32 0.0, %v4225
      %v4227 = vpop.f32.mrb[0].mxu0
      %4228 = vmatprep.mubr.bf16.mxu0 0
      %4229 = vmatmul.mubr.bf16.gmra.mrb[0].mxu0 %v4044
      %v4230 = vpop.f32.mrb[0].mxu0
      %v4231 = vadd.f32 0.0, %v4230
      %v4232 = vpop.f32.mrb[0].mxu0
      %v4233 = vpop.f32.mrb[0].mxu0
      %v4234 = vadd.f32 0.0, %v4233
      %v4235 = vpop.f32.mrb[0].mxu0
      %4236 = vmatprep.mubr.bf16.mxu0 0
      %4237 = vmatmul.mubr.bf16.gmra.mrb[0].mxu0 %v4047
      %v4238 = vpop.f32.mrb[0].mxu0
      %v4239 = vadd.f32 0.0, %v4238
      %v4240 = vpop.f32.mrb[0].mxu0
      %v4241 = vpop.f32.mrb[0].mxu0
      %v4242 = vadd.f32 0.0, %v4241
      %v4243 = vpop.f32.mrb[0].mxu0
      %4244 = vdwg.mxu0
      %v4245 = vadd.f32 %v3796, %v4087
      %v4246 = vadd.f32 %v3797, %v4090
      %v4247 = vadd.f32 %v3798, %v4095
      %v4248 = vadd.f32 %v3799, %v4098
      %v4249 = vadd.f32 %v3800, %v4103
      %v4250 = vadd.f32 %v3801, %v4106
      %v4251 = vadd.f32 %v3802, %v4111
      %v4252 = vadd.f32 %v3803, %v4114
      %v4253 = vadd.f32 %v3804, %v4119
      %v4254 = vadd.f32 %v3805, %v4122
      %v4255 = vadd.f32 %v3806, %v4127
      %v4256 = vadd.f32 %v3807, %v4130
      %v4257 = vadd.f32 %v3808, %v4135
      %v4258 = vadd.f32 %v3809, %v4138
      %v4259 = vadd.f32 %v3810, %v4143
      %v4260 = vadd.f32 %v3811, %v4146
      %v4261 = vadd.f32 %v3812, %v4151
      %v4262 = vadd.f32 %v3813, %v4154
      %v4263 = vadd.f32 %v3814, %v4159
      %v4264 = vadd.f32 %v3815, %v4162
      %v4265 = vadd.f32 %v3816, %v4167
      %v4266 = vadd.f32 %v3817, %v4170
      %v4267 = vadd.f32 %v3818, %v4175
      %v4268 = vadd.f32 %v3819, %v4178
      %v4269 = vadd.f32 %v3820, %v4183
      %v4270 = vadd.f32 %v3821, %v4186
      %v4271 = vadd.f32 %v3822, %v4191
      %v4272 = vadd.f32 %v3823, %v4194
      %v4273 = vadd.f32 %v3824, %v4199
      %v4274 = vadd.f32 %v3825, %v4202
      %v4275 = vadd.f32 %v3826, %v4207
      %v4276 = vadd.f32 %v3827, %v4210
      %v4277 = vadd.f32 %v3828, %v4215
      %v4278 = vadd.f32 %v3829, %v4218
      %v4279 = vadd.f32 %v3830, %v4223
      %v4280 = vadd.f32 %v3831, %v4226
      %v4281 = vadd.f32 %v3832, %v4231
      %v4282 = vadd.f32 %v3833, %v4234
      %v4283 = vadd.f32 %v3834, %v4239
      %v4284 = vadd.f32 %v3835, %v4242
      %4285 = vst [vmem:[%s170] sm:$0xff] %v4245
      %4286 = vst [vmem:[%s170 + $0x8] sm:$0xff] %v4246
      %4287 = vst [vmem:[%s170 + $0x10] sm:$0xff] %v4247
      %4288 = vst [vmem:[%s170 + $0x18] sm:$0xff] %v4248
      %4289 = vst [vmem:[%s170 + $0x20] sm:$0xff] %v4249
      %4290 = vst [vmem:[%s170 + $0x28] sm:$0xff] %v4250
      %4291 = vst [vmem:[%s170 + $0x30] sm:$0xff] %v4251
      %4292 = vst [vmem:[%s170 + $0x38] sm:$0xff] %v4252
      %4293 = vst [vmem:[%s170 + $0x40] sm:$0xff] %v4253
      %4294 = vst [vmem:[%s170 + $0x48] sm:$0xff] %v4254
      %4295 = vst [vmem:[%s170 + $0x50] sm:$0xff] %v4255
      %4296 = vst [vmem:[%s170 + $0x58] sm:$0xff] %v4256
      %4297 = vst [vmem:[%s170 + $0x60] sm:$0xff] %v4257
      %4298 = vst [vmem:[%s170 + $0x68] sm:$0xff] %v4258
      %4299 = vst [vmem:[%s170 + $0x70] sm:$0xff] %v4259
      %4300 = vst [vmem:[%s170 + $0x78] sm:$0xff] %v4260
      %4301 = vst [vmem:[%s170 + $0x80] sm:$0xff] %v4261
      %4302 = vst [vmem:[%s170 + $0x88] sm:$0xff] %v4262
      %4303 = vst [vmem:[%s170 + $0x90] sm:$0xff] %v4263
      %4304 = vst [vmem:[%s170 + $0x98] sm:$0xff] %v4264
      %4305 = vst [vmem:[%s170 + $0xa0] sm:$0xff] %v4265
      %4306 = vst [vmem:[%s170 + $0xa8] sm:$0xff] %v4266
      %4307 = vst [vmem:[%s170 + $0xb0] sm:$0xff] %v4267
      %4308 = vst [vmem:[%s170 + $0xb8] sm:$0xff] %v4268
      %4309 = vst [vmem:[%s170 + $0xc0] sm:$0xff] %v4269
      %4310 = vst [vmem:[%s170 + $0xc8] sm:$0xff] %v4270
      %4311 = vst [vmem:[%s170 + $0xd0] sm:$0xff] %v4271
      %4312 = vst [vmem:[%s170 + $0xd8] sm:$0xff] %v4272
      %4313 = vst [vmem:[%s170 + $0xe0] sm:$0xff] %v4273
      %4314 = vst [vmem:[%s170 + $0xe8] sm:$0xff] %v4274
      %4315 = vst [vmem:[%s170 + $0xf0] sm:$0xff] %v4275
      %4316 = vst [vmem:[%s170 + $0xf8] sm:$0xff] %v4276
      %4317 = vst [vmem:[%s170 + $0x100] sm:$0xff] %v4277
      %4318 = vst [vmem:[%s170 + $0x108] sm:$0xff] %v4278
      %4319 = vst [vmem:[%s170 + $0x110] sm:$0xff] %v4279
      %4320 = vst [vmem:[%s170 + $0x118] sm:$0xff] %v4280
      %4321 = vst [vmem:[%s170 + $0x120] sm:$0xff] %v4281
      %4322 = vst [vmem:[%s170 + $0x128] sm:$0xff] %v4282
      %4323 = vst [vmem:[%s170 + $0x130] sm:$0xff] %v4283
      %4324 = vst [vmem:[%s170 + $0x138] sm:$0xff] %v4284
      %v4325 = vld [vmem:[%s170] sm:$0xff]
      %v4326 = vld [vmem:[%s170 + $0x8] sm:$0xff]
      %v4327 = vld [vmem:[%s170 + $0x10] sm:$0xff]
      %v4328 = vld [vmem:[%s170 + $0x18] sm:$0xff]
      %v4329 = vld [vmem:[%s170 + $0x20] sm:$0xff]
      %v4330 = vld [vmem:[%s170 + $0x28] sm:$0xff]
      %v4331 = vld [vmem:[%s170 + $0x30] sm:$0xff]
      %v4332 = vld [vmem:[%s170 + $0x38] sm:$0xff]
      %v4333 = vld [vmem:[%s170 + $0x40] sm:$0xff]
      %v4334 = vld [vmem:[%s170 + $0x48] sm:$0xff]
      %v4335 = vld [vmem:[%s170 + $0x50] sm:$0xff]
      %v4336 = vld [vmem:[%s170 + $0x58] sm:$0xff]
      %v4337 = vld [vmem:[%s170 + $0x60] sm:$0xff]
      %v4338 = vld [vmem:[%s170 + $0x68] sm:$0xff]
      %v4339 = vld [vmem:[%s170 + $0x70] sm:$0xff]
      %v4340 = vld [vmem:[%s170 + $0x78] sm:$0xff]
      %v4341 = vld [vmem:[%s170 + $0x80] sm:$0xff]
      %v4342 = vld [vmem:[%s170 + $0x88] sm:$0xff]
      %v4343 = vld [vmem:[%s170 + $0x90] sm:$0xff]
      %v4344 = vld [vmem:[%s170 + $0x98] sm:$0xff]
      %v4345 = vld [vmem:[%s170 + $0xa0] sm:$0xff]
      %v4346 = vld [vmem:[%s170 + $0xa8] sm:$0xff]
      %v4347 = vld [vmem:[%s170 + $0xb0] sm:$0xff]
      %v4348 = vld [vmem:[%s170 + $0xb8] sm:$0xff]
      %v4349 = vld [vmem:[%s170 + $0xc0] sm:$0xff]
      %v4350 = vld [vmem:[%s170 + $0xc8] sm:$0xff]
      %v4351 = vld [vmem:[%s170 + $0xd0] sm:$0xff]
      %v4352 = vld [vmem:[%s170 + $0xd8] sm:$0xff]
      %v4353 = vld [vmem:[%s170 + $0xe0] sm:$0xff]
      %v4354 = vld [vmem:[%s170 + $0xe8] sm:$0xff]
      %v4355 = vld [vmem:[%s170 + $0xf0] sm:$0xff]
      %v4356 = vld [vmem:[%s170 + $0xf8] sm:$0xff]
      %v4357 = vld [vmem:[%s170 + $0x100] sm:$0xff]
      %v4358 = vld [vmem:[%s170 + $0x108] sm:$0xff]
      %v4359 = vld [vmem:[%s170 + $0x110] sm:$0xff]
      %v4360 = vld [vmem:[%s170 + $0x118] sm:$0xff]
      %v4361 = vld [vmem:[%s170 + $0x120] sm:$0xff]
      %v4362 = vld [vmem:[%s170 + $0x128] sm:$0xff]
      %v4363 = vld [vmem:[%s170 + $0x130] sm:$0xff]
      %v4364 = vld [vmem:[%s170 + $0x138] sm:$0xff]
      %v4365 = vld [vmem:[%s165 + $0x58] sm:$0xf]
      %v4366 = vld [vmem:[%s165 + $0x5c] sm:$0xf]
      %v4367 = vld [vmem:[%s165 + $0x60] sm:$0xf]
      %v4368 = vld [vmem:[%s165 + $0x64] sm:$0xf]
      %v4369 = vld [vmem:[%s165 + $0x68] sm:$0xf]
      %v4370 = vld [vmem:[%s165 + $0x6c] sm:$0xf]
      %v4371 = vld [vmem:[%s165 + $0x70] sm:$0xf]
      %v4372 = vld [vmem:[%s165 + $0x74] sm:$0xf]
      %v4373 = vld [vmem:[%s165 + $0x78] sm:$0xf]
      %v4374 = vld [vmem:[%s165 + $0x7c] sm:$0xf]
      %v4375 = vld [vmem:[%s165 + $0x80] sm:$0xf]
      %v4376 = vld [vmem:[%s165 + $0x84] sm:$0xf]
      %v4377 = vld [vmem:[%s165 + $0x88] sm:$0xf]
      %v4378 = vld [vmem:[%s165 + $0x8c] sm:$0xf]
      %v4379 = vld [vmem:[%s165 + $0x90] sm:$0xf]
      %v4380 = vld [vmem:[%s165 + $0x94] sm:$0xf]
      %v4381 = vld [vmem:[%s165 + $0x98] sm:$0xf]
      %v4382 = vld [vmem:[%s165 + $0x9c] sm:$0xf]
      %v4383 = vld [vmem:[%s165 + $0xa0] sm:$0xf]
      %v4384 = vld [vmem:[%s165 + $0xa4] sm:$0xf]
      %v4385 = vld [vmem:[%s165 + $0xa8] sm:$0xf]
      %v4386 = vld [vmem:[%s165 + $0xac] sm:$0xf]
      %v4387 = vld [vmem:[%s165 + $0xb0] sm:$0xf]
      %v4388 = vld [vmem:[%s165 + $0xb4] sm:$0xf]
      %v4389 = vld [vmem:[%s165 + $0xb8] sm:$0xf]
      %v4390 = vld [vmem:[%s165 + $0xbc] sm:$0xf]
      %v4391 = vld [vmem:[%s165 + $0xc0] sm:$0xf]
      %v4392 = vld [vmem:[%s165 + $0xc4] sm:$0xf]
      %v4393 = vld [vmem:[%s165 + $0xc8] sm:$0xf]
      %v4394 = vld [vmem:[%s165 + $0xcc] sm:$0xf]
      %v4395 = vld [vmem:[%s165 + $0xd0] sm:$0xf]
      %v4396 = vld [vmem:[%s165 + $0xd4] sm:$0xf]
      %v4397 = vld [vmem:[%s165 + $0xd8] sm:$0xf]
      %v4398 = vld [vmem:[%s165 + $0xdc] sm:$0xf]
      %v4399 = vld [vmem:[%s165 + $0xe0] sm:$0xf]
      %v4400 = vld [vmem:[%s165 + $0xe4] sm:$0xf]
      %v4401 = vld [vmem:[%s165 + $0xe8] sm:$0xf]
      %v4402 = vld [vmem:[%s165 + $0xec] sm:$0xf]
      %v4403 = vld [vmem:[%s165 + $0xf0] sm:$0xf]
      %v4404 = vld [vmem:[%s165 + $0xf4] sm:$0xf]
      %s4405 = scalar_lea.vmem %s1, 96
      %v4406 = vld [vmem:[%s4405] sm:$0xf]
      %v4407 = vld [vmem:[%s4405 + $0x4] sm:$0xf]
      %v4408 = vld [vmem:[%s4405 + $0x8] sm:$0xf]
      %v4449 = vunpack.c.l.b16 %v4365
      %v4450 = vunpack.c.l.b16 %v4366
      %v4451 = vunpack.c.l.b16 %v4367
      %v4452 = vunpack.c.l.b16 %v4368
      %v4453 = vunpack.c.l.b16 %v4369
      %v4454 = vunpack.c.l.b16 %v4370
      %v4455 = vunpack.c.l.b16 %v4371
      %v4456 = vunpack.c.l.b16 %v4372
      %v4457 = vunpack.c.l.b16 %v4373
      %v4458 = vunpack.c.l.b16 %v4374
      %v4459 = vunpack.c.l.b16 %v4375
      %v4460 = vunpack.c.l.b16 %v4376
      %v4461 = vunpack.c.l.b16 %v4377
      %v4462 = vunpack.c.l.b16 %v4378
      %v4463 = vunpack.c.l.b16 %v4379
      %v4464 = vunpack.c.l.b16 %v4380
      %v4465 = vunpack.c.l.b16 %v4381
      %v4466 = vunpack.c.l.b16 %v4382
      %v4467 = vunpack.c.l.b16 %v4383
      %v4468 = vunpack.c.l.b16 %v4384
      %v4469 = vunpack.c.l.b16 %v4385
      %v4470 = vunpack.c.l.b16 %v4386
      %v4471 = vunpack.c.l.b16 %v4387
      %v4472 = vunpack.c.l.b16 %v4388
      %v4473 = vunpack.c.l.b16 %v4389
      %v4474 = vunpack.c.l.b16 %v4390
      %v4475 = vunpack.c.l.b16 %v4391
      %v4476 = vunpack.c.l.b16 %v4392
      %v4477 = vunpack.c.l.b16 %v4393
      %v4478 = vunpack.c.l.b16 %v4394
      %v4479 = vunpack.c.l.b16 %v4395
      %v4480 = vunpack.c.l.b16 %v4396
      %v4481 = vunpack.c.l.b16 %v4397
      %v4482 = vunpack.c.l.b16 %v4398
      %v4483 = vunpack.c.l.b16 %v4399
      %v4484 = vunpack.c.l.b16 %v4400
      %v4485 = vunpack.c.l.b16 %v4401
      %v4486 = vunpack.c.l.b16 %v4402
      %v4487 = vunpack.c.l.b16 %v4403
      %v4488 = vunpack.c.l.b16 %v4404
      %v4489 = vpack.c.b16 %v4450, %v4449
      %v4490 = vpack.c.b16 %v4452, %v4451
      %v4491 = vpack.c.b16 %v4454, %v4453
      %v4492 = vpack.c.b16 %v4456, %v4455
      %v4493 = vpack.c.b16 %v4458, %v4457
      %v4494 = vpack.c.b16 %v4460, %v4459
      %v4495 = vpack.c.b16 %v4462, %v4461
      %v4496 = vpack.c.b16 %v4464, %v4463
      %v4497 = vpack.c.b16 %v4466, %v4465
      %v4498 = vpack.c.b16 %v4468, %v4467
      %v4499 = vpack.c.b16 %v4470, %v4469
      %v4500 = vpack.c.b16 %v4472, %v4471
      %v4501 = vpack.c.b16 %v4474, %v4473
      %v4502 = vpack.c.b16 %v4476, %v4475
      %v4503 = vpack.c.b16 %v4478, %v4477
      %v4504 = vpack.c.b16 %v4480, %v4479
      %v4505 = vpack.c.b16 %v4482, %v4481
      %v4506 = vpack.c.b16 %v4484, %v4483
      %v4507 = vpack.c.b16 %v4486, %v4485
      %v4508 = vpack.c.b16 %v4488, %v4487
      %v4512 = vunpack.c.l.b16 %v4406
      %v4513 = vunpack.c.l.b16 %v4407
      %v4514 = vunpack.c.l.b16 %v4408
      %v4515 = vpack.c.b16 %v4513, %v4512
      %v4516 = vpack.c.b16 %v4514, %v4514
      %v4519 = vsel %vm324, %v4489, 0
      %v4522 = vsel %vm324, %v4490, 0
      %v4525 = vsel %vm324, %v4491, 0
      %v4528 = vsel %vm324, %v4492, 0
      %v4531 = vsel %vm324, %v4493, 0
      %v4534 = vsel %vm324, %v4494, 0
      %v4537 = vsel %vm324, %v4495, 0
      %v4540 = vsel %vm324, %v4496, 0
      %v4543 = vsel %vm324, %v4497, 0
      %v4546 = vsel %vm324, %v4498, 0
      %v4549 = vsel %vm324, %v4499, 0
      %v4552 = vsel %vm324, %v4500, 0
      %v4555 = vsel %vm324, %v4501, 0
      %v4558 = vsel %vm324, %v4502, 0
      %v4561 = vsel %vm324, %v4503, 0
      %v4564 = vsel %vm324, %v4504, 0
      %v4567 = vsel %vm324, %v4505, 0
      %v4570 = vsel %vm324, %v4506, 0
      %v4573 = vsel %vm324, %v4507, 0
      %v4576 = vsel %vm324, %v4508, 0
      %v4579 = vsel %vm385, %v4516, 0
      %4581 = vmatprep.subr.bf16.mxu0 0
      %4582 = vmatpush1.bf16.msra.mxu0 %v4515
      %4583 = vmatprep.subr.bf16.mxu0 0
      %4584 = vmatpush1.bf16.msra.mxu0 %v4579
      %4585 = vmatprep.subr.bf16.mxu0 0
      %4586 = vmatpush1.bf16.msra.mxu0 0
      %4587 = vmatprep.subr.bf16.mxu0 0
      %4588 = vmatpush1.bf16.msra.mxu0 0
      %4589 = vmatprep.subr.bf16.mxu0 0
      %4590 = vmatpush1.bf16.msra.mxu0 0
      %4591 = vmatprep.subr.bf16.mxu0 0
      %4592 = vmatpush1.bf16.msra.mxu0 0
      %4593 = vmatprep.subr.bf16.mxu0 0
      %4594 = vmatpush1.bf16.msra.mxu0 0
      %4595 = vmatprep.subr.bf16.mxu0 0
      %4596 = vmatpush1.bf16.msra.mxu0 0
      %4597 = vmatprep.subr.bf16.mxu0 0
      %4598 = vmatpush1.bf16.msra.mxu0 0
      %4599 = vmatprep.subr.bf16.mxu0 0
      %4600 = vmatpush1.bf16.msra.mxu0 0
      %4601 = vmatprep.subr.bf16.mxu0 0
      %4602 = vmatpush1.bf16.msra.mxu0 0
      %4603 = vmatprep.subr.bf16.mxu0 0
      %4604 = vmatpush1.bf16.msra.mxu0 0
      %4605 = vmatprep.subr.bf16.mxu0 0
      %4606 = vmatpush1.bf16.msra.mxu0 0
      %4607 = vmatprep.subr.bf16.mxu0 0
      %4608 = vmatpush1.bf16.msra.mxu0 0
      %4609 = vmatprep.subr.bf16.mxu0 0
      %4610 = vmatpush1.bf16.msra.mxu0 0
      %4611 = vmatprep.subr.bf16.mxu0 0
      %4612 = vmatpush1.bf16.msra.mxu0 0
      %4613 = vmatprep.mubr.bf16.mxu0 0
      %4614 = vmatmul.mubr.bf16.gmra.mrb[0].mxu0 %v4519
      %v4615 = vpop.f32.mrb[0].mxu0
      %v4616 = vadd.f32 0.0, %v4615
      %v4617 = vpop.f32.mrb[0].mxu0
      %v4618 = vpop.f32.mrb[0].mxu0
      %v4619 = vadd.f32 0.0, %v4618
      %v4620 = vpop.f32.mrb[0].mxu0
      %4621 = vmatprep.mubr.bf16.mxu0 0
      %4622 = vmatmul.mubr.bf16.gmra.mrb[0].mxu0 %v4522
      %v4623 = vpop.f32.mrb[0].mxu0
      %v4624 = vadd.f32 0.0, %v4623
      %v4625 = vpop.f32.mrb[0].mxu0
      %v4626 = vpop.f32.mrb[0].mxu0
      %v4627 = vadd.f32 0.0, %v4626
      %v4628 = vpop.f32.mrb[0].mxu0
      %4629 = vmatprep.mubr.bf16.mxu0 0
      %4630 = vmatmul.mubr.bf16.gmra.mrb[0].mxu0 %v4525
      %v4631 = vpop.f32.mrb[0].mxu0
      %v4632 = vadd.f32 0.0, %v4631
      %v4633 = vpop.f32.mrb[0].mxu0
      %v4634 = vpop.f32.mrb[0].mxu0
      %v4635 = vadd.f32 0.0, %v4634
      %v4636 = vpop.f32.mrb[0].mxu0
      %4637 = vmatprep.mubr.bf16.mxu0 0
      %4638 = vmatmul.mubr.bf16.gmra.mrb[0].mxu0 %v4528
      %v4639 = vpop.f32.mrb[0].mxu0
      %v4640 = vadd.f32 0.0, %v4639
      %v4641 = vpop.f32.mrb[0].mxu0
      %v4642 = vpop.f32.mrb[0].mxu0
      %v4643 = vadd.f32 0.0, %v4642
      %v4644 = vpop.f32.mrb[0].mxu0
      %4645 = vmatprep.mubr.bf16.mxu0 0
      %4646 = vmatmul.mubr.bf16.gmra.mrb[0].mxu0 %v4531
      %v4647 = vpop.f32.mrb[0].mxu0
      %v4648 = vadd.f32 0.0, %v4647
      %v4649 = vpop.f32.mrb[0].mxu0
      %v4650 = vpop.f32.mrb[0].mxu0
      %v4651 = vadd.f32 0.0, %v4650
      %v4652 = vpop.f32.mrb[0].mxu0
      %4653 = vmatprep.mubr.bf16.mxu0 0
      %4654 = vmatmul.mubr.bf16.gmra.mrb[0].mxu0 %v4534
      %v4655 = vpop.f32.mrb[0].mxu0
      %v4656 = vadd.f32 0.0, %v4655
      %v4657 = vpop.f32.mrb[0].mxu0
      %v4658 = vpop.f32.mrb[0].mxu0
      %v4659 = vadd.f32 0.0, %v4658
      %v4660 = vpop.f32.mrb[0].mxu0
      %4661 = vmatprep.mubr.bf16.mxu0 0
      %4662 = vmatmul.mubr.bf16.gmra.mrb[0].mxu0 %v4537
      %v4663 = vpop.f32.mrb[0].mxu0
      %v4664 = vadd.f32 0.0, %v4663
      %v4665 = vpop.f32.mrb[0].mxu0
      %v4666 = vpop.f32.mrb[0].mxu0
      %v4667 = vadd.f32 0.0, %v4666
      %v4668 = vpop.f32.mrb[0].mxu0
      %4669 = vmatprep.mubr.bf16.mxu0 0
      %4670 = vmatmul.mubr.bf16.gmra.mrb[0].mxu0 %v4540
      %v4671 = vpop.f32.mrb[0].mxu0
      %v4672 = vadd.f32 0.0, %v4671
      %v4673 = vpop.f32.mrb[0].mxu0
      %v4674 = vpop.f32.mrb[0].mxu0
      %v4675 = vadd.f32 0.0, %v4674
      %v4676 = vpop.f32.mrb[0].mxu0
      %4677 = vmatprep.mubr.bf16.mxu0 0
      %4678 = vmatmul.mubr.bf16.gmra.mrb[0].mxu0 %v4543
      %v4679 = vpop.f32.mrb[0].mxu0
      %v4680 = vadd.f32 0.0, %v4679
      %v4681 = vpop.f32.mrb[0].mxu0
      %v4682 = vpop.f32.mrb[0].mxu0
      %v4683 = vadd.f32 0.0, %v4682
      %v4684 = vpop.f32.mrb[0].mxu0
      %4685 = vmatprep.mubr.bf16.mxu0 0
      %4686 = vmatmul.mubr.bf16.gmra.mrb[0].mxu0 %v4546
      %v4687 = vpop.f32.mrb[0].mxu0
      %v4688 = vadd.f32 0.0, %v4687
      %v4689 = vpop.f32.mrb[0].mxu0
      %v4690 = vpop.f32.mrb[0].mxu0
      %v4691 = vadd.f32 0.0, %v4690
      %v4692 = vpop.f32.mrb[0].mxu0
      %4693 = vmatprep.mubr.bf16.mxu0 0
      %4694 = vmatmul.mubr.bf16.gmra.mrb[0].mxu0 %v4549
      %v4695 = vpop.f32.mrb[0].mxu0
      %v4696 = vadd.f32 0.0, %v4695
      %v4697 = vpop.f32.mrb[0].mxu0
      %v4698 = vpop.f32.mrb[0].mxu0
      %v4699 = vadd.f32 0.0, %v4698
      %v4700 = vpop.f32.mrb[0].mxu0
      %4701 = vmatprep.mubr.bf16.mxu0 0
      %4702 = vmatmul.mubr.bf16.gmra.mrb[0].mxu0 %v4552
      %v4703 = vpop.f32.mrb[0].mxu0
      %v4704 = vadd.f32 0.0, %v4703
      %v4705 = vpop.f32.mrb[0].mxu0
      %v4706 = vpop.f32.mrb[0].mxu0
      %v4707 = vadd.f32 0.0, %v4706
      %v4708 = vpop.f32.mrb[0].mxu0
      %4709 = vmatprep.mubr.bf16.mxu0 0
      %4710 = vmatmul.mubr.bf16.gmra.mrb[0].mxu0 %v4555
      %v4711 = vpop.f32.mrb[0].mxu0
      %v4712 = vadd.f32 0.0, %v4711
      %v4713 = vpop.f32.mrb[0].mxu0
      %v4714 = vpop.f32.mrb[0].mxu0
      %v4715 = vadd.f32 0.0, %v4714
      %v4716 = vpop.f32.mrb[0].mxu0
      %4717 = vmatprep.mubr.bf16.mxu0 0
      %4718 = vmatmul.mubr.bf16.gmra.mrb[0].mxu0 %v4558
      %v4719 = vpop.f32.mrb[0].mxu0
      %v4720 = vadd.f32 0.0, %v4719
      %v4721 = vpop.f32.mrb[0].mxu0
      %v4722 = vpop.f32.mrb[0].mxu0
      %v4723 = vadd.f32 0.0, %v4722
      %v4724 = vpop.f32.mrb[0].mxu0
      %4725 = vmatprep.mubr.bf16.mxu0 0
      %4726 = vmatmul.mubr.bf16.gmra.mrb[0].mxu0 %v4561
      %v4727 = vpop.f32.mrb[0].mxu0
      %v4728 = vadd.f32 0.0, %v4727
      %v4729 = vpop.f32.mrb[0].mxu0
      %v4730 = vpop.f32.mrb[0].mxu0
      %v4731 = vadd.f32 0.0, %v4730
      %v4732 = vpop.f32.mrb[0].mxu0
      %4733 = vmatprep.mubr.bf16.mxu0 0
      %4734 = vmatmul.mubr.bf16.gmra.mrb[0].mxu0 %v4564
      %v4735 = vpop.f32.mrb[0].mxu0
      %v4736 = vadd.f32 0.0, %v4735
      %v4737 = vpop.f32.mrb[0].mxu0
      %v4738 = vpop.f32.mrb[0].mxu0
      %v4739 = vadd.f32 0.0, %v4738
      %v4740 = vpop.f32.mrb[0].mxu0
      %4741 = vmatprep.mubr.bf16.mxu0 0
      %4742 = vmatmul.mubr.bf16.gmra.mrb[0].mxu0 %v4567
      %v4743 = vpop.f32.mrb[0].mxu0
      %v4744 = vadd.f32 0.0, %v4743
      %v4745 = vpop.f32.mrb[0].mxu0
      %v4746 = vpop.f32.mrb[0].mxu0
      %v4747 = vadd.f32 0.0, %v4746
      %v4748 = vpop.f32.mrb[0].mxu0
      %4749 = vmatprep.mubr.bf16.mxu0 0
      %4750 = vmatmul.mubr.bf16.gmra.mrb[0].mxu0 %v4570
      %v4751 = vpop.f32.mrb[0].mxu0
      %v4752 = vadd.f32 0.0, %v4751
      %v4753 = vpop.f32.mrb[0].mxu0
      %v4754 = vpop.f32.mrb[0].mxu0
      %v4755 = vadd.f32 0.0, %v4754
      %v4756 = vpop.f32.mrb[0].mxu0
      %4757 = vmatprep.mubr.bf16.mxu0 0
      %4758 = vmatmul.mubr.bf16.gmra.mrb[0].mxu0 %v4573
      %v4759 = vpop.f32.mrb[0].mxu0
      %v4760 = vadd.f32 0.0, %v4759
      %v4761 = vpop.f32.mrb[0].mxu0
      %v4762 = vpop.f32.mrb[0].mxu0
      %v4763 = vadd.f32 0.0, %v4762
      %v4764 = vpop.f32.mrb[0].mxu0
      %4765 = vmatprep.mubr.bf16.mxu0 0
      %4766 = vmatmul.mubr.bf16.gmra.mrb[0].mxu0 %v4576
      %v4767 = vpop.f32.mrb[0].mxu0
      %v4768 = vadd.f32 0.0, %v4767
      %v4769 = vpop.f32.mrb[0].mxu0
      %v4770 = vpop.f32.mrb[0].mxu0
      %v4771 = vadd.f32 0.0, %v4770
      %v4772 = vpop.f32.mrb[0].mxu0
      %4773 = vdwg.mxu0
      %v4774 = vadd.f32 %v4325, %v4616
      %v4775 = vadd.f32 %v4326, %v4619
      %v4776 = vadd.f32 %v4327, %v4624
      %v4777 = vadd.f32 %v4328, %v4627
      %v4778 = vadd.f32 %v4329, %v4632
      %v4779 = vadd.f32 %v4330, %v4635
      %v4780 = vadd.f32 %v4331, %v4640
      %v4781 = vadd.f32 %v4332, %v4643
      %v4782 = vadd.f32 %v4333, %v4648
      %v4783 = vadd.f32 %v4334, %v4651
      %v4784 = vadd.f32 %v4335, %v4656
      %v4785 = vadd.f32 %v4336, %v4659
      %v4786 = vadd.f32 %v4337, %v4664
      %v4787 = vadd.f32 %v4338, %v4667
      %v4788 = vadd.f32 %v4339, %v4672
      %v4789 = vadd.f32 %v4340, %v4675
      %v4790 = vadd.f32 %v4341, %v4680
      %v4791 = vadd.f32 %v4342, %v4683
      %v4792 = vadd.f32 %v4343, %v4688
      %v4793 = vadd.f32 %v4344, %v4691
      %v4794 = vadd.f32 %v4345, %v4696
      %v4795 = vadd.f32 %v4346, %v4699
      %v4796 = vadd.f32 %v4347, %v4704
      %v4797 = vadd.f32 %v4348, %v4707
      %v4798 = vadd.f32 %v4349, %v4712
      %v4799 = vadd.f32 %v4350, %v4715
      %v4800 = vadd.f32 %v4351, %v4720
      %v4801 = vadd.f32 %v4352, %v4723
      %v4802 = vadd.f32 %v4353, %v4728
      %v4803 = vadd.f32 %v4354, %v4731
      %v4804 = vadd.f32 %v4355, %v4736
      %v4805 = vadd.f32 %v4356, %v4739
      %v4806 = vadd.f32 %v4357, %v4744
      %v4807 = vadd.f32 %v4358, %v4747
      %v4808 = vadd.f32 %v4359, %v4752
      %v4809 = vadd.f32 %v4360, %v4755
      %v4810 = vadd.f32 %v4361, %v4760
      %v4811 = vadd.f32 %v4362, %v4763
      %v4812 = vadd.f32 %v4363, %v4768
      %v4813 = vadd.f32 %v4364, %v4771
      %4814 = vst [vmem:[%s170] sm:$0xff] %v4774
      %4815 = vst [vmem:[%s170 + $0x8] sm:$0xff] %v4775
      %4816 = vst [vmem:[%s170 + $0x10] sm:$0xff] %v4776
      %4817 = vst [vmem:[%s170 + $0x18] sm:$0xff] %v4777
      %4818 = vst [vmem:[%s170 + $0x20] sm:$0xff] %v4778
      %4819 = vst [vmem:[%s170 + $0x28] sm:$0xff] %v4779
      %4820 = vst [vmem:[%s170 + $0x30] sm:$0xff] %v4780
      %4821 = vst [vmem:[%s170 + $0x38] sm:$0xff] %v4781
      %4822 = vst [vmem:[%s170 + $0x40] sm:$0xff] %v4782
      %4823 = vst [vmem:[%s170 + $0x48] sm:$0xff] %v4783
      %4824 = vst [vmem:[%s170 + $0x50] sm:$0xff] %v4784
      %4825 = vst [vmem:[%s170 + $0x58] sm:$0xff] %v4785
      %4826 = vst [vmem:[%s170 + $0x60] sm:$0xff] %v4786
      %4827 = vst [vmem:[%s170 + $0x68] sm:$0xff] %v4787
      %4828 = vst [vmem:[%s170 + $0x70] sm:$0xff] %v4788
      %4829 = vst [vmem:[%s170 + $0x78] sm:$0xff] %v4789
      %4830 = vst [vmem:[%s170 + $0x80] sm:$0xff] %v4790
      %4831 = vst [vmem:[%s170 + $0x88] sm:$0xff] %v4791
      %4832 = vst [vmem:[%s170 + $0x90] sm:$0xff] %v4792
      %4833 = vst [vmem:[%s170 + $0x98] sm:$0xff] %v4793
      %4834 = vst [vmem:[%s170 + $0xa0] sm:$0xff] %v4794
      %4835 = vst [vmem:[%s170 + $0xa8] sm:$0xff] %v4795
      %4836 = vst [vmem:[%s170 + $0xb0] sm:$0xff] %v4796
      %4837 = vst [vmem:[%s170 + $0xb8] sm:$0xff] %v4797
      %4838 = vst [vmem:[%s170 + $0xc0] sm:$0xff] %v4798
      %4839 = vst [vmem:[%s170 + $0xc8] sm:$0xff] %v4799
      %4840 = vst [vmem:[%s170 + $0xd0] sm:$0xff] %v4800
      %4841 = vst [vmem:[%s170 + $0xd8] sm:$0xff] %v4801
      %4842 = vst [vmem:[%s170 + $0xe0] sm:$0xff] %v4802
      %4843 = vst [vmem:[%s170 + $0xe8] sm:$0xff] %v4803
      %4844 = vst [vmem:[%s170 + $0xf0] sm:$0xff] %v4804
      %4845 = vst [vmem:[%s170 + $0xf8] sm:$0xff] %v4805
      %4846 = vst [vmem:[%s170 + $0x100] sm:$0xff] %v4806
      %4847 = vst [vmem:[%s170 + $0x108] sm:$0xff] %v4807
      %4848 = vst [vmem:[%s170 + $0x110] sm:$0xff] %v4808
      %4849 = vst [vmem:[%s170 + $0x118] sm:$0xff] %v4809
      %4850 = vst [vmem:[%s170 + $0x120] sm:$0xff] %v4810
      %4851 = vst [vmem:[%s170 + $0x128] sm:$0xff] %v4811
      %4852 = vst [vmem:[%s170 + $0x130] sm:$0xff] %v4812
      %4853 = vst [vmem:[%s170 + $0x138] sm:$0xff] %v4813
      %v4854 = vld [vmem:[%s170] sm:$0xff]
      %v4855 = vld [vmem:[%s170 + $0x8] sm:$0xff]
      %v4856 = vld [vmem:[%s170 + $0x10] sm:$0xff]
      %v4857 = vld [vmem:[%s170 + $0x18] sm:$0xff]
      %v4858 = vld [vmem:[%s170 + $0x20] sm:$0xff]
      %v4859 = vld [vmem:[%s170 + $0x28] sm:$0xff]
      %v4860 = vld [vmem:[%s170 + $0x30] sm:$0xff]
      %v4861 = vld [vmem:[%s170 + $0x38] sm:$0xff]
      %v4862 = vld [vmem:[%s170 + $0x40] sm:$0xff]
      %v4863 = vld [vmem:[%s170 + $0x48] sm:$0xff]
      %v4864 = vld [vmem:[%s170 + $0x50] sm:$0xff]
      %v4865 = vld [vmem:[%s170 + $0x58] sm:$0xff]
      %v4866 = vld [vmem:[%s170 + $0x60] sm:$0xff]
      %v4867 = vld [vmem:[%s170 + $0x68] sm:$0xff]
      %v4868 = vld [vmem:[%s170 + $0x70] sm:$0xff]
      %v4869 = vld [vmem:[%s170 + $0x78] sm:$0xff]
      %v4870 = vld [vmem:[%s170 + $0x80] sm:$0xff]
      %v4871 = vld [vmem:[%s170 + $0x88] sm:$0xff]
      %v4872 = vld [vmem:[%s170 + $0x90] sm:$0xff]
      %v4873 = vld [vmem:[%s170 + $0x98] sm:$0xff]
      %v4874 = vld [vmem:[%s170 + $0xa0] sm:$0xff]
      %v4875 = vld [vmem:[%s170 + $0xa8] sm:$0xff]
      %v4876 = vld [vmem:[%s170 + $0xb0] sm:$0xff]
      %v4877 = vld [vmem:[%s170 + $0xb8] sm:$0xff]
      %v4878 = vld [vmem:[%s170 + $0xc0] sm:$0xff]
      %v4879 = vld [vmem:[%s170 + $0xc8] sm:$0xff]
      %v4880 = vld [vmem:[%s170 + $0xd0] sm:$0xff]
      %v4881 = vld [vmem:[%s170 + $0xd8] sm:$0xff]
      %v4882 = vld [vmem:[%s170 + $0xe0] sm:$0xff]
      %v4883 = vld [vmem:[%s170 + $0xe8] sm:$0xff]
      %v4884 = vld [vmem:[%s170 + $0xf0] sm:$0xff]
      %v4885 = vld [vmem:[%s170 + $0xf8] sm:$0xff]
      %v4886 = vld [vmem:[%s170 + $0x100] sm:$0xff]
      %v4887 = vld [vmem:[%s170 + $0x108] sm:$0xff]
      %v4888 = vld [vmem:[%s170 + $0x110] sm:$0xff]
      %v4889 = vld [vmem:[%s170 + $0x118] sm:$0xff]
      %v4890 = vld [vmem:[%s170 + $0x120] sm:$0xff]
      %v4891 = vld [vmem:[%s170 + $0x128] sm:$0xff]
      %v4892 = vld [vmem:[%s170 + $0x130] sm:$0xff]
      %v4893 = vld [vmem:[%s170 + $0x138] sm:$0xff]
      %v4894 = vld [vmem:[%s2] sm:$0x1]
      %v4896 = vlaneseq
      %v4897 = vshrl.u32 %v4896, 7
      %v4898 = vsub.s32 0, %v4897
      %v4899 = vrot.slane %v4894, %v4898
      %v4901 = vadd.f32 %v4854, %v4899
      %v4902 = vadd.f32 %v4855, %v4899
      %v4903 = vadd.f32 %v4856, %v4899
      %v4904 = vadd.f32 %v4857, %v4899
      %v4905 = vadd.f32 %v4858, %v4899
      %v4906 = vadd.f32 %v4859, %v4899
      %v4907 = vadd.f32 %v4860, %v4899
      %v4908 = vadd.f32 %v4861, %v4899
      %v4909 = vadd.f32 %v4862, %v4899
      %v4910 = vadd.f32 %v4863, %v4899
      %v4911 = vadd.f32 %v4864, %v4899
      %v4912 = vadd.f32 %v4865, %v4899
      %v4913 = vadd.f32 %v4866, %v4899
      %v4914 = vadd.f32 %v4867, %v4899
      %v4915 = vadd.f32 %v4868, %v4899
      %v4916 = vadd.f32 %v4869, %v4899
      %v4917 = vadd.f32 %v4870, %v4899
      %v4918 = vadd.f32 %v4871, %v4899
      %v4919 = vadd.f32 %v4872, %v4899
      %v4920 = vadd.f32 %v4873, %v4899
      %v4921 = vadd.f32 %v4874, %v4899
      %v4922 = vadd.f32 %v4875, %v4899
      %v4923 = vadd.f32 %v4876, %v4899
      %v4924 = vadd.f32 %v4877, %v4899
      %v4925 = vadd.f32 %v4878, %v4899
      %v4926 = vadd.f32 %v4879, %v4899
      %v4927 = vadd.f32 %v4880, %v4899
      %v4928 = vadd.f32 %v4881, %v4899
      %v4929 = vadd.f32 %v4882, %v4899
      %v4930 = vadd.f32 %v4883, %v4899
      %v4931 = vadd.f32 %v4884, %v4899
      %v4932 = vadd.f32 %v4885, %v4899
      %v4933 = vadd.f32 %v4886, %v4899
      %v4934 = vadd.f32 %v4887, %v4899
      %v4935 = vadd.f32 %v4888, %v4899
      %v4936 = vadd.f32 %v4889, %v4899
      %v4937 = vadd.f32 %v4890, %v4899
      %v4938 = vadd.f32 %v4891, %v4899
      %v4939 = vadd.f32 %v4892, %v4899
      %v4940 = vadd.f32 %v4893, %v4899
      %v4941 = vmax.f32 %v4901, 0.0
      %v4942 = vmax.f32 %v4902, 0.0
      %v4943 = vmax.f32 %v4903, 0.0
      %v4944 = vmax.f32 %v4904, 0.0
      %v4945 = vmax.f32 %v4905, 0.0
      %v4946 = vmax.f32 %v4906, 0.0
      %v4947 = vmax.f32 %v4907, 0.0
      %v4948 = vmax.f32 %v4908, 0.0
      %v4949 = vmax.f32 %v4909, 0.0
      %v4950 = vmax.f32 %v4910, 0.0
      %v4951 = vmax.f32 %v4911, 0.0
      %v4952 = vmax.f32 %v4912, 0.0
      %v4953 = vmax.f32 %v4913, 0.0
      %v4954 = vmax.f32 %v4914, 0.0
      %v4955 = vmax.f32 %v4915, 0.0
      %v4956 = vmax.f32 %v4916, 0.0
      %v4957 = vmax.f32 %v4917, 0.0
      %v4958 = vmax.f32 %v4918, 0.0
      %v4959 = vmax.f32 %v4919, 0.0
      %v4960 = vmax.f32 %v4920, 0.0
      %v4961 = vmax.f32 %v4921, 0.0
      %v4962 = vmax.f32 %v4922, 0.0
      %v4963 = vmax.f32 %v4923, 0.0
      %v4964 = vmax.f32 %v4924, 0.0
      %v4965 = vmax.f32 %v4925, 0.0
      %v4966 = vmax.f32 %v4926, 0.0
      %v4967 = vmax.f32 %v4927, 0.0
      %v4968 = vmax.f32 %v4928, 0.0
      %v4969 = vmax.f32 %v4929, 0.0
      %v4970 = vmax.f32 %v4930, 0.0
      %v4971 = vmax.f32 %v4931, 0.0
      %v4972 = vmax.f32 %v4932, 0.0
      %v4973 = vmax.f32 %v4933, 0.0
      %v4974 = vmax.f32 %v4934, 0.0
      %v4975 = vmax.f32 %v4935, 0.0
      %v4976 = vmax.f32 %v4936, 0.0
      %v4977 = vmax.f32 %v4937, 0.0
      %v4978 = vmax.f32 %v4938, 0.0
      %v4979 = vmax.f32 %v4939, 0.0
      %v4980 = vmax.f32 %v4940, 0.0
      %4981 = vst [vmem:[%s170] sm:$0xff] %v4941
      %4982 = vst [vmem:[%s170 + $0x8] sm:$0xff] %v4942
      %4983 = vst [vmem:[%s170 + $0x10] sm:$0xff] %v4943
      %4984 = vst [vmem:[%s170 + $0x18] sm:$0xff] %v4944
      %4985 = vst [vmem:[%s170 + $0x20] sm:$0xff] %v4945
      %4986 = vst [vmem:[%s170 + $0x28] sm:$0xff] %v4946
      %4987 = vst [vmem:[%s170 + $0x30] sm:$0xff] %v4947
      %4988 = vst [vmem:[%s170 + $0x38] sm:$0xff] %v4948
      %4989 = vst [vmem:[%s170 + $0x40] sm:$0xff] %v4949
      %4990 = vst [vmem:[%s170 + $0x48] sm:$0xff] %v4950
      %4991 = vst [vmem:[%s170 + $0x50] sm:$0xff] %v4951
      %4992 = vst [vmem:[%s170 + $0x58] sm:$0xff] %v4952
      %4993 = vst [vmem:[%s170 + $0x60] sm:$0xff] %v4953
      %4994 = vst [vmem:[%s170 + $0x68] sm:$0xff] %v4954
      %4995 = vst [vmem:[%s170 + $0x70] sm:$0xff] %v4955
      %4996 = vst [vmem:[%s170 + $0x78] sm:$0xff] %v4956
      %4997 = vst [vmem:[%s170 + $0x80] sm:$0xff] %v4957
      %4998 = vst [vmem:[%s170 + $0x88] sm:$0xff] %v4958
      %4999 = vst [vmem:[%s170 + $0x90] sm:$0xff] %v4959
      %5000 = vst [vmem:[%s170 + $0x98] sm:$0xff] %v4960
      %5001 = vst [vmem:[%s170 + $0xa0] sm:$0xff] %v4961
      %5002 = vst [vmem:[%s170 + $0xa8] sm:$0xff] %v4962
      %5003 = vst [vmem:[%s170 + $0xb0] sm:$0xff] %v4963
      %5004 = vst [vmem:[%s170 + $0xb8] sm:$0xff] %v4964
      %5005 = vst [vmem:[%s170 + $0xc0] sm:$0xff] %v4965
      %5006 = vst [vmem:[%s170 + $0xc8] sm:$0xff] %v4966
      %5007 = vst [vmem:[%s170 + $0xd0] sm:$0xff] %v4967
      %5008 = vst [vmem:[%s170 + $0xd8] sm:$0xff] %v4968
      %5009 = vst [vmem:[%s170 + $0xe0] sm:$0xff] %v4969
      %5010 = vst [vmem:[%s170 + $0xe8] sm:$0xff] %v4970
      %5011 = vst [vmem:[%s170 + $0xf0] sm:$0xff] %v4971
      %5012 = vst [vmem:[%s170 + $0xf8] sm:$0xff] %v4972
      %5013 = vst [vmem:[%s170 + $0x100] sm:$0xff] %v4973
      %5014 = vst [vmem:[%s170 + $0x108] sm:$0xff] %v4974
      %5015 = vst [vmem:[%s170 + $0x110] sm:$0xff] %v4975
      %5016 = vst [vmem:[%s170 + $0x118] sm:$0xff] %v4976
      %5017 = vst [vmem:[%s170 + $0x120] sm:$0xff] %v4977
      %5018 = vst [vmem:[%s170 + $0x128] sm:$0xff] %v4978
      %5019 = vst [vmem:[%s170 + $0x130] sm:$0xff] %v4979
      %5020 = vst [vmem:[%s170 + $0x138] sm:$0xff] %v4980
      %p5021 = scmp.lt.s32.totalorder %s14, 1
      %s5022 = scalar_select %p5021, %s14, 1
      %s5023 = smul.addr %s5022, 40
      %s5024 = smul.addr %s5023, 8
      %s5025 = scalar_lea.vmem %s3, %s5024
      // Predicated region
      $region33: #{mixed_forward.5} parent=31 // pred_check
        %p5026 = pneg %p100
      $region34: #{mixed_forward.5} parent=31 // pred_check_branch
        %5028 = sbr.rel (%p5026) target = $region36
      $region35: #{mixed_forward.5} parent=31 // pred_region
        _
      $region36: #{mixed_forward.5} parent=31 // pred_fallthru
        _
    $region32: #{mixed_forward.5} parent=5 // pred_fallthru
      _
    %p5029 = scmp.le.s32.totalorder 2, %s9
    // Predicated region
    $region37: #{mixed_forward.5} parent=5 // pred_check
      %p5030 = pneg %p5029
    $region38: #{mixed_forward.5} parent=5 // pred_check_branch
      %5032 = sbr.rel (%p5030) target = $region40
    $region39: #{mixed_forward.5} parent=5 // pred_region
      %s5033 = ssub.s32 %s9, 2
      // Predicated region
      $region41: #{mixed_forward.5} parent=39 // pred_check
        %p5034 = pneg %p106
      $region42: #{mixed_forward.5} parent=39 // pred_check_branch
        %5036 = sbr.rel (%p5034) target = $region44
      $region43: #{mixed_forward.5} parent=39 // pred_region
        %p5037 = scmp.lt.s32.totalorder %s15, 1
        %s5038 = scalar_select %p5037, %s15, 1
        %s5039 = smul.addr %s5038, 40
        %s5040 = smul.addr %s5039, 8
        %s5041 = scalar_lea.vmem %s3, %s5040
      $region44: #{mixed_forward.5} parent=39 // pred_fallthru
        _
    $region40: #{mixed_forward.5} parent=5 // pred_fallthru
      _
  $region6: #{mixed_forward.5} parent=0 // loop_footer
    %s13 = sadd.s32 1, %s9
  $region7: #{mixed_forward.5} parent=0 // loop_footer_branch
    %8 = sbr.rel target = $region3
  $region8: #{mixed_forward.5} parent=0 // loop_exit
    _

// kernel: mixed_forward.7
$region0: #{mixed_forward.7}
  #allocation0 [shape = 'u32[]', space=smem, size = 0x4, offset = 0x4, fixed_abs, tag = 'smem constant byte address 0x4 - core index']
  #allocation1 [shape = 'u32[144,128]{1,0:T(1,128)}', space=vmem, size = 0x12000, scoped, tag = 'internal scratch']
  %s0 = inlined_call_operand.vmem [shape: bf16[2,606,8], index: 0, kind: input, shape index: {}]
  %s1 = inlined_call_operand.vmem [shape: bf16[8,128], index: 1, kind: input, shape index: {}]
  %s2 = inlined_call_operand.vmem [shape: f32[1,128], index: 2, kind: input, shape index: {}]
  %s3 = inlined_call_operand.vmem [shape: f32[2,384,128], index: 3, kind: output, shape index: {}]
  %s4 = sld [smem:[#allocation0]]
  $region45: #{mixed_forward.7} parent=0
    _
  %s6 = ssub.s32 1, %s4
  %s7 = scalar_select 0, %s6, %s4
  loop: start=0, step=1, limit=4
  $region2: #{mixed_forward.7} parent=0 // loop_pre_header
    _
  $region3: #{mixed_forward.7} parent=0 // loop_header
    %s9 = sphi 0, %s13
    %p10 = scmp.ge.s32.totalorder %s9, 4
    %s19 = sphi 0, %s21
    %s22 = sphi 0, %s19
    %s23 = sphi 0, %s22
    %s39 = sphi 0, %s23
    %s43 = sphi 0, %s43
    %s45 = sphi 0, %s43
    %s46 = sphi 0, %s45
    %s60 = sphi 0, %s46
    %s64 = sphi 0, %s64
    %s66 = sphi 0, %s64
    %s67 = sphi 0, %s66
    %s81 = sphi 0, %s67
    %s87 = sphi 0, %s89
    %s90 = sphi 0, %s87
    %s91 = sphi 0, %s90
    %s107 = sphi 0, %s91
  $region4: #{mixed_forward.7} parent=0 // loop_header_branch
    %12 = sbr.rel (%p10) target = $region8
  $region5: #{mixed_forward.7} parent=0 // loop_body
    %s14 = ssub.s32 %s9, 1
    %s15 = ssub.s32 %s9, 2
    %s16 = sadd.s32 %s9, 1
    %s17 = ssub.s32 %s9, %s16
    %p18 = scmp.eq.s32.totalorder %s17, 0
    %s20 = sadd.s32 %s19, 1
    %s21 = scalar_select %p18, %s19, %s20
    %p24 = pneg %p18
    %p25 = scmp.eq.s32.totalorder %s9, 1
    %p26 = por %p24, %p25
    %p27 = scmp.ne.s32.totalorder %s19, %s22
    %p28 = scmp.eq.s32.totalorder %s9, 0
    %p29 = por %p27, %p28
    %p30 = scmp.ne.s32.totalorder %s19, %s22
    %p31 = scmp.eq.s32.totalorder %s14, 1
    %p32 = por %p30, %p31
    %p33 = scmp.ne.s32.totalorder %s22, %s23
    %p34 = scmp.eq.s32.totalorder %s14, 0
    %p35 = por %p33, %p34
    %p36 = scmp.ne.s32.totalorder %s22, %s23
    %p37 = scmp.eq.s32.totalorder %s15, 1
    %p38 = por %p36, %p37
    %p40 = scmp.ne.s32.totalorder %s23, %s39
    %p41 = scmp.eq.s32.totalorder %s15, 0
    %p42 = por %p40, %p41
    %s44 = sadd.s32 %s43, 1
    %p47 = scmp.eq.s32.totalorder %s9, 1
    %p48 = scmp.ne.s32.totalorder %s43, %s45
    %p49 = scmp.eq.s32.totalorder %s9, 0
    %p50 = por %p48, %p49
    %p51 = scmp.ne.s32.totalorder %s43, %s45
    %p52 = scmp.eq.s32.totalorder %s14, 1
    %p53 = por %p51, %p52
    %p54 = scmp.ne.s32.totalorder %s45, %s46
    %p55 = scmp.eq.s32.totalorder %s14, 0
    %p56 = por %p54, %p55
    %p57 = scmp.ne.s32.totalorder %s45, %s46
    %p58 = scmp.eq.s32.totalorder %s15, 1
    %p59 = por %p57, %p58
    %p61 = scmp.ne.s32.totalorder %s46, %s60
    %p62 = scmp.eq.s32.totalorder %s15, 0
    %p63 = por %p61, %p62
    %s65 = sadd.s32 %s64, 1
    %p68 = scmp.eq.s32.totalorder %s9, 1
    %p69 = scmp.ne.s32.totalorder %s64, %s66
    %p70 = scmp.eq.s32.totalorder %s9, 0
    %p71 = por %p69, %p70
    %p72 = scmp.ne.s32.totalorder %s64, %s66
    %p73 = scmp.eq.s32.totalorder %s14, 1
    %p74 = por %p72, %p73
    %p75 = scmp.ne.s32.totalorder %s66, %s67
    %p76 = scmp.eq.s32.totalorder %s14, 0
    %p77 = por %p75, %p76
    %p78 = scmp.ne.s32.totalorder %s66, %s67
    %p79 = scmp.eq.s32.totalorder %s15, 1
    %p80 = por %p78, %p79
    %p82 = scmp.ne.s32.totalorder %s67, %s81
    %p83 = scmp.eq.s32.totalorder %s15, 0
    %p84 = por %p82, %p83
    %s85 = ssub.s32 %s9, %s16
    %p86 = scmp.eq.s32.totalorder %s85, 0
    %s88 = sadd.s32 %s87, 1
    %s89 = scalar_select %p86, %s87, %s88
    %p92 = pneg %p86
    %p93 = scmp.eq.s32.totalorder %s9, 1
    %p94 = por %p92, %p93
    %p95 = scmp.ne.s32.totalorder %s87, %s90
    %p96 = scmp.eq.s32.totalorder %s9, 0
    %p97 = por %p95, %p96
    %p98 = scmp.ne.s32.totalorder %s87, %s90
    %p99 = scmp.eq.s32.totalorder %s14, 1
    %p100 = por %p98, %p99
    %p101 = scmp.ne.s32.totalorder %s90, %s91
    %p102 = scmp.eq.s32.totalorder %s14, 0
    %p103 = por %p101, %p102
    %p104 = scmp.ne.s32.totalorder %s90, %s91
    %p105 = scmp.eq.s32.totalorder %s15, 1
    %p106 = por %p104, %p105
    %p108 = scmp.ne.s32.totalorder %s91, %s107
    %p109 = scmp.eq.s32.totalorder %s15, 0
    %p110 = por %p108, %p109
    %p111 = scmp.le.s32.totalorder 1, %s9
    %p112 = scmp.lt.s32.totalorder %s9, 3
    %p113 = pnand %p111, %p112
    %p114 = pneg %p113
    // Predicated region
    $region9: #{mixed_forward.7} parent=5 // pred_check
      _
    $region10: #{mixed_forward.7} parent=5 // pred_check_branch
      %116 = sbr.rel (%p113) target = $region12
    $region11: #{mixed_forward.7} parent=5 // pred_region
      %s117 = ssub.s32 %s9, 1
      // Predicated region
      $region13: #{mixed_forward.7} parent=11 // pred_check
        %p118 = pneg %p56
      $region14: #{mixed_forward.7} parent=11 // pred_check_branch
        %120 = sbr.rel (%p118) target = $region16
      $region15: #{mixed_forward.7} parent=11 // pred_region
        _
      $region16: #{mixed_forward.7} parent=11 // pred_fallthru
        _
      // Predicated region
      $region17: #{mixed_forward.7} parent=11 // pred_check
        %p121 = pneg %p77
      $region18: #{mixed_forward.7} parent=11 // pred_check_branch
        %123 = sbr.rel (%p121) target = $region20
      $region19: #{mixed_forward.7} parent=11 // pred_region
        _
      $region20: #{mixed_forward.7} parent=11 // pred_fallthru
        _
    $region12: #{mixed_forward.7} parent=5 // pred_fallthru
      _
    %p124 = scmp.lt.s32.totalorder %s9, 2
    // Predicated region
    $region21: #{mixed_forward.7} parent=5 // pred_check
      %p125 = pneg %p124
    $region22: #{mixed_forward.7} parent=5 // pred_check_branch
      %127 = sbr.rel (%p125) target = $region24
    $region23: #{mixed_forward.7} parent=5 // pred_region
      // Predicated region
      $region25: #{mixed_forward.7} parent=23 // pred_check
        %p128 = pneg %p29
      $region26: #{mixed_forward.7} parent=23 // pred_check_branch
        %130 = sbr.rel (%p128) target = $region28
      $region27: #{mixed_forward.7} parent=23 // pred_region
        %p131 = scmp.lt.s32.totalorder %s9, 1
        %s132 = scalar_select %p131, %s9, 1
        %s133 = smul.addr %s132, 76
        %s134 = smul.addr %s133, 4
        %s135 = scalar_lea.vmem %s0, %s134
      $region28: #{mixed_forward.7} parent=23 // pred_fallthru
        _
    $region24: #{mixed_forward.7} parent=5 // pred_fallthru
      _
    %p136 = scmp.le.s32.totalorder 1, %s9
    %p137 = scmp.lt.s32.totalorder %s9, 3
    %p138 = pnand %p136, %p137
    %p139 = pneg %p138
    // Predicated region
    $region29: #{mixed_forward.7} parent=5 // pred_check
      _
    $region30: #{mixed_forward.7} parent=5 // pred_check_branch
      %141 = sbr.rel (%p138) target = $region32
    $region31: #{mixed_forward.7} parent=5 // pred_region
      %s142 = ssub.s32 %s9, 1
      %p143 = scmp.lt.s32.totalorder %s14, 1
      %s144 = scalar_select %p143, %s14, 1
      %s145 = smul.addr %s144, 76
      %s146 = smul.addr %s145, 4
      %s147 = scalar_lea.vmem %s0, %s146
      %p148 = pneg %p35
      %p149 = pneg %p32
      %p150 = pneg %p56
      %p151 = pneg %p53
      %p152 = pneg %p77
      %p153 = pneg %p74
      %p154 = pneg %p103
      %p155 = pneg %p100
      %p156 = scmp.lt.s32.totalorder %s14, 1
      %s157 = scalar_select %p156, %s14, 1
      %s158 = smul.addr %s157, 48
      %s159 = smul.addr %s158, 8
      %s160 = scalar_lea.vmem %s3, %s159
      %p161 = scmp.lt.s32.totalorder %s14, 1
      %s162 = scalar_select %p161, %s14, 1
      %s163 = smul.addr %s162, 76
      %s164 = smul.addr %s163, 4
      %s165 = scalar_lea.vmem %s0, %s164
      %p166 = scmp.lt.s32.totalorder %s14, 1
      %s167 = scalar_select %p166, %s14, 1
      %s168 = smul.addr %s167, 48
      %s169 = smul.addr %s168, 8
      %s170 = scalar_lea.vmem %s3, %s169
      %v172 = vld [vmem:[%s165] sm:$0xf]
      %v173 = vld [vmem:[%s165 + $0x4] sm:$0xf]
      %v174 = vld [vmem:[%s165 + $0x8] sm:$0xf]
      %v175 = vld [vmem:[%s165 + $0xc] sm:$0xf]
      %v176 = vld [vmem:[%s165 + $0x10] sm:$0xf]
      %v177 = vld [vmem:[%s165 + $0x14] sm:$0xf]
      %v178 = vld [vmem:[%s165 + $0x18] sm:$0xf]
      %v179 = vld [vmem:[%s165 + $0x1c] sm:$0xf]
      %v180 = vld [vmem:[%s165 + $0x20] sm:$0xf]
      %v181 = vld [vmem:[%s165 + $0x24] sm:$0xf]
      %v182 = vld [vmem:[%s165 + $0x28] sm:$0xf]
      %v183 = vld [vmem:[%s165 + $0x2c] sm:$0xf]
      %v184 = vld [vmem:[%s165 + $0x30] sm:$0xf]
      %v185 = vld [vmem:[%s165 + $0x34] sm:$0xf]
      %v186 = vld [vmem:[%s165 + $0x38] sm:$0xf]
      %v187 = vld [vmem:[%s165 + $0x3c] sm:$0xf]
      %v188 = vld [vmem:[%s165 + $0x40] sm:$0xf]
      %v189 = vld [vmem:[%s165 + $0x44] sm:$0xf]
      %v190 = vld [vmem:[%s165 + $0x48] sm:$0xf]
      %v191 = vld [vmem:[%s165 + $0x4c] sm:$0xf]
      %v192 = vld [vmem:[%s165 + $0x50] sm:$0xf]
      %v193 = vld [vmem:[%s165 + $0x54] sm:$0xf]
      %v194 = vld [vmem:[%s165 + $0x58] sm:$0xf]
      %v195 = vld [vmem:[%s165 + $0x5c] sm:$0xf]
      %v196 = vld [vmem:[%s165 + $0x60] sm:$0xf]
      %v197 = vld [vmem:[%s165 + $0x64] sm:$0xf]
      %v198 = vld [vmem:[%s165 + $0x68] sm:$0xf]
      %v199 = vld [vmem:[%s165 + $0x6c] sm:$0xf]
      %v200 = vld [vmem:[%s165 + $0x70] sm:$0xf]
      %v201 = vld [vmem:[%s165 + $0x74] sm:$0xf]
      %v202 = vld [vmem:[%s165 + $0x78] sm:$0xf]
      %v203 = vld [vmem:[%s165 + $0x7c] sm:$0xf]
      %v204 = vld [vmem:[%s165 + $0x80] sm:$0xf]
      %v205 = vld [vmem:[%s165 + $0x84] sm:$0xf]
      %v206 = vld [vmem:[%s165 + $0x88] sm:$0xf]
      %v207 = vld [vmem:[%s165 + $0x8c] sm:$0xf]
      %v208 = vld [vmem:[%s165 + $0x90] sm:$0xf]
      %v209 = vld [vmem:[%s165 + $0x94] sm:$0xf]
      %v210 = vld [vmem:[%s165 + $0x98] sm:$0xf]
      %v211 = vld [vmem:[%s165 + $0x9c] sm:$0xf]
      %v212 = vld [vmem:[%s165 + $0xa0] sm:$0xf]
      %v213 = vld [vmem:[%s165 + $0xa4] sm:$0xf]
      %v214 = vld [vmem:[%s165 + $0xa8] sm:$0xf]
      %v215 = vld [vmem:[%s165 + $0xac] sm:$0xf]
      %v216 = vld [vmem:[%s165 + $0xb0] sm:$0xf]
      %v217 = vld [vmem:[%s165 + $0xb4] sm:$0xf]
      %v218 = vld [vmem:[%s165 + $0xb8] sm:$0xf]
      %v219 = vld [vmem:[%s165 + $0xbc] sm:$0xf]
      %v220 = vld [vmem:[%s165 + $0xc0] sm:$0xf]
      %v221 = vld [vmem:[%s165 + $0xc4] sm:$0xf]
      %v222 = vld [vmem:[%s165 + $0xc8] sm:$0xf]
      %v223 = vld [vmem:[%s165 + $0xcc] sm:$0xf]
      %v224 = vld [vmem:[%s165 + $0xd0] sm:$0xf]
      %v225 = vld [vmem:[%s165 + $0xd4] sm:$0xf]
      %v226 = vld [vmem:[%s165 + $0xd8] sm:$0xf]
      %v227 = vld [vmem:[%s165 + $0xdc] sm:$0xf]
      %v228 = vld [vmem:[%s165 + $0xe0] sm:$0xf]
      %v229 = vld [vmem:[%s165 + $0xe4] sm:$0xf]
      %v230 = vld [vmem:[%s165 + $0xe8] sm:$0xf]
      %v231 = vld [vmem:[%s165 + $0xec] sm:$0xf]
      %v232 = vld [vmem:[%s165 + $0xf0] sm:$0xf]
      %v233 = vld [vmem:[%s165 + $0xf4] sm:$0xf]
      %v234 = vld [vmem:[%s165 + $0xf8] sm:$0xf]
      %v235 = vld [vmem:[%s165 + $0xfc] sm:$0xf]
      %v236 = vld [vmem:[%s165 + $0x100] sm:$0xf]
      %v237 = vld [vmem:[%s165 + $0x104] sm:$0xf]
      %v238 = vld [vmem:[%s165 + $0x108] sm:$0xf]
      %v239 = vld [vmem:[%s165 + $0x10c] sm:$0xf]
      %v240 = vld [vmem:[%s165 + $0x110] sm:$0xf]
      %v241 = vld [vmem:[%s165 + $0x114] sm:$0xf]
      %v242 = vld [vmem:[%s165 + $0x118] sm:$0xf]
      %v243 = vld [vmem:[%s165 + $0x11c] sm:$0xf]
      %v244 = vld [vmem:[%s165 + $0x120] sm:$0xf]
      %v245 = vld [vmem:[%s165 + $0x124] sm:$0xf]
      %v246 = vld [vmem:[%s165 + $0x128] sm:$0xf]
      %v247 = vld [vmem:[%s165 + $0x12c] sm:$0x7]
      %vm248 = vsmask.f32 3328
      %vm249 = vsmask.f32 7440
      %vm250 = vmor %vm248, %vm249
      %v252 = vshrl.u32 %v172, 16
      %v254 = vrot.slane %v252, 4
      %v255 = vshll.u32 %v172, 16
      %v257 = vrot.slane %v255, 5
      %v258 = vor.u32 %v254, %v257
      %v259 = vrot.slane %v258, 4
      %v261 = vshll.u32 %v173, 16
      %v263 = vrot.slane %v261, 5
      %v264 = vsel %vm250, %v259, %v263
      %v265 = vshrl.u32 %v173, 16
      %v267 = vrot.slane %v265, 4
      %v268 = vor.u32 %v267, %v263
      %v269 = vrot.slane %v268, 4
      %v271 = vshll.u32 %v174, 16
      %v273 = vrot.slane %v271, 5
      %v274 = vsel %vm250, %v269, %v273
      %v275 = vshrl.u32 %v174, 16
      %v277 = vrot.slane %v275, 4
      %v278 = vor.u32 %v277, %v273
      %v279 = vrot.slane %v278, 4
      %v281 = vshll.u32 %v175, 16
      %v283 = vrot.slane %v281, 5
      %v284 = vsel %vm250, %v279, %v283
      %v285 = vshrl.u32 %v175, 16
      %v287 = vrot.slane %v285, 4
      %v288 = vor.u32 %v287, %v283
      %v289 = vrot.slane %v288, 4
      %v291 = vshll.u32 %v176, 16
      %v293 = vrot.slane %v291, 5
      %v294 = vsel %vm250, %v289, %v293
      %v295 = vshrl.u32 %v176, 16
      %v297 = vrot.slane %v295, 4
      %v298 = vor.u32 %v297, %v293
      %v299 = vrot.slane %v298, 4
      %v301 = vshll.u32 %v177, 16
      %v303 = vrot.slane %v301, 5
      %v304 = vsel %vm250, %v299, %v303
      %v305 = vshrl.u32 %v177, 16
      %v307 = vrot.slane %v305, 4
      %v308 = vor.u32 %v307, %v303
      %v309 = vrot.slane %v308, 4
      %v311 = vshll.u32 %v178, 16
      %v313 = vrot.slane %v311, 5
      %v314 = vsel %vm250, %v309, %v313
      %v315 = vshrl.u32 %v178, 16
      %v317 = vrot.slane %v315, 4
      %v318 = vor.u32 %v317, %v313
      %v319 = vrot.slane %v318, 4
      %v321 = vshll.u32 %v179, 16
      %v323 = vrot.slane %v321, 5
      %v324 = vsel %vm250, %v319, %v323
      %v325 = vshrl.u32 %v179, 16
      %v327 = vrot.slane %v325, 4
      %v328 = vor.u32 %v327, %v323
      %v329 = vrot.slane %v328, 4
      %v331 = vshll.u32 %v180, 16
      %v333 = vrot.slane %v331, 5
      %v334 = vsel %vm250, %v329, %v333
      %v335 = vshrl.u32 %v180, 16
      %v337 = vrot.slane %v335, 4
      %v338 = vor.u32 %v337, %v333
      %v339 = vrot.slane %v338, 4
      %v341 = vshll.u32 %v181, 16
      %v343 = vrot.slane %v341, 5
      %v344 = vsel %vm250, %v339, %v343
      %v345 = vshrl.u32 %v181, 16
      %v347 = vrot.slane %v345, 4
      %v348 = vor.u32 %v347, %v343
      %v349 = vrot.slane %v348, 4
      %v351 = vshll.u32 %v182, 16
      %v353 = vrot.slane %v351, 5
      %v354 = vsel %vm250, %v349, %v353
      %v355 = vshrl.u32 %v182, 16
      %v357 = vrot.slane %v355, 4
      %v358 = vor.u32 %v357, %v353
      %v359 = vrot.slane %v358, 4
      %v361 = vshll.u32 %v183, 16
      %v363 = vrot.slane %v361, 5
      %v364 = vsel %vm250, %v359, %v363
      %v365 = vshrl.u32 %v183, 16
      %v367 = vrot.slane %v365, 4
      %v368 = vor.u32 %v367, %v363
      %v369 = vrot.slane %v368, 4
      %v371 = vshll.u32 %v184, 16
      %v373 = vrot.slane %v371, 5
      %v374 = vsel %vm250, %v369, %v373
      %v375 = vshrl.u32 %v184, 16
      %v377 = vrot.slane %v375, 4
      %v378 = vor.u32 %v377, %v373
      %v379 = vrot.slane %v378, 4
      %v381 = vshll.u32 %v185, 16
      %v383 = vrot.slane %v381, 5
      %v384 = vsel %vm250, %v379, %v383
      %v385 = vshrl.u32 %v185, 16
      %v387 = vrot.slane %v385, 4
      %v388 = vor.u32 %v387, %v383
      %v389 = vrot.slane %v388, 4
      %v391 = vshll.u32 %v186, 16
      %v393 = vrot.slane %v391, 5
      %v394 = vsel %vm250, %v389, %v393
      %v395 = vshrl.u32 %v186, 16
      %v397 = vrot.slane %v395, 4
      %v398 = vor.u32 %v397, %v393
      %v399 = vrot.slane %v398, 4
      %v401 = vshll.u32 %v187, 16
      %v403 = vrot.slane %v401, 5
      %v404 = vsel %vm250, %v399, %v403
      %v405 = vshrl.u32 %v187, 16
      %v407 = vrot.slane %v405, 4
      %v408 = vor.u32 %v407, %v403
      %v409 = vrot.slane %v408, 4
      %v411 = vshll.u32 %v188, 16
      %v413 = vrot.slane %v411, 5
      %v414 = vsel %vm250, %v409, %v413
      %v415 = vshrl.u32 %v188, 16
      %v417 = vrot.slane %v415, 4
      %v418 = vor.u32 %v417, %v413
      %v419 = vrot.slane %v418, 4
      %v421 = vshll.u32 %v189, 16
      %v423 = vrot.slane %v421, 5
      %v424 = vsel %vm250, %v419, %v423
      %v425 = vshrl.u32 %v189, 16
      %v427 = vrot.slane %v425, 4
      %v428 = vor.u32 %v427, %v423
      %v429 = vrot.slane %v428, 4
      %v431 = vshll.u32 %v190, 16
      %v433 = vrot.slane %v431, 5
      %v434 = vsel %vm250, %v429, %v433
      %v435 = vshrl.u32 %v190, 16
      %v437 = vrot.slane %v435, 4
      %v438 = vor.u32 %v437, %v433
      %v439 = vrot.slane %v438, 4
      %v441 = vshll.u32 %v191, 16
      %v443 = vrot.slane %v441, 5
      %v444 = vsel %vm250, %v439, %v443
      %v445 = vshrl.u32 %v191, 16
      %v447 = vrot.slane %v445, 4
      %v448 = vor.u32 %v447, %v443
      %v449 = vrot.slane %v448, 4
      %v451 = vshll.u32 %v192, 16
      %v453 = vrot.slane %v451, 5
      %v454 = vsel %vm250, %v449, %v453
      %v455 = vshrl.u32 %v192, 16
      %v457 = vrot.slane %v455, 4
      %v458 = vor.u32 %v457, %v453
      %v459 = vrot.slane %v458, 4
      %v461 = vshll.u32 %v193, 16
      %v463 = vrot.slane %v461, 5
      %v464 = vsel %vm250, %v459, %v463
      %v465 = vshrl.u32 %v193, 16
      %v467 = vrot.slane %v465, 4
      %v468 = vor.u32 %v467, %v463
      %v469 = vrot.slane %v468, 4
      %v471 = vshll.u32 %v194, 16
      %v473 = vrot.slane %v471, 5
      %v474 = vsel %vm250, %v469, %v473
      %v475 = vshrl.u32 %v194, 16
      %v477 = vrot.slane %v475, 4
      %v478 = vor.u32 %v477, %v473
      %v479 = vrot.slane %v478, 4
      %v481 = vshll.u32 %v195, 16
      %v483 = vrot.slane %v481, 5
      %v484 = vsel %vm250, %v479, %v483
      %v485 = vshrl.u32 %v195, 16
      %v487 = vrot.slane %v485, 4
      %v488 = vor.u32 %v487, %v483
      %v489 = vrot.slane %v488, 4
      %v491 = vshll.u32 %v196, 16
      %v493 = vrot.slane %v491, 5
      %v494 = vsel %vm250, %v489, %v493
      %v495 = vshrl.u32 %v196, 16
      %v497 = vrot.slane %v495, 4
      %v498 = vor.u32 %v497, %v493
      %v499 = vrot.slane %v498, 4
      %v501 = vshll.u32 %v197, 16
      %v503 = vrot.slane %v501, 5
      %v504 = vsel %vm250, %v499, %v503
      %v505 = vshrl.u32 %v197, 16
      %v507 = vrot.slane %v505, 4
      %v508 = vor.u32 %v507, %v503
      %v509 = vrot.slane %v508, 4
      %v511 = vshll.u32 %v198, 16
      %v513 = vrot.slane %v511, 5
      %v514 = vsel %vm250, %v509, %v513
      %v515 = vshrl.u32 %v198, 16
      %v517 = vrot.slane %v515, 4
      %v518 = vor.u32 %v517, %v513
      %v519 = vrot.slane %v518, 4
      %v521 = vshll.u32 %v199, 16
      %v523 = vrot.slane %v521, 5
      %v524 = vsel %vm250, %v519, %v523
      %v525 = vshrl.u32 %v199, 16
      %v527 = vrot.slane %v525, 4
      %v528 = vor.u32 %v527, %v523
      %v529 = vrot.slane %v528, 4
      %v531 = vshll.u32 %v200, 16
      %v533 = vrot.slane %v531, 5
      %v534 = vsel %vm250, %v529, %v533
      %v535 = vshrl.u32 %v200, 16
      %v537 = vrot.slane %v535, 4
      %v538 = vor.u32 %v537, %v533
      %v539 = vrot.slane %v538, 4
      %v541 = vshll.u32 %v201, 16
      %v543 = vrot.slane %v541, 5
      %v544 = vsel %vm250, %v539, %v543
      %v545 = vshrl.u32 %v201, 16
      %v547 = vrot.slane %v545, 4
      %v548 = vor.u32 %v547, %v543
      %v549 = vrot.slane %v548, 4
      %v551 = vshll.u32 %v202, 16
      %v553 = vrot.slane %v551, 5
      %v554 = vsel %vm250, %v549, %v553
      %v555 = vshrl.u32 %v202, 16
      %v557 = vrot.slane %v555, 4
      %v558 = vor.u32 %v557, %v553
      %v559 = vrot.slane %v558, 4
      %v561 = vshll.u32 %v203, 16
      %v563 = vrot.slane %v561, 5
      %v564 = vsel %vm250, %v559, %v563
      %v565 = vshrl.u32 %v203, 16
      %v567 = vrot.slane %v565, 4
      %v568 = vor.u32 %v567, %v563
      %v569 = vrot.slane %v568, 4
      %v571 = vshll.u32 %v204, 16
      %v573 = vrot.slane %v571, 5
      %v574 = vsel %vm250, %v569, %v573
      %v575 = vshrl.u32 %v204, 16
      %v577 = vrot.slane %v575, 4
      %v578 = vor.u32 %v577, %v573
      %v579 = vrot.slane %v578, 4
      %v581 = vshll.u32 %v205, 16
      %v583 = vrot.slane %v581, 5
      %v584 = vsel %vm250, %v579, %v583
      %v585 = vshrl.u32 %v205, 16
      %v587 = vrot.slane %v585, 4
      %v588 = vor.u32 %v587, %v583
      %v589 = vrot.slane %v588, 4
      %v591 = vshll.u32 %v206, 16
      %v593 = vrot.slane %v591, 5
      %v594 = vsel %vm250, %v589, %v593
      %v595 = vshrl.u32 %v206, 16
      %v597 = vrot.slane %v595, 4
      %v598 = vor.u32 %v597, %v593
      %v599 = vrot.slane %v598, 4
      %v601 = vshll.u32 %v207, 16
      %v603 = vrot.slane %v601, 5
      %v604 = vsel %vm250, %v599, %v603
      %v605 = vshrl.u32 %v207, 16
      %v607 = vrot.slane %v605, 4
      %v608 = vor.u32 %v607, %v603
      %v609 = vrot.slane %v608, 4
      %v611 = vshll.u32 %v208, 16
      %v613 = vrot.slane %v611, 5
      %v614 = vsel %vm250, %v609, %v613
      %v615 = vshrl.u32 %v208, 16
      %v617 = vrot.slane %v615, 4
      %v618 = vor.u32 %v617, %v613
      %v619 = vrot.slane %v618, 4
      %v621 = vshll.u32 %v209, 16
      %v623 = vrot.slane %v621, 5
      %v624 = vsel %vm250, %v619, %v623
      %v625 = vshrl.u32 %v209, 16
      %v627 = vrot.slane %v625, 4
      %v628 = vor.u32 %v627, %v623
      %v629 = vrot.slane %v628, 4
      %v631 = vshll.u32 %v210, 16
      %v633 = vrot.slane %v631, 5
      %v634 = vsel %vm250, %v629, %v633
      %v635 = vshrl.u32 %v210, 16
      %v637 = vrot.slane %v635, 4
      %v638 = vor.u32 %v637, %v633
      %v639 = vrot.slane %v638, 4
      %v641 = vshll.u32 %v211, 16
      %v643 = vrot.slane %v641, 5
      %v644 = vsel %vm250, %v639, %v643
      %v645 = vshrl.u32 %v211, 16
      %v647 = vrot.slane %v645, 4
      %v648 = vor.u32 %v647, %v643
      %v649 = vrot.slane %v648, 4
      %v651 = vshll.u32 %v212, 16
      %v653 = vrot.slane %v651, 5
      %v654 = vsel %vm250, %v649, %v653
      %v655 = vshrl.u32 %v212, 16
      %v657 = vrot.slane %v655, 4
      %v658 = vor.u32 %v657, %v653
      %v659 = vrot.slane %v658, 4
      %v661 = vshll.u32 %v213, 16
      %v663 = vrot.slane %v661, 5
      %v664 = vsel %vm250, %v659, %v663
      %v665 = vshrl.u32 %v213, 16
      %v667 = vrot.slane %v665, 4
      %v668 = vor.u32 %v667, %v663
      %v669 = vrot.slane %v668, 4
      %v671 = vshll.u32 %v214, 16
      %v673 = vrot.slane %v671, 5
      %v674 = vsel %vm250, %v669, %v673
      %v675 = vshrl.u32 %v214, 16
      %v677 = vrot.slane %v675, 4
      %v678 = vor.u32 %v677, %v673
      %v679 = vrot.slane %v678, 4
      %v681 = vshll.u32 %v215, 16
      %v683 = vrot.slane %v681, 5
      %v684 = vsel %vm250, %v679, %v683
      %v685 = vshrl.u32 %v215, 16
      %v687 = vrot.slane %v685, 4
      %v688 = vor.u32 %v687, %v683
      %v689 = vrot.slane %v688, 4
      %v691 = vshll.u32 %v216, 16
      %v693 = vrot.slane %v691, 5
      %v694 = vsel %vm250, %v689, %v693
      %v695 = vshrl.u32 %v216, 16
      %v697 = vrot.slane %v695, 4
      %v698 = vor.u32 %v697, %v693
      %v699 = vrot.slane %v698, 4
      %v701 = vshll.u32 %v217, 16
      %v703 = vrot.slane %v701, 5
      %v704 = vsel %vm250, %v699, %v703
      %v705 = vshrl.u32 %v217, 16
      %v707 = vrot.slane %v705, 4
      %v708 = vor.u32 %v707, %v703
      %v709 = vrot.slane %v708, 4
      %v711 = vshll.u32 %v218, 16
      %v713 = vrot.slane %v711, 5
      %v714 = vsel %vm250, %v709, %v713
      %v715 = vshrl.u32 %v218, 16
      %v717 = vrot.slane %v715, 4
      %v718 = vor.u32 %v717, %v713
      %v719 = vrot.slane %v718, 4
      %v721 = vshll.u32 %v219, 16
      %v723 = vrot.slane %v721, 5
      %v724 = vsel %vm250, %v719, %v723
      %v725 = vshrl.u32 %v219, 16
      %v727 = vrot.slane %v725, 4
      %v728 = vor.u32 %v727, %v723
      %v729 = vrot.slane %v728, 4
      %v731 = vshll.u32 %v220, 16
      %v733 = vrot.slane %v731, 5
      %v734 = vsel %vm250, %v729, %v733
      %v735 = vshrl.u32 %v220, 16
      %v737 = vrot.slane %v735, 4
      %v738 = vor.u32 %v737, %v733
      %v739 = vrot.slane %v738, 4
      %v741 = vshll.u32 %v221, 16
      %v743 = vrot.slane %v741, 5
      %v744 = vsel %vm250, %v739, %v743
      %v745 = vshrl.u32 %v221, 16
      %v747 = vrot.slane %v745, 4
      %v748 = vor.u32 %v747, %v743
      %v749 = vrot.slane %v748, 4
      %v751 = vshll.u32 %v222, 16
      %v753 = vrot.slane %v751, 5
      %v754 = vsel %vm250, %v749, %v753
      %v755 = vshrl.u32 %v222, 16
      %v757 = vrot.slane %v755, 4
      %v758 = vor.u32 %v757, %v753
      %v759 = vrot.slane %v758, 4
      %v761 = vshll.u32 %v223, 16
      %v763 = vrot.slane %v761, 5
      %v764 = vsel %vm250, %v759, %v763
      %v765 = vshrl.u32 %v223, 16
      %v767 = vrot.slane %v765, 4
      %v768 = vor.u32 %v767, %v763
      %v769 = vrot.slane %v768, 4
      %v771 = vshll.u32 %v224, 16
      %v773 = vrot.slane %v771, 5
      %v774 = vsel %vm250, %v769, %v773
      %v775 = vshrl.u32 %v224, 16
      %v777 = vrot.slane %v775, 4
      %v778 = vor.u32 %v777, %v773
      %v779 = vrot.slane %v778, 4
      %v781 = vshll.u32 %v225, 16
      %v783 = vrot.slane %v781, 5
      %v784 = vsel %vm250, %v779, %v783
      %v785 = vshrl.u32 %v225, 16
      %v787 = vrot.slane %v785, 4
      %v788 = vor.u32 %v787, %v783
      %v789 = vrot.slane %v788, 4
      %v791 = vshll.u32 %v226, 16
      %v793 = vrot.slane %v791, 5
      %v794 = vsel %vm250, %v789, %v793
      %v795 = vshrl.u32 %v226, 16
      %v797 = vrot.slane %v795, 4
      %v798 = vor.u32 %v797, %v793
      %v799 = vrot.slane %v798, 4
      %v801 = vshll.u32 %v227, 16
      %v803 = vrot.slane %v801, 5
      %v804 = vsel %vm250, %v799, %v803
      %v805 = vshrl.u32 %v227, 16
      %v807 = vrot.slane %v805, 4
      %v808 = vor.u32 %v807, %v803
      %v809 = vrot.slane %v808, 4
      %v811 = vshll.u32 %v228, 16
      %v813 = vrot.slane %v811, 5
      %v814 = vsel %vm250, %v809, %v813
      %v815 = vshrl.u32 %v228, 16
      %v817 = vrot.slane %v815, 4
      %v818 = vor.u32 %v817, %v813
      %v819 = vrot.slane %v818, 4
      %v821 = vshll.u32 %v229, 16
      %v823 = vrot.slane %v821, 5
      %v824 = vsel %vm250, %v819, %v823
      %v825 = vshrl.u32 %v229, 16
      %v827 = vrot.slane %v825, 4
      %v828 = vor.u32 %v827, %v823
      %v829 = vrot.slane %v828, 4
      %v831 = vshll.u32 %v230, 16
      %v833 = vrot.slane %v831, 5
      %v834 = vsel %vm250, %v829, %v833
      %v835 = vshrl.u32 %v230, 16
      %v837 = vrot.slane %v835, 4
      %v838 = vor.u32 %v837, %v833
      %v839 = vrot.slane %v838, 4
      %v841 = vshll.u32 %v231, 16
      %v843 = vrot.slane %v841, 5
      %v844 = vsel %vm250, %v839, %v843
      %v845 = vshrl.u32 %v231, 16
      %v847 = vrot.slane %v845, 4
      %v848 = vor.u32 %v847, %v843
      %v849 = vrot.slane %v848, 4
      %v851 = vshll.u32 %v232, 16
      %v853 = vrot.slane %v851, 5
      %v854 = vsel %vm250, %v849, %v853
      %v855 = vshrl.u32 %v232, 16
      %v857 = vrot.slane %v855, 4
      %v858 = vor.u32 %v857, %v853
      %v859 = vrot.slane %v858, 4
      %v861 = vshll.u32 %v233, 16
      %v863 = vrot.slane %v861, 5
      %v864 = vsel %vm250, %v859, %v863
      %v865 = vshrl.u32 %v233, 16
      %v867 = vrot.slane %v865, 4
      %v868 = vor.u32 %v867, %v863
      %v869 = vrot.slane %v868, 4
      %v871 = vshll.u32 %v234, 16
      %v873 = vrot.slane %v871, 5
      %v874 = vsel %vm250, %v869, %v873
      %v875 = vshrl.u32 %v234, 16
      %v877 = vrot.slane %v875, 4
      %v878 = vor.u32 %v877, %v873
      %v879 = vrot.slane %v878, 4
      %v881 = vshll.u32 %v235, 16
      %v883 = vrot.slane %v881, 5
      %v884 = vsel %vm250, %v879, %v883
      %v885 = vshrl.u32 %v235, 16
      %v887 = vrot.slane %v885, 4
      %v888 = vor.u32 %v887, %v883
      %v889 = vrot.slane %v888, 4
      %v891 = vshll.u32 %v236, 16
      %v893 = vrot.slane %v891, 5
      %v894 = vsel %vm250, %v889, %v893
      %v895 = vshrl.u32 %v236, 16
      %v897 = vrot.slane %v895, 4
      %v898 = vor.u32 %v897, %v893
      %v899 = vrot.slane %v898, 4
      %v901 = vshll.u32 %v237, 16
      %v903 = vrot.slane %v901, 5
      %v904 = vsel %vm250, %v899, %v903
      %v905 = vshrl.u32 %v237, 16
      %v907 = vrot.slane %v905, 4
      %v908 = vor.u32 %v907, %v903
      %v909 = vrot.slane %v908, 4
      %v911 = vshll.u32 %v238, 16
      %v913 = vrot.slane %v911, 5
      %v914 = vsel %vm250, %v909, %v913
      %v915 = vshrl.u32 %v238, 16
      %v917 = vrot.slane %v915, 4
      %v918 = vor.u32 %v917, %v913
      %v919 = vrot.slane %v918, 4
      %v921 = vshll.u32 %v239, 16
      %v923 = vrot.slane %v921, 5
      %v924 = vsel %vm250, %v919, %v923
      %v925 = vshrl.u32 %v239, 16
      %v927 = vrot.slane %v925, 4
      %v928 = vor.u32 %v927, %v923
      %v929 = vrot.slane %v928, 4
      %v931 = vshll.u32 %v240, 16
      %v933 = vrot.slane %v931, 5
      %v934 = vsel %vm250, %v929, %v933
      %v935 = vshrl.u32 %v240, 16
      %v937 = vrot.slane %v935, 4
      %v938 = vor.u32 %v937, %v933
      %v939 = vrot.slane %v938, 4
      %v941 = vshll.u32 %v241, 16
      %v943 = vrot.slane %v941, 5
      %v944 = vsel %vm250, %v939, %v943
      %v945 = vshrl.u32 %v241, 16
      %v947 = vrot.slane %v945, 4
      %v948 = vor.u32 %v947, %v943
      %v949 = vrot.slane %v948, 4
      %v951 = vshll.u32 %v242, 16
      %v953 = vrot.slane %v951, 5
      %v954 = vsel %vm250, %v949, %v953
      %v955 = vshrl.u32 %v242, 16
      %v957 = vrot.slane %v955, 4
      %v958 = vor.u32 %v957, %v953
      %v959 = vrot.slane %v958, 4
      %v961 = vshll.u32 %v243, 16
      %v963 = vrot.slane %v961, 5
      %v964 = vsel %vm250, %v959, %v963
      %v965 = vshrl.u32 %v243, 16
      %v967 = vrot.slane %v965, 4
      %v968 = vor.u32 %v967, %v963
      %v969 = vrot.slane %v968, 4
      %v971 = vshll.u32 %v244, 16
      %v973 = vrot.slane %v971, 5
      %v974 = vsel %vm250, %v969, %v973
      %v975 = vshrl.u32 %v244, 16
      %v977 = vrot.slane %v975, 4
      %v978 = vor.u32 %v977, %v973
      %v979 = vrot.slane %v978, 4
      %v981 = vshll.u32 %v245, 16
      %v983 = vrot.slane %v981, 5
      %v984 = vsel %vm250, %v979, %v983
      %v985 = vshrl.u32 %v245, 16
      %v987 = vrot.slane %v985, 4
      %v988 = vor.u32 %v987, %v983
      %v989 = vrot.slane %v988, 4
      %v991 = vshll.u32 %v246, 16
      %v993 = vrot.slane %v991, 5
      %v994 = vsel %vm250, %v989, %v993
      %v995 = vshrl.u32 %v246, 16
      %v997 = vrot.slane %v995, 4
      %v998 = vor.u32 %v997, %v993
      %v999 = vrot.slane %v998, 4
      %v1001 = vshll.u32 %v247, 16
      %v1003 = vrot.slane %v1001, 5
      %v1004 = vsel %vm250, %v999, %v1003
      %v1005 = vshrl.u32 %v247, 16
      %v1007 = vrot.slane %v1005, 4
      %v1008 = vor.u32 %v1007, %v1003
      %v1009 = vrot.slane %v1008, 4
      %v1086 = vmax.bf16 %v172, %v264
      %v1087 = vmax.bf16 %v173, %v274
      %v1088 = vmax.bf16 %v174, %v284
      %v1089 = vmax.bf16 %v175, %v294
      %v1090 = vmax.bf16 %v176, %v304
      %v1091 = vmax.bf16 %v177, %v314
      %v1092 = vmax.bf16 %v178, %v324
      %v1093 = vmax.bf16 %v179, %v334
      %v1094 = vmax.bf16 %v180, %v344
      %v1095 = vmax.bf16 %v181, %v354
      %v1096 = vmax.bf16 %v182, %v364
      %v1097 = vmax.bf16 %v183, %v374
      %v1098 = vmax.bf16 %v184, %v384
      %v1099 = vmax.bf16 %v185, %v394
      %v1100 = vmax.bf16 %v186, %v404
      %v1101 = vmax.bf16 %v187, %v414
      %v1102 = vmax.bf16 %v188, %v424
      %v1103 = vmax.bf16 %v189, %v434
      %v1104 = vmax.bf16 %v190, %v444
      %v1105 = vmax.bf16 %v191, %v454
      %v1106 = vmax.bf16 %v192, %v464
      %v1107 = vmax.bf16 %v193, %v474
      %v1108 = vmax.bf16 %v194, %v484
      %v1109 = vmax.bf16 %v195, %v494
      %v1110 = vmax.bf16 %v196, %v504
      %v1111 = vmax.bf16 %v197, %v514
      %v1112 = vmax.bf16 %v198, %v524
      %v1113 = vmax.bf16 %v199, %v534
      %v1114 = vmax.bf16 %v200, %v544
      %v1115 = vmax.bf16 %v201, %v554
      %v1116 = vmax.bf16 %v202, %v564
      %v1117 = vmax.bf16 %v203, %v574
      %v1118 = vmax.bf16 %v204, %v584
      %v1119 = vmax.bf16 %v205, %v594
      %v1120 = vmax.bf16 %v206, %v604
      %v1121 = vmax.bf16 %v207, %v614
      %v1122 = vmax.bf16 %v208, %v624
      %v1123 = vmax.bf16 %v209, %v634
      %v1124 = vmax.bf16 %v210, %v644
      %v1125 = vmax.bf16 %v211, %v654
      %v1126 = vmax.bf16 %v212, %v664
      %v1127 = vmax.bf16 %v213, %v674
      %v1128 = vmax.bf16 %v214, %v684
      %v1129 = vmax.bf16 %v215, %v694
      %v1130 = vmax.bf16 %v216, %v704
      %v1131 = vmax.bf16 %v217, %v714
      %v1132 = vmax.bf16 %v218, %v724
      %v1133 = vmax.bf16 %v219, %v734
      %v1134 = vmax.bf16 %v220, %v744
      %v1135 = vmax.bf16 %v221, %v754
      %v1136 = vmax.bf16 %v222, %v764
      %v1137 = vmax.bf16 %v223, %v774
      %v1138 = vmax.bf16 %v224, %v784
      %v1139 = vmax.bf16 %v225, %v794
      %v1140 = vmax.bf16 %v226, %v804
      %v1141 = vmax.bf16 %v227, %v814
      %v1142 = vmax.bf16 %v228, %v824
      %v1143 = vmax.bf16 %v229, %v834
      %v1144 = vmax.bf16 %v230, %v844
      %v1145 = vmax.bf16 %v231, %v854
      %v1146 = vmax.bf16 %v232, %v864
      %v1147 = vmax.bf16 %v233, %v874
      %v1148 = vmax.bf16 %v234, %v884
      %v1149 = vmax.bf16 %v235, %v894
      %v1150 = vmax.bf16 %v236, %v904
      %v1151 = vmax.bf16 %v237, %v914
      %v1152 = vmax.bf16 %v238, %v924
      %v1153 = vmax.bf16 %v239, %v934
      %v1154 = vmax.bf16 %v240, %v944
      %v1155 = vmax.bf16 %v241, %v954
      %v1156 = vmax.bf16 %v242, %v964
      %v1157 = vmax.bf16 %v243, %v974
      %v1158 = vmax.bf16 %v244, %v984
      %v1159 = vmax.bf16 %v245, %v994
      %v1160 = vmax.bf16 %v246, %v1004
      %v1161 = vmax.bf16 %v247, %v1009
      %vm1238 = vcmask 1042432
      %vm1239 = vcmask 1046532
      %vm1240 = vmor %vm1238, %vm1239
      %v1241 = vrot.slane %v172, 5
      %v1242 = vrot.slane %v1241, 4
      %v1243 = vrot.slane %v173, 5
      %v1244 = vsel %vm1240, %v1242, %v1243
      %v1245 = vrot.slane %v1243, 4
      %v1246 = vrot.slane %v174, 5
      %v1247 = vsel %vm1240, %v1245, %v1246
      %v1248 = vrot.slane %v1246, 4
      %v1249 = vrot.slane %v175, 5
      %v1250 = vsel %vm1240, %v1248, %v1249
      %v1251 = vrot.slane %v1249, 4
      %v1252 = vrot.slane %v176, 5
      %v1253 = vsel %vm1240, %v1251, %v1252
      %v1254 = vrot.slane %v1252, 4
      %v1255 = vrot.slane %v177, 5
      %v1256 = vsel %vm1240, %v1254, %v1255
      %v1257 = vrot.slane %v1255, 4
      %v1258 = vrot.slane %v178, 5
      %v1259 = vsel %vm1240, %v1257, %v1258
      %v1260 = vrot.slane %v1258, 4
      %v1261 = vrot.slane %v179, 5
      %v1262 = vsel %vm1240, %v1260, %v1261
      %v1263 = vrot.slane %v1261, 4
      %v1264 = vrot.slane %v180, 5
      %v1265 = vsel %vm1240, %v1263, %v1264
      %v1266 = vrot.slane %v1264, 4
      %v1267 = vrot.slane %v181, 5
      %v1268 = vsel %vm1240, %v1266, %v1267
      %v1269 = vrot.slane %v1267, 4
      %v1270 = vrot.slane %v182, 5
      %v1271 = vsel %vm1240, %v1269, %v1270
      %v1272 = vrot.slane %v1270, 4
      %v1273 = vrot.slane %v183, 5
      %v1274 = vsel %vm1240, %v1272, %v1273
      %v1275 = vrot.slane %v1273, 4
      %v1276 = vrot.slane %v184, 5
      %v1277 = vsel %vm1240, %v1275, %v1276
      %v1278 = vrot.slane %v1276, 4
      %v1279 = vrot.slane %v185, 5
      %v1280 = vsel %vm1240, %v1278, %v1279
      %v1281 = vrot.slane %v1279, 4
      %v1282 = vrot.slane %v186, 5
      %v1283 = vsel %vm1240, %v1281, %v1282
      %v1284 = vrot.slane %v1282, 4
      %v1285 = vrot.slane %v187, 5
      %v1286 = vsel %vm1240, %v1284, %v1285
      %v1287 = vrot.slane %v1285, 4
      %v1288 = vrot.slane %v188, 5
      %v1289 = vsel %vm1240, %v1287, %v1288
      %v1290 = vrot.slane %v1288, 4
      %v1291 = vrot.slane %v189, 5
      %v1292 = vsel %vm1240, %v1290, %v1291
      %v1293 = vrot.slane %v1291, 4
      %v1294 = vrot.slane %v190, 5
      %v1295 = vsel %vm1240, %v1293, %v1294
      %v1296 = vrot.slane %v1294, 4
      %v1297 = vrot.slane %v191, 5
      %v1298 = vsel %vm1240, %v1296, %v1297
      %v1299 = vrot.slane %v1297, 4
      %v1300 = vrot.slane %v192, 5
      %v1301 = vsel %vm1240, %v1299, %v1300
      %v1302 = vrot.slane %v1300, 4
      %v1303 = vrot.slane %v193, 5
      %v1304 = vsel %vm1240, %v1302, %v1303
      %v1305 = vrot.slane %v1303, 4
      %v1306 = vrot.slane %v194, 5
      %v1307 = vsel %vm1240, %v1305, %v1306
      %v1308 = vrot.slane %v1306, 4
      %v1309 = vrot.slane %v195, 5
      %v1310 = vsel %vm1240, %v1308, %v1309
      %v1311 = vrot.slane %v1309, 4
      %v1312 = vrot.slane %v196, 5
      %v1313 = vsel %vm1240, %v1311, %v1312
      %v1314 = vrot.slane %v1312, 4
      %v1315 = vrot.slane %v197, 5
      %v1316 = vsel %vm1240, %v1314, %v1315
      %v1317 = vrot.slane %v1315, 4
      %v1318 = vrot.slane %v198, 5
      %v1319 = vsel %vm1240, %v1317, %v1318
      %v1320 = vrot.slane %v1318, 4
      %v1321 = vrot.slane %v199, 5
      %v1322 = vsel %vm1240, %v1320, %v1321
      %v1323 = vrot.slane %v1321, 4
      %v1324 = vrot.slane %v200, 5
      %v1325 = vsel %vm1240, %v1323, %v1324
      %v1326 = vrot.slane %v1324, 4
      %v1327 = vrot.slane %v201, 5
      %v1328 = vsel %vm1240, %v1326, %v1327
      %v1329 = vrot.slane %v1327, 4
      %v1330 = vrot.slane %v202, 5
      %v1331 = vsel %vm1240, %v1329, %v1330
      %v1332 = vrot.slane %v1330, 4
      %v1333 = vrot.slane %v203, 5
      %v1334 = vsel %vm1240, %v1332, %v1333
      %v1335 = vrot.slane %v1333, 4
      %v1336 = vrot.slane %v204, 5
      %v1337 = vsel %vm1240, %v1335, %v1336
      %v1338 = vrot.slane %v1336, 4
      %v1339 = vrot.slane %v205, 5
      %v1340 = vsel %vm1240, %v1338, %v1339
      %v1341 = vrot.slane %v1339, 4
      %v1342 = vrot.slane %v206, 5
      %v1343 = vsel %vm1240, %v1341, %v1342
      %v1344 = vrot.slane %v1342, 4
      %v1345 = vrot.slane %v207, 5
      %v1346 = vsel %vm1240, %v1344, %v1345
      %v1347 = vrot.slane %v1345, 4
      %v1348 = vrot.slane %v208, 5
      %v1349 = vsel %vm1240, %v1347, %v1348
      %v1350 = vrot.slane %v1348, 4
      %v1351 = vrot.slane %v209, 5
      %v1352 = vsel %vm1240, %v1350, %v1351
      %v1353 = vrot.slane %v1351, 4
      %v1354 = vrot.slane %v210, 5
      %v1355 = vsel %vm1240, %v1353, %v1354
      %v1356 = vrot.slane %v1354, 4
      %v1357 = vrot.slane %v211, 5
      %v1358 = vsel %vm1240, %v1356, %v1357
      %v1359 = vrot.slane %v1357, 4
      %v1360 = vrot.slane %v212, 5
      %v1361 = vsel %vm1240, %v1359, %v1360
      %v1362 = vrot.slane %v1360, 4
      %v1363 = vrot.slane %v213, 5
      %v1364 = vsel %vm1240, %v1362, %v1363
      %v1365 = vrot.slane %v1363, 4
      %v1366 = vrot.slane %v214, 5
      %v1367 = vsel %vm1240, %v1365, %v1366
      %v1368 = vrot.slane %v1366, 4
      %v1369 = vrot.slane %v215, 5
      %v1370 = vsel %vm1240, %v1368, %v1369
      %v1371 = vrot.slane %v1369, 4
      %v1372 = vrot.slane %v216, 5
      %v1373 = vsel %vm1240, %v1371, %v1372
      %v1374 = vrot.slane %v1372, 4
      %v1375 = vrot.slane %v217, 5
      %v1376 = vsel %vm1240, %v1374, %v1375
      %v1377 = vrot.slane %v1375, 4
      %v1378 = vrot.slane %v218, 5
      %v1379 = vsel %vm1240, %v1377, %v1378
      %v1380 = vrot.slane %v1378, 4
      %v1381 = vrot.slane %v219, 5
      %v1382 = vsel %vm1240, %v1380, %v1381
      %v1383 = vrot.slane %v1381, 4
      %v1384 = vrot.slane %v220, 5
      %v1385 = vsel %vm1240, %v1383, %v1384
      %v1386 = vrot.slane %v1384, 4
      %v1387 = vrot.slane %v221, 5
      %v1388 = vsel %vm1240, %v1386, %v1387
      %v1389 = vrot.slane %v1387, 4
      %v1390 = vrot.slane %v222, 5
      %v1391 = vsel %vm1240, %v1389, %v1390
      %v1392 = vrot.slane %v1390, 4
      %v1393 = vrot.slane %v223, 5
      %v1394 = vsel %vm1240, %v1392, %v1393
      %v1395 = vrot.slane %v1393, 4
      %v1396 = vrot.slane %v224, 5
      %v1397 = vsel %vm1240, %v1395, %v1396
      %v1398 = vrot.slane %v1396, 4
      %v1399 = vrot.slane %v225, 5
      %v1400 = vsel %vm1240, %v1398, %v1399
      %v1401 = vrot.slane %v1399, 4
      %v1402 = vrot.slane %v226, 5
      %v1403 = vsel %vm1240, %v1401, %v1402
      %v1404 = vrot.slane %v1402, 4
      %v1405 = vrot.slane %v227, 5
      %v1406 = vsel %vm1240, %v1404, %v1405
      %v1407 = vrot.slane %v1405, 4
      %v1408 = vrot.slane %v228, 5
      %v1409 = vsel %vm1240, %v1407, %v1408
      %v1410 = vrot.slane %v1408, 4
      %v1411 = vrot.slane %v229, 5
      %v1412 = vsel %vm1240, %v1410, %v1411
      %v1413 = vrot.slane %v1411, 4
      %v1414 = vrot.slane %v230, 5
      %v1415 = vsel %vm1240, %v1413, %v1414
      %v1416 = vrot.slane %v1414, 4
      %v1417 = vrot.slane %v231, 5
      %v1418 = vsel %vm1240, %v1416, %v1417
      %v1419 = vrot.slane %v1417, 4
      %v1420 = vrot.slane %v232, 5
      %v1421 = vsel %vm1240, %v1419, %v1420
      %v1422 = vrot.slane %v1420, 4
      %v1423 = vrot.slane %v233, 5
      %v1424 = vsel %vm1240, %v1422, %v1423
      %v1425 = vrot.slane %v1423, 4
      %v1426 = vrot.slane %v234, 5
      %v1427 = vsel %vm1240, %v1425, %v1426
      %v1428 = vrot.slane %v1426, 4
      %v1429 = vrot.slane %v235, 5
      %v1430 = vsel %vm1240, %v1428, %v1429
      %v1431 = vrot.slane %v1429, 4
      %v1432 = vrot.slane %v236, 5
      %v1433 = vsel %vm1240, %v1431, %v1432
      %v1434 = vrot.slane %v1432, 4
      %v1435 = vrot.slane %v237, 5
      %v1436 = vsel %vm1240, %v1434, %v1435
      %v1437 = vrot.slane %v1435, 4
      %v1438 = vrot.slane %v238, 5
      %v1439 = vsel %vm1240, %v1437, %v1438
      %v1440 = vrot.slane %v1438, 4
      %v1441 = vrot.slane %v239, 5
      %v1442 = vsel %vm1240, %v1440, %v1441
      %v1443 = vrot.slane %v1441, 4
      %v1444 = vrot.slane %v240, 5
      %v1445 = vsel %vm1240, %v1443, %v1444
      %v1446 = vrot.slane %v1444, 4
      %v1447 = vrot.slane %v241, 5
      %v1448 = vsel %vm1240, %v1446, %v1447
      %v1449 = vrot.slane %v1447, 4
      %v1450 = vrot.slane %v242, 5
      %v1451 = vsel %vm1240, %v1449, %v1450
      %v1452 = vrot.slane %v1450, 4
      %v1453 = vrot.slane %v243, 5
      %v1454 = vsel %vm1240, %v1452, %v1453
      %v1455 = vrot.slane %v1453, 4
      %v1456 = vrot.slane %v244, 5
      %v1457 = vsel %vm1240, %v1455, %v1456
      %v1458 = vrot.slane %v1456, 4
      %v1459 = vrot.slane %v245, 5
      %v1460 = vsel %vm1240, %v1458, %v1459
      %v1461 = vrot.slane %v1459, 4
      %v1462 = vrot.slane %v246, 5
      %v1463 = vsel %vm1240, %v1461, %v1462
      %v1464 = vrot.slane %v1462, 4
      %v1465 = vrot.slane %v247, 5
      %v1466 = vsel %vm1240, %v1464, %v1465
      %v1467 = vrot.slane %v1465, 4
      %v1544 = vmax.bf16 %v1086, %v1244
      %v1545 = vmax.bf16 %v1087, %v1247
      %v1546 = vmax.bf16 %v1088, %v1250
      %v1547 = vmax.bf16 %v1089, %v1253
      %v1548 = vmax.bf16 %v1090, %v1256
      %v1549 = vmax.bf16 %v1091, %v1259
      %v1550 = vmax.bf16 %v1092, %v1262
      %v1551 = vmax.bf16 %v1093, %v1265
      %v1552 = vmax.bf16 %v1094, %v1268
      %v1553 = vmax.bf16 %v1095, %v1271
      %v1554 = vmax.bf16 %v1096, %v1274
      %v1555 = vmax.bf16 %v1097, %v1277
      %v1556 = vmax.bf16 %v1098, %v1280
      %v1557 = vmax.bf16 %v1099, %v1283
      %v1558 = vmax.bf16 %v1100, %v1286
      %v1559 = vmax.bf16 %v1101, %v1289
      %v1560 = vmax.bf16 %v1102, %v1292
      %v1561 = vmax.bf16 %v1103, %v1295
      %v1562 = vmax.bf16 %v1104, %v1298
      %v1563 = vmax.bf16 %v1105, %v1301
      %v1564 = vmax.bf16 %v1106, %v1304
      %v1565 = vmax.bf16 %v1107, %v1307
      %v1566 = vmax.bf16 %v1108, %v1310
      %v1567 = vmax.bf16 %v1109, %v1313
      %v1568 = vmax.bf16 %v1110, %v1316
      %v1569 = vmax.bf16 %v1111, %v1319
      %v1570 = vmax.bf16 %v1112, %v1322
      %v1571 = vmax.bf16 %v1113, %v1325
      %v1572 = vmax.bf16 %v1114, %v1328
      %v1573 = vmax.bf16 %v1115, %v1331
      %v1574 = vmax.bf16 %v1116, %v1334
      %v1575 = vmax.bf16 %v1117, %v1337
      %v1576 = vmax.bf16 %v1118, %v1340
      %v1577 = vmax.bf16 %v1119, %v1343
      %v1578 = vmax.bf16 %v1120, %v1346
      %v1579 = vmax.bf16 %v1121, %v1349
      %v1580 = vmax.bf16 %v1122, %v1352
      %v1581 = vmax.bf16 %v1123, %v1355
      %v1582 = vmax.bf16 %v1124, %v1358
      %v1583 = vmax.bf16 %v1125, %v1361
      %v1584 = vmax.bf16 %v1126, %v1364
      %v1585 = vmax.bf16 %v1127, %v1367
      %v1586 = vmax.bf16 %v1128, %v1370
      %v1587 = vmax.bf16 %v1129, %v1373
      %v1588 = vmax.bf16 %v1130, %v1376
      %v1589 = vmax.bf16 %v1131, %v1379
      %v1590 = vmax.bf16 %v1132, %v1382
      %v1591 = vmax.bf16 %v1133, %v1385
      %v1592 = vmax.bf16 %v1134, %v1388
      %v1593 = vmax.bf16 %v1135, %v1391
      %v1594 = vmax.bf16 %v1136, %v1394
      %v1595 = vmax.bf16 %v1137, %v1397
      %v1596 = vmax.bf16 %v1138, %v1400
      %v1597 = vmax.bf16 %v1139, %v1403
      %v1598 = vmax.bf16 %v1140, %v1406
      %v1599 = vmax.bf16 %v1141, %v1409
      %v1600 = vmax.bf16 %v1142, %v1412
      %v1601 = vmax.bf16 %v1143, %v1415
      %v1602 = vmax.bf16 %v1144, %v1418
      %v1603 = vmax.bf16 %v1145, %v1421
      %v1604 = vmax.bf16 %v1146, %v1424
      %v1605 = vmax.bf16 %v1147, %v1427
      %v1606 = vmax.bf16 %v1148, %v1430
      %v1607 = vmax.bf16 %v1149, %v1433
      %v1608 = vmax.bf16 %v1150, %v1436
      %v1609 = vmax.bf16 %v1151, %v1439
      %v1610 = vmax.bf16 %v1152, %v1442
      %v1611 = vmax.bf16 %v1153, %v1445
      %v1612 = vmax.bf16 %v1154, %v1448
      %v1613 = vmax.bf16 %v1155, %v1451
      %v1614 = vmax.bf16 %v1156, %v1454
      %v1615 = vmax.bf16 %v1157, %v1457
      %v1616 = vmax.bf16 %v1158, %v1460
      %v1617 = vmax.bf16 %v1159, %v1463
      %v1618 = vmax.bf16 %v1160, %v1466
      %v1619 = vmax.bf16 %v1161, %v1467
      %v1694 = vrot.slane %v1545, 5
      %v1695 = vrot.slane %v1694, 4
      %v1696 = vrot.slane %v1546, 5
      %v1697 = vsel %vm1240, %v1695, %v1696
      %v1698 = vrot.slane %v1696, 4
      %v1699 = vrot.slane %v1547, 5
      %v1700 = vsel %vm1240, %v1698, %v1699
      %v1701 = vrot.slane %v1699, 4
      %v1702 = vrot.slane %v1548, 5
      %v1703 = vsel %vm1240, %v1701, %v1702
      %v1704 = vrot.slane %v1702, 4
      %v1705 = vrot.slane %v1549, 5
      %v1706 = vsel %vm1240, %v1704, %v1705
      %v1707 = vrot.slane %v1705, 4
      %v1708 = vrot.slane %v1550, 5
      %v1709 = vsel %vm1240, %v1707, %v1708
      %v1710 = vrot.slane %v1708, 4
      %v1711 = vrot.slane %v1551, 5
      %v1712 = vsel %vm1240, %v1710, %v1711
      %v1713 = vrot.slane %v1711, 4
      %v1714 = vrot.slane %v1552, 5
      %v1715 = vsel %vm1240, %v1713, %v1714
      %v1716 = vrot.slane %v1714, 4
      %v1717 = vrot.slane %v1553, 5
      %v1718 = vsel %vm1240, %v1716, %v1717
      %v1719 = vrot.slane %v1717, 4
      %v1720 = vrot.slane %v1554, 5
      %v1721 = vsel %vm1240, %v1719, %v1720
      %v1722 = vrot.slane %v1720, 4
      %v1723 = vrot.slane %v1555, 5
      %v1724 = vsel %vm1240, %v1722, %v1723
      %v1725 = vrot.slane %v1723, 4
      %v1726 = vrot.slane %v1556, 5
      %v1727 = vsel %vm1240, %v1725, %v1726
      %v1728 = vrot.slane %v1726, 4
      %v1729 = vrot.slane %v1557, 5
      %v1730 = vsel %vm1240, %v1728, %v1729
      %v1731 = vrot.slane %v1729, 4
      %v1732 = vrot.slane %v1558, 5
      %v1733 = vsel %vm1240, %v1731, %v1732
      %v1734 = vrot.slane %v1732, 4
      %v1735 = vrot.slane %v1559, 5
      %v1736 = vsel %vm1240, %v1734, %v1735
      %v1737 = vrot.slane %v1735, 4
      %v1738 = vrot.slane %v1560, 5
      %v1739 = vsel %vm1240, %v1737, %v1738
      %v1740 = vrot.slane %v1738, 4
      %v1741 = vrot.slane %v1561, 5
      %v1742 = vsel %vm1240, %v1740, %v1741
      %v1743 = vrot.slane %v1741, 4
      %v1744 = vrot.slane %v1562, 5
      %v1745 = vsel %vm1240, %v1743, %v1744
      %v1746 = vrot.slane %v1744, 4
      %v1747 = vrot.slane %v1563, 5
      %v1748 = vsel %vm1240, %v1746, %v1747
      %v1749 = vrot.slane %v1747, 4
      %v1750 = vrot.slane %v1564, 5
      %v1751 = vsel %vm1240, %v1749, %v1750
      %v1752 = vrot.slane %v1750, 4
      %v1753 = vrot.slane %v1565, 5
      %v1754 = vsel %vm1240, %v1752, %v1753
      %v1755 = vrot.slane %v1753, 4
      %v1756 = vrot.slane %v1566, 5
      %v1757 = vsel %vm1240, %v1755, %v1756
      %v1758 = vrot.slane %v1756, 4
      %v1759 = vrot.slane %v1567, 5
      %v1760 = vsel %vm1240, %v1758, %v1759
      %v1761 = vrot.slane %v1759, 4
      %v1762 = vrot.slane %v1568, 5
      %v1763 = vsel %vm1240, %v1761, %v1762
      %v1764 = vrot.slane %v1762, 4
      %v1765 = vrot.slane %v1569, 5
      %v1766 = vsel %vm1240, %v1764, %v1765
      %v1767 = vrot.slane %v1765, 4
      %v1768 = vrot.slane %v1570, 5
      %v1769 = vsel %vm1240, %v1767, %v1768
      %v1770 = vrot.slane %v1768, 4
      %v1771 = vrot.slane %v1571, 5
      %v1772 = vsel %vm1240, %v1770, %v1771
      %v1773 = vrot.slane %v1771, 4
      %v1774 = vrot.slane %v1572, 5
      %v1775 = vsel %vm1240, %v1773, %v1774
      %v1776 = vrot.slane %v1774, 4
      %v1777 = vrot.slane %v1573, 5
      %v1778 = vsel %vm1240, %v1776, %v1777
      %v1779 = vrot.slane %v1777, 4
      %v1780 = vrot.slane %v1574, 5
      %v1781 = vsel %vm1240, %v1779, %v1780
      %v1782 = vrot.slane %v1780, 4
      %v1783 = vrot.slane %v1575, 5
      %v1784 = vsel %vm1240, %v1782, %v1783
      %v1785 = vrot.slane %v1783, 4
      %v1786 = vrot.slane %v1576, 5
      %v1787 = vsel %vm1240, %v1785, %v1786
      %v1788 = vrot.slane %v1786, 4
      %v1789 = vrot.slane %v1577, 5
      %v1790 = vsel %vm1240, %v1788, %v1789
      %v1791 = vrot.slane %v1789, 4
      %v1792 = vrot.slane %v1578, 5
      %v1793 = vsel %vm1240, %v1791, %v1792
      %v1794 = vrot.slane %v1792, 4
      %v1795 = vrot.slane %v1579, 5
      %v1796 = vsel %vm1240, %v1794, %v1795
      %v1797 = vrot.slane %v1795, 4
      %v1798 = vrot.slane %v1580, 5
      %v1799 = vsel %vm1240, %v1797, %v1798
      %v1800 = vrot.slane %v1798, 4
      %v1801 = vrot.slane %v1581, 5
      %v1802 = vsel %vm1240, %v1800, %v1801
      %v1803 = vrot.slane %v1801, 4
      %v1804 = vrot.slane %v1582, 5
      %v1805 = vsel %vm1240, %v1803, %v1804
      %v1806 = vrot.slane %v1804, 4
      %v1807 = vrot.slane %v1583, 5
      %v1808 = vsel %vm1240, %v1806, %v1807
      %v1809 = vrot.slane %v1807, 4
      %v1810 = vrot.slane %v1584, 5
      %v1811 = vsel %vm1240, %v1809, %v1810
      %v1812 = vrot.slane %v1810, 4
      %v1813 = vrot.slane %v1585, 5
      %v1814 = vsel %vm1240, %v1812, %v1813
      %v1815 = vrot.slane %v1813, 4
      %v1816 = vrot.slane %v1586, 5
      %v1817 = vsel %vm1240, %v1815, %v1816
      %v1818 = vrot.slane %v1816, 4
      %v1819 = vrot.slane %v1587, 5
      %v1820 = vsel %vm1240, %v1818, %v1819
      %v1821 = vrot.slane %v1819, 4
      %v1822 = vrot.slane %v1588, 5
      %v1823 = vsel %vm1240, %v1821, %v1822
      %v1824 = vrot.slane %v1822, 4
      %v1825 = vrot.slane %v1589, 5
      %v1826 = vsel %vm1240, %v1824, %v1825
      %v1827 = vrot.slane %v1825, 4
      %v1828 = vrot.slane %v1590, 5
      %v1829 = vsel %vm1240, %v1827, %v1828
      %v1830 = vrot.slane %v1828, 4
      %v1831 = vrot.slane %v1591, 5
      %v1832 = vsel %vm1240, %v1830, %v1831
      %v1833 = vrot.slane %v1831, 4
      %v1834 = vrot.slane %v1592, 5
      %v1835 = vsel %vm1240, %v1833, %v1834
      %v1836 = vrot.slane %v1834, 4
      %v1837 = vrot.slane %v1593, 5
      %v1838 = vsel %vm1240, %v1836, %v1837
      %v1839 = vrot.slane %v1837, 4
      %v1840 = vrot.slane %v1594, 5
      %v1841 = vsel %vm1240, %v1839, %v1840
      %v1842 = vrot.slane %v1840, 4
      %v1843 = vrot.slane %v1595, 5
      %v1844 = vsel %vm1240, %v1842, %v1843
      %v1845 = vrot.slane %v1843, 4
      %v1846 = vrot.slane %v1596, 5
      %v1847 = vsel %vm1240, %v1845, %v1846
      %v1848 = vrot.slane %v1846, 4
      %v1849 = vrot.slane %v1597, 5
      %v1850 = vsel %vm1240, %v1848, %v1849
      %v1851 = vrot.slane %v1849, 4
      %v1852 = vrot.slane %v1598, 5
      %v1853 = vsel %vm1240, %v1851, %v1852
      %v1854 = vrot.slane %v1852, 4
      %v1855 = vrot.slane %v1599, 5
      %v1856 = vsel %vm1240, %v1854, %v1855
      %v1857 = vrot.slane %v1855, 4
      %v1858 = vrot.slane %v1600, 5
      %v1859 = vsel %vm1240, %v1857, %v1858
      %v1860 = vrot.slane %v1858, 4
      %v1861 = vrot.slane %v1601, 5
      %v1862 = vsel %vm1240, %v1860, %v1861
      %v1863 = vrot.slane %v1861, 4
      %v1864 = vrot.slane %v1602, 5
      %v1865 = vsel %vm1240, %v1863, %v1864
      %v1866 = vrot.slane %v1864, 4
      %v1867 = vrot.slane %v1603, 5
      %v1868 = vsel %vm1240, %v1866, %v1867
      %v1869 = vrot.slane %v1867, 4
      %v1870 = vrot.slane %v1604, 5
      %v1871 = vsel %vm1240, %v1869, %v1870
      %v1872 = vrot.slane %v1870, 4
      %v1873 = vrot.slane %v1605, 5
      %v1874 = vsel %vm1240, %v1872, %v1873
      %v1875 = vrot.slane %v1873, 4
      %v1876 = vrot.slane %v1606, 5
      %v1877 = vsel %vm1240, %v1875, %v1876
      %v1878 = vrot.slane %v1876, 4
      %v1879 = vrot.slane %v1607, 5
      %v1880 = vsel %vm1240, %v1878, %v1879
      %v1881 = vrot.slane %v1879, 4
      %v1882 = vrot.slane %v1608, 5
      %v1883 = vsel %vm1240, %v1881, %v1882
      %v1884 = vrot.slane %v1882, 4
      %v1885 = vrot.slane %v1609, 5
      %v1886 = vsel %vm1240, %v1884, %v1885
      %v1887 = vrot.slane %v1885, 4
      %v1888 = vrot.slane %v1610, 5
      %v1889 = vsel %vm1240, %v1887, %v1888
      %v1890 = vrot.slane %v1888, 4
      %v1891 = vrot.slane %v1611, 5
      %v1892 = vsel %vm1240, %v1890, %v1891
      %v1893 = vrot.slane %v1891, 4
      %v1894 = vrot.slane %v1612, 5
      %v1895 = vsel %vm1240, %v1893, %v1894
      %v1896 = vrot.slane %v1894, 4
      %v1897 = vrot.slane %v1613, 5
      %v1898 = vsel %vm1240, %v1896, %v1897
      %v1899 = vrot.slane %v1897, 4
      %v1900 = vrot.slane %v1614, 5
      %v1901 = vsel %vm1240, %v1899, %v1900
      %v1902 = vrot.slane %v1900, 4
      %v1903 = vrot.slane %v1615, 5
      %v1904 = vsel %vm1240, %v1902, %v1903
      %v1905 = vrot.slane %v1903, 4
      %v1906 = vrot.slane %v1616, 5
      %v1907 = vsel %vm1240, %v1905, %v1906
      %v1908 = vrot.slane %v1906, 4
      %v1909 = vrot.slane %v1617, 5
      %v1910 = vsel %vm1240, %v1908, %v1909
      %v1911 = vrot.slane %v1909, 4
      %v1912 = vrot.slane %v1618, 5
      %v1913 = vsel %vm1240, %v1911, %v1912
      %v1987 = vmax.bf16 %v1544, %v1697
      %v1988 = vmax.bf16 %v1545, %v1700
      %v1989 = vmax.bf16 %v1546, %v1703
      %v1990 = vmax.bf16 %v1547, %v1706
      %v1991 = vmax.bf16 %v1548, %v1709
      %v1992 = vmax.bf16 %v1549, %v1712
      %v1993 = vmax.bf16 %v1550, %v1715
      %v1994 = vmax.bf16 %v1551, %v1718
      %v1995 = vmax.bf16 %v1552, %v1721
      %v1996 = vmax.bf16 %v1553, %v1724
      %v1997 = vmax.bf16 %v1554, %v1727
      %v1998 = vmax.bf16 %v1555, %v1730
      %v1999 = vmax.bf16 %v1556, %v1733
      %v2000 = vmax.bf16 %v1557, %v1736
      %v2001 = vmax.bf16 %v1558, %v1739
      %v2002 = vmax.bf16 %v1559, %v1742
      %v2003 = vmax.bf16 %v1560, %v1745
      %v2004 = vmax.bf16 %v1561, %v1748
      %v2005 = vmax.bf16 %v1562, %v1751
      %v2006 = vmax.bf16 %v1563, %v1754
      %v2007 = vmax.bf16 %v1564, %v1757
      %v2008 = vmax.bf16 %v1565, %v1760
      %v2009 = vmax.bf16 %v1566, %v1763
      %v2010 = vmax.bf16 %v1567, %v1766
      %v2011 = vmax.bf16 %v1568, %v1769
      %v2012 = vmax.bf16 %v1569, %v1772
      %v2013 = vmax.bf16 %v1570, %v1775
      %v2014 = vmax.bf16 %v1571, %v1778
      %v2015 = vmax.bf16 %v1572, %v1781
      %v2016 = vmax.bf16 %v1573, %v1784
      %v2017 = vmax.bf16 %v1574, %v1787
      %v2018 = vmax.bf16 %v1575, %v1790
      %v2019 = vmax.bf16 %v1576, %v1793
      %v2020 = vmax.bf16 %v1577, %v1796
      %v2021 = vmax.bf16 %v1578, %v1799
      %v2022 = vmax.bf16 %v1579, %v1802
      %v2023 = vmax.bf16 %v1580, %v1805
      %v2024 = vmax.bf16 %v1581, %v1808
      %v2025 = vmax.bf16 %v1582, %v1811
      %v2026 = vmax.bf16 %v1583, %v1814
      %v2027 = vmax.bf16 %v1584, %v1817
      %v2028 = vmax.bf16 %v1585, %v1820
      %v2029 = vmax.bf16 %v1586, %v1823
      %v2030 = vmax.bf16 %v1587, %v1826
      %v2031 = vmax.bf16 %v1588, %v1829
      %v2032 = vmax.bf16 %v1589, %v1832
      %v2033 = vmax.bf16 %v1590, %v1835
      %v2034 = vmax.bf16 %v1591, %v1838
      %v2035 = vmax.bf16 %v1592, %v1841
      %v2036 = vmax.bf16 %v1593, %v1844
      %v2037 = vmax.bf16 %v1594, %v1847
      %v2038 = vmax.bf16 %v1595, %v1850
      %v2039 = vmax.bf16 %v1596, %v1853
      %v2040 = vmax.bf16 %v1597, %v1856
      %v2041 = vmax.bf16 %v1598, %v1859
      %v2042 = vmax.bf16 %v1599, %v1862
      %v2043 = vmax.bf16 %v1600, %v1865
      %v2044 = vmax.bf16 %v1601, %v1868
      %v2045 = vmax.bf16 %v1602, %v1871
      %v2046 = vmax.bf16 %v1603, %v1874
      %v2047 = vmax.bf16 %v1604, %v1877
      %v2048 = vmax.bf16 %v1605, %v1880
      %v2049 = vmax.bf16 %v1606, %v1883
      %v2050 = vmax.bf16 %v1607, %v1886
      %v2051 = vmax.bf16 %v1608, %v1889
      %v2052 = vmax.bf16 %v1609, %v1892
      %v2053 = vmax.bf16 %v1610, %v1895
      %v2054 = vmax.bf16 %v1611, %v1898
      %v2055 = vmax.bf16 %v1612, %v1901
      %v2056 = vmax.bf16 %v1613, %v1904
      %v2057 = vmax.bf16 %v1614, %v1907
      %v2058 = vmax.bf16 %v1615, %v1910
      %v2059 = vmax.bf16 %v1616, %v1913
      %vm2061 = vcmask 1041408
      %vm2062 = vcmask 1045508
      %vm2063 = vmor %vm2061, %vm2062
      %v2064 = vrot.slane %v1546, 6
      %v2065 = vrot.slane %v2064, 4
      %v2066 = vrot.slane %v1547, 6
      %v2067 = vsel %vm2063, %v2065, %v2066
      %v2068 = vrot.slane %v2066, 4
      %v2069 = vrot.slane %v1548, 6
      %v2070 = vsel %vm2063, %v2068, %v2069
      %v2071 = vrot.slane %v2069, 4
      %v2072 = vrot.slane %v1549, 6
      %v2073 = vsel %vm2063, %v2071, %v2072
      %v2074 = vrot.slane %v2072, 4
      %v2075 = vrot.slane %v1550, 6
      %v2076 = vsel %vm2063, %v2074, %v2075
      %v2077 = vrot.slane %v2075, 4
      %v2078 = vrot.slane %v1551, 6
      %v2079 = vsel %vm2063, %v2077, %v2078
      %v2080 = vrot.slane %v2078, 4
      %v2081 = vrot.slane %v1552, 6
      %v2082 = vsel %vm2063, %v2080, %v2081
      %v2083 = vrot.slane %v2081, 4
      %v2084 = vrot.slane %v1553, 6
      %v2085 = vsel %vm2063, %v2083, %v2084
      %v2086 = vrot.slane %v2084, 4
      %v2087 = vrot.slane %v1554, 6
      %v2088 = vsel %vm2063, %v2086, %v2087
      %v2089 = vrot.slane %v2087, 4
      %v2090 = vrot.slane %v1555, 6
      %v2091 = vsel %vm2063, %v2089, %v2090
      %v2092 = vrot.slane %v2090, 4
      %v2093 = vrot.slane %v1556, 6
      %v2094 = vsel %vm2063, %v2092, %v2093
      %v2095 = vrot.slane %v2093, 4
      %v2096 = vrot.slane %v1557, 6
      %v2097 = vsel %vm2063, %v2095, %v2096
      %v2098 = vrot.slane %v2096, 4
      %v2099 = vrot.slane %v1558, 6
      %v2100 = vsel %vm2063, %v2098, %v2099
      %v2101 = vrot.slane %v2099, 4
      %v2102 = vrot.slane %v1559, 6
      %v2103 = vsel %vm2063, %v2101, %v2102
      %v2104 = vrot.slane %v2102, 4
      %v2105 = vrot.slane %v1560, 6
      %v2106 = vsel %vm2063, %v2104, %v2105
      %v2107 = vrot.slane %v2105, 4
      %v2108 = vrot.slane %v1561, 6
      %v2109 = vsel %vm2063, %v2107, %v2108
      %v2110 = vrot.slane %v2108, 4
      %v2111 = vrot.slane %v1562, 6
      %v2112 = vsel %vm2063, %v2110, %v2111
      %v2113 = vrot.slane %v2111, 4
      %v2114 = vrot.slane %v1563, 6
      %v2115 = vsel %vm2063, %v2113, %v2114
      %v2116 = vrot.slane %v2114, 4
      %v2117 = vrot.slane %v1564, 6
      %v2118 = vsel %vm2063, %v2116, %v2117
      %v2119 = vrot.slane %v2117, 4
      %v2120 = vrot.slane %v1565, 6
      %v2121 = vsel %vm2063, %v2119, %v2120
      %v2122 = vrot.slane %v2120, 4
      %v2123 = vrot.slane %v1566, 6
      %v2124 = vsel %vm2063, %v2122, %v2123
      %v2125 = vrot.slane %v2123, 4
      %v2126 = vrot.slane %v1567, 6
      %v2127 = vsel %vm2063, %v2125, %v2126
      %v2128 = vrot.slane %v2126, 4
      %v2129 = vrot.slane %v1568, 6
      %v2130 = vsel %vm2063, %v2128, %v2129
      %v2131 = vrot.slane %v2129, 4
      %v2132 = vrot.slane %v1569, 6
      %v2133 = vsel %vm2063, %v2131, %v2132
      %v2134 = vrot.slane %v2132, 4
      %v2135 = vrot.slane %v1570, 6
      %v2136 = vsel %vm2063, %v2134, %v2135
      %v2137 = vrot.slane %v2135, 4
      %v2138 = vrot.slane %v1571, 6
      %v2139 = vsel %vm2063, %v2137, %v2138
      %v2140 = vrot.slane %v2138, 4
      %v2141 = vrot.slane %v1572, 6
      %v2142 = vsel %vm2063, %v2140, %v2141
      %v2143 = vrot.slane %v2141, 4
      %v2144 = vrot.slane %v1573, 6
      %v2145 = vsel %vm2063, %v2143, %v2144
      %v2146 = vrot.slane %v2144, 4
      %v2147 = vrot.slane %v1574, 6
      %v2148 = vsel %vm2063, %v2146, %v2147
      %v2149 = vrot.slane %v2147, 4
      %v2150 = vrot.slane %v1575, 6
      %v2151 = vsel %vm2063, %v2149, %v2150
      %v2152 = vrot.slane %v2150, 4
      %v2153 = vrot.slane %v1576, 6
      %v2154 = vsel %vm2063, %v2152, %v2153
      %v2155 = vrot.slane %v2153, 4
      %v2156 = vrot.slane %v1577, 6
      %v2157 = vsel %vm2063, %v2155, %v2156
      %v2158 = vrot.slane %v2156, 4
      %v2159 = vrot.slane %v1578, 6
      %v2160 = vsel %vm2063, %v2158, %v2159
      %v2161 = vrot.slane %v2159, 4
      %v2162 = vrot.slane %v1579, 6
      %v2163 = vsel %vm2063, %v2161, %v2162
      %v2164 = vrot.slane %v2162, 4
      %v2165 = vrot.slane %v1580, 6
      %v2166 = vsel %vm2063, %v2164, %v2165
      %v2167 = vrot.slane %v2165, 4
      %v2168 = vrot.slane %v1581, 6
      %v2169 = vsel %vm2063, %v2167, %v2168
      %v2170 = vrot.slane %v2168, 4
      %v2171 = vrot.slane %v1582, 6
      %v2172 = vsel %vm2063, %v2170, %v2171
      %v2173 = vrot.slane %v2171, 4
      %v2174 = vrot.slane %v1583, 6
      %v2175 = vsel %vm2063, %v2173, %v2174
      %v2176 = vrot.slane %v2174, 4
      %v2177 = vrot.slane %v1584, 6
      %v2178 = vsel %vm2063, %v2176, %v2177
      %v2179 = vrot.slane %v2177, 4
      %v2180 = vrot.slane %v1585, 6
      %v2181 = vsel %vm2063, %v2179, %v2180
      %v2182 = vrot.slane %v2180, 4
      %v2183 = vrot.slane %v1586, 6
      %v2184 = vsel %vm2063, %v2182, %v2183
      %v2185 = vrot.slane %v2183, 4
      %v2186 = vrot.slane %v1587, 6
      %v2187 = vsel %vm2063, %v2185, %v2186
      %v2188 = vrot.slane %v2186, 4
      %v2189 = vrot.slane %v1588, 6
      %v2190 = vsel %vm2063, %v2188, %v2189
      %v2191 = vrot.slane %v2189, 4
      %v2192 = vrot.slane %v1589, 6
      %v2193 = vsel %vm2063, %v2191, %v2192
      %v2194 = vrot.slane %v2192, 4
      %v2195 = vrot.slane %v1590, 6
      %v2196 = vsel %vm2063, %v2194, %v2195
      %v2197 = vrot.slane %v2195, 4
      %v2198 = vrot.slane %v1591, 6
      %v2199 = vsel %vm2063, %v2197, %v2198
      %v2200 = vrot.slane %v2198, 4
      %v2201 = vrot.slane %v1592, 6
      %v2202 = vsel %vm2063, %v2200, %v2201
      %v2203 = vrot.slane %v2201, 4
      %v2204 = vrot.slane %v1593, 6
      %v2205 = vsel %vm2063, %v2203, %v2204
      %v2206 = vrot.slane %v2204, 4
      %v2207 = vrot.slane %v1594, 6
      %v2208 = vsel %vm2063, %v2206, %v2207
      %v2209 = vrot.slane %v2207, 4
      %v2210 = vrot.slane %v1595, 6
      %v2211 = vsel %vm2063, %v2209, %v2210
      %v2212 = vrot.slane %v2210, 4
      %v2213 = vrot.slane %v1596, 6
      %v2214 = vsel %vm2063, %v2212, %v2213
      %v2215 = vrot.slane %v2213, 4
      %v2216 = vrot.slane %v1597, 6
      %v2217 = vsel %vm2063, %v2215, %v2216
      %v2218 = vrot.slane %v2216, 4
      %v2219 = vrot.slane %v1598, 6
      %v2220 = vsel %vm2063, %v2218, %v2219
      %v2221 = vrot.slane %v2219, 4
      %v2222 = vrot.slane %v1599, 6
      %v2223 = vsel %vm2063, %v2221, %v2222
      %v2224 = vrot.slane %v2222, 4
      %v2225 = vrot.slane %v1600, 6
      %v2226 = vsel %vm2063, %v2224, %v2225
      %v2227 = vrot.slane %v2225, 4
      %v2228 = vrot.slane %v1601, 6
      %v2229 = vsel %vm2063, %v2227, %v2228
      %v2230 = vrot.slane %v2228, 4
      %v2231 = vrot.slane %v1602, 6
      %v2232 = vsel %vm2063, %v2230, %v2231
      %v2233 = vrot.slane %v2231, 4
      %v2234 = vrot.slane %v1603, 6
      %v2235 = vsel %vm2063, %v2233, %v2234
      %v2236 = vrot.slane %v2234, 4
      %v2237 = vrot.slane %v1604, 6
      %v2238 = vsel %vm2063, %v2236, %v2237
      %v2239 = vrot.slane %v2237, 4
      %v2240 = vrot.slane %v1605, 6
      %v2241 = vsel %vm2063, %v2239, %v2240
      %v2242 = vrot.slane %v2240, 4
      %v2243 = vrot.slane %v1606, 6
      %v2244 = vsel %vm2063, %v2242, %v2243
      %v2245 = vrot.slane %v2243, 4
      %v2246 = vrot.slane %v1607, 6
      %v2247 = vsel %vm2063, %v2245, %v2246
      %v2248 = vrot.slane %v2246, 4
      %v2249 = vrot.slane %v1608, 6
      %v2250 = vsel %vm2063, %v2248, %v2249
      %v2251 = vrot.slane %v2249, 4
      %v2252 = vrot.slane %v1609, 6
      %v2253 = vsel %vm2063, %v2251, %v2252
      %v2254 = vrot.slane %v2252, 4
      %v2255 = vrot.slane %v1610, 6
      %v2256 = vsel %vm2063, %v2254, %v2255
      %v2257 = vrot.slane %v2255, 4
      %v2258 = vrot.slane %v1611, 6
      %v2259 = vsel %vm2063, %v2257, %v2258
      %v2260 = vrot.slane %v2258, 4
      %v2261 = vrot.slane %v1612, 6
      %v2262 = vsel %vm2063, %v2260, %v2261
      %v2263 = vrot.slane %v2261, 4
      %v2264 = vrot.slane %v1613, 6
      %v2265 = vsel %vm2063, %v2263, %v2264
      %v2266 = vrot.slane %v2264, 4
      %v2267 = vrot.slane %v1614, 6
      %v2268 = vsel %vm2063, %v2266, %v2267
      %v2269 = vrot.slane %v2267, 4
      %v2270 = vrot.slane %v1615, 6
      %v2271 = vsel %vm2063, %v2269, %v2270
      %v2272 = vrot.slane %v2270, 4
      %v2273 = vrot.slane %v1616, 6
      %v2274 = vsel %vm2063, %v2272, %v2273
      %v2275 = vrot.slane %v2273, 4
      %v2276 = vrot.slane %v1617, 6
      %v2277 = vsel %vm2063, %v2275, %v2276
      %v2278 = vrot.slane %v2276, 4
      %v2279 = vrot.slane %v1618, 6
      %v2280 = vsel %vm2063, %v2278, %v2279
      %v2281 = vrot.slane %v2279, 4
      %v2282 = vrot.slane %v1619, 6
      %v2283 = vsel %vm2063, %v2281, %v2282
      %v2357 = vmax.bf16 %v1987, %v2067
      %v2358 = vmax.bf16 %v1988, %v2070
      %v2359 = vmax.bf16 %v1989, %v2073
      %v2360 = vmax.bf16 %v1990, %v2076
      %v2361 = vmax.bf16 %v1991, %v2079
      %v2362 = vmax.bf16 %v1992, %v2082
      %v2363 = vmax.bf16 %v1993, %v2085
      %v2364 = vmax.bf16 %v1994, %v2088
      %v2365 = vmax.bf16 %v1995, %v2091
      %v2366 = vmax.bf16 %v1996, %v2094
      %v2367 = vmax.bf16 %v1997, %v2097
      %v2368 = vmax.bf16 %v1998, %v2100
      %v2369 = vmax.bf16 %v1999, %v2103
      %v2370 = vmax.bf16 %v2000, %v2106
      %v2371 = vmax.bf16 %v2001, %v2109
      %v2372 = vmax.bf16 %v2002, %v2112
      %v2373 = vmax.bf16 %v2003, %v2115
      %v2374 = vmax.bf16 %v2004, %v2118
      %v2375 = vmax.bf16 %v2005, %v2121
      %v2376 = vmax.bf16 %v2006, %v2124
      %v2377 = vmax.bf16 %v2007, %v2127
      %v2378 = vmax.bf16 %v2008, %v2130
      %v2379 = vmax.bf16 %v2009, %v2133
      %v2380 = vmax.bf16 %v2010, %v2136
      %v2381 = vmax.bf16 %v2011, %v2139
      %v2382 = vmax.bf16 %v2012, %v2142
      %v2383 = vmax.bf16 %v2013, %v2145
      %v2384 = vmax.bf16 %v2014, %v2148
      %v2385 = vmax.bf16 %v2015, %v2151
      %v2386 = vmax.bf16 %v2016, %v2154
      %v2387 = vmax.bf16 %v2017, %v2157
      %v2388 = vmax.bf16 %v2018, %v2160
      %v2389 = vmax.bf16 %v2019, %v2163
      %v2390 = vmax.bf16 %v2020, %v2166
      %v2391 = vmax.bf16 %v2021, %v2169
      %v2392 = vmax.bf16 %v2022, %v2172
      %v2393 = vmax.bf16 %v2023, %v2175
      %v2394 = vmax.bf16 %v2024, %v2178
      %v2395 = vmax.bf16 %v2025, %v2181
      %v2396 = vmax.bf16 %v2026, %v2184
      %v2397 = vmax.bf16 %v2027, %v2187
      %v2398 = vmax.bf16 %v2028, %v2190
      %v2399 = vmax.bf16 %v2029, %v2193
      %v2400 = vmax.bf16 %v2030, %v2196
      %v2401 = vmax.bf16 %v2031, %v2199
      %v2402 = vmax.bf16 %v2032, %v2202
      %v2403 = vmax.bf16 %v2033, %v2205
      %v2404 = vmax.bf16 %v2034, %v2208
      %v2405 = vmax.bf16 %v2035, %v2211
      %v2406 = vmax.bf16 %v2036, %v2214
      %v2407 = vmax.bf16 %v2037, %v2217
      %v2408 = vmax.bf16 %v2038, %v2220
      %v2409 = vmax.bf16 %v2039, %v2223
      %v2410 = vmax.bf16 %v2040, %v2226
      %v2411 = vmax.bf16 %v2041, %v2229
      %v2412 = vmax.bf16 %v2042, %v2232
      %v2413 = vmax.bf16 %v2043, %v2235
      %v2414 = vmax.bf16 %v2044, %v2238
      %v2415 = vmax.bf16 %v2045, %v2241
      %v2416 = vmax.bf16 %v2046, %v2244
      %v2417 = vmax.bf16 %v2047, %v2247
      %v2418 = vmax.bf16 %v2048, %v2250
      %v2419 = vmax.bf16 %v2049, %v2253
      %v2420 = vmax.bf16 %v2050, %v2256
      %v2421 = vmax.bf16 %v2051, %v2259
      %v2422 = vmax.bf16 %v2052, %v2262
      %v2423 = vmax.bf16 %v2053, %v2265
      %v2424 = vmax.bf16 %v2054, %v2268
      %v2425 = vmax.bf16 %v2055, %v2271
      %v2426 = vmax.bf16 %v2056, %v2274
      %v2427 = vmax.bf16 %v2057, %v2277
      %v2428 = vmax.bf16 %v2058, %v2280
      %v2429 = vmax.bf16 %v2059, %v2283
      %v2479 = vrot.slane %v2369, 6
      %v2480 = vrot.slane %v2479, 4
      %v2481 = vrot.slane %v2370, 6
      %v2482 = vsel %vm2063, %v2480, %v2481
      %v2483 = vrot.slane %v2481, 4
      %v2484 = vrot.slane %v2371, 6
      %v2485 = vsel %vm2063, %v2483, %v2484
      %v2486 = vrot.slane %v2484, 4
      %v2487 = vrot.slane %v2372, 6
      %v2488 = vsel %vm2063, %v2486, %v2487
      %v2489 = vrot.slane %v2487, 4
      %v2490 = vrot.slane %v2373, 6
      %v2491 = vsel %vm2063, %v2489, %v2490
      %v2492 = vrot.slane %v2490, 4
      %v2493 = vrot.slane %v2374, 6
      %v2494 = vsel %vm2063, %v2492, %v2493
      %v2495 = vrot.slane %v2493, 4
      %v2496 = vrot.slane %v2375, 6
      %v2497 = vsel %vm2063, %v2495, %v2496
      %v2498 = vrot.slane %v2496, 4
      %v2499 = vrot.slane %v2376, 6
      %v2500 = vsel %vm2063, %v2498, %v2499
      %v2501 = vrot.slane %v2499, 4
      %v2502 = vrot.slane %v2377, 6
      %v2503 = vsel %vm2063, %v2501, %v2502
      %v2504 = vrot.slane %v2502, 4
      %v2505 = vrot.slane %v2378, 6
      %v2506 = vsel %vm2063, %v2504, %v2505
      %v2507 = vrot.slane %v2505, 4
      %v2508 = vrot.slane %v2379, 6
      %v2509 = vsel %vm2063, %v2507, %v2508
      %v2510 = vrot.slane %v2508, 4
      %v2511 = vrot.slane %v2380, 6
      %v2512 = vsel %vm2063, %v2510, %v2511
      %v2513 = vrot.slane %v2511, 4
      %v2514 = vrot.slane %v2381, 6
      %v2515 = vsel %vm2063, %v2513, %v2514
      %v2516 = vrot.slane %v2514, 4
      %v2517 = vrot.slane %v2382, 6
      %v2518 = vsel %vm2063, %v2516, %v2517
      %v2519 = vrot.slane %v2517, 4
      %v2520 = vrot.slane %v2383, 6
      %v2521 = vsel %vm2063, %v2519, %v2520
      %v2522 = vrot.slane %v2520, 4
      %v2523 = vrot.slane %v2384, 6
      %v2524 = vsel %vm2063, %v2522, %v2523
      %v2525 = vrot.slane %v2523, 4
      %v2526 = vrot.slane %v2385, 6
      %v2527 = vsel %vm2063, %v2525, %v2526
      %v2528 = vrot.slane %v2526, 4
      %v2529 = vrot.slane %v2386, 6
      %v2530 = vsel %vm2063, %v2528, %v2529
      %v2531 = vrot.slane %v2529, 4
      %v2532 = vrot.slane %v2387, 6
      %v2533 = vsel %vm2063, %v2531, %v2532
      %v2534 = vrot.slane %v2532, 4
      %v2535 = vrot.slane %v2388, 6
      %v2536 = vsel %vm2063, %v2534, %v2535
      %v2537 = vrot.slane %v2535, 4
      %v2538 = vrot.slane %v2389, 6
      %v2539 = vsel %vm2063, %v2537, %v2538
      %v2540 = vrot.slane %v2538, 4
      %v2541 = vrot.slane %v2390, 6
      %v2542 = vsel %vm2063, %v2540, %v2541
      %v2543 = vrot.slane %v2541, 4
      %v2544 = vrot.slane %v2391, 6
      %v2545 = vsel %vm2063, %v2543, %v2544
      %v2546 = vrot.slane %v2544, 4
      %v2547 = vrot.slane %v2392, 6
      %v2548 = vsel %vm2063, %v2546, %v2547
      %v2549 = vrot.slane %v2547, 4
      %v2550 = vrot.slane %v2393, 6
      %v2551 = vsel %vm2063, %v2549, %v2550
      %v2552 = vrot.slane %v2550, 4
      %v2553 = vrot.slane %v2394, 6
      %v2554 = vsel %vm2063, %v2552, %v2553
      %v2555 = vrot.slane %v2553, 4
      %v2556 = vrot.slane %v2395, 6
      %v2557 = vsel %vm2063, %v2555, %v2556
      %v2558 = vrot.slane %v2556, 4
      %v2559 = vrot.slane %v2396, 6
      %v2560 = vsel %vm2063, %v2558, %v2559
      %v2561 = vrot.slane %v2559, 4
      %v2562 = vrot.slane %v2397, 6
      %v2563 = vsel %vm2063, %v2561, %v2562
      %v2564 = vrot.slane %v2562, 4
      %v2565 = vrot.slane %v2398, 6
      %v2566 = vsel %vm2063, %v2564, %v2565
      %v2567 = vrot.slane %v2565, 4
      %v2568 = vrot.slane %v2399, 6
      %v2569 = vsel %vm2063, %v2567, %v2568
      %v2570 = vrot.slane %v2568, 4
      %v2571 = vrot.slane %v2400, 6
      %v2572 = vsel %vm2063, %v2570, %v2571
      %v2573 = vrot.slane %v2571, 4
      %v2574 = vrot.slane %v2401, 6
      %v2575 = vsel %vm2063, %v2573, %v2574
      %v2576 = vrot.slane %v2574, 4
      %v2577 = vrot.slane %v2402, 6
      %v2578 = vsel %vm2063, %v2576, %v2577
      %v2579 = vrot.slane %v2577, 4
      %v2580 = vrot.slane %v2403, 6
      %v2581 = vsel %vm2063, %v2579, %v2580
      %v2582 = vrot.slane %v2580, 4
      %v2583 = vrot.slane %v2404, 6
      %v2584 = vsel %vm2063, %v2582, %v2583
      %v2585 = vrot.slane %v2583, 4
      %v2586 = vrot.slane %v2405, 6
      %v2587 = vsel %vm2063, %v2585, %v2586
      %v2588 = vrot.slane %v2586, 4
      %v2589 = vrot.slane %v2406, 6
      %v2590 = vsel %vm2063, %v2588, %v2589
      %v2591 = vrot.slane %v2589, 4
      %v2592 = vrot.slane %v2407, 6
      %v2593 = vsel %vm2063, %v2591, %v2592
      %v2594 = vrot.slane %v2592, 4
      %v2595 = vrot.slane %v2408, 6
      %v2596 = vsel %vm2063, %v2594, %v2595
      %v2597 = vrot.slane %v2595, 4
      %v2598 = vrot.slane %v2409, 6
      %v2599 = vsel %vm2063, %v2597, %v2598
      %v2600 = vrot.slane %v2598, 4
      %v2601 = vrot.slane %v2410, 6
      %v2602 = vsel %vm2063, %v2600, %v2601
      %v2603 = vrot.slane %v2601, 4
      %v2604 = vrot.slane %v2411, 6
      %v2605 = vsel %vm2063, %v2603, %v2604
      %v2606 = vrot.slane %v2604, 4
      %v2607 = vrot.slane %v2412, 6
      %v2608 = vsel %vm2063, %v2606, %v2607
      %v2609 = vrot.slane %v2607, 4
      %v2610 = vrot.slane %v2413, 6
      %v2611 = vsel %vm2063, %v2609, %v2610
      %v2612 = vrot.slane %v2610, 4
      %v2613 = vrot.slane %v2414, 6
      %v2614 = vsel %vm2063, %v2612, %v2613
      %v2615 = vrot.slane %v2613, 4
      %v2616 = vrot.slane %v2415, 6
      %v2617 = vsel %vm2063, %v2615, %v2616
      %v2618 = vrot.slane %v2616, 4
      %v2619 = vrot.slane %v2416, 6
      %v2620 = vsel %vm2063, %v2618, %v2619
      %v2621 = vrot.slane %v2619, 4
      %v2622 = vrot.slane %v2417, 6
      %v2623 = vsel %vm2063, %v2621, %v2622
      %v2672 = vmax.bf16 %v2357, %v2482
      %v2673 = vmax.bf16 %v2358, %v2485
      %v2674 = vmax.bf16 %v2359, %v2488
      %v2675 = vmax.bf16 %v2360, %v2491
      %v2676 = vmax.bf16 %v2361, %v2494
      %v2677 = vmax.bf16 %v2362, %v2497
      %v2678 = vmax.bf16 %v2363, %v2500
      %v2679 = vmax.bf16 %v2364, %v2503
      %v2680 = vmax.bf16 %v2365, %v2506
      %v2681 = vmax.bf16 %v2366, %v2509
      %v2682 = vmax.bf16 %v2367, %v2512
      %v2683 = vmax.bf16 %v2368, %v2515
      %v2684 = vmax.bf16 %v2369, %v2518
      %v2685 = vmax.bf16 %v2370, %v2521
      %v2686 = vmax.bf16 %v2371, %v2524
      %v2687 = vmax.bf16 %v2372, %v2527
      %v2688 = vmax.bf16 %v2373, %v2530
      %v2689 = vmax.bf16 %v2374, %v2533
      %v2690 = vmax.bf16 %v2375, %v2536
      %v2691 = vmax.bf16 %v2376, %v2539
      %v2692 = vmax.bf16 %v2377, %v2542
      %v2693 = vmax.bf16 %v2378, %v2545
      %v2694 = vmax.bf16 %v2379, %v2548
      %v2695 = vmax.bf16 %v2380, %v2551
      %v2696 = vmax.bf16 %v2381, %v2554
      %v2697 = vmax.bf16 %v2382, %v2557
      %v2698 = vmax.bf16 %v2383, %v2560
      %v2699 = vmax.bf16 %v2384, %v2563
      %v2700 = vmax.bf16 %v2385, %v2566
      %v2701 = vmax.bf16 %v2386, %v2569
      %v2702 = vmax.bf16 %v2387, %v2572
      %v2703 = vmax.bf16 %v2388, %v2575
      %v2704 = vmax.bf16 %v2389, %v2578
      %v2705 = vmax.bf16 %v2390, %v2581
      %v2706 = vmax.bf16 %v2391, %v2584
      %v2707 = vmax.bf16 %v2392, %v2587
      %v2708 = vmax.bf16 %v2393, %v2590
      %v2709 = vmax.bf16 %v2394, %v2593
      %v2710 = vmax.bf16 %v2395, %v2596
      %v2711 = vmax.bf16 %v2396, %v2599
      %v2712 = vmax.bf16 %v2397, %v2602
      %v2713 = vmax.bf16 %v2398, %v2605
      %v2714 = vmax.bf16 %v2399, %v2608
      %v2715 = vmax.bf16 %v2400, %v2611
      %v2716 = vmax.bf16 %v2401, %v2614
      %v2717 = vmax.bf16 %v2402, %v2617
      %v2718 = vmax.bf16 %v2403, %v2620
      %v2719 = vmax.bf16 %v2404, %v2623
      %v2720 = vmax.bf16 %v2672, %v2382
      %v2721 = vmax.bf16 %v2673, %v2383
      %v2722 = vmax.bf16 %v2674, %v2384
      %v2723 = vmax.bf16 %v2675, %v2385
      %v2724 = vmax.bf16 %v2676, %v2386
      %v2725 = vmax.bf16 %v2677, %v2387
      %v2726 = vmax.bf16 %v2678, %v2388
      %v2727 = vmax.bf16 %v2679, %v2389
      %v2728 = vmax.bf16 %v2680, %v2390
      %v2729 = vmax.bf16 %v2681, %v2391
      %v2730 = vmax.bf16 %v2682, %v2392
      %v2731 = vmax.bf16 %v2683, %v2393
      %v2732 = vmax.bf16 %v2684, %v2394
      %v2733 = vmax.bf16 %v2685, %v2395
      %v2734 = vmax.bf16 %v2686, %v2396
      %v2735 = vmax.bf16 %v2687, %v2397
      %v2736 = vmax.bf16 %v2688, %v2398
      %v2737 = vmax.bf16 %v2689, %v2399
      %v2738 = vmax.bf16 %v2690, %v2400
      %v2739 = vmax.bf16 %v2691, %v2401
      %v2740 = vmax.bf16 %v2692, %v2402
      %v2741 = vmax.bf16 %v2693, %v2403
      %v2742 = vmax.bf16 %v2694, %v2404
      %v2743 = vmax.bf16 %v2695, %v2405
      %v2744 = vmax.bf16 %v2696, %v2406
      %v2745 = vmax.bf16 %v2697, %v2407
      %v2746 = vmax.bf16 %v2698, %v2408
      %v2747 = vmax.bf16 %v2699, %v2409
      %v2748 = vmax.bf16 %v2700, %v2410
      %v2749 = vmax.bf16 %v2701, %v2411
      %v2750 = vmax.bf16 %v2702, %v2412
      %v2751 = vmax.bf16 %v2703, %v2413
      %v2752 = vmax.bf16 %v2704, %v2414
      %v2753 = vmax.bf16 %v2705, %v2415
      %v2754 = vmax.bf16 %v2706, %v2416
      %v2755 = vmax.bf16 %v2707, %v2417
      %v2756 = vmax.bf16 %v2708, %v2418
      %v2757 = vmax.bf16 %v2709, %v2419
      %v2758 = vmax.bf16 %v2710, %v2420
      %v2759 = vmax.bf16 %v2711, %v2421
      %v2760 = vmax.bf16 %v2712, %v2422
      %v2761 = vmax.bf16 %v2713, %v2423
      %v2762 = vmax.bf16 %v2714, %v2424
      %v2763 = vmax.bf16 %v2715, %v2425
      %v2764 = vmax.bf16 %v2716, %v2426
      %v2765 = vmax.bf16 %v2717, %v2427
      %v2766 = vmax.bf16 %v2718, %v2428
      %v2767 = vmax.bf16 %v2719, %v2429
      %v2768 = vld [vmem:[%s1] sm:$0xf]
      %v2769 = vld [vmem:[%s2] sm:$0x1]
      %v2771 = vlaneseq
      %v2772 = vshrl.u32 %v2771, 7
      %v2773 = vsub.s32 0, %v2772
      %v2774 = vrot.slane %v2769, %v2773
      %v2824 = vunpack.c.l.b16 %v2720
      %v2825 = vunpack.c.l.b16 %v2721
      %v2826 = vunpack.c.l.b16 %v2722
      %v2827 = vunpack.c.l.b16 %v2723
      %v2828 = vunpack.c.l.b16 %v2724
      %v2829 = vunpack.c.l.b16 %v2725
      %v2830 = vunpack.c.l.b16 %v2726
      %v2831 = vunpack.c.l.b16 %v2727
      %v2832 = vunpack.c.l.b16 %v2728
      %v2833 = vunpack.c.l.b16 %v2729
      %v2834 = vunpack.c.l.b16 %v2730
      %v2835 = vunpack.c.l.b16 %v2731
      %v2836 = vunpack.c.l.b16 %v2732
      %v2837 = vunpack.c.l.b16 %v2733
      %v2838 = vunpack.c.l.b16 %v2734
      %v2839 = vunpack.c.l.b16 %v2735
      %v2840 = vunpack.c.l.b16 %v2736
      %v2841 = vunpack.c.l.b16 %v2737
      %v2842 = vunpack.c.l.b16 %v2738
      %v2843 = vunpack.c.l.b16 %v2739
      %v2844 = vunpack.c.l.b16 %v2740
      %v2845 = vunpack.c.l.b16 %v2741
      %v2846 = vunpack.c.l.b16 %v2742
      %v2847 = vunpack.c.l.b16 %v2743
      %v2848 = vunpack.c.l.b16 %v2744
      %v2849 = vunpack.c.l.b16 %v2745
      %v2850 = vunpack.c.l.b16 %v2746
      %v2851 = vunpack.c.l.b16 %v2747
      %v2852 = vunpack.c.l.b16 %v2748
      %v2853 = vunpack.c.l.b16 %v2749
      %v2854 = vunpack.c.l.b16 %v2750
      %v2855 = vunpack.c.l.b16 %v2751
      %v2856 = vunpack.c.l.b16 %v2752
      %v2857 = vunpack.c.l.b16 %v2753
      %v2858 = vunpack.c.l.b16 %v2754
      %v2859 = vunpack.c.l.b16 %v2755
      %v2860 = vunpack.c.l.b16 %v2756
      %v2861 = vunpack.c.l.b16 %v2757
      %v2862 = vunpack.c.l.b16 %v2758
      %v2863 = vunpack.c.l.b16 %v2759
      %v2864 = vunpack.c.l.b16 %v2760
      %v2865 = vunpack.c.l.b16 %v2761
      %v2866 = vunpack.c.l.b16 %v2762
      %v2867 = vunpack.c.l.b16 %v2763
      %v2868 = vunpack.c.l.b16 %v2764
      %v2869 = vunpack.c.l.b16 %v2765
      %v2870 = vunpack.c.l.b16 %v2766
      %v2871 = vunpack.c.l.b16 %v2767
      %v2872 = vpack.c.b16 %v2825, %v2824
      %v2873 = vpack.c.b16 %v2827, %v2826
      %v2874 = vpack.c.b16 %v2829, %v2828
      %v2875 = vpack.c.b16 %v2831, %v2830
      %v2876 = vpack.c.b16 %v2833, %v2832
      %v2877 = vpack.c.b16 %v2835, %v2834
      %v2878 = vpack.c.b16 %v2837, %v2836
      %v2879 = vpack.c.b16 %v2839, %v2838
      %v2880 = vpack.c.b16 %v2841, %v2840
      %v2881 = vpack.c.b16 %v2843, %v2842
      %v2882 = vpack.c.b16 %v2845, %v2844
      %v2883 = vpack.c.b16 %v2847, %v2846
      %v2884 = vpack.c.b16 %v2849, %v2848
      %v2885 = vpack.c.b16 %v2851, %v2850
      %v2886 = vpack.c.b16 %v2853, %v2852
      %v2887 = vpack.c.b16 %v2855, %v2854
      %v2888 = vpack.c.b16 %v2857, %v2856
      %v2889 = vpack.c.b16 %v2859, %v2858
      %v2890 = vpack.c.b16 %v2861, %v2860
      %v2891 = vpack.c.b16 %v2863, %v2862
      %v2892 = vpack.c.b16 %v2865, %v2864
      %v2893 = vpack.c.b16 %v2867, %v2866
      %v2894 = vpack.c.b16 %v2869, %v2868
      %v2895 = vpack.c.b16 %v2871, %v2870
      %vm2896 = vcmask 64512
      %v2898 = vsel %vm2896, %v2872, 0
      %v2901 = vsel %vm2896, %v2873, 0
      %v2904 = vsel %vm2896, %v2874, 0
      %v2907 = vsel %vm2896, %v2875, 0
      %v2910 = vsel %vm2896, %v2876, 0
      %v2913 = vsel %vm2896, %v2877, 0
      %v2916 = vsel %vm2896, %v2878, 0
      %v2919 = vsel %vm2896, %v2879, 0
      %v2922 = vsel %vm2896, %v2880, 0
      %v2925 = vsel %vm2896, %v2881, 0
      %v2928 = vsel %vm2896, %v2882, 0
      %v2931 = vsel %vm2896, %v2883, 0
      %v2934 = vsel %vm2896, %v2884, 0
      %v2937 = vsel %vm2896, %v2885, 0
      %v2940 = vsel %vm2896, %v2886, 0
      %v2943 = vsel %vm2896, %v2887, 0
      %v2946 = vsel %vm2896, %v2888, 0
      %v2949 = vsel %vm2896, %v2889, 0
      %v2952 = vsel %vm2896, %v2890, 0
      %v2955 = vsel %vm2896, %v2891, 0
      %v2958 = vsel %vm2896, %v2892, 0
      %v2961 = vsel %vm2896, %v2893, 0
      %v2964 = vsel %vm2896, %v2894, 0
      %v2967 = vsel %vm2896, %v2895, 0
      %vm2969 = vcmask 1043456
      %v2971 = vsel %vm2969, %v2768, 0
      %2973 = vmatprep.subr.bf16.mxu0 0
      %2974 = vmatpush1.bf16.msra.mxu0 %v2971
      %2975 = vmatprep.subr.bf16.mxu0 0
      %2976 = vmatpush1.bf16.msra.mxu0 0
      %2977 = vmatprep.subr.bf16.mxu0 0
      %2978 = vmatpush1.bf16.msra.mxu0 0
      %2979 = vmatprep.subr.bf16.mxu0 0
      %2980 = vmatpush1.bf16.msra.mxu0 0
      %2981 = vmatprep.subr.bf16.mxu0 0
      %2982 = vmatpush1.bf16.msra.mxu0 0
      %2983 = vmatprep.subr.bf16.mxu0 0
      %2984 = vmatpush1.bf16.msra.mxu0 0
      %2985 = vmatprep.subr.bf16.mxu0 0
      %2986 = vmatpush1.bf16.msra.mxu0 0
      %2987 = vmatprep.subr.bf16.mxu0 0
      %2988 = vmatpush1.bf16.msra.mxu0 0
      %2989 = vmatprep.subr.bf16.mxu0 0
      %2990 = vmatpush1.bf16.msra.mxu0 0
      %2991 = vmatprep.subr.bf16.mxu0 0
      %2992 = vmatpush1.bf16.msra.mxu0 0
      %2993 = vmatprep.subr.bf16.mxu0 0
      %2994 = vmatpush1.bf16.msra.mxu0 0
      %2995 = vmatprep.subr.bf16.mxu0 0
      %2996 = vmatpush1.bf16.msra.mxu0 0
      %2997 = vmatprep.subr.bf16.mxu0 0
      %2998 = vmatpush1.bf16.msra.mxu0 0
      %2999 = vmatprep.subr.bf16.mxu0 0
      %3000 = vmatpush1.bf16.msra.mxu0 0
      %3001 = vmatprep.subr.bf16.mxu0 0
      %3002 = vmatpush1.bf16.msra.mxu0 0
      %3003 = vmatprep.subr.bf16.mxu0 0
      %3004 = vmatpush1.bf16.msra.mxu0 0
      %3005 = vmatprep.mubr.bf16.mxu0 0
      %3006 = vmatmul.mubr.bf16.gmra.mrb[0].mxu0 %v2898
      %v3007 = vpop.f32.mrb[0].mxu0
      %v3008 = vadd.f32 %v2774, %v3007
      %v3009 = vpop.f32.mrb[0].mxu0
      %v3010 = vpop.f32.mrb[0].mxu0
      %v3011 = vadd.f32 %v2774, %v3010
      %v3012 = vpop.f32.mrb[0].mxu0
      %3013 = vmatprep.mubr.bf16.mxu0 0
      %3014 = vmatmul.mubr.bf16.gmra.mrb[0].mxu0 %v2901
      %v3015 = vpop.f32.mrb[0].mxu0
      %v3016 = vadd.f32 %v2774, %v3015
      %v3017 = vpop.f32.mrb[0].mxu0
      %v3018 = vpop.f32.mrb[0].mxu0
      %v3019 = vadd.f32 %v2774, %v3018
      %v3020 = vpop.f32.mrb[0].mxu0
      %3021 = vmatprep.mubr.bf16.mxu0 0
      %3022 = vmatmul.mubr.bf16.gmra.mrb[0].mxu0 %v2904
      %v3023 = vpop.f32.mrb[0].mxu0
      %v3024 = vadd.f32 %v2774, %v3023
      %v3025 = vpop.f32.mrb[0].mxu0
      %v3026 = vpop.f32.mrb[0].mxu0
      %v3027 = vadd.f32 %v2774, %v3026
      %v3028 = vpop.f32.mrb[0].mxu0
      %3029 = vmatprep.mubr.bf16.mxu0 0
      %3030 = vmatmul.mubr.bf16.gmra.mrb[0].mxu0 %v2907
      %v3031 = vpop.f32.mrb[0].mxu0
      %v3032 = vadd.f32 %v2774, %v3031
      %v3033 = vpop.f32.mrb[0].mxu0
      %v3034 = vpop.f32.mrb[0].mxu0
      %v3035 = vadd.f32 %v2774, %v3034
      %v3036 = vpop.f32.mrb[0].mxu0
      %3037 = vmatprep.mubr.bf16.mxu0 0
      %3038 = vmatmul.mubr.bf16.gmra.mrb[0].mxu0 %v2910
      %v3039 = vpop.f32.mrb[0].mxu0
      %v3040 = vadd.f32 %v2774, %v3039
      %v3041 = vpop.f32.mrb[0].mxu0
      %v3042 = vpop.f32.mrb[0].mxu0
      %v3043 = vadd.f32 %v2774, %v3042
      %v3044 = vpop.f32.mrb[0].mxu0
      %3045 = vmatprep.mubr.bf16.mxu0 0
      %3046 = vmatmul.mubr.bf16.gmra.mrb[0].mxu0 %v2913
      %v3047 = vpop.f32.mrb[0].mxu0
      %v3048 = vadd.f32 %v2774, %v3047
      %v3049 = vpop.f32.mrb[0].mxu0
      %v3050 = vpop.f32.mrb[0].mxu0
      %v3051 = vadd.f32 %v2774, %v3050
      %v3052 = vpop.f32.mrb[0].mxu0
      %3053 = vmatprep.mubr.bf16.mxu0 0
      %3054 = vmatmul.mubr.bf16.gmra.mrb[0].mxu0 %v2916
      %v3055 = vpop.f32.mrb[0].mxu0
      %v3056 = vadd.f32 %v2774, %v3055
      %v3057 = vpop.f32.mrb[0].mxu0
      %v3058 = vpop.f32.mrb[0].mxu0
      %v3059 = vadd.f32 %v2774, %v3058
      %v3060 = vpop.f32.mrb[0].mxu0
      %3061 = vmatprep.mubr.bf16.mxu0 0
      %3062 = vmatmul.mubr.bf16.gmra.mrb[0].mxu0 %v2919
      %v3063 = vpop.f32.mrb[0].mxu0
      %v3064 = vadd.f32 %v2774, %v3063
      %v3065 = vpop.f32.mrb[0].mxu0
      %v3066 = vpop.f32.mrb[0].mxu0
      %v3067 = vadd.f32 %v2774, %v3066
      %v3068 = vpop.f32.mrb[0].mxu0
      %3069 = vmatprep.mubr.bf16.mxu0 0
      %3070 = vmatmul.mubr.bf16.gmra.mrb[0].mxu0 %v2922
      %v3071 = vpop.f32.mrb[0].mxu0
      %v3072 = vadd.f32 %v2774, %v3071
      %v3073 = vpop.f32.mrb[0].mxu0
      %v3074 = vpop.f32.mrb[0].mxu0
      %v3075 = vadd.f32 %v2774, %v3074
      %v3076 = vpop.f32.mrb[0].mxu0
      %3077 = vmatprep.mubr.bf16.mxu0 0
      %3078 = vmatmul.mubr.bf16.gmra.mrb[0].mxu0 %v2925
      %v3079 = vpop.f32.mrb[0].mxu0
      %v3080 = vadd.f32 %v2774, %v3079
      %v3081 = vpop.f32.mrb[0].mxu0
      %v3082 = vpop.f32.mrb[0].mxu0
      %v3083 = vadd.f32 %v2774, %v3082
      %v3084 = vpop.f32.mrb[0].mxu0
      %3085 = vmatprep.mubr.bf16.mxu0 0
      %3086 = vmatmul.mubr.bf16.gmra.mrb[0].mxu0 %v2928
      %v3087 = vpop.f32.mrb[0].mxu0
      %v3088 = vadd.f32 %v2774, %v3087
      %v3089 = vpop.f32.mrb[0].mxu0
      %v3090 = vpop.f32.mrb[0].mxu0
      %v3091 = vadd.f32 %v2774, %v3090
      %v3092 = vpop.f32.mrb[0].mxu0
      %3093 = vmatprep.mubr.bf16.mxu0 0
      %3094 = vmatmul.mubr.bf16.gmra.mrb[0].mxu0 %v2931
      %v3095 = vpop.f32.mrb[0].mxu0
      %v3096 = vadd.f32 %v2774, %v3095
      %v3097 = vpop.f32.mrb[0].mxu0
      %v3098 = vpop.f32.mrb[0].mxu0
      %v3099 = vadd.f32 %v2774, %v3098
      %v3100 = vpop.f32.mrb[0].mxu0
      %3101 = vmatprep.mubr.bf16.mxu0 0
      %3102 = vmatmul.mubr.bf16.gmra.mrb[0].mxu0 %v2934
      %v3103 = vpop.f32.mrb[0].mxu0
      %v3104 = vadd.f32 %v2774, %v3103
      %v3105 = vpop.f32.mrb[0].mxu0
      %v3106 = vpop.f32.mrb[0].mxu0
      %v3107 = vadd.f32 %v2774, %v3106
      %v3108 = vpop.f32.mrb[0].mxu0
      %3109 = vmatprep.mubr.bf16.mxu0 0
      %3110 = vmatmul.mubr.bf16.gmra.mrb[0].mxu0 %v2937
      %v3111 = vpop.f32.mrb[0].mxu0
      %v3112 = vadd.f32 %v2774, %v3111
      %v3113 = vpop.f32.mrb[0].mxu0
      %v3114 = vpop.f32.mrb[0].mxu0
      %v3115 = vadd.f32 %v2774, %v3114
      %v3116 = vpop.f32.mrb[0].mxu0
      %3117 = vmatprep.mubr.bf16.mxu0 0
      %3118 = vmatmul.mubr.bf16.gmra.mrb[0].mxu0 %v2940
      %v3119 = vpop.f32.mrb[0].mxu0
      %v3120 = vadd.f32 %v2774, %v3119
      %v3121 = vpop.f32.mrb[0].mxu0
      %v3122 = vpop.f32.mrb[0].mxu0
      %v3123 = vadd.f32 %v2774, %v3122
      %v3124 = vpop.f32.mrb[0].mxu0
      %3125 = vmatprep.mubr.bf16.mxu0 0
      %3126 = vmatmul.mubr.bf16.gmra.mrb[0].mxu0 %v2943
      %v3127 = vpop.f32.mrb[0].mxu0
      %v3128 = vadd.f32 %v2774, %v3127
      %v3129 = vpop.f32.mrb[0].mxu0
      %v3130 = vpop.f32.mrb[0].mxu0
      %v3131 = vadd.f32 %v2774, %v3130
      %v3132 = vpop.f32.mrb[0].mxu0
      %3133 = vmatprep.mubr.bf16.mxu0 0
      %3134 = vmatmul.mubr.bf16.gmra.mrb[0].mxu0 %v2946
      %v3135 = vpop.f32.mrb[0].mxu0
      %v3136 = vadd.f32 %v2774, %v3135
      %v3137 = vpop.f32.mrb[0].mxu0
      %v3138 = vpop.f32.mrb[0].mxu0
      %v3139 = vadd.f32 %v2774, %v3138
      %v3140 = vpop.f32.mrb[0].mxu0
      %3141 = vmatprep.mubr.bf16.mxu0 0
      %3142 = vmatmul.mubr.bf16.gmra.mrb[0].mxu0 %v2949
      %v3143 = vpop.f32.mrb[0].mxu0
      %v3144 = vadd.f32 %v2774, %v3143
      %v3145 = vpop.f32.mrb[0].mxu0
      %v3146 = vpop.f32.mrb[0].mxu0
      %v3147 = vadd.f32 %v2774, %v3146
      %v3148 = vpop.f32.mrb[0].mxu0
      %3149 = vmatprep.mubr.bf16.mxu0 0
      %3150 = vmatmul.mubr.bf16.gmra.mrb[0].mxu0 %v2952
      %v3151 = vpop.f32.mrb[0].mxu0
      %v3152 = vadd.f32 %v2774, %v3151
      %v3153 = vpop.f32.mrb[0].mxu0
      %v3154 = vpop.f32.mrb[0].mxu0
      %v3155 = vadd.f32 %v2774, %v3154
      %v3156 = vpop.f32.mrb[0].mxu0
      %3157 = vmatprep.mubr.bf16.mxu0 0
      %3158 = vmatmul.mubr.bf16.gmra.mrb[0].mxu0 %v2955
      %v3159 = vpop.f32.mrb[0].mxu0
      %v3160 = vadd.f32 %v2774, %v3159
      %v3161 = vpop.f32.mrb[0].mxu0
      %v3162 = vpop.f32.mrb[0].mxu0
      %v3163 = vadd.f32 %v2774, %v3162
      %v3164 = vpop.f32.mrb[0].mxu0
      %3165 = vmatprep.mubr.bf16.mxu0 0
      %3166 = vmatmul.mubr.bf16.gmra.mrb[0].mxu0 %v2958
      %v3167 = vpop.f32.mrb[0].mxu0
      %v3168 = vadd.f32 %v2774, %v3167
      %v3169 = vpop.f32.mrb[0].mxu0
      %v3170 = vpop.f32.mrb[0].mxu0
      %v3171 = vadd.f32 %v2774, %v3170
      %v3172 = vpop.f32.mrb[0].mxu0
      %3173 = vmatprep.mubr.bf16.mxu0 0
      %3174 = vmatmul.mubr.bf16.gmra.mrb[0].mxu0 %v2961
      %v3175 = vpop.f32.mrb[0].mxu0
      %v3176 = vadd.f32 %v2774, %v3175
      %v3177 = vpop.f32.mrb[0].mxu0
      %v3178 = vpop.f32.mrb[0].mxu0
      %v3179 = vadd.f32 %v2774, %v3178
      %v3180 = vpop.f32.mrb[0].mxu0
      %3181 = vmatprep.mubr.bf16.mxu0 0
      %3182 = vmatmul.mubr.bf16.gmra.mrb[0].mxu0 %v2964
      %v3183 = vpop.f32.mrb[0].mxu0
      %v3184 = vadd.f32 %v2774, %v3183
      %v3185 = vpop.f32.mrb[0].mxu0
      %v3186 = vpop.f32.mrb[0].mxu0
      %v3187 = vadd.f32 %v2774, %v3186
      %v3188 = vpop.f32.mrb[0].mxu0
      %3189 = vmatprep.mubr.bf16.mxu0 0
      %3190 = vmatmul.mubr.bf16.gmra.mrb[0].mxu0 %v2967
      %v3191 = vpop.f32.mrb[0].mxu0
      %v3192 = vadd.f32 %v2774, %v3191
      %v3193 = vpop.f32.mrb[0].mxu0
      %v3194 = vpop.f32.mrb[0].mxu0
      %v3195 = vadd.f32 %v2774, %v3194
      %v3196 = vpop.f32.mrb[0].mxu0
      %3197 = vdwg.mxu0
      %v3198 = vmax.f32 %v3008, 0.0
      %v3199 = vmax.f32 %v3011, 0.0
      %v3200 = vmax.f32 %v3016, 0.0
      %v3201 = vmax.f32 %v3019, 0.0
      %v3202 = vmax.f32 %v3024, 0.0
      %v3203 = vmax.f32 %v3027, 0.0
      %v3204 = vmax.f32 %v3032, 0.0
      %v3205 = vmax.f32 %v3035, 0.0
      %v3206 = vmax.f32 %v3040, 0.0
      %v3207 = vmax.f32 %v3043, 0.0
      %v3208 = vmax.f32 %v3048, 0.0
      %v3209 = vmax.f32 %v3051, 0.0
      %v3210 = vmax.f32 %v3056, 0.0
      %v3211 = vmax.f32 %v3059, 0.0
      %v3212 = vmax.f32 %v3064, 0.0
      %v3213 = vmax.f32 %v3067, 0.0
      %v3214 = vmax.f32 %v3072, 0.0
      %v3215 = vmax.f32 %v3075, 0.0
      %v3216 = vmax.f32 %v3080, 0.0
      %v3217 = vmax.f32 %v3083, 0.0
      %v3218 = vmax.f32 %v3088, 0.0
      %v3219 = vmax.f32 %v3091, 0.0
      %v3220 = vmax.f32 %v3096, 0.0
      %v3221 = vmax.f32 %v3099, 0.0
      %v3222 = vmax.f32 %v3104, 0.0
      %v3223 = vmax.f32 %v3107, 0.0
      %v3224 = vmax.f32 %v3112, 0.0
      %v3225 = vmax.f32 %v3115, 0.0
      %v3226 = vmax.f32 %v3120, 0.0
      %v3227 = vmax.f32 %v3123, 0.0
      %v3228 = vmax.f32 %v3128, 0.0
      %v3229 = vmax.f32 %v3131, 0.0
      %v3230 = vmax.f32 %v3136, 0.0
      %v3231 = vmax.f32 %v3139, 0.0
      %v3232 = vmax.f32 %v3144, 0.0
      %v3233 = vmax.f32 %v3147, 0.0
      %v3234 = vmax.f32 %v3152, 0.0
      %v3235 = vmax.f32 %v3155, 0.0
      %v3236 = vmax.f32 %v3160, 0.0
      %v3237 = vmax.f32 %v3163, 0.0
      %v3238 = vmax.f32 %v3168, 0.0
      %v3239 = vmax.f32 %v3171, 0.0
      %v3240 = vmax.f32 %v3176, 0.0
      %v3241 = vmax.f32 %v3179, 0.0
      %v3242 = vmax.f32 %v3184, 0.0
      %v3243 = vmax.f32 %v3187, 0.0
      %v3244 = vmax.f32 %v3192, 0.0
      %v3245 = vmax.f32 %v3195, 0.0
      %3246 = vst [vmem:[%s170] sm:$0xff] %v3198
      %3247 = vst [vmem:[%s170 + $0x8] sm:$0xff] %v3199
      %3248 = vst [vmem:[%s170 + $0x10] sm:$0xff] %v3200
      %3249 = vst [vmem:[%s170 + $0x18] sm:$0xff] %v3201
      %3250 = vst [vmem:[%s170 + $0x20] sm:$0xff] %v3202
      %3251 = vst [vmem:[%s170 + $0x28] sm:$0xff] %v3203
      %3252 = vst [vmem:[%s170 + $0x30] sm:$0xff] %v3204
      %3253 = vst [vmem:[%s170 + $0x38] sm:$0xff] %v3205
      %3254 = vst [vmem:[%s170 + $0x40] sm:$0xff] %v3206
      %3255 = vst [vmem:[%s170 + $0x48] sm:$0xff] %v3207
      %3256 = vst [vmem:[%s170 + $0x50] sm:$0xff] %v3208
      %3257 = vst [vmem:[%s170 + $0x58] sm:$0xff] %v3209
      %3258 = vst [vmem:[%s170 + $0x60] sm:$0xff] %v3210
      %3259 = vst [vmem:[%s170 + $0x68] sm:$0xff] %v3211
      %3260 = vst [vmem:[%s170 + $0x70] sm:$0xff] %v3212
      %3261 = vst [vmem:[%s170 + $0x78] sm:$0xff] %v3213
      %3262 = vst [vmem:[%s170 + $0x80] sm:$0xff] %v3214
      %3263 = vst [vmem:[%s170 + $0x88] sm:$0xff] %v3215
      %3264 = vst [vmem:[%s170 + $0x90] sm:$0xff] %v3216
      %3265 = vst [vmem:[%s170 + $0x98] sm:$0xff] %v3217
      %3266 = vst [vmem:[%s170 + $0xa0] sm:$0xff] %v3218
      %3267 = vst [vmem:[%s170 + $0xa8] sm:$0xff] %v3219
      %3268 = vst [vmem:[%s170 + $0xb0] sm:$0xff] %v3220
      %3269 = vst [vmem:[%s170 + $0xb8] sm:$0xff] %v3221
      %3270 = vst [vmem:[%s170 + $0xc0] sm:$0xff] %v3222
      %3271 = vst [vmem:[%s170 + $0xc8] sm:$0xff] %v3223
      %3272 = vst [vmem:[%s170 + $0xd0] sm:$0xff] %v3224
      %3273 = vst [vmem:[%s170 + $0xd8] sm:$0xff] %v3225
      %3274 = vst [vmem:[%s170 + $0xe0] sm:$0xff] %v3226
      %3275 = vst [vmem:[%s170 + $0xe8] sm:$0xff] %v3227
      %3276 = vst [vmem:[%s170 + $0xf0] sm:$0xff] %v3228
      %3277 = vst [vmem:[%s170 + $0xf8] sm:$0xff] %v3229
      %3278 = vst [vmem:[%s170 + $0x100] sm:$0xff] %v3230
      %3279 = vst [vmem:[%s170 + $0x108] sm:$0xff] %v3231
      %3280 = vst [vmem:[%s170 + $0x110] sm:$0xff] %v3232
      %3281 = vst [vmem:[%s170 + $0x118] sm:$0xff] %v3233
      %3282 = vst [vmem:[%s170 + $0x120] sm:$0xff] %v3234
      %3283 = vst [vmem:[%s170 + $0x128] sm:$0xff] %v3235
      %3284 = vst [vmem:[%s170 + $0x130] sm:$0xff] %v3236
      %3285 = vst [vmem:[%s170 + $0x138] sm:$0xff] %v3237
      %3286 = vst [vmem:[%s170 + $0x140] sm:$0xff] %v3238
      %3287 = vst [vmem:[%s170 + $0x148] sm:$0xff] %v3239
      %3288 = vst [vmem:[%s170 + $0x150] sm:$0xff] %v3240
      %3289 = vst [vmem:[%s170 + $0x158] sm:$0xff] %v3241
      %3290 = vst [vmem:[%s170 + $0x160] sm:$0xff] %v3242
      %3291 = vst [vmem:[%s170 + $0x168] sm:$0xff] %v3243
      %3292 = vst [vmem:[%s170 + $0x170] sm:$0xff] %v3244
      %3293 = vst [vmem:[%s170 + $0x178] sm:$0xff] %v3245
      %p3294 = scmp.lt.s32.totalorder %s14, 1
      %s3295 = scalar_select %p3294, %s14, 1
      %s3296 = smul.addr %s3295, 48
      %s3297 = smul.addr %s3296, 8
      %s3298 = scalar_lea.vmem %s3, %s3297
      // Predicated region
      $region33: #{mixed_forward.7} parent=31 // pred_check
        %p3299 = pneg %p100
      $region34: #{mixed_forward.7} parent=31 // pred_check_branch
        %3301 = sbr.rel (%p3299) target = $region36
      $region35: #{mixed_forward.7} parent=31 // pred_region
        _
      $region36: #{mixed_forward.7} parent=31 // pred_fallthru
        _
    $region32: #{mixed_forward.7} parent=5 // pred_fallthru
      _
    %p3302 = scmp.le.s32.totalorder 2, %s9
    // Predicated region
    $region37: #{mixed_forward.7} parent=5 // pred_check
      %p3303 = pneg %p3302
    $region38: #{mixed_forward.7} parent=5 // pred_check_branch
      %3305 = sbr.rel (%p3303) target = $region40
    $region39: #{mixed_forward.7} parent=5 // pred_region
      %s3306 = ssub.s32 %s9, 2
      // Predicated region
      $region41: #{mixed_forward.7} parent=39 // pred_check
        %p3307 = pneg %p106
      $region42: #{mixed_forward.7} parent=39 // pred_check_branch
        %3309 = sbr.rel (%p3307) target = $region44
      $region43: #{mixed_forward.7} parent=39 // pred_region
        %p3310 = scmp.lt.s32.totalorder %s15, 1
        %s3311 = scalar_select %p3310, %s15, 1
        %s3312 = smul.addr %s3311, 48
        %s3313 = smul.addr %s3312, 8
        %s3314 = scalar_lea.vmem %s3, %s3313
      $region44: #{mixed_forward.7} parent=39 // pred_fallthru
        _
    $region40: #{mixed_forward.7} parent=5 // pred_fallthru
      _
  $region6: #{mixed_forward.7} parent=0 // loop_footer
    %s13 = sadd.s32 1, %s9
  $region7: #{mixed_forward.7} parent=0 // loop_footer_branch
    %8 = sbr.rel target = $region3
  $region8: #{mixed_forward.7} parent=0 // loop_exit
    _

</llo_original>
